<compile_context>
chip_gen: v6e
topology: v6e:2x2x1
jax: 0.10.0
libtpu: 0.0.40
codegen_flags: <defaults>
</compile_context>

<pallas_src>
import functools

import jax
import jax.numpy as jnp
from jax.experimental import pallas as pl
from jax.experimental.pallas import tpu as pltpu


# ----------------------------- Pallas kernels ------------------------------

def _matmul_bias_kernel(x_ref, w_ref, b_ref, o_ref, *, relu):
    """o = x @ w + b (optionally ReLU); used for the conv-as-GEMM layers."""
    y = jnp.dot(x_ref[...], w_ref[...], preferred_element_type=jnp.float32)
    y = y + b_ref[...]                      # b is (1, N), broadcasts over rows
    if relu:
        y = jnp.maximum(y, 0.0)
    o_ref[...] = y.astype(o_ref.dtype)


def _dense_tail_kernel(feat_ref, wav_ref, bav_ref,
                       wa2_ref, ba2_ref, wv2_ref, bv2_ref, q_ref):
    """Fused dense tail: [a1|v1] trunk, ReLU, a2/v2 heads, dueling combine.

    wav_ref is the bf16 concatenation [w_a1 | w_v1] of shape (3136, 1024);
    accumulation stays f32 on the MXU via preferred_element_type.
    """
    feat = feat_ref[...].astype(wav_ref.dtype)             # f32 -> bf16 cast
    h = jnp.dot(feat, wav_ref[...], preferred_element_type=jnp.float32)
    h = jnp.maximum(h + bav_ref[...], 0.0)                  # (B, 1024)
    half = h.shape[1] // 2
    ha = h[:, :half]                                        # advantage stream
    hv = h[:, half:]                                        # value stream
    a = jnp.dot(ha, wa2_ref[...], preferred_element_type=jnp.float32)
    a = a + ba2_ref[...]                                    # (B, nA)
    v = jnp.dot(hv, wv2_ref[...], preferred_element_type=jnp.float32)
    v = v + bv2_ref[...]                                    # (B, 1)
    a_mean = jnp.mean(a, axis=1, keepdims=True)             # a.mean(1).unsqueeze(1)
    q_ref[...] = (v + a - a_mean).astype(q_ref.dtype)       # v broadcasts over nA


# ------------------------------ Pallas wrappers -----------------------------

_VMEM_SPEC = pl.BlockSpec(memory_space=pltpu.MemorySpace.VMEM)


def pallas_linear(x, w, b, *, relu, m_tile=None):
    """y = x @ w + b (optional ReLU).  x:(M,K)  w:(K,N)  b:(1,N).

    If m_tile evenly tiles M (multiple of 8), the GEMM is tiled over rows with
    a "parallel" grid axis: splits across both TensorCores on v7x and bounds
    VMEM usage for larger batches. Otherwise a single whole-array invocation.
    """
    M, K = x.shape
    N = w.shape[1]
    kernel = functools.partial(_matmul_bias_kernel, relu=relu)
    out_shape = jax.ShapeDtypeStruct((M, N), jnp.float32)

    if m_tile is None or m_tile >= M or M % m_tile or m_tile % 8:
        return pl.pallas_call(
            kernel, out_shape=out_shape,
            in_specs=[_VMEM_SPEC] * 3, out_specs=_VMEM_SPEC,
        )(x, w, b)

    return pl.pallas_call(
        kernel, out_shape=out_shape,
        grid=(M // m_tile,),
        in_specs=[pl.BlockSpec((m_tile, K), lambda i: (i, 0)),
                  pl.BlockSpec((K, N), lambda i: (0, 0)),
                  pl.BlockSpec((1, N), lambda i: (0, 0))],
        out_specs=pl.BlockSpec((m_tile, N), lambda i: (i, 0)),
        compiler_params=pltpu.CompilerParams(
            dimension_semantics=("parallel",)),
    )(x, w, b)


def pallas_dense_tail(feat, w_av, b_av, w_a2, b_a2, w_v2, b_v2):
    """Fused trunk + heads + dueling combine in a single pallas_call."""
    B = feat.shape[0]
    n_actions = w_a2.shape[1]
    return pl.pallas_call(
        _dense_tail_kernel,
        out_shape=jax.ShapeDtypeStruct((B, n_actions), jnp.float32),
        in_specs=[_VMEM_SPEC] * 7,
        out_specs=_VMEM_SPEC,
    )(feat, w_av, b_av, w_a2, b_a2, w_v2, b_v2)


# ------------------------------ im2col (glue) ------------------------------

def im2col_nhwc(x, k, s):
    """x: (B, H, W, C) -> patches (B*Ho*Wo, k*k*C), plus (Ho, Wo).

    Flattened patch ordering is (kh, kw, c) with c fastest-varying, matching a
    PyTorch conv weight (O, C, kh, kw) permuted to (kh, kw, C, O) and reshaped
    to (k*k*C, O).  Staying NHWC makes the post-GEMM reshape back to
    (B, Ho, Wo, Cout) free (no transpose between Pallas calls).
    """
    B, H, W, C = x.shape
    Ho = (H - k) // s + 1
    Wo = (W - k) // s + 1
    cols = []
    for i in range(k):
        for j in range(k):
            cols.append(x[:, i:i + Ho * s:s, j:j + Wo * s:s, :])  # (B,Ho,Wo,C)
    p = jnp.concatenate(cols, axis=-1)            # (B, Ho, Wo, k*k*C)
    return p.reshape(B * Ho * Wo, k * k * C), Ho, Wo


# ------------------------------ DuelNet forward -----------------------------

def duelnet_forward(x, params):
    """x: (B, 4, 84, 84) NCHW (PyTorch layout) -> q values (B, n_actions)."""
    B = x.shape[0]
    x = jnp.transpose(x, (0, 2, 3, 1))            # NCHW -> NHWC, once

    # Conv2d(4, 32, k=8, s=4) + ReLU   (conv lowered to im2col GEMM)
    # TODO(synk): fold the patch gather into the conv kernel (in-kernel
    # strided window reads) to avoid materializing the duplicated patches.
    p, Ho, Wo = im2col_nhwc(x, 8, 4)
    y = pallas_linear(p, params["w_c1"], params["b_c1"], relu=True, m_tile=400)
    x = y.reshape(B, Ho, Wo, 32)                  # free reshape, stays NHWC

    # Conv2d(32, 64, k=4, s=2) + ReLU
    p, Ho, Wo = im2col_nhwc(x, 4, 2)
    y = pallas_linear(p, params["w_c2"], params["b_c2"], relu=True)
    x = y.reshape(B, Ho, Wo, 64)

    # Conv2d(64, 64, k=3, s=1) + ReLU
    p, Ho, Wo = im2col_nhwc(x, 3, 1)
    y = pallas_linear(p, params["w_c3"], params["b_c3"], relu=True)
    x = y.reshape(B, Ho, Wo, 64)

    # Flatten in NHWC order (h, w, c); w_a1/w_v1 rows were permuted to match.
    feat = x.reshape(B, -1)                       # (B, 3136)

    # Fused dense tail: [a1|v1] trunk + ReLU + a2/v2 heads + dueling combine.
    return pallas_dense_tail(feat,
                             params["w_av1"], params["b_av1"],
                             params["w_a2"], params["b_a2"],
                             params["w_v2"], params["b_v2"])


# ------------------------------ parameter init ------------------------------

def _conv_w_to_gemm(w):
    """PyTorch conv weight (O, C, kh, kw) -> GEMM layout (kh*kw*C, O)."""
    o, c, kh, kw = w.shape
    return jnp.transpose(w, (2, 3, 1, 0)).reshape(kh * kw * c, o)


def _fc_rows_chw_to_hwc(w_t, c, h, w):
    """Rows of a (c*h*w, out) FC weight reordered from (c,h,w) to (h,w,c)."""
    out = w_t.shape[1]
    return jnp.transpose(w_t.reshape(c, h, w, out), (1, 2, 0, 3)).reshape(c * h * w, out)


def init_params(key, n_actions):
    """Deterministic synthetic weights, generated in PyTorch layouts and then
    permuted / fused / cast once into the layouts the kernels expect."""
    ks = jax.random.split(key, 14)

    def rnd(k, shape, fan_in):
        return jax.random.normal(k, shape, jnp.float32) / jnp.sqrt(fan_in)

    # PyTorch-layout synthetic weights.
    w_c1 = rnd(ks[0], (32, 4, 8, 8), 4 * 8 * 8)        # Conv2d weight (O,C,kh,kw)
    w_c2 = rnd(ks[1], (64, 32, 4, 4), 32 * 4 * 4)
    w_c3 = rnd(ks[2], (64, 64, 3, 3), 64 * 3 * 3)
    b_c1 = rnd(ks[3], (1, 32), 4 * 8 * 8)
    b_c2 = rnd(ks[4], (1, 64), 32 * 4 * 4)
    b_c3 = rnd(ks[5], (1, 64), 64 * 3 * 3)
    w_a1 = rnd(ks[6], (3136, 512), 3136)               # Linear weights as (in, out)
    b_a1 = rnd(ks[7], (1, 512), 3136)
    w_v1 = rnd(ks[8], (3136, 512), 3136)
    b_v1 = rnd(ks[9], (1, 512), 3136)
    w_a2 = rnd(ks[10], (512, n_actions), 512)
    b_a2 = rnd(ks[11], (1, n_actions), 512)
    w_v2 = rnd(ks[12], (512, 1), 512)
    b_v2 = rnd(ks[13], (1, 1), 512)

    # Re-permute the first FC weights' rows from PyTorch's (c,h,w) flatten
    # order to the NHWC (h,w,c) flatten order used by the kernels, then fuse
    # the advantage/value trunks into one lane-dense bf16 weight.
    w_a1 = _fc_rows_chw_to_hwc(w_a1, 64, 7, 7)
    w_v1 = _fc_rows_chw_to_hwc(w_v1, 64, 7, 7)
    w_av1 = jnp.concatenate([w_a1, w_v1], axis=1).astype(jnp.bfloat16)  # (3136, 1024)
    b_av1 = jnp.concatenate([b_a1, b_v1], axis=1)                       # (1, 1024) f32

    return {
        "w_c1": _conv_w_to_gemm(w_c1), "b_c1": b_c1,
        "w_c2": _conv_w_to_gemm(w_c2), "b_c2": b_c2,
        "w_c3": _conv_w_to_gemm(w_c3), "b_c3": b_c3,
        "w_av1": w_av1, "b_av1": b_av1,
        "w_a2": w_a2, "b_a2": b_a2,
        "w_v2": w_v2, "b_v2": b_v2,
    }


# ----------------------------------- main -----------------------------------

if __name__ == "__main__":
    key = jax.random.PRNGKey(0)
    k_x, k_p = jax.random.split(key)

    n_actions = 3
    batch = 2
    # 84x84 is required for the flatten to produce 3136 = 64*7*7 features.
    x = jax.random.normal(k_x, (batch, 4, 84, 84), jnp.float32)
    params = init_params(k_p, n_actions)

    fwd = jax.jit(duelnet_forward)
    q = jax.block_until_ready(fwd(x, params))

    assert q.shape == (batch, n_actions)
    assert q.dtype == jnp.float32
    print("KERNEL_OK")
</pallas_src>

<mosaic_0001>
module attributes {stable_mosaic.version = 11 : i64} {
  func.func @_matmul_bias_kernel(%arg0: i32, %arg1: memref<400x256xf32, #tpu.memory_space<vmem>>, %arg2: memref<256x32xf32, #tpu.memory_space<vmem>>, %arg3: memref<1x32xf32, #tpu.memory_space<vmem>>, %arg4: memref<400x32xf32, #tpu.memory_space<vmem>>) attributes {dimension_semantics = [#tpu.dimension_semantics<parallel>], iteration_bounds = array<i64: 2>, scalar_prefetch = 0 : i64, scratch_operands = 0 : i64, tpu.core_type = #tpu.core_type<tc>, window_params = [{transform_indices = @transform_0, window_bounds = array<i64: 400, 256>}, {pipeline_mode = #tpu.pipeline_mode<synchronous>, transform_indices = @transform_1, window_bounds = array<i64: 256, 32>}, {pipeline_mode = #tpu.pipeline_mode<synchronous>, transform_indices = @transform_2, window_bounds = array<i64: 1, 32>}, {transform_indices = @transform_3, window_bounds = array<i64: 400, 32>}]} {
    %c0 = arith.constant 0 : index
    %c0_0 = arith.constant 0 : index
    %0 = vector.load %arg1[%c0, %c0_0] : memref<400x256xf32, #tpu.memory_space<vmem>>, vector<400x256xf32>
    %c0_1 = arith.constant 0 : index
    %c0_2 = arith.constant 0 : index
    %1 = vector.load %arg2[%c0_1, %c0_2] : memref<256x32xf32, #tpu.memory_space<vmem>>, vector<256x32xf32>
    %cst = arith.constant dense<0.000000e+00> : vector<400x32xf32>
    %2 = tpu.matmul %0, %1, %cst {dimension_numbers = #tpu.dot_dimension_numbers<[1], [0], [0], [1], [0, 0, 1, 1], [], []>} : vector<400x256xf32>, vector<256x32xf32>, vector<400x32xf32> -> vector<400x32xf32>
    %c0_3 = arith.constant 0 : index
    %c0_4 = arith.constant 0 : index
    %3 = vector.load %arg3[%c0_3, %c0_4] : memref<1x32xf32, #tpu.memory_space<vmem>>, vector<1x32xf32>
    %4 = vector.broadcast %3 : vector<1x32xf32> to vector<400x32xf32>
    %5 = arith.addf %2, %4 : vector<400x32xf32>
    %cst_5 = arith.constant 0.000000e+00 : f32
    %6 = vector.broadcast %cst_5 : f32 to vector<400x32xf32>
    %7 = arith.maximumf %5, %6 : vector<400x32xf32>
    %c0_6 = arith.constant 0 : index
    %c0_7 = arith.constant 0 : index
    %8 = vector.load %arg4[%c0_6, %c0_7] : memref<400x32xf32, #tpu.memory_space<vmem>>, vector<400x32xf32>
    tpu.vector_store %arg4[%c0_6, %c0_7], %7 {strides = array<i32>} : memref<400x32xf32, #tpu.memory_space<vmem>>, vector<400x32xf32>,
    return
  }
  func.func @transform_0(%arg0: i32) -> (i32, i32) {
    %c0_i32 = arith.constant 0 : i32
    %c0_i32_0 = arith.constant 0 : i32
    return %arg0, %c0_i32 : i32, i32
  }
  func.func @transform_1(%arg0: i32) -> (i32, i32) {
    %c0_i32 = arith.constant 0 : i32
    %c0_i32_0 = arith.constant 0 : i32
    %c0_i32_1 = arith.constant 0 : i32
    return %c0_i32, %c0_i32_0 : i32, i32
  }
  func.func @transform_2(%arg0: i32) -> (i32, i32) {
    %c0_i32 = arith.constant 0 : i32
    %c0_i32_0 = arith.constant 0 : i32
    %c0_i32_1 = arith.constant 0 : i32
    return %c0_i32, %c0_i32_0 : i32, i32
  }
  func.func @transform_3(%arg0: i32) -> (i32, i32) {
    %c0_i32 = arith.constant 0 : i32
    %c0_i32_0 = arith.constant 0 : i32
    return %arg0, %c0_i32 : i32, i32
  }
}

module attributes {stable_mosaic.version = 11 : i64} {
  func.func @_matmul_bias_kernel(%arg0: memref<162x512xf32, #tpu.memory_space<vmem>>, %arg1: memref<512x64xf32, #tpu.memory_space<vmem>>, %arg2: memref<1x64xf32, #tpu.memory_space<vmem>>, %arg3: memref<162x64xf32, #tpu.memory_space<vmem>>) attributes {dimension_semantics = [], scalar_prefetch = 0 : i64, scratch_operands = 0 : i64, tpu.core_type = #tpu.core_type<tc>} {
    %c0 = arith.constant 0 : index
    %c0_0 = arith.constant 0 : index
    %0 = vector.load %arg0[%c0, %c0_0] : memref<162x512xf32, #tpu.memory_space<vmem>>, vector<162x512xf32>
    %c0_1 = arith.constant 0 : index
    %c0_2 = arith.constant 0 : index
    %1 = vector.load %arg1[%c0_1, %c0_2] : memref<512x64xf32, #tpu.memory_space<vmem>>, vector<512x64xf32>
    %cst = arith.constant dense<0.000000e+00> : vector<162x64xf32>
    %2 = tpu.matmul %0, %1, %cst {dimension_numbers = #tpu.dot_dimension_numbers<[1], [0], [0], [1], [0, 0, 1, 1], [], []>} : vector<162x512xf32>, vector<512x64xf32>, vector<162x64xf32> -> vector<162x64xf32>
    %c0_3 = arith.constant 0 : index
    %c0_4 = arith.constant 0 : index
    %3 = vector.load %arg2[%c0_3, %c0_4] : memref<1x64xf32, #tpu.memory_space<vmem>>, vector<1x64xf32>
    %4 = vector.broadcast %3 : vector<1x64xf32> to vector<162x64xf32>
    %5 = arith.addf %2, %4 : vector<162x64xf32>
    %cst_5 = arith.constant 0.000000e+00 : f32
    %6 = vector.broadcast %cst_5 : f32 to vector<162x64xf32>
    %7 = arith.maximumf %5, %6 : vector<162x64xf32>
    %c0_6 = arith.constant 0 : index
    %c0_7 = arith.constant 0 : index
    %8 = vector.load %arg3[%c0_6, %c0_7] : memref<162x64xf32, #tpu.memory_space<vmem>>, vector<162x64xf32>
    tpu.vector_store %arg3[%c0_6, %c0_7], %7 {strides = array<i32>} : memref<162x64xf32, #tpu.memory_space<vmem>>, vector<162x64xf32>,
    return
  }
}

module attributes {stable_mosaic.version = 11 : i64} {
  func.func @_matmul_bias_kernel(%arg0: memref<98x576xf32, #tpu.memory_space<vmem>>, %arg1: memref<576x64xf32, #tpu.memory_space<vmem>>, %arg2: memref<1x64xf32, #tpu.memory_space<vmem>>, %arg3: memref<98x64xf32, #tpu.memory_space<vmem>>) attributes {dimension_semantics = [], scalar_prefetch = 0 : i64, scratch_operands = 0 : i64, tpu.core_type = #tpu.core_type<tc>} {
    %c0 = arith.constant 0 : index
    %c0_0 = arith.constant 0 : index
    %0 = vector.load %arg0[%c0, %c0_0] : memref<98x576xf32, #tpu.memory_space<vmem>>, vector<98x576xf32>
    %c0_1 = arith.constant 0 : index
    %c0_2 = arith.constant 0 : index
    %1 = vector.load %arg1[%c0_1, %c0_2] : memref<576x64xf32, #tpu.memory_space<vmem>>, vector<576x64xf32>
    %cst = arith.constant dense<0.000000e+00> : vector<98x64xf32>
    %2 = tpu.matmul %0, %1, %cst {dimension_numbers = #tpu.dot_dimension_numbers<[1], [0], [0], [1], [0, 0, 1, 1], [], []>} : vector<98x576xf32>, vector<576x64xf32>, vector<98x64xf32> -> vector<98x64xf32>
    %c0_3 = arith.constant 0 : index
    %c0_4 = arith.constant 0 : index
    %3 = vector.load %arg2[%c0_3, %c0_4] : memref<1x64xf32, #tpu.memory_space<vmem>>, vector<1x64xf32>
    %4 = vector.broadcast %3 : vector<1x64xf32> to vector<98x64xf32>
    %5 = arith.addf %2, %4 : vector<98x64xf32>
    %cst_5 = arith.constant 0.000000e+00 : f32
    %6 = vector.broadcast %cst_5 : f32 to vector<98x64xf32>
    %7 = arith.maximumf %5, %6 : vector<98x64xf32>
    %c0_6 = arith.constant 0 : index
    %c0_7 = arith.constant 0 : index
    %8 = vector.load %arg3[%c0_6, %c0_7] : memref<98x64xf32, #tpu.memory_space<vmem>>, vector<98x64xf32>
    tpu.vector_store %arg3[%c0_6, %c0_7], %7 {strides = array<i32>} : memref<98x64xf32, #tpu.memory_space<vmem>>, vector<98x64xf32>,
    return
  }
}

module attributes {stable_mosaic.version = 11 : i64} {
  func.func @_dense_tail_kernel(%arg0: memref<2x3136xf32, #tpu.memory_space<vmem>>, %arg1: memref<3136x1024xbf16, #tpu.memory_space<vmem>>, %arg2: memref<1x1024xf32, #tpu.memory_space<vmem>>, %arg3: memref<512x3xf32, #tpu.memory_space<vmem>>, %arg4: memref<1x3xf32, #tpu.memory_space<vmem>>, %arg5: memref<512x1xf32, #tpu.memory_space<vmem>>, %arg6: memref<1x1xf32, #tpu.memory_space<vmem>>, %arg7: memref<2x3xf32, #tpu.memory_space<vmem>>) attributes {dimension_semantics = [], scalar_prefetch = 0 : i64, scratch_operands = 0 : i64, tpu.core_type = #tpu.core_type<tc>} {
    %c0 = arith.constant 0 : index
    %c0_0 = arith.constant 0 : index
    %0 = vector.load %arg0[%c0, %c0_0] : memref<2x3136xf32, #tpu.memory_space<vmem>>, vector<2x3136xf32>
    %1 = arith.truncf %0 : vector<2x3136xf32> to vector<2x3136xbf16>
    %c0_1 = arith.constant 0 : index
    %c0_2 = arith.constant 0 : index
    %2 = vector.load %arg1[%c0_1, %c0_2] : memref<3136x1024xbf16, #tpu.memory_space<vmem>>, vector<3136x1024xbf16>
    %cst = arith.constant dense<0.000000e+00> : vector<2x1024xf32>
    %3 = tpu.matmul %1, %2, %cst {dimension_numbers = #tpu.dot_dimension_numbers<[1], [0], [0], [1], [0, 0, 1, 1], [], []>} : vector<2x3136xbf16>, vector<3136x1024xbf16>, vector<2x1024xf32> -> vector<2x1024xf32>
    %c0_3 = arith.constant 0 : index
    %c0_4 = arith.constant 0 : index
    %4 = vector.load %arg2[%c0_3, %c0_4] : memref<1x1024xf32, #tpu.memory_space<vmem>>, vector<1x1024xf32>
    %5 = vector.broadcast %4 : vector<1x1024xf32> to vector<2x1024xf32>
    %6 = arith.addf %3, %5 : vector<2x1024xf32>
    %cst_5 = arith.constant 0.000000e+00 : f32
    %7 = vector.broadcast %cst_5 : f32 to vector<2x1024xf32>
    %8 = arith.maximumf %6, %7 : vector<2x1024xf32>
    %9 = vector.extract_strided_slice %8 {offsets = [0, 0], sizes = [2, 512], strides = [1, 1]} : vector<2x1024xf32> to vector<2x512xf32>
    %10 = vector.extract_strided_slice %8 {offsets = [0, 512], sizes = [2, 512], strides = [1, 1]} : vector<2x1024xf32> to vector<2x512xf32>
    %c0_6 = arith.constant 0 : index
    %c0_7 = arith.constant 0 : index
    %11 = vector.load %arg3[%c0_6, %c0_7] : memref<512x3xf32, #tpu.memory_space<vmem>>, vector<512x3xf32>
    %cst_8 = arith.constant dense<0.000000e+00> : vector<2x3xf32>
    %12 = tpu.matmul %9, %11, %cst_8 {dimension_numbers = #tpu.dot_dimension_numbers<[1], [0], [0], [1], [0, 0, 1, 1], [], []>} : vector<2x512xf32>, vector<512x3xf32>, vector<2x3xf32> -> vector<2x3xf32>
    %c0_9 = arith.constant 0 : index
    %c0_10 = arith.constant 0 : index
    %13 = vector.load %arg4[%c0_9, %c0_10] : memref<1x3xf32, #tpu.memory_space<vmem>>, vector<1x3xf32>
    %14 = vector.broadcast %13 : vector<1x3xf32> to vector<2x3xf32>
    %15 = arith.addf %12, %14 : vector<2x3xf32>
    %c0_11 = arith.constant 0 : index
    %c0_12 = arith.constant 0 : index
    %16 = vector.load %arg5[%c0_11, %c0_12] : memref<512x1xf32, #tpu.memory_space<vmem>>, vector<512x1xf32>
    %cst_13 = arith.constant dense<0.000000e+00> : vector<2x1xf32>
    %17 = tpu.matmul %10, %16, %cst_13 {dimension_numbers = #tpu.dot_dimension_numbers<[1], [0], [0], [1], [0, 0, 1, 1], [], []>} : vector<2x512xf32>, vector<512x1xf32>, vector<2x1xf32> -> vector<2x1xf32>
    %c0_14 = arith.constant 0 : index
    %c0_15 = arith.constant 0 : index
    %18 = vector.load %arg6[%c0_14, %c0_15] : memref<1x1xf32, #tpu.memory_space<vmem>>, vector<1x1xf32>
    %19 = vector.broadcast %18 : vector<1x1xf32> to vector<2x1xf32>
    %20 = arith.addf %17, %19 : vector<2x1xf32>
    %cst_16 = arith.constant dense<0.000000e+00> : vector<2xf32>
    %21 = vector.multi_reduction <add>, %15, %cst_16 [1] : vector<2x3xf32> to vector<2xf32>
    %22 = vector.shape_cast %21 : vector<2xf32> to vector<2x1xf32>
    %cst_17 = arith.constant 3.000000e+00 : f32
    %23 = vector.broadcast %cst_17 : f32 to vector<2x1xf32>
    %24 = arith.divf %22, %23 : vector<2x1xf32>
    %25 = vector.broadcast %20 : vector<2x1xf32> to vector<2x3xf32>
    %26 = arith.addf %25, %15 : vector<2x3xf32>
    %27 = vector.broadcast %24 : vector<2x1xf32> to vector<2x3xf32>
    %28 = arith.subf %26, %27 : vector<2x3xf32>
    %c0_18 = arith.constant 0 : index
    %c0_19 = arith.constant 0 : index
    %29 = vector.load %arg7[%c0_18, %c0_19] : memref<2x3xf32, #tpu.memory_space<vmem>>, vector<2x3xf32>
    tpu.vector_store %arg7[%c0_18, %c0_19], %28 {strides = array<i32>} : memref<2x3xf32, #tpu.memory_space<vmem>>, vector<2x3xf32>,
    return
  }
}

</mosaic_0001>

<llo_original>
// kernel: duelnet_forward.4
$region0: #{duelnet_forward.4}
  #allocation0 [shape = 'u32[]', space=smem, size = 0x4, offset = 0x4, fixed_abs, tag = 'smem constant byte address 0x4 - core index']
  #allocation1 [shape = 'u32[144,128]{1,0:T(1,128)}', space=vmem, size = 0x12000, scoped, tag = 'internal scratch']
  %s0 = inlined_call_operand.vmem [shape: f32[800,256], index: 0, kind: input, shape index: {}]
  %s1 = inlined_call_operand.vmem [shape: f32[256,32], index: 1, kind: input, shape index: {}]
  %s2 = inlined_call_operand.vmem [shape: f32[1,32], index: 2, kind: input, shape index: {}]
  %s3 = inlined_call_operand.vmem [shape: f32[800,32], index: 3, kind: output, shape index: {}]
  %s4 = sld [smem:[#allocation0]]
  $region45: #{duelnet_forward.4} parent=0
    _
  %s6 = ssub.s32 1, %s4
  %s7 = scalar_select 0, %s6, %s4
  loop: start=0, step=1, limit=4
  $region2: #{duelnet_forward.4} parent=0 // loop_pre_header
    _
  $region3: #{duelnet_forward.4} parent=0 // loop_header
    %s9 = sphi 0, %s13
    %p10 = scmp.ge.s32.totalorder %s9, 4
    %s19 = sphi 0, %s21
    %s22 = sphi 0, %s19
    %s23 = sphi 0, %s22
    %s39 = sphi 0, %s23
    %s43 = sphi 0, %s43
    %s45 = sphi 0, %s43
    %s46 = sphi 0, %s45
    %s60 = sphi 0, %s46
    %s64 = sphi 0, %s64
    %s66 = sphi 0, %s64
    %s67 = sphi 0, %s66
    %s81 = sphi 0, %s67
    %s87 = sphi 0, %s89
    %s90 = sphi 0, %s87
    %s91 = sphi 0, %s90
    %s107 = sphi 0, %s91
  $region4: #{duelnet_forward.4} parent=0 // loop_header_branch
    %12 = sbr.rel (%p10) target = $region8
  $region5: #{duelnet_forward.4} parent=0 // loop_body
    %s14 = ssub.s32 %s9, 1
    %s15 = ssub.s32 %s9, 2
    %s16 = sadd.s32 %s9, 1
    %s17 = ssub.s32 %s9, %s16
    %p18 = scmp.eq.s32.totalorder %s17, 0
    %s20 = sadd.s32 %s19, 1
    %s21 = scalar_select %p18, %s19, %s20
    %p24 = pneg %p18
    %p25 = scmp.eq.s32.totalorder %s9, 1
    %p26 = por %p24, %p25
    %p27 = scmp.ne.s32.totalorder %s19, %s22
    %p28 = scmp.eq.s32.totalorder %s9, 0
    %p29 = por %p27, %p28
    %p30 = scmp.ne.s32.totalorder %s19, %s22
    %p31 = scmp.eq.s32.totalorder %s14, 1
    %p32 = por %p30, %p31
    %p33 = scmp.ne.s32.totalorder %s22, %s23
    %p34 = scmp.eq.s32.totalorder %s14, 0
    %p35 = por %p33, %p34
    %p36 = scmp.ne.s32.totalorder %s22, %s23
    %p37 = scmp.eq.s32.totalorder %s15, 1
    %p38 = por %p36, %p37
    %p40 = scmp.ne.s32.totalorder %s23, %s39
    %p41 = scmp.eq.s32.totalorder %s15, 0
    %p42 = por %p40, %p41
    %s44 = sadd.s32 %s43, 1
    %p47 = scmp.eq.s32.totalorder %s9, 1
    %p48 = scmp.ne.s32.totalorder %s43, %s45
    %p49 = scmp.eq.s32.totalorder %s9, 0
    %p50 = por %p48, %p49
    %p51 = scmp.ne.s32.totalorder %s43, %s45
    %p52 = scmp.eq.s32.totalorder %s14, 1
    %p53 = por %p51, %p52
    %p54 = scmp.ne.s32.totalorder %s45, %s46
    %p55 = scmp.eq.s32.totalorder %s14, 0
    %p56 = por %p54, %p55
    %p57 = scmp.ne.s32.totalorder %s45, %s46
    %p58 = scmp.eq.s32.totalorder %s15, 1
    %p59 = por %p57, %p58
    %p61 = scmp.ne.s32.totalorder %s46, %s60
    %p62 = scmp.eq.s32.totalorder %s15, 0
    %p63 = por %p61, %p62
    %s65 = sadd.s32 %s64, 1
    %p68 = scmp.eq.s32.totalorder %s9, 1
    %p69 = scmp.ne.s32.totalorder %s64, %s66
    %p70 = scmp.eq.s32.totalorder %s9, 0
    %p71 = por %p69, %p70
    %p72 = scmp.ne.s32.totalorder %s64, %s66
    %p73 = scmp.eq.s32.totalorder %s14, 1
    %p74 = por %p72, %p73
    %p75 = scmp.ne.s32.totalorder %s66, %s67
    %p76 = scmp.eq.s32.totalorder %s14, 0
    %p77 = por %p75, %p76
    %p78 = scmp.ne.s32.totalorder %s66, %s67
    %p79 = scmp.eq.s32.totalorder %s15, 1
    %p80 = por %p78, %p79
    %p82 = scmp.ne.s32.totalorder %s67, %s81
    %p83 = scmp.eq.s32.totalorder %s15, 0
    %p84 = por %p82, %p83
    %s85 = ssub.s32 %s9, %s16
    %p86 = scmp.eq.s32.totalorder %s85, 0
    %s88 = sadd.s32 %s87, 1
    %s89 = scalar_select %p86, %s87, %s88
    %p92 = pneg %p86
    %p93 = scmp.eq.s32.totalorder %s9, 1
    %p94 = por %p92, %p93
    %p95 = scmp.ne.s32.totalorder %s87, %s90
    %p96 = scmp.eq.s32.totalorder %s9, 0
    %p97 = por %p95, %p96
    %p98 = scmp.ne.s32.totalorder %s87, %s90
    %p99 = scmp.eq.s32.totalorder %s14, 1
    %p100 = por %p98, %p99
    %p101 = scmp.ne.s32.totalorder %s90, %s91
    %p102 = scmp.eq.s32.totalorder %s14, 0
    %p103 = por %p101, %p102
    %p104 = scmp.ne.s32.totalorder %s90, %s91
    %p105 = scmp.eq.s32.totalorder %s15, 1
    %p106 = por %p104, %p105
    %p108 = scmp.ne.s32.totalorder %s91, %s107
    %p109 = scmp.eq.s32.totalorder %s15, 0
    %p110 = por %p108, %p109
    %p111 = scmp.le.s32.totalorder 1, %s9
    %p112 = scmp.lt.s32.totalorder %s9, 3
    %p113 = pnand %p111, %p112
    %p114 = pneg %p113
    // Predicated region
    $region9: #{duelnet_forward.4} parent=5 // pred_check
      _
    $region10: #{duelnet_forward.4} parent=5 // pred_check_branch
      %116 = sbr.rel (%p113) target = $region12
    $region11: #{duelnet_forward.4} parent=5 // pred_region
      %s117 = ssub.s32 %s9, 1
      // Predicated region
      $region13: #{duelnet_forward.4} parent=11 // pred_check
        %p118 = pneg %p56
      $region14: #{duelnet_forward.4} parent=11 // pred_check_branch
        %120 = sbr.rel (%p118) target = $region16
      $region15: #{duelnet_forward.4} parent=11 // pred_region
        _
      $region16: #{duelnet_forward.4} parent=11 // pred_fallthru
        _
      // Predicated region
      $region17: #{duelnet_forward.4} parent=11 // pred_check
        %p121 = pneg %p77
      $region18: #{duelnet_forward.4} parent=11 // pred_check_branch
        %123 = sbr.rel (%p121) target = $region20
      $region19: #{duelnet_forward.4} parent=11 // pred_region
        _
      $region20: #{duelnet_forward.4} parent=11 // pred_fallthru
        _
    $region12: #{duelnet_forward.4} parent=5 // pred_fallthru
      _
    %p124 = scmp.lt.s32.totalorder %s9, 2
    // Predicated region
    $region21: #{duelnet_forward.4} parent=5 // pred_check
      %p125 = pneg %p124
    $region22: #{duelnet_forward.4} parent=5 // pred_check_branch
      %127 = sbr.rel (%p125) target = $region24
    $region23: #{duelnet_forward.4} parent=5 // pred_region
      // Predicated region
      $region25: #{duelnet_forward.4} parent=23 // pred_check
        %p128 = pneg %p29
      $region26: #{duelnet_forward.4} parent=23 // pred_check_branch
        %130 = sbr.rel (%p128) target = $region28
      $region27: #{duelnet_forward.4} parent=23 // pred_region
        %s131 = smul.u32 50, %s9
        %p132 = scmp.lt.s32.totalorder %s131, 99
        %s133 = scalar_select %p132, %s131, 99
        %s134 = smul.addr %s133, 2
        %s135 = smul.addr %s134, 8
        %s136 = scalar_lea.vmem %s0, %s135
        %s137 = smul.u32 50, %s9
      $region28: #{duelnet_forward.4} parent=23 // pred_fallthru
        _
    $region24: #{duelnet_forward.4} parent=5 // pred_fallthru
      _
    %p138 = scmp.le.s32.totalorder 1, %s9
    %p139 = scmp.lt.s32.totalorder %s9, 3
    %p140 = pnand %p138, %p139
    %p141 = pneg %p140
    // Predicated region
    $region29: #{duelnet_forward.4} parent=5 // pred_check
      _
    $region30: #{duelnet_forward.4} parent=5 // pred_check_branch
      %143 = sbr.rel (%p140) target = $region32
    $region31: #{duelnet_forward.4} parent=5 // pred_region
      %s144 = ssub.s32 %s9, 1
      %s145 = smul.u32 50, %s14
      %p146 = scmp.lt.s32.totalorder %s145, 99
      %s147 = scalar_select %p146, %s145, 99
      %s148 = smul.addr %s147, 2
      %s149 = smul.addr %s148, 8
      %s150 = scalar_lea.vmem %s0, %s149
      %p151 = pneg %p35
      %p152 = pneg %p32
      %p153 = pneg %p56
      %p154 = pneg %p53
      %p155 = pneg %p77
      %p156 = pneg %p74
      %p157 = pneg %p103
      %p158 = pneg %p100
      %s159 = smul.u32 50, %s14
      %p160 = scmp.lt.s32.totalorder %s159, 99
      %s161 = scalar_select %p160, %s159, 99
      %s162 = smul.addr %s161, 8
      %s163 = scalar_lea.vmem %s3, %s162
      %s164 = smul.u32 50, %s14
      %p165 = scmp.lt.s32.totalorder %s164, 99
      %s166 = scalar_select %p165, %s164, 99
      %s167 = smul.addr %s166, 2
      %s168 = smul.addr %s167, 8
      %s169 = scalar_lea.vmem %s0, %s168
      %s170 = smul.u32 50, %s14
      %s171 = smul.u32 50, %s14
      %p172 = scmp.lt.s32.totalorder %s171, 99
      %s173 = scalar_select %p172, %s171, 99
      %s174 = smul.addr %s173, 8
      %s175 = scalar_lea.vmem %s3, %s174
      %s176 = smul.u32 50, %s14
      %v177 = vld [vmem:[%s169] sm:$0xff]
      %v178 = vld [vmem:[%s169 + $0x8] sm:$0xff]
      %v179 = vld [vmem:[%s169 + $0x10] sm:$0xff]
      %v180 = vld [vmem:[%s169 + $0x18] sm:$0xff]
      %v181 = vld [vmem:[%s169 + $0x20] sm:$0xff]
      %v182 = vld [vmem:[%s169 + $0x28] sm:$0xff]
      %v183 = vld [vmem:[%s169 + $0x30] sm:$0xff]
      %v184 = vld [vmem:[%s169 + $0x38] sm:$0xff]
      %v185 = vld [vmem:[%s169 + $0x40] sm:$0xff]
      %v186 = vld [vmem:[%s169 + $0x48] sm:$0xff]
      %v187 = vld [vmem:[%s169 + $0x50] sm:$0xff]
      %v188 = vld [vmem:[%s169 + $0x58] sm:$0xff]
      %v189 = vld [vmem:[%s169 + $0x60] sm:$0xff]
      %v190 = vld [vmem:[%s169 + $0x68] sm:$0xff]
      %v191 = vld [vmem:[%s169 + $0x70] sm:$0xff]
      %v192 = vld [vmem:[%s169 + $0x78] sm:$0xff]
      %v193 = vld [vmem:[%s169 + $0x80] sm:$0xff]
      %v194 = vld [vmem:[%s169 + $0x88] sm:$0xff]
      %v195 = vld [vmem:[%s169 + $0x90] sm:$0xff]
      %v196 = vld [vmem:[%s169 + $0x98] sm:$0xff]
      %v197 = vld [vmem:[%s169 + $0xa0] sm:$0xff]
      %v198 = vld [vmem:[%s169 + $0xa8] sm:$0xff]
      %v199 = vld [vmem:[%s169 + $0xb0] sm:$0xff]
      %v200 = vld [vmem:[%s169 + $0xb8] sm:$0xff]
      %v201 = vld [vmem:[%s169 + $0xc0] sm:$0xff]
      %v202 = vld [vmem:[%s169 + $0xc8] sm:$0xff]
      %v203 = vld [vmem:[%s169 + $0xd0] sm:$0xff]
      %v204 = vld [vmem:[%s169 + $0xd8] sm:$0xff]
      %v205 = vld [vmem:[%s169 + $0xe0] sm:$0xff]
      %v206 = vld [vmem:[%s169 + $0xe8] sm:$0xff]
      %v207 = vld [vmem:[%s169 + $0xf0] sm:$0xff]
      %v208 = vld [vmem:[%s169 + $0xf8] sm:$0xff]
      %v209 = vld [vmem:[%s169 + $0x100] sm:$0xff]
      %v210 = vld [vmem:[%s169 + $0x108] sm:$0xff]
      %v211 = vld [vmem:[%s169 + $0x110] sm:$0xff]
      %v212 = vld [vmem:[%s169 + $0x118] sm:$0xff]
      %v213 = vld [vmem:[%s169 + $0x120] sm:$0xff]
      %v214 = vld [vmem:[%s169 + $0x128] sm:$0xff]
      %v215 = vld [vmem:[%s169 + $0x130] sm:$0xff]
      %v216 = vld [vmem:[%s169 + $0x138] sm:$0xff]
      %v217 = vld [vmem:[%s169 + $0x140] sm:$0xff]
      %v218 = vld [vmem:[%s169 + $0x148] sm:$0xff]
      %v219 = vld [vmem:[%s169 + $0x150] sm:$0xff]
      %v220 = vld [vmem:[%s169 + $0x158] sm:$0xff]
      %v221 = vld [vmem:[%s169 + $0x160] sm:$0xff]
      %v222 = vld [vmem:[%s169 + $0x168] sm:$0xff]
      %v223 = vld [vmem:[%s169 + $0x170] sm:$0xff]
      %v224 = vld [vmem:[%s169 + $0x178] sm:$0xff]
      %v225 = vld [vmem:[%s169 + $0x180] sm:$0xff]
      %v226 = vld [vmem:[%s169 + $0x188] sm:$0xff]
      %v227 = vld [vmem:[%s169 + $0x190] sm:$0xff]
      %v228 = vld [vmem:[%s169 + $0x198] sm:$0xff]
      %v229 = vld [vmem:[%s169 + $0x1a0] sm:$0xff]
      %v230 = vld [vmem:[%s169 + $0x1a8] sm:$0xff]
      %v231 = vld [vmem:[%s169 + $0x1b0] sm:$0xff]
      %v232 = vld [vmem:[%s169 + $0x1b8] sm:$0xff]
      %v233 = vld [vmem:[%s169 + $0x1c0] sm:$0xff]
      %v234 = vld [vmem:[%s169 + $0x1c8] sm:$0xff]
      %v235 = vld [vmem:[%s169 + $0x1d0] sm:$0xff]
      %v236 = vld [vmem:[%s169 + $0x1d8] sm:$0xff]
      %v237 = vld [vmem:[%s169 + $0x1e0] sm:$0xff]
      %v238 = vld [vmem:[%s169 + $0x1e8] sm:$0xff]
      %v239 = vld [vmem:[%s169 + $0x1f0] sm:$0xff]
      %v240 = vld [vmem:[%s169 + $0x1f8] sm:$0xff]
      %v241 = vld [vmem:[%s169 + $0x200] sm:$0xff]
      %v242 = vld [vmem:[%s169 + $0x208] sm:$0xff]
      %v243 = vld [vmem:[%s169 + $0x210] sm:$0xff]
      %v244 = vld [vmem:[%s169 + $0x218] sm:$0xff]
      %v245 = vld [vmem:[%s169 + $0x220] sm:$0xff]
      %v246 = vld [vmem:[%s169 + $0x228] sm:$0xff]
      %v247 = vld [vmem:[%s169 + $0x230] sm:$0xff]
      %v248 = vld [vmem:[%s169 + $0x238] sm:$0xff]
      %v249 = vld [vmem:[%s169 + $0x240] sm:$0xff]
      %v250 = vld [vmem:[%s169 + $0x248] sm:$0xff]
      %v251 = vld [vmem:[%s169 + $0x250] sm:$0xff]
      %v252 = vld [vmem:[%s169 + $0x258] sm:$0xff]
      %v253 = vld [vmem:[%s169 + $0x260] sm:$0xff]
      %v254 = vld [vmem:[%s169 + $0x268] sm:$0xff]
      %v255 = vld [vmem:[%s169 + $0x270] sm:$0xff]
      %v256 = vld [vmem:[%s169 + $0x278] sm:$0xff]
      %v257 = vld [vmem:[%s169 + $0x280] sm:$0xff]
      %v258 = vld [vmem:[%s169 + $0x288] sm:$0xff]
      %v259 = vld [vmem:[%s169 + $0x290] sm:$0xff]
      %v260 = vld [vmem:[%s169 + $0x298] sm:$0xff]
      %v261 = vld [vmem:[%s169 + $0x2a0] sm:$0xff]
      %v262 = vld [vmem:[%s169 + $0x2a8] sm:$0xff]
      %v263 = vld [vmem:[%s169 + $0x2b0] sm:$0xff]
      %v264 = vld [vmem:[%s169 + $0x2b8] sm:$0xff]
      %v265 = vld [vmem:[%s169 + $0x2c0] sm:$0xff]
      %v266 = vld [vmem:[%s169 + $0x2c8] sm:$0xff]
      %v267 = vld [vmem:[%s169 + $0x2d0] sm:$0xff]
      %v268 = vld [vmem:[%s169 + $0x2d8] sm:$0xff]
      %v269 = vld [vmem:[%s169 + $0x2e0] sm:$0xff]
      %v270 = vld [vmem:[%s169 + $0x2e8] sm:$0xff]
      %v271 = vld [vmem:[%s169 + $0x2f0] sm:$0xff]
      %v272 = vld [vmem:[%s169 + $0x2f8] sm:$0xff]
      %v273 = vld [vmem:[%s169 + $0x300] sm:$0xff]
      %v274 = vld [vmem:[%s169 + $0x308] sm:$0xff]
      %v275 = vld [vmem:[%s169 + $0x310] sm:$0xff]
      %v276 = vld [vmem:[%s169 + $0x318] sm:$0xff]
      %v277 = vld [vmem:[%s1] sm:$0xff]
      %v278 = vld [vmem:[%s1 + $0x8] sm:$0xff]
      %v279 = vld [vmem:[%s1 + $0x10] sm:$0xff]
      %v280 = vld [vmem:[%s1 + $0x18] sm:$0xff]
      %v281 = vld [vmem:[%s1 + $0x20] sm:$0xff]
      %v282 = vld [vmem:[%s1 + $0x28] sm:$0xff]
      %v283 = vld [vmem:[%s1 + $0x30] sm:$0xff]
      %v284 = vld [vmem:[%s1 + $0x38] sm:$0xff]
      %v285 = vld [vmem:[%s1 + $0x40] sm:$0xff]
      %v286 = vld [vmem:[%s1 + $0x48] sm:$0xff]
      %v287 = vld [vmem:[%s1 + $0x50] sm:$0xff]
      %v288 = vld [vmem:[%s1 + $0x58] sm:$0xff]
      %v289 = vld [vmem:[%s1 + $0x60] sm:$0xff]
      %v290 = vld [vmem:[%s1 + $0x68] sm:$0xff]
      %v291 = vld [vmem:[%s1 + $0x70] sm:$0xff]
      %v292 = vld [vmem:[%s1 + $0x78] sm:$0xff]
      %v293 = vld [vmem:[%s1 + $0x80] sm:$0xff]
      %v294 = vld [vmem:[%s1 + $0x88] sm:$0xff]
      %v295 = vld [vmem:[%s1 + $0x90] sm:$0xff]
      %v296 = vld [vmem:[%s1 + $0x98] sm:$0xff]
      %v297 = vld [vmem:[%s1 + $0xa0] sm:$0xff]
      %v298 = vld [vmem:[%s1 + $0xa8] sm:$0xff]
      %v299 = vld [vmem:[%s1 + $0xb0] sm:$0xff]
      %v300 = vld [vmem:[%s1 + $0xb8] sm:$0xff]
      %v301 = vld [vmem:[%s1 + $0xc0] sm:$0xff]
      %v302 = vld [vmem:[%s1 + $0xc8] sm:$0xff]
      %v303 = vld [vmem:[%s1 + $0xd0] sm:$0xff]
      %v304 = vld [vmem:[%s1 + $0xd8] sm:$0xff]
      %v305 = vld [vmem:[%s1 + $0xe0] sm:$0xff]
      %v306 = vld [vmem:[%s1 + $0xe8] sm:$0xff]
      %v307 = vld [vmem:[%s1 + $0xf0] sm:$0xff]
      %v308 = vld [vmem:[%s1 + $0xf8] sm:$0xff]
      %v309 = vld [vmem:[%s2] sm:$0x1]
      %v311 = vlaneseq
      %v312 = vshrl.u32 %v311, 7
      %v313 = vsub.s32 0, %v312
      %v314 = vrot.slane %v309, %v313
      %316 = vmatprep.subr.mxu0 0.0
      %317 = vmatpush1.msra.mxu0 %v292
      %318 = vmatprep.subr.mxu0 0.0
      %319 = vmatpush1.msra.mxu0 %v291
      %320 = vmatprep.subr.mxu0 0.0
      %321 = vmatpush1.msra.mxu0 %v290
      %322 = vmatprep.subr.mxu0 0.0
      %323 = vmatpush1.msra.mxu0 %v289
      %324 = vmatprep.subr.mxu0 0.0
      %325 = vmatpush1.msra.mxu0 %v288
      %326 = vmatprep.subr.mxu0 0.0
      %327 = vmatpush1.msra.mxu0 %v287
      %328 = vmatprep.subr.mxu0 0.0
      %329 = vmatpush1.msra.mxu0 %v286
      %330 = vmatprep.subr.mxu0 0.0
      %331 = vmatpush1.msra.mxu0 %v285
      %332 = vmatprep.subr.mxu0 0.0
      %333 = vmatpush1.msra.mxu0 %v284
      %334 = vmatprep.subr.mxu0 0.0
      %335 = vmatpush1.msra.mxu0 %v283
      %336 = vmatprep.subr.mxu0 0.0
      %337 = vmatpush1.msra.mxu0 %v282
      %338 = vmatprep.subr.mxu0 0.0
      %339 = vmatpush1.msra.mxu0 %v281
      %340 = vmatprep.subr.mxu0 0.0
      %341 = vmatpush1.msra.mxu0 %v280
      %342 = vmatprep.subr.mxu0 0.0
      %343 = vmatpush1.msra.mxu0 %v279
      %344 = vmatprep.subr.mxu0 0.0
      %345 = vmatpush1.msra.mxu0 %v278
      %346 = vmatprep.subr.mxu0 0.0
      %347 = vmatpush1.msra.mxu0 %v277
      %348 = vmatprep.subr.mxu0 0.0
      %349 = vmatpush2.msra.mxu0 %v308
      %350 = vmatprep.subr.mxu0 0.0
      %351 = vmatpush2.msra.mxu0 %v307
      %352 = vmatprep.subr.mxu0 0.0
      %353 = vmatpush2.msra.mxu0 %v306
      %354 = vmatprep.subr.mxu0 0.0
      %355 = vmatpush2.msra.mxu0 %v305
      %356 = vmatprep.subr.mxu0 0.0
      %357 = vmatpush2.msra.mxu0 %v304
      %358 = vmatprep.subr.mxu0 0.0
      %359 = vmatpush2.msra.mxu0 %v303
      %360 = vmatprep.subr.mxu0 0.0
      %361 = vmatpush2.msra.mxu0 %v302
      %362 = vmatprep.subr.mxu0 0.0
      %363 = vmatpush2.msra.mxu0 %v301
      %364 = vmatprep.subr.mxu0 0.0
      %365 = vmatpush2.msra.mxu0 %v300
      %366 = vmatprep.subr.mxu0 0.0
      %367 = vmatpush2.msra.mxu0 %v299
      %368 = vmatprep.subr.mxu0 0.0
      %369 = vmatpush2.msra.mxu0 %v298
      %370 = vmatprep.subr.mxu0 0.0
      %371 = vmatpush2.msra.mxu0 %v297
      %372 = vmatprep.subr.mxu0 0.0
      %373 = vmatpush2.msra.mxu0 %v296
      %374 = vmatprep.subr.mxu0 0.0
      %375 = vmatpush2.msra.mxu0 %v295
      %376 = vmatprep.subr.mxu0 0.0
      %377 = vmatpush2.msra.mxu0 %v294
      %378 = vmatprep.subr.mxu0 0.0
      %379 = vmatpush2.msra.mxu0 %v293
      %380 = vmatprep.mubr.f32.mxu0 %v178
      %381 = vmatmul.mubr.f32.gmra.mxu0 %v177
      %v382 = vpop.f32.mrf.mxu0
      %v383 = vadd.f32 %v314, %v382
      %v384 = vpop.f32.mrf.mxu0
      %385 = vmatprep.mubr.f32.mxu0 %v180
      %386 = vmatmul.mubr.f32.gmra.mxu0 %v179
      %v387 = vpop.f32.mrf.mxu0
      %v388 = vadd.f32 %v314, %v387
      %v389 = vpop.f32.mrf.mxu0
      %390 = vmatprep.mubr.f32.mxu0 %v182
      %391 = vmatmul.mubr.f32.gmra.mxu0 %v181
      %v392 = vpop.f32.mrf.mxu0
      %v393 = vadd.f32 %v314, %v392
      %v394 = vpop.f32.mrf.mxu0
      %395 = vmatprep.mubr.f32.mxu0 %v184
      %396 = vmatmul.mubr.f32.gmra.mxu0 %v183
      %v397 = vpop.f32.mrf.mxu0
      %v398 = vadd.f32 %v314, %v397
      %v399 = vpop.f32.mrf.mxu0
      %400 = vmatprep.mubr.f32.mxu0 %v186
      %401 = vmatmul.mubr.f32.gmra.mxu0 %v185
      %v402 = vpop.f32.mrf.mxu0
      %v403 = vadd.f32 %v314, %v402
      %v404 = vpop.f32.mrf.mxu0
      %405 = vmatprep.mubr.f32.mxu0 %v188
      %406 = vmatmul.mubr.f32.gmra.mxu0 %v187
      %v407 = vpop.f32.mrf.mxu0
      %v408 = vadd.f32 %v314, %v407
      %v409 = vpop.f32.mrf.mxu0
      %410 = vmatprep.mubr.f32.mxu0 %v190
      %411 = vmatmul.mubr.f32.gmra.mxu0 %v189
      %v412 = vpop.f32.mrf.mxu0
      %v413 = vadd.f32 %v314, %v412
      %v414 = vpop.f32.mrf.mxu0
      %415 = vmatprep.mubr.f32.mxu0 %v192
      %416 = vmatmul.mubr.f32.gmra.mxu0 %v191
      %v417 = vpop.f32.mrf.mxu0
      %v418 = vadd.f32 %v314, %v417
      %v419 = vpop.f32.mrf.mxu0
      %420 = vmatprep.mubr.f32.mxu0 %v194
      %421 = vmatmul.mubr.f32.gmra.mxu0 %v193
      %v422 = vpop.f32.mrf.mxu0
      %v423 = vadd.f32 %v314, %v422
      %v424 = vpop.f32.mrf.mxu0
      %425 = vmatprep.mubr.f32.mxu0 %v196
      %426 = vmatmul.mubr.f32.gmra.mxu0 %v195
      %v427 = vpop.f32.mrf.mxu0
      %v428 = vadd.f32 %v314, %v427
      %v429 = vpop.f32.mrf.mxu0
      %430 = vmatprep.mubr.f32.mxu0 %v198
      %431 = vmatmul.mubr.f32.gmra.mxu0 %v197
      %v432 = vpop.f32.mrf.mxu0
      %v433 = vadd.f32 %v314, %v432
      %v434 = vpop.f32.mrf.mxu0
      %435 = vmatprep.mubr.f32.mxu0 %v200
      %436 = vmatmul.mubr.f32.gmra.mxu0 %v199
      %v437 = vpop.f32.mrf.mxu0
      %v438 = vadd.f32 %v314, %v437
      %v439 = vpop.f32.mrf.mxu0
      %440 = vmatprep.mubr.f32.mxu0 %v202
      %441 = vmatmul.mubr.f32.gmra.mxu0 %v201
      %v442 = vpop.f32.mrf.mxu0
      %v443 = vadd.f32 %v314, %v442
      %v444 = vpop.f32.mrf.mxu0
      %445 = vmatprep.mubr.f32.mxu0 %v204
      %446 = vmatmul.mubr.f32.gmra.mxu0 %v203
      %v447 = vpop.f32.mrf.mxu0
      %v448 = vadd.f32 %v314, %v447
      %v449 = vpop.f32.mrf.mxu0
      %450 = vmatprep.mubr.f32.mxu0 %v206
      %451 = vmatmul.mubr.f32.gmra.mxu0 %v205
      %v452 = vpop.f32.mrf.mxu0
      %v453 = vadd.f32 %v314, %v452
      %v454 = vpop.f32.mrf.mxu0
      %455 = vmatprep.mubr.f32.mxu0 %v208
      %456 = vmatmul.mubr.f32.gmra.mxu0 %v207
      %v457 = vpop.f32.mrf.mxu0
      %v458 = vadd.f32 %v314, %v457
      %v459 = vpop.f32.mrf.mxu0
      %460 = vmatprep.mubr.f32.mxu0 %v210
      %461 = vmatmul.mubr.f32.gmra.mxu0 %v209
      %v462 = vpop.f32.mrf.mxu0
      %v463 = vadd.f32 %v314, %v462
      %v464 = vpop.f32.mrf.mxu0
      %465 = vmatprep.mubr.f32.mxu0 %v212
      %466 = vmatmul.mubr.f32.gmra.mxu0 %v211
      %v467 = vpop.f32.mrf.mxu0
      %v468 = vadd.f32 %v314, %v467
      %v469 = vpop.f32.mrf.mxu0
      %470 = vmatprep.mubr.f32.mxu0 %v214
      %471 = vmatmul.mubr.f32.gmra.mxu0 %v213
      %v472 = vpop.f32.mrf.mxu0
      %v473 = vadd.f32 %v314, %v472
      %v474 = vpop.f32.mrf.mxu0
      %475 = vmatprep.mubr.f32.mxu0 %v216
      %476 = vmatmul.mubr.f32.gmra.mxu0 %v215
      %v477 = vpop.f32.mrf.mxu0
      %v478 = vadd.f32 %v314, %v477
      %v479 = vpop.f32.mrf.mxu0
      %480 = vmatprep.mubr.f32.mxu0 %v218
      %481 = vmatmul.mubr.f32.gmra.mxu0 %v217
      %v482 = vpop.f32.mrf.mxu0
      %v483 = vadd.f32 %v314, %v482
      %v484 = vpop.f32.mrf.mxu0
      %485 = vmatprep.mubr.f32.mxu0 %v220
      %486 = vmatmul.mubr.f32.gmra.mxu0 %v219
      %v487 = vpop.f32.mrf.mxu0
      %v488 = vadd.f32 %v314, %v487
      %v489 = vpop.f32.mrf.mxu0
      %490 = vmatprep.mubr.f32.mxu0 %v222
      %491 = vmatmul.mubr.f32.gmra.mxu0 %v221
      %v492 = vpop.f32.mrf.mxu0
      %v493 = vadd.f32 %v314, %v492
      %v494 = vpop.f32.mrf.mxu0
      %495 = vmatprep.mubr.f32.mxu0 %v224
      %496 = vmatmul.mubr.f32.gmra.mxu0 %v223
      %v497 = vpop.f32.mrf.mxu0
      %v498 = vadd.f32 %v314, %v497
      %v499 = vpop.f32.mrf.mxu0
      %500 = vmatprep.mubr.f32.mxu0 %v226
      %501 = vmatmul.mubr.f32.gmra.mxu0 %v225
      %v502 = vpop.f32.mrf.mxu0
      %v503 = vadd.f32 %v314, %v502
      %v504 = vpop.f32.mrf.mxu0
      %505 = vmatprep.mubr.f32.mxu0 %v228
      %506 = vmatmul.mubr.f32.gmra.mxu0 %v227
      %v507 = vpop.f32.mrf.mxu0
      %v508 = vadd.f32 %v314, %v507
      %v509 = vpop.f32.mrf.mxu0
      %510 = vmatprep.mubr.f32.mxu0 %v230
      %511 = vmatmul.mubr.f32.gmra.mxu0 %v229
      %v512 = vpop.f32.mrf.mxu0
      %v513 = vadd.f32 %v314, %v512
      %v514 = vpop.f32.mrf.mxu0
      %515 = vmatprep.mubr.f32.mxu0 %v232
      %516 = vmatmul.mubr.f32.gmra.mxu0 %v231
      %v517 = vpop.f32.mrf.mxu0
      %v518 = vadd.f32 %v314, %v517
      %v519 = vpop.f32.mrf.mxu0
      %520 = vmatprep.mubr.f32.mxu0 %v234
      %521 = vmatmul.mubr.f32.gmra.mxu0 %v233
      %v522 = vpop.f32.mrf.mxu0
      %v523 = vadd.f32 %v314, %v522
      %v524 = vpop.f32.mrf.mxu0
      %525 = vmatprep.mubr.f32.mxu0 %v236
      %526 = vmatmul.mubr.f32.gmra.mxu0 %v235
      %v527 = vpop.f32.mrf.mxu0
      %v528 = vadd.f32 %v314, %v527
      %v529 = vpop.f32.mrf.mxu0
      %530 = vmatprep.mubr.f32.mxu0 %v238
      %531 = vmatmul.mubr.f32.gmra.mxu0 %v237
      %v532 = vpop.f32.mrf.mxu0
      %v533 = vadd.f32 %v314, %v532
      %v534 = vpop.f32.mrf.mxu0
      %535 = vmatprep.mubr.f32.mxu0 %v240
      %536 = vmatmul.mubr.f32.gmra.mxu0 %v239
      %v537 = vpop.f32.mrf.mxu0
      %v538 = vadd.f32 %v314, %v537
      %v539 = vpop.f32.mrf.mxu0
      %540 = vmatprep.mubr.f32.mxu0 %v242
      %541 = vmatmul.mubr.f32.gmra.mxu0 %v241
      %v542 = vpop.f32.mrf.mxu0
      %v543 = vadd.f32 %v314, %v542
      %v544 = vpop.f32.mrf.mxu0
      %545 = vmatprep.mubr.f32.mxu0 %v244
      %546 = vmatmul.mubr.f32.gmra.mxu0 %v243
      %v547 = vpop.f32.mrf.mxu0
      %v548 = vadd.f32 %v314, %v547
      %v549 = vpop.f32.mrf.mxu0
      %550 = vmatprep.mubr.f32.mxu0 %v246
      %551 = vmatmul.mubr.f32.gmra.mxu0 %v245
      %v552 = vpop.f32.mrf.mxu0
      %v553 = vadd.f32 %v314, %v552
      %v554 = vpop.f32.mrf.mxu0
      %555 = vmatprep.mubr.f32.mxu0 %v248
      %556 = vmatmul.mubr.f32.gmra.mxu0 %v247
      %v557 = vpop.f32.mrf.mxu0
      %v558 = vadd.f32 %v314, %v557
      %v559 = vpop.f32.mrf.mxu0
      %560 = vmatprep.mubr.f32.mxu0 %v250
      %561 = vmatmul.mubr.f32.gmra.mxu0 %v249
      %v562 = vpop.f32.mrf.mxu0
      %v563 = vadd.f32 %v314, %v562
      %v564 = vpop.f32.mrf.mxu0
      %565 = vmatprep.mubr.f32.mxu0 %v252
      %566 = vmatmul.mubr.f32.gmra.mxu0 %v251
      %v567 = vpop.f32.mrf.mxu0
      %v568 = vadd.f32 %v314, %v567
      %v569 = vpop.f32.mrf.mxu0
      %570 = vmatprep.mubr.f32.mxu0 %v254
      %571 = vmatmul.mubr.f32.gmra.mxu0 %v253
      %v572 = vpop.f32.mrf.mxu0
      %v573 = vadd.f32 %v314, %v572
      %v574 = vpop.f32.mrf.mxu0
      %575 = vmatprep.mubr.f32.mxu0 %v256
      %576 = vmatmul.mubr.f32.gmra.mxu0 %v255
      %v577 = vpop.f32.mrf.mxu0
      %v578 = vadd.f32 %v314, %v577
      %v579 = vpop.f32.mrf.mxu0
      %580 = vmatprep.mubr.f32.mxu0 %v258
      %581 = vmatmul.mubr.f32.gmra.mxu0 %v257
      %v582 = vpop.f32.mrf.mxu0
      %v583 = vadd.f32 %v314, %v582
      %v584 = vpop.f32.mrf.mxu0
      %585 = vmatprep.mubr.f32.mxu0 %v260
      %586 = vmatmul.mubr.f32.gmra.mxu0 %v259
      %v587 = vpop.f32.mrf.mxu0
      %v588 = vadd.f32 %v314, %v587
      %v589 = vpop.f32.mrf.mxu0
      %590 = vmatprep.mubr.f32.mxu0 %v262
      %591 = vmatmul.mubr.f32.gmra.mxu0 %v261
      %v592 = vpop.f32.mrf.mxu0
      %v593 = vadd.f32 %v314, %v592
      %v594 = vpop.f32.mrf.mxu0
      %595 = vmatprep.mubr.f32.mxu0 %v264
      %596 = vmatmul.mubr.f32.gmra.mxu0 %v263
      %v597 = vpop.f32.mrf.mxu0
      %v598 = vadd.f32 %v314, %v597
      %v599 = vpop.f32.mrf.mxu0
      %600 = vmatprep.mubr.f32.mxu0 %v266
      %601 = vmatmul.mubr.f32.gmra.mxu0 %v265
      %v602 = vpop.f32.mrf.mxu0
      %v603 = vadd.f32 %v314, %v602
      %v604 = vpop.f32.mrf.mxu0
      %605 = vmatprep.mubr.f32.mxu0 %v268
      %606 = vmatmul.mubr.f32.gmra.mxu0 %v267
      %v607 = vpop.f32.mrf.mxu0
      %v608 = vadd.f32 %v314, %v607
      %v609 = vpop.f32.mrf.mxu0
      %610 = vmatprep.mubr.f32.mxu0 %v270
      %611 = vmatmul.mubr.f32.gmra.mxu0 %v269
      %v612 = vpop.f32.mrf.mxu0
      %v613 = vadd.f32 %v314, %v612
      %v614 = vpop.f32.mrf.mxu0
      %615 = vmatprep.mubr.f32.mxu0 %v272
      %616 = vmatmul.mubr.f32.gmra.mxu0 %v271
      %v617 = vpop.f32.mrf.mxu0
      %v618 = vadd.f32 %v314, %v617
      %v619 = vpop.f32.mrf.mxu0
      %620 = vmatprep.mubr.f32.mxu0 %v274
      %621 = vmatmul.mubr.f32.gmra.mxu0 %v273
      %v622 = vpop.f32.mrf.mxu0
      %v623 = vadd.f32 %v314, %v622
      %v624 = vpop.f32.mrf.mxu0
      %625 = vmatprep.mubr.f32.mxu0 %v276
      %626 = vmatmul.mubr.f32.gmra.mxu0 %v275
      %v627 = vpop.f32.mrf.mxu0
      %v628 = vadd.f32 %v314, %v627
      %v629 = vpop.f32.mrf.mxu0
      %630 = vdwg.mxu0
      %v631 = vmax.f32 %v383, 0.0
      %v632 = vmax.f32 %v388, 0.0
      %v633 = vmax.f32 %v393, 0.0
      %v634 = vmax.f32 %v398, 0.0
      %v635 = vmax.f32 %v403, 0.0
      %v636 = vmax.f32 %v408, 0.0
      %v637 = vmax.f32 %v413, 0.0
      %v638 = vmax.f32 %v418, 0.0
      %v639 = vmax.f32 %v423, 0.0
      %v640 = vmax.f32 %v428, 0.0
      %v641 = vmax.f32 %v433, 0.0
      %v642 = vmax.f32 %v438, 0.0
      %v643 = vmax.f32 %v443, 0.0
      %v644 = vmax.f32 %v448, 0.0
      %v645 = vmax.f32 %v453, 0.0
      %v646 = vmax.f32 %v458, 0.0
      %v647 = vmax.f32 %v463, 0.0
      %v648 = vmax.f32 %v468, 0.0
      %v649 = vmax.f32 %v473, 0.0
      %v650 = vmax.f32 %v478, 0.0
      %v651 = vmax.f32 %v483, 0.0
      %v652 = vmax.f32 %v488, 0.0
      %v653 = vmax.f32 %v493, 0.0
      %v654 = vmax.f32 %v498, 0.0
      %v655 = vmax.f32 %v503, 0.0
      %v656 = vmax.f32 %v508, 0.0
      %v657 = vmax.f32 %v513, 0.0
      %v658 = vmax.f32 %v518, 0.0
      %v659 = vmax.f32 %v523, 0.0
      %v660 = vmax.f32 %v528, 0.0
      %v661 = vmax.f32 %v533, 0.0
      %v662 = vmax.f32 %v538, 0.0
      %v663 = vmax.f32 %v543, 0.0
      %v664 = vmax.f32 %v548, 0.0
      %v665 = vmax.f32 %v553, 0.0
      %v666 = vmax.f32 %v558, 0.0
      %v667 = vmax.f32 %v563, 0.0
      %v668 = vmax.f32 %v568, 0.0
      %v669 = vmax.f32 %v573, 0.0
      %v670 = vmax.f32 %v578, 0.0
      %v671 = vmax.f32 %v583, 0.0
      %v672 = vmax.f32 %v588, 0.0
      %v673 = vmax.f32 %v593, 0.0
      %v674 = vmax.f32 %v598, 0.0
      %v675 = vmax.f32 %v603, 0.0
      %v676 = vmax.f32 %v608, 0.0
      %v677 = vmax.f32 %v613, 0.0
      %v678 = vmax.f32 %v618, 0.0
      %v679 = vmax.f32 %v623, 0.0
      %v680 = vmax.f32 %v628, 0.0
      %vm681 = vcmask 261120
      %682 = vst.msk [vmem:[%s175] sm:$0xff] %vm681, %v631
      %683 = vst.msk [vmem:[%s175 + $0x8] sm:$0xff] %vm681, %v632
      %684 = vst.msk [vmem:[%s175 + $0x10] sm:$0xff] %vm681, %v633
      %685 = vst.msk [vmem:[%s175 + $0x18] sm:$0xff] %vm681, %v634
      %686 = vst.msk [vmem:[%s175 + $0x20] sm:$0xff] %vm681, %v635
      %687 = vst.msk [vmem:[%s175 + $0x28] sm:$0xff] %vm681, %v636
      %688 = vst.msk [vmem:[%s175 + $0x30] sm:$0xff] %vm681, %v637
      %689 = vst.msk [vmem:[%s175 + $0x38] sm:$0xff] %vm681, %v638
      %690 = vst.msk [vmem:[%s175 + $0x40] sm:$0xff] %vm681, %v639
      %691 = vst.msk [vmem:[%s175 + $0x48] sm:$0xff] %vm681, %v640
      %692 = vst.msk [vmem:[%s175 + $0x50] sm:$0xff] %vm681, %v641
      %693 = vst.msk [vmem:[%s175 + $0x58] sm:$0xff] %vm681, %v642
      %694 = vst.msk [vmem:[%s175 + $0x60] sm:$0xff] %vm681, %v643
      %695 = vst.msk [vmem:[%s175 + $0x68] sm:$0xff] %vm681, %v644
      %696 = vst.msk [vmem:[%s175 + $0x70] sm:$0xff] %vm681, %v645
      %697 = vst.msk [vmem:[%s175 + $0x78] sm:$0xff] %vm681, %v646
      %698 = vst.msk [vmem:[%s175 + $0x80] sm:$0xff] %vm681, %v647
      %699 = vst.msk [vmem:[%s175 + $0x88] sm:$0xff] %vm681, %v648
      %700 = vst.msk [vmem:[%s175 + $0x90] sm:$0xff] %vm681, %v649
      %701 = vst.msk [vmem:[%s175 + $0x98] sm:$0xff] %vm681, %v650
      %702 = vst.msk [vmem:[%s175 + $0xa0] sm:$0xff] %vm681, %v651
      %703 = vst.msk [vmem:[%s175 + $0xa8] sm:$0xff] %vm681, %v652
      %704 = vst.msk [vmem:[%s175 + $0xb0] sm:$0xff] %vm681, %v653
      %705 = vst.msk [vmem:[%s175 + $0xb8] sm:$0xff] %vm681, %v654
      %706 = vst.msk [vmem:[%s175 + $0xc0] sm:$0xff] %vm681, %v655
      %707 = vst.msk [vmem:[%s175 + $0xc8] sm:$0xff] %vm681, %v656
      %708 = vst.msk [vmem:[%s175 + $0xd0] sm:$0xff] %vm681, %v657
      %709 = vst.msk [vmem:[%s175 + $0xd8] sm:$0xff] %vm681, %v658
      %710 = vst.msk [vmem:[%s175 + $0xe0] sm:$0xff] %vm681, %v659
      %711 = vst.msk [vmem:[%s175 + $0xe8] sm:$0xff] %vm681, %v660
      %712 = vst.msk [vmem:[%s175 + $0xf0] sm:$0xff] %vm681, %v661
      %713 = vst.msk [vmem:[%s175 + $0xf8] sm:$0xff] %vm681, %v662
      %714 = vst.msk [vmem:[%s175 + $0x100] sm:$0xff] %vm681, %v663
      %715 = vst.msk [vmem:[%s175 + $0x108] sm:$0xff] %vm681, %v664
      %716 = vst.msk [vmem:[%s175 + $0x110] sm:$0xff] %vm681, %v665
      %717 = vst.msk [vmem:[%s175 + $0x118] sm:$0xff] %vm681, %v666
      %718 = vst.msk [vmem:[%s175 + $0x120] sm:$0xff] %vm681, %v667
      %719 = vst.msk [vmem:[%s175 + $0x128] sm:$0xff] %vm681, %v668
      %720 = vst.msk [vmem:[%s175 + $0x130] sm:$0xff] %vm681, %v669
      %721 = vst.msk [vmem:[%s175 + $0x138] sm:$0xff] %vm681, %v670
      %722 = vst.msk [vmem:[%s175 + $0x140] sm:$0xff] %vm681, %v671
      %723 = vst.msk [vmem:[%s175 + $0x148] sm:$0xff] %vm681, %v672
      %724 = vst.msk [vmem:[%s175 + $0x150] sm:$0xff] %vm681, %v673
      %725 = vst.msk [vmem:[%s175 + $0x158] sm:$0xff] %vm681, %v674
      %726 = vst.msk [vmem:[%s175 + $0x160] sm:$0xff] %vm681, %v675
      %727 = vst.msk [vmem:[%s175 + $0x168] sm:$0xff] %vm681, %v676
      %728 = vst.msk [vmem:[%s175 + $0x170] sm:$0xff] %vm681, %v677
      %729 = vst.msk [vmem:[%s175 + $0x178] sm:$0xff] %vm681, %v678
      %730 = vst.msk [vmem:[%s175 + $0x180] sm:$0xff] %vm681, %v679
      %731 = vst.msk [vmem:[%s175 + $0x188] sm:$0xff] %vm681, %v680
      %s732 = smul.u32 50, %s14
      %p733 = scmp.lt.s32.totalorder %s732, 99
      %s734 = scalar_select %p733, %s732, 99
      %s735 = smul.addr %s734, 8
      %s736 = scalar_lea.vmem %s3, %s735
      // Predicated region
      $region33: #{duelnet_forward.4} parent=31 // pred_check
        %p737 = pneg %p100
      $region34: #{duelnet_forward.4} parent=31 // pred_check_branch
        %739 = sbr.rel (%p737) target = $region36
      $region35: #{duelnet_forward.4} parent=31 // pred_region
        %s740 = smul.u32 50, %s14
      $region36: #{duelnet_forward.4} parent=31 // pred_fallthru
        _
    $region32: #{duelnet_forward.4} parent=5 // pred_fallthru
      _
    %p741 = scmp.le.s32.totalorder 2, %s9
    // Predicated region
    $region37: #{duelnet_forward.4} parent=5 // pred_check
      %p742 = pneg %p741
    $region38: #{duelnet_forward.4} parent=5 // pred_check_branch
      %744 = sbr.rel (%p742) target = $region40
    $region39: #{duelnet_forward.4} parent=5 // pred_region
      %s745 = ssub.s32 %s9, 2
      // Predicated region
      $region41: #{duelnet_forward.4} parent=39 // pred_check
        %p746 = pneg %p106
      $region42: #{duelnet_forward.4} parent=39 // pred_check_branch
        %748 = sbr.rel (%p746) target = $region44
      $region43: #{duelnet_forward.4} parent=39 // pred_region
        %s749 = smul.u32 50, %s15
        %p750 = scmp.lt.s32.totalorder %s749, 99
        %s751 = scalar_select %p750, %s749, 99
        %s752 = smul.addr %s751, 8
        %s753 = scalar_lea.vmem %s3, %s752
      $region44: #{duelnet_forward.4} parent=39 // pred_fallthru
        _
    $region40: #{duelnet_forward.4} parent=5 // pred_fallthru
      _
  $region6: #{duelnet_forward.4} parent=0 // loop_footer
    %s13 = sadd.s32 1, %s9
  $region7: #{duelnet_forward.4} parent=0 // loop_footer_branch
    %8 = sbr.rel target = $region3
  $region8: #{duelnet_forward.4} parent=0 // loop_exit
    _

// kernel: duelnet_forward.5
$region0: #{duelnet_forward.5}
  #allocation0 [shape = 'u32[]', space=smem, size = 0x4, offset = 0x4, fixed_abs, tag = 'smem constant byte address 0x4 - core index']
  #allocation1 [shape = 'u32[144,128]{1,0:T(1,128)}', space=vmem, size = 0x12000, scoped, tag = 'internal scratch']
  %s0 = inlined_call_operand.vmem [shape: f32[162,512], index: 0, kind: input, shape index: {}]
  %s1 = inlined_call_operand.vmem [shape: f32[512,64], index: 1, kind: input, shape index: {}]
  %s2 = inlined_call_operand.vmem [shape: f32[1,64], index: 2, kind: input, shape index: {}]
  %s3 = inlined_call_operand.vmem [shape: f32[162,64], index: 3, kind: output, shape index: {}]
  %s4 = sld [smem:[#allocation0]]
  $region22: #{duelnet_forward.5} parent=0
    _
  %s6 = ssub.s32 1, %s4
  %s7 = scalar_select 0, %s6, %s4
  // Predicated region
  $region2: #{duelnet_forward.5} parent=0 // pred_check
    _
  $region3: #{duelnet_forward.5} parent=0 // pred_check_branch
    %9 = sbr.rel (0) target = $region5
  $region4: #{duelnet_forward.5} parent=0 // pred_region
    _
  $region5: #{duelnet_forward.5} parent=0 // pred_fallthru
    _
  // Predicated region
  $region6: #{duelnet_forward.5} parent=0 // pred_check
    _
  $region7: #{duelnet_forward.5} parent=0 // pred_check_branch
    %11 = sbr.rel (0) target = $region9
  $region8: #{duelnet_forward.5} parent=0 // pred_region
    _
  $region9: #{duelnet_forward.5} parent=0 // pred_fallthru
    _
  // Predicated region
  $region10: #{duelnet_forward.5} parent=0 // pred_check
    _
  $region11: #{duelnet_forward.5} parent=0 // pred_check_branch
    %13 = sbr.rel (0) target = $region13
  $region12: #{duelnet_forward.5} parent=0 // pred_region
    _
  $region13: #{duelnet_forward.5} parent=0 // pred_fallthru
    _
  %v14 = vld [vmem:[%s0] sm:$0xff]
  %v15 = vld [vmem:[%s0 + $0x8] sm:$0xff]
  %v16 = vld [vmem:[%s0 + $0x10] sm:$0xff]
  %v17 = vld [vmem:[%s0 + $0x18] sm:$0xff]
  %v18 = vld [vmem:[%s0 + $0x20] sm:$0xff]
  %v19 = vld [vmem:[%s0 + $0x28] sm:$0xff]
  %v20 = vld [vmem:[%s0 + $0x30] sm:$0xff]
  %v21 = vld [vmem:[%s0 + $0x38] sm:$0xff]
  %v22 = vld [vmem:[%s0 + $0x40] sm:$0xff]
  %v23 = vld [vmem:[%s0 + $0x48] sm:$0xff]
  %v24 = vld [vmem:[%s0 + $0x50] sm:$0xff]
  %v25 = vld [vmem:[%s0 + $0x58] sm:$0xff]
  %v26 = vld [vmem:[%s0 + $0x60] sm:$0xff]
  %v27 = vld [vmem:[%s0 + $0x68] sm:$0xff]
  %v28 = vld [vmem:[%s0 + $0x70] sm:$0xff]
  %v29 = vld [vmem:[%s0 + $0x78] sm:$0xff]
  %v30 = vld [vmem:[%s0 + $0x80] sm:$0xff]
  %v31 = vld [vmem:[%s0 + $0x88] sm:$0xff]
  %v32 = vld [vmem:[%s0 + $0x90] sm:$0xff]
  %v33 = vld [vmem:[%s0 + $0x98] sm:$0xff]
  %v34 = vld [vmem:[%s0 + $0xa0] sm:$0xff]
  %v35 = vld [vmem:[%s0 + $0xa8] sm:$0xff]
  %v36 = vld [vmem:[%s0 + $0xb0] sm:$0xff]
  %v37 = vld [vmem:[%s0 + $0xb8] sm:$0xff]
  %v38 = vld [vmem:[%s0 + $0xc0] sm:$0xff]
  %v39 = vld [vmem:[%s0 + $0xc8] sm:$0xff]
  %v40 = vld [vmem:[%s0 + $0xd0] sm:$0xff]
  %v41 = vld [vmem:[%s0 + $0xd8] sm:$0xff]
  %v42 = vld [vmem:[%s0 + $0xe0] sm:$0xff]
  %v43 = vld [vmem:[%s0 + $0xe8] sm:$0xff]
  %v44 = vld [vmem:[%s0 + $0xf0] sm:$0xff]
  %v45 = vld [vmem:[%s0 + $0xf8] sm:$0xff]
  %v46 = vld [vmem:[%s0 + $0x100] sm:$0xff]
  %v47 = vld [vmem:[%s0 + $0x108] sm:$0xff]
  %v48 = vld [vmem:[%s0 + $0x110] sm:$0xff]
  %v49 = vld [vmem:[%s0 + $0x118] sm:$0xff]
  %v50 = vld [vmem:[%s0 + $0x120] sm:$0xff]
  %v51 = vld [vmem:[%s0 + $0x128] sm:$0xff]
  %v52 = vld [vmem:[%s0 + $0x130] sm:$0xff]
  %v53 = vld [vmem:[%s0 + $0x138] sm:$0xff]
  %v54 = vld [vmem:[%s0 + $0x140] sm:$0xff]
  %v55 = vld [vmem:[%s0 + $0x148] sm:$0xff]
  %v56 = vld [vmem:[%s0 + $0x150] sm:$0xff]
  %v57 = vld [vmem:[%s0 + $0x158] sm:$0xff]
  %v58 = vld [vmem:[%s0 + $0x160] sm:$0xff]
  %v59 = vld [vmem:[%s0 + $0x168] sm:$0xff]
  %v60 = vld [vmem:[%s0 + $0x170] sm:$0xff]
  %v61 = vld [vmem:[%s0 + $0x178] sm:$0xff]
  %v62 = vld [vmem:[%s0 + $0x180] sm:$0xff]
  %v63 = vld [vmem:[%s0 + $0x188] sm:$0xff]
  %v64 = vld [vmem:[%s0 + $0x190] sm:$0xff]
  %v65 = vld [vmem:[%s0 + $0x198] sm:$0xff]
  %v66 = vld [vmem:[%s0 + $0x1a0] sm:$0xff]
  %v67 = vld [vmem:[%s0 + $0x1a8] sm:$0xff]
  %v68 = vld [vmem:[%s0 + $0x1b0] sm:$0xff]
  %v69 = vld [vmem:[%s0 + $0x1b8] sm:$0xff]
  %v70 = vld [vmem:[%s0 + $0x1c0] sm:$0xff]
  %v71 = vld [vmem:[%s0 + $0x1c8] sm:$0xff]
  %v72 = vld [vmem:[%s0 + $0x1d0] sm:$0xff]
  %v73 = vld [vmem:[%s0 + $0x1d8] sm:$0xff]
  %v74 = vld [vmem:[%s0 + $0x1e0] sm:$0xff]
  %v75 = vld [vmem:[%s0 + $0x1e8] sm:$0xff]
  %v76 = vld [vmem:[%s0 + $0x1f0] sm:$0xff]
  %v77 = vld [vmem:[%s0 + $0x1f8] sm:$0xff]
  %v78 = vld [vmem:[%s0 + $0x200] sm:$0xff]
  %v79 = vld [vmem:[%s0 + $0x208] sm:$0xff]
  %v80 = vld [vmem:[%s0 + $0x210] sm:$0xff]
  %v81 = vld [vmem:[%s0 + $0x218] sm:$0xff]
  %v82 = vld [vmem:[%s0 + $0x220] sm:$0xff]
  %v83 = vld [vmem:[%s0 + $0x228] sm:$0xff]
  %v84 = vld [vmem:[%s0 + $0x230] sm:$0xff]
  %v85 = vld [vmem:[%s0 + $0x238] sm:$0xff]
  %v86 = vld [vmem:[%s0 + $0x240] sm:$0xff]
  %v87 = vld [vmem:[%s0 + $0x248] sm:$0xff]
  %v88 = vld [vmem:[%s0 + $0x250] sm:$0xff]
  %v89 = vld [vmem:[%s0 + $0x258] sm:$0xff]
  %v90 = vld [vmem:[%s0 + $0x260] sm:$0xff]
  %v91 = vld [vmem:[%s0 + $0x268] sm:$0xff]
  %v92 = vld [vmem:[%s0 + $0x270] sm:$0xff]
  %v93 = vld [vmem:[%s0 + $0x278] sm:$0xff]
  %v94 = vld [vmem:[%s0 + $0x280] sm:$0x3]
  %v95 = vld [vmem:[%s0 + $0x288] sm:$0x3]
  %v96 = vld [vmem:[%s0 + $0x290] sm:$0x3]
  %v97 = vld [vmem:[%s0 + $0x298] sm:$0x3]
  %v98 = vld [vmem:[%s1] sm:$0xff]
  %v99 = vld [vmem:[%s1 + $0x8] sm:$0xff]
  %v100 = vld [vmem:[%s1 + $0x10] sm:$0xff]
  %v101 = vld [vmem:[%s1 + $0x18] sm:$0xff]
  %v102 = vld [vmem:[%s1 + $0x20] sm:$0xff]
  %v103 = vld [vmem:[%s1 + $0x28] sm:$0xff]
  %v104 = vld [vmem:[%s1 + $0x30] sm:$0xff]
  %v105 = vld [vmem:[%s1 + $0x38] sm:$0xff]
  %v106 = vld [vmem:[%s1 + $0x40] sm:$0xff]
  %v107 = vld [vmem:[%s1 + $0x48] sm:$0xff]
  %v108 = vld [vmem:[%s1 + $0x50] sm:$0xff]
  %v109 = vld [vmem:[%s1 + $0x58] sm:$0xff]
  %v110 = vld [vmem:[%s1 + $0x60] sm:$0xff]
  %v111 = vld [vmem:[%s1 + $0x68] sm:$0xff]
  %v112 = vld [vmem:[%s1 + $0x70] sm:$0xff]
  %v113 = vld [vmem:[%s1 + $0x78] sm:$0xff]
  %v114 = vld [vmem:[%s1 + $0x80] sm:$0xff]
  %v115 = vld [vmem:[%s1 + $0x88] sm:$0xff]
  %v116 = vld [vmem:[%s1 + $0x90] sm:$0xff]
  %v117 = vld [vmem:[%s1 + $0x98] sm:$0xff]
  %v118 = vld [vmem:[%s1 + $0xa0] sm:$0xff]
  %v119 = vld [vmem:[%s1 + $0xa8] sm:$0xff]
  %v120 = vld [vmem:[%s1 + $0xb0] sm:$0xff]
  %v121 = vld [vmem:[%s1 + $0xb8] sm:$0xff]
  %v122 = vld [vmem:[%s1 + $0xc0] sm:$0xff]
  %v123 = vld [vmem:[%s1 + $0xc8] sm:$0xff]
  %v124 = vld [vmem:[%s1 + $0xd0] sm:$0xff]
  %v125 = vld [vmem:[%s1 + $0xd8] sm:$0xff]
  %v126 = vld [vmem:[%s1 + $0xe0] sm:$0xff]
  %v127 = vld [vmem:[%s1 + $0xe8] sm:$0xff]
  %v128 = vld [vmem:[%s1 + $0xf0] sm:$0xff]
  %v129 = vld [vmem:[%s1 + $0xf8] sm:$0xff]
  %v130 = vld [vmem:[%s1 + $0x100] sm:$0xff]
  %v131 = vld [vmem:[%s1 + $0x108] sm:$0xff]
  %v132 = vld [vmem:[%s1 + $0x110] sm:$0xff]
  %v133 = vld [vmem:[%s1 + $0x118] sm:$0xff]
  %v134 = vld [vmem:[%s1 + $0x120] sm:$0xff]
  %v135 = vld [vmem:[%s1 + $0x128] sm:$0xff]
  %v136 = vld [vmem:[%s1 + $0x130] sm:$0xff]
  %v137 = vld [vmem:[%s1 + $0x138] sm:$0xff]
  %v138 = vld [vmem:[%s1 + $0x140] sm:$0xff]
  %v139 = vld [vmem:[%s1 + $0x148] sm:$0xff]
  %v140 = vld [vmem:[%s1 + $0x150] sm:$0xff]
  %v141 = vld [vmem:[%s1 + $0x158] sm:$0xff]
  %v142 = vld [vmem:[%s1 + $0x160] sm:$0xff]
  %v143 = vld [vmem:[%s1 + $0x168] sm:$0xff]
  %v144 = vld [vmem:[%s1 + $0x170] sm:$0xff]
  %v145 = vld [vmem:[%s1 + $0x178] sm:$0xff]
  %v146 = vld [vmem:[%s1 + $0x180] sm:$0xff]
  %v147 = vld [vmem:[%s1 + $0x188] sm:$0xff]
  %v148 = vld [vmem:[%s1 + $0x190] sm:$0xff]
  %v149 = vld [vmem:[%s1 + $0x198] sm:$0xff]
  %v150 = vld [vmem:[%s1 + $0x1a0] sm:$0xff]
  %v151 = vld [vmem:[%s1 + $0x1a8] sm:$0xff]
  %v152 = vld [vmem:[%s1 + $0x1b0] sm:$0xff]
  %v153 = vld [vmem:[%s1 + $0x1b8] sm:$0xff]
  %v154 = vld [vmem:[%s1 + $0x1c0] sm:$0xff]
  %v155 = vld [vmem:[%s1 + $0x1c8] sm:$0xff]
  %v156 = vld [vmem:[%s1 + $0x1d0] sm:$0xff]
  %v157 = vld [vmem:[%s1 + $0x1d8] sm:$0xff]
  %v158 = vld [vmem:[%s1 + $0x1e0] sm:$0xff]
  %v159 = vld [vmem:[%s1 + $0x1e8] sm:$0xff]
  %v160 = vld [vmem:[%s1 + $0x1f0] sm:$0xff]
  %v161 = vld [vmem:[%s1 + $0x1f8] sm:$0xff]
  %v162 = vld [vmem:[%s2] sm:$0x1]
  %v164 = vlaneseq
  %v165 = vshrl.u32 %v164, 7
  %v166 = vsub.s32 0, %v165
  %v167 = vrot.slane %v162, %v166
  %169 = vmatprep.subr.mxu0 0.0
  %170 = vmatpush1.msra.mxu0 %v113
  %171 = vmatprep.subr.mxu0 0.0
  %172 = vmatpush1.msra.mxu0 %v112
  %173 = vmatprep.subr.mxu0 0.0
  %174 = vmatpush1.msra.mxu0 %v111
  %175 = vmatprep.subr.mxu0 0.0
  %176 = vmatpush1.msra.mxu0 %v110
  %177 = vmatprep.subr.mxu0 0.0
  %178 = vmatpush1.msra.mxu0 %v109
  %179 = vmatprep.subr.mxu0 0.0
  %180 = vmatpush1.msra.mxu0 %v108
  %181 = vmatprep.subr.mxu0 0.0
  %182 = vmatpush1.msra.mxu0 %v107
  %183 = vmatprep.subr.mxu0 0.0
  %184 = vmatpush1.msra.mxu0 %v106
  %185 = vmatprep.subr.mxu0 0.0
  %186 = vmatpush1.msra.mxu0 %v105
  %187 = vmatprep.subr.mxu0 0.0
  %188 = vmatpush1.msra.mxu0 %v104
  %189 = vmatprep.subr.mxu0 0.0
  %190 = vmatpush1.msra.mxu0 %v103
  %191 = vmatprep.subr.mxu0 0.0
  %192 = vmatpush1.msra.mxu0 %v102
  %193 = vmatprep.subr.mxu0 0.0
  %194 = vmatpush1.msra.mxu0 %v101
  %195 = vmatprep.subr.mxu0 0.0
  %196 = vmatpush1.msra.mxu0 %v100
  %197 = vmatprep.subr.mxu0 0.0
  %198 = vmatpush1.msra.mxu0 %v99
  %199 = vmatprep.subr.mxu0 0.0
  %200 = vmatpush1.msra.mxu0 %v98
  %201 = vmatprep.subr.mxu0 0.0
  %202 = vmatpush2.msra.mxu0 %v129
  %203 = vmatprep.subr.mxu0 0.0
  %204 = vmatpush2.msra.mxu0 %v128
  %205 = vmatprep.subr.mxu0 0.0
  %206 = vmatpush2.msra.mxu0 %v127
  %207 = vmatprep.subr.mxu0 0.0
  %208 = vmatpush2.msra.mxu0 %v126
  %209 = vmatprep.subr.mxu0 0.0
  %210 = vmatpush2.msra.mxu0 %v125
  %211 = vmatprep.subr.mxu0 0.0
  %212 = vmatpush2.msra.mxu0 %v124
  %213 = vmatprep.subr.mxu0 0.0
  %214 = vmatpush2.msra.mxu0 %v123
  %215 = vmatprep.subr.mxu0 0.0
  %216 = vmatpush2.msra.mxu0 %v122
  %217 = vmatprep.subr.mxu0 0.0
  %218 = vmatpush2.msra.mxu0 %v121
  %219 = vmatprep.subr.mxu0 0.0
  %220 = vmatpush2.msra.mxu0 %v120
  %221 = vmatprep.subr.mxu0 0.0
  %222 = vmatpush2.msra.mxu0 %v119
  %223 = vmatprep.subr.mxu0 0.0
  %224 = vmatpush2.msra.mxu0 %v118
  %225 = vmatprep.subr.mxu0 0.0
  %226 = vmatpush2.msra.mxu0 %v117
  %227 = vmatprep.subr.mxu0 0.0
  %228 = vmatpush2.msra.mxu0 %v116
  %229 = vmatprep.subr.mxu0 0.0
  %230 = vmatpush2.msra.mxu0 %v115
  %231 = vmatprep.subr.mxu0 0.0
  %232 = vmatpush2.msra.mxu0 %v114
  %233 = vmatprep.mubr.f32.mxu0 %v15
  %234 = vmatmul.mubr.f32.gmra.mxu0 %v14
  %v235 = vpop.f32.mrf.mxu0
  %v236 = vadd.f32 %v167, %v235
  %v237 = vpop.f32.mrf.mxu0
  %238 = vmatprep.mubr.f32.mxu0 %v19
  %239 = vmatmul.mubr.f32.gmra.mxu0 %v18
  %v240 = vpop.f32.mrf.mxu0
  %v241 = vadd.f32 %v167, %v240
  %v242 = vpop.f32.mrf.mxu0
  %243 = vmatprep.mubr.f32.mxu0 %v23
  %244 = vmatmul.mubr.f32.gmra.mxu0 %v22
  %v245 = vpop.f32.mrf.mxu0
  %v246 = vadd.f32 %v167, %v245
  %v247 = vpop.f32.mrf.mxu0
  %248 = vmatprep.mubr.f32.mxu0 %v27
  %249 = vmatmul.mubr.f32.gmra.mxu0 %v26
  %v250 = vpop.f32.mrf.mxu0
  %v251 = vadd.f32 %v167, %v250
  %v252 = vpop.f32.mrf.mxu0
  %253 = vmatprep.mubr.f32.mxu0 %v31
  %254 = vmatmul.mubr.f32.gmra.mxu0 %v30
  %v255 = vpop.f32.mrf.mxu0
  %v256 = vadd.f32 %v167, %v255
  %v257 = vpop.f32.mrf.mxu0
  %258 = vmatprep.mubr.f32.mxu0 %v35
  %259 = vmatmul.mubr.f32.gmra.mxu0 %v34
  %v260 = vpop.f32.mrf.mxu0
  %v261 = vadd.f32 %v167, %v260
  %v262 = vpop.f32.mrf.mxu0
  %263 = vmatprep.mubr.f32.mxu0 %v39
  %264 = vmatmul.mubr.f32.gmra.mxu0 %v38
  %v265 = vpop.f32.mrf.mxu0
  %v266 = vadd.f32 %v167, %v265
  %v267 = vpop.f32.mrf.mxu0
  %268 = vmatprep.mubr.f32.mxu0 %v43
  %269 = vmatmul.mubr.f32.gmra.mxu0 %v42
  %v270 = vpop.f32.mrf.mxu0
  %v271 = vadd.f32 %v167, %v270
  %v272 = vpop.f32.mrf.mxu0
  %273 = vmatprep.mubr.f32.mxu0 %v47
  %274 = vmatmul.mubr.f32.gmra.mxu0 %v46
  %v275 = vpop.f32.mrf.mxu0
  %v276 = vadd.f32 %v167, %v275
  %v277 = vpop.f32.mrf.mxu0
  %278 = vmatprep.mubr.f32.mxu0 %v51
  %279 = vmatmul.mubr.f32.gmra.mxu0 %v50
  %v280 = vpop.f32.mrf.mxu0
  %v281 = vadd.f32 %v167, %v280
  %v282 = vpop.f32.mrf.mxu0
  %283 = vmatprep.mubr.f32.mxu0 %v55
  %284 = vmatmul.mubr.f32.gmra.mxu0 %v54
  %v285 = vpop.f32.mrf.mxu0
  %v286 = vadd.f32 %v167, %v285
  %v287 = vpop.f32.mrf.mxu0
  %288 = vmatprep.mubr.f32.mxu0 %v59
  %289 = vmatmul.mubr.f32.gmra.mxu0 %v58
  %v290 = vpop.f32.mrf.mxu0
  %v291 = vadd.f32 %v167, %v290
  %v292 = vpop.f32.mrf.mxu0
  %293 = vmatprep.mubr.f32.mxu0 %v63
  %294 = vmatmul.mubr.f32.gmra.mxu0 %v62
  %v295 = vpop.f32.mrf.mxu0
  %v296 = vadd.f32 %v167, %v295
  %v297 = vpop.f32.mrf.mxu0
  %298 = vmatprep.mubr.f32.mxu0 %v67
  %299 = vmatmul.mubr.f32.gmra.mxu0 %v66
  %v300 = vpop.f32.mrf.mxu0
  %v301 = vadd.f32 %v167, %v300
  %v302 = vpop.f32.mrf.mxu0
  %303 = vmatprep.mubr.f32.mxu0 %v71
  %304 = vmatmul.mubr.f32.gmra.mxu0 %v70
  %v305 = vpop.f32.mrf.mxu0
  %v306 = vadd.f32 %v167, %v305
  %v307 = vpop.f32.mrf.mxu0
  %308 = vmatprep.mubr.f32.mxu0 %v75
  %309 = vmatmul.mubr.f32.gmra.mxu0 %v74
  %v310 = vpop.f32.mrf.mxu0
  %v311 = vadd.f32 %v167, %v310
  %v312 = vpop.f32.mrf.mxu0
  %313 = vmatprep.mubr.f32.mxu0 %v79
  %314 = vmatmul.mubr.f32.gmra.mxu0 %v78
  %v315 = vpop.f32.mrf.mxu0
  %v316 = vadd.f32 %v167, %v315
  %v317 = vpop.f32.mrf.mxu0
  %318 = vmatprep.mubr.f32.mxu0 %v83
  %319 = vmatmul.mubr.f32.gmra.mxu0 %v82
  %v320 = vpop.f32.mrf.mxu0
  %v321 = vadd.f32 %v167, %v320
  %v322 = vpop.f32.mrf.mxu0
  %323 = vmatprep.mubr.f32.mxu0 %v87
  %324 = vmatmul.mubr.f32.gmra.mxu0 %v86
  %v325 = vpop.f32.mrf.mxu0
  %v326 = vadd.f32 %v167, %v325
  %v327 = vpop.f32.mrf.mxu0
  %328 = vmatprep.mubr.f32.mxu0 %v91
  %329 = vmatmul.mubr.f32.gmra.mxu0 %v90
  %v330 = vpop.f32.mrf.mxu0
  %v331 = vadd.f32 %v167, %v330
  %v332 = vpop.f32.mrf.mxu0
  %333 = vmatprep.mubr.f32.mxu0 %v95
  %334 = vmatmul.mubr.f32.gmra.mxu0 %v94
  %v335 = vpop.f32.mrf.mxu0
  %v336 = vadd.f32 %v167, %v335
  %v337 = vpop.f32.mrf.mxu0
  %338 = vdwg.mxu0
  %339 = vmatprep.subr.mxu0 0.0
  %340 = vmatpush1.msra.mxu0 %v145
  %341 = vmatprep.subr.mxu0 0.0
  %342 = vmatpush1.msra.mxu0 %v144
  %343 = vmatprep.subr.mxu0 0.0
  %344 = vmatpush1.msra.mxu0 %v143
  %345 = vmatprep.subr.mxu0 0.0
  %346 = vmatpush1.msra.mxu0 %v142
  %347 = vmatprep.subr.mxu0 0.0
  %348 = vmatpush1.msra.mxu0 %v141
  %349 = vmatprep.subr.mxu0 0.0
  %350 = vmatpush1.msra.mxu0 %v140
  %351 = vmatprep.subr.mxu0 0.0
  %352 = vmatpush1.msra.mxu0 %v139
  %353 = vmatprep.subr.mxu0 0.0
  %354 = vmatpush1.msra.mxu0 %v138
  %355 = vmatprep.subr.mxu0 0.0
  %356 = vmatpush1.msra.mxu0 %v137
  %357 = vmatprep.subr.mxu0 0.0
  %358 = vmatpush1.msra.mxu0 %v136
  %359 = vmatprep.subr.mxu0 0.0
  %360 = vmatpush1.msra.mxu0 %v135
  %361 = vmatprep.subr.mxu0 0.0
  %362 = vmatpush1.msra.mxu0 %v134
  %363 = vmatprep.subr.mxu0 0.0
  %364 = vmatpush1.msra.mxu0 %v133
  %365 = vmatprep.subr.mxu0 0.0
  %366 = vmatpush1.msra.mxu0 %v132
  %367 = vmatprep.subr.mxu0 0.0
  %368 = vmatpush1.msra.mxu0 %v131
  %369 = vmatprep.subr.mxu0 0.0
  %370 = vmatpush1.msra.mxu0 %v130
  %371 = vmatprep.subr.mxu0 0.0
  %372 = vmatpush2.msra.mxu0 %v161
  %373 = vmatprep.subr.mxu0 0.0
  %374 = vmatpush2.msra.mxu0 %v160
  %375 = vmatprep.subr.mxu0 0.0
  %376 = vmatpush2.msra.mxu0 %v159
  %377 = vmatprep.subr.mxu0 0.0
  %378 = vmatpush2.msra.mxu0 %v158
  %379 = vmatprep.subr.mxu0 0.0
  %380 = vmatpush2.msra.mxu0 %v157
  %381 = vmatprep.subr.mxu0 0.0
  %382 = vmatpush2.msra.mxu0 %v156
  %383 = vmatprep.subr.mxu0 0.0
  %384 = vmatpush2.msra.mxu0 %v155
  %385 = vmatprep.subr.mxu0 0.0
  %386 = vmatpush2.msra.mxu0 %v154
  %387 = vmatprep.subr.mxu0 0.0
  %388 = vmatpush2.msra.mxu0 %v153
  %389 = vmatprep.subr.mxu0 0.0
  %390 = vmatpush2.msra.mxu0 %v152
  %391 = vmatprep.subr.mxu0 0.0
  %392 = vmatpush2.msra.mxu0 %v151
  %393 = vmatprep.subr.mxu0 0.0
  %394 = vmatpush2.msra.mxu0 %v150
  %395 = vmatprep.subr.mxu0 0.0
  %396 = vmatpush2.msra.mxu0 %v149
  %397 = vmatprep.subr.mxu0 0.0
  %398 = vmatpush2.msra.mxu0 %v148
  %399 = vmatprep.subr.mxu0 0.0
  %400 = vmatpush2.msra.mxu0 %v147
  %401 = vmatprep.subr.mxu0 0.0
  %402 = vmatpush2.msra.mxu0 %v146
  %403 = vmatprep.mubr.f32.mxu0 %v17
  %404 = vmatmul.mubr.f32.gmra.mxu0 %v16
  %v405 = vpop.f32.mrf.mxu0
  %v406 = vadd.f32 %v236, %v405
  %v407 = vpop.f32.mrf.mxu0
  %408 = vmatprep.mubr.f32.mxu0 %v21
  %409 = vmatmul.mubr.f32.gmra.mxu0 %v20
  %v410 = vpop.f32.mrf.mxu0
  %v411 = vadd.f32 %v241, %v410
  %v412 = vpop.f32.mrf.mxu0
  %413 = vmatprep.mubr.f32.mxu0 %v25
  %414 = vmatmul.mubr.f32.gmra.mxu0 %v24
  %v415 = vpop.f32.mrf.mxu0
  %v416 = vadd.f32 %v246, %v415
  %v417 = vpop.f32.mrf.mxu0
  %418 = vmatprep.mubr.f32.mxu0 %v29
  %419 = vmatmul.mubr.f32.gmra.mxu0 %v28
  %v420 = vpop.f32.mrf.mxu0
  %v421 = vadd.f32 %v251, %v420
  %v422 = vpop.f32.mrf.mxu0
  %423 = vmatprep.mubr.f32.mxu0 %v33
  %424 = vmatmul.mubr.f32.gmra.mxu0 %v32
  %v425 = vpop.f32.mrf.mxu0
  %v426 = vadd.f32 %v256, %v425
  %v427 = vpop.f32.mrf.mxu0
  %428 = vmatprep.mubr.f32.mxu0 %v37
  %429 = vmatmul.mubr.f32.gmra.mxu0 %v36
  %v430 = vpop.f32.mrf.mxu0
  %v431 = vadd.f32 %v261, %v430
  %v432 = vpop.f32.mrf.mxu0
  %433 = vmatprep.mubr.f32.mxu0 %v41
  %434 = vmatmul.mubr.f32.gmra.mxu0 %v40
  %v435 = vpop.f32.mrf.mxu0
  %v436 = vadd.f32 %v266, %v435
  %v437 = vpop.f32.mrf.mxu0
  %438 = vmatprep.mubr.f32.mxu0 %v45
  %439 = vmatmul.mubr.f32.gmra.mxu0 %v44
  %v440 = vpop.f32.mrf.mxu0
  %v441 = vadd.f32 %v271, %v440
  %v442 = vpop.f32.mrf.mxu0
  %443 = vmatprep.mubr.f32.mxu0 %v49
  %444 = vmatmul.mubr.f32.gmra.mxu0 %v48
  %v445 = vpop.f32.mrf.mxu0
  %v446 = vadd.f32 %v276, %v445
  %v447 = vpop.f32.mrf.mxu0
  %448 = vmatprep.mubr.f32.mxu0 %v53
  %449 = vmatmul.mubr.f32.gmra.mxu0 %v52
  %v450 = vpop.f32.mrf.mxu0
  %v451 = vadd.f32 %v281, %v450
  %v452 = vpop.f32.mrf.mxu0
  %453 = vmatprep.mubr.f32.mxu0 %v57
  %454 = vmatmul.mubr.f32.gmra.mxu0 %v56
  %v455 = vpop.f32.mrf.mxu0
  %v456 = vadd.f32 %v286, %v455
  %v457 = vpop.f32.mrf.mxu0
  %458 = vmatprep.mubr.f32.mxu0 %v61
  %459 = vmatmul.mubr.f32.gmra.mxu0 %v60
  %v460 = vpop.f32.mrf.mxu0
  %v461 = vadd.f32 %v291, %v460
  %v462 = vpop.f32.mrf.mxu0
  %463 = vmatprep.mubr.f32.mxu0 %v65
  %464 = vmatmul.mubr.f32.gmra.mxu0 %v64
  %v465 = vpop.f32.mrf.mxu0
  %v466 = vadd.f32 %v296, %v465
  %v467 = vpop.f32.mrf.mxu0
  %468 = vmatprep.mubr.f32.mxu0 %v69
  %469 = vmatmul.mubr.f32.gmra.mxu0 %v68
  %v470 = vpop.f32.mrf.mxu0
  %v471 = vadd.f32 %v301, %v470
  %v472 = vpop.f32.mrf.mxu0
  %473 = vmatprep.mubr.f32.mxu0 %v73
  %474 = vmatmul.mubr.f32.gmra.mxu0 %v72
  %v475 = vpop.f32.mrf.mxu0
  %v476 = vadd.f32 %v306, %v475
  %v477 = vpop.f32.mrf.mxu0
  %478 = vmatprep.mubr.f32.mxu0 %v77
  %479 = vmatmul.mubr.f32.gmra.mxu0 %v76
  %v480 = vpop.f32.mrf.mxu0
  %v481 = vadd.f32 %v311, %v480
  %v482 = vpop.f32.mrf.mxu0
  %483 = vmatprep.mubr.f32.mxu0 %v81
  %484 = vmatmul.mubr.f32.gmra.mxu0 %v80
  %v485 = vpop.f32.mrf.mxu0
  %v486 = vadd.f32 %v316, %v485
  %v487 = vpop.f32.mrf.mxu0
  %488 = vmatprep.mubr.f32.mxu0 %v85
  %489 = vmatmul.mubr.f32.gmra.mxu0 %v84
  %v490 = vpop.f32.mrf.mxu0
  %v491 = vadd.f32 %v321, %v490
  %v492 = vpop.f32.mrf.mxu0
  %493 = vmatprep.mubr.f32.mxu0 %v89
  %494 = vmatmul.mubr.f32.gmra.mxu0 %v88
  %v495 = vpop.f32.mrf.mxu0
  %v496 = vadd.f32 %v326, %v495
  %v497 = vpop.f32.mrf.mxu0
  %498 = vmatprep.mubr.f32.mxu0 %v93
  %499 = vmatmul.mubr.f32.gmra.mxu0 %v92
  %v500 = vpop.f32.mrf.mxu0
  %v501 = vadd.f32 %v331, %v500
  %v502 = vpop.f32.mrf.mxu0
  %503 = vmatprep.mubr.f32.mxu0 %v97
  %504 = vmatmul.mubr.f32.gmra.mxu0 %v96
  %v505 = vpop.f32.mrf.mxu0
  %v506 = vadd.f32 %v336, %v505
  %v507 = vpop.f32.mrf.mxu0
  %508 = vdwg.mxu0
  %v509 = vmax.f32 %v406, 0.0
  %v510 = vmax.f32 %v411, 0.0
  %v511 = vmax.f32 %v416, 0.0
  %v512 = vmax.f32 %v421, 0.0
  %v513 = vmax.f32 %v426, 0.0
  %v514 = vmax.f32 %v431, 0.0
  %v515 = vmax.f32 %v436, 0.0
  %v516 = vmax.f32 %v441, 0.0
  %v517 = vmax.f32 %v446, 0.0
  %v518 = vmax.f32 %v451, 0.0
  %v519 = vmax.f32 %v456, 0.0
  %v520 = vmax.f32 %v461, 0.0
  %v521 = vmax.f32 %v466, 0.0
  %v522 = vmax.f32 %v471, 0.0
  %v523 = vmax.f32 %v476, 0.0
  %v524 = vmax.f32 %v481, 0.0
  %v525 = vmax.f32 %v486, 0.0
  %v526 = vmax.f32 %v491, 0.0
  %v527 = vmax.f32 %v496, 0.0
  %v528 = vmax.f32 %v501, 0.0
  %v529 = vmax.f32 %v506, 0.0
  %vm530 = vcmask 523264
  %531 = vst.msk [vmem:[%s3] sm:$0xff] %vm530, %v509
  %532 = vst.msk [vmem:[%s3 + $0x8] sm:$0xff] %vm530, %v510
  %533 = vst.msk [vmem:[%s3 + $0x10] sm:$0xff] %vm530, %v511
  %534 = vst.msk [vmem:[%s3 + $0x18] sm:$0xff] %vm530, %v512
  %535 = vst.msk [vmem:[%s3 + $0x20] sm:$0xff] %vm530, %v513
  %536 = vst.msk [vmem:[%s3 + $0x28] sm:$0xff] %vm530, %v514
  %537 = vst.msk [vmem:[%s3 + $0x30] sm:$0xff] %vm530, %v515
  %538 = vst.msk [vmem:[%s3 + $0x38] sm:$0xff] %vm530, %v516
  %539 = vst.msk [vmem:[%s3 + $0x40] sm:$0xff] %vm530, %v517
  %540 = vst.msk [vmem:[%s3 + $0x48] sm:$0xff] %vm530, %v518
  %541 = vst.msk [vmem:[%s3 + $0x50] sm:$0xff] %vm530, %v519
  %542 = vst.msk [vmem:[%s3 + $0x58] sm:$0xff] %vm530, %v520
  %543 = vst.msk [vmem:[%s3 + $0x60] sm:$0xff] %vm530, %v521
  %544 = vst.msk [vmem:[%s3 + $0x68] sm:$0xff] %vm530, %v522
  %545 = vst.msk [vmem:[%s3 + $0x70] sm:$0xff] %vm530, %v523
  %546 = vst.msk [vmem:[%s3 + $0x78] sm:$0xff] %vm530, %v524
  %547 = vst.msk [vmem:[%s3 + $0x80] sm:$0xff] %vm530, %v525
  %548 = vst.msk [vmem:[%s3 + $0x88] sm:$0xff] %vm530, %v526
  %549 = vst.msk [vmem:[%s3 + $0x90] sm:$0xff] %vm530, %v527
  %550 = vst.msk [vmem:[%s3 + $0x98] sm:$0xff] %vm530, %v528
  %vm551 = vcmask 517120
  %552 = vst.msk [vmem:[%s3 + $0xa0] sm:$0x3] %vm551, %v529
  // Predicated region
  $region14: #{duelnet_forward.5} parent=0 // pred_check
    _
  $region15: #{duelnet_forward.5} parent=0 // pred_check_branch
    %554 = sbr.rel (0) target = $region17
  $region16: #{duelnet_forward.5} parent=0 // pred_region
    _
  $region17: #{duelnet_forward.5} parent=0 // pred_fallthru
    _
  // Predicated region
  $region18: #{duelnet_forward.5} parent=0 // pred_check
    _
  $region19: #{duelnet_forward.5} parent=0 // pred_check_branch
    %556 = sbr.rel (0) target = $region21
  $region20: #{duelnet_forward.5} parent=0 // pred_region
    _
  $region21: #{duelnet_forward.5} parent=0 // pred_fallthru
    _

// kernel: duelnet_forward.6
$region0: #{duelnet_forward.6}
  #allocation0 [shape = 'u32[]', space=smem, size = 0x4, offset = 0x4, fixed_abs, tag = 'smem constant byte address 0x4 - core index']
  #allocation1 [shape = 'u32[144,128]{1,0:T(1,128)}', space=vmem, size = 0x12000, scoped, tag = 'internal scratch']
  %s0 = inlined_call_operand.vmem [shape: f32[98,576], index: 0, kind: input, shape index: {}]
  %s1 = inlined_call_operand.vmem [shape: f32[576,64], index: 1, kind: input, shape index: {}]
  %s2 = inlined_call_operand.vmem [shape: f32[1,64], index: 2, kind: input, shape index: {}]
  %s3 = inlined_call_operand.vmem [shape: f32[98,64], index: 3, kind: output, shape index: {}]
  %s4 = sld [smem:[#allocation0]]
  $region22: #{duelnet_forward.6} parent=0
    _
  %s6 = ssub.s32 1, %s4
  %s7 = scalar_select 0, %s6, %s4
  // Predicated region
  $region2: #{duelnet_forward.6} parent=0 // pred_check
    _
  $region3: #{duelnet_forward.6} parent=0 // pred_check_branch
    %9 = sbr.rel (0) target = $region5
  $region4: #{duelnet_forward.6} parent=0 // pred_region
    _
  $region5: #{duelnet_forward.6} parent=0 // pred_fallthru
    _
  // Predicated region
  $region6: #{duelnet_forward.6} parent=0 // pred_check
    _
  $region7: #{duelnet_forward.6} parent=0 // pred_check_branch
    %11 = sbr.rel (0) target = $region9
  $region8: #{duelnet_forward.6} parent=0 // pred_region
    _
  $region9: #{duelnet_forward.6} parent=0 // pred_fallthru
    _
  // Predicated region
  $region10: #{duelnet_forward.6} parent=0 // pred_check
    _
  $region11: #{duelnet_forward.6} parent=0 // pred_check_branch
    %13 = sbr.rel (0) target = $region13
  $region12: #{duelnet_forward.6} parent=0 // pred_region
    _
  $region13: #{duelnet_forward.6} parent=0 // pred_fallthru
    _
  %v14 = vld [vmem:[%s0] sm:$0xff]
  %v15 = vld [vmem:[%s0 + $0x8] sm:$0xff]
  %v16 = vld [vmem:[%s0 + $0x10] sm:$0xff]
  %v17 = vld [vmem:[%s0 + $0x18] sm:$0xff]
  %v18 = vld [vmem:[%s0 + $0x20] sm:$0xff]
  %v19 = vld [vmem:[%s0 + $0x28] sm:$0xff]
  %v20 = vld [vmem:[%s0 + $0x30] sm:$0xff]
  %v21 = vld [vmem:[%s0 + $0x38] sm:$0xff]
  %v22 = vld [vmem:[%s0 + $0x40] sm:$0xff]
  %v23 = vld [vmem:[%s0 + $0x48] sm:$0xff]
  %v24 = vld [vmem:[%s0 + $0x50] sm:$0xff]
  %v25 = vld [vmem:[%s0 + $0x58] sm:$0xff]
  %v26 = vld [vmem:[%s0 + $0x60] sm:$0xff]
  %v27 = vld [vmem:[%s0 + $0x68] sm:$0xff]
  %v28 = vld [vmem:[%s0 + $0x70] sm:$0xff]
  %v29 = vld [vmem:[%s0 + $0x78] sm:$0xff]
  %v30 = vld [vmem:[%s0 + $0x80] sm:$0xff]
  %v31 = vld [vmem:[%s0 + $0x88] sm:$0xff]
  %v32 = vld [vmem:[%s0 + $0x90] sm:$0xff]
  %v33 = vld [vmem:[%s0 + $0x98] sm:$0xff]
  %v34 = vld [vmem:[%s0 + $0xa0] sm:$0xff]
  %v35 = vld [vmem:[%s0 + $0xa8] sm:$0xff]
  %v36 = vld [vmem:[%s0 + $0xb0] sm:$0xff]
  %v37 = vld [vmem:[%s0 + $0xb8] sm:$0xff]
  %v38 = vld [vmem:[%s0 + $0xc0] sm:$0xff]
  %v39 = vld [vmem:[%s0 + $0xc8] sm:$0xff]
  %v40 = vld [vmem:[%s0 + $0xd0] sm:$0xff]
  %v41 = vld [vmem:[%s0 + $0xd8] sm:$0xff]
  %v42 = vld [vmem:[%s0 + $0xe0] sm:$0xff]
  %v43 = vld [vmem:[%s0 + $0xe8] sm:$0xff]
  %v44 = vld [vmem:[%s0 + $0xf0] sm:$0xff]
  %v45 = vld [vmem:[%s0 + $0xf8] sm:$0xff]
  %v46 = vld [vmem:[%s0 + $0x100] sm:$0xff]
  %v47 = vld [vmem:[%s0 + $0x108] sm:$0xff]
  %v48 = vld [vmem:[%s0 + $0x110] sm:$0xff]
  %v49 = vld [vmem:[%s0 + $0x118] sm:$0xff]
  %v50 = vld [vmem:[%s0 + $0x120] sm:$0xff]
  %v51 = vld [vmem:[%s0 + $0x128] sm:$0xff]
  %v52 = vld [vmem:[%s0 + $0x130] sm:$0xff]
  %v53 = vld [vmem:[%s0 + $0x138] sm:$0xff]
  %v54 = vld [vmem:[%s0 + $0x140] sm:$0xff]
  %v55 = vld [vmem:[%s0 + $0x148] sm:$0xff]
  %v56 = vld [vmem:[%s0 + $0x150] sm:$0xff]
  %v57 = vld [vmem:[%s0 + $0x158] sm:$0xff]
  %v58 = vld [vmem:[%s0 + $0x160] sm:$0xff]
  %v59 = vld [vmem:[%s0 + $0x168] sm:$0xff]
  %v60 = vld [vmem:[%s0 + $0x170] sm:$0xff]
  %v61 = vld [vmem:[%s0 + $0x178] sm:$0xff]
  %v62 = vld [vmem:[%s0 + $0x180] sm:$0xff]
  %v63 = vld [vmem:[%s0 + $0x188] sm:$0xff]
  %v64 = vld [vmem:[%s0 + $0x190] sm:$0xff]
  %v65 = vld [vmem:[%s0 + $0x198] sm:$0xff]
  %v66 = vld [vmem:[%s0 + $0x1a0] sm:$0xff]
  %v67 = vld [vmem:[%s0 + $0x1a8] sm:$0xff]
  %v68 = vld [vmem:[%s0 + $0x1b0] sm:$0xff]
  %v69 = vld [vmem:[%s0 + $0x1b8] sm:$0xff]
  %v70 = vld [vmem:[%s0 + $0x1c0] sm:$0xff]
  %v71 = vld [vmem:[%s0 + $0x1c8] sm:$0xff]
  %v72 = vld [vmem:[%s0 + $0x1d0] sm:$0xff]
  %v73 = vld [vmem:[%s0 + $0x1d8] sm:$0xff]
  %v74 = vld [vmem:[%s0 + $0x1e0] sm:$0x3]
  %v75 = vld [vmem:[%s0 + $0x1e8] sm:$0x3]
  %v76 = vld [vmem:[%s0 + $0x1f0] sm:$0x3]
  %v77 = vld [vmem:[%s0 + $0x1f8] sm:$0x3]
  %v78 = vld [vmem:[%s0 + $0x200] sm:$0x3]
  %v79 = vld [vmem:[%s1] sm:$0xff]
  %v80 = vld [vmem:[%s1 + $0x8] sm:$0xff]
  %v81 = vld [vmem:[%s1 + $0x10] sm:$0xff]
  %v82 = vld [vmem:[%s1 + $0x18] sm:$0xff]
  %v83 = vld [vmem:[%s1 + $0x20] sm:$0xff]
  %v84 = vld [vmem:[%s1 + $0x28] sm:$0xff]
  %v85 = vld [vmem:[%s1 + $0x30] sm:$0xff]
  %v86 = vld [vmem:[%s1 + $0x38] sm:$0xff]
  %v87 = vld [vmem:[%s1 + $0x40] sm:$0xff]
  %v88 = vld [vmem:[%s1 + $0x48] sm:$0xff]
  %v89 = vld [vmem:[%s1 + $0x50] sm:$0xff]
  %v90 = vld [vmem:[%s1 + $0x58] sm:$0xff]
  %v91 = vld [vmem:[%s1 + $0x60] sm:$0xff]
  %v92 = vld [vmem:[%s1 + $0x68] sm:$0xff]
  %v93 = vld [vmem:[%s1 + $0x70] sm:$0xff]
  %v94 = vld [vmem:[%s1 + $0x78] sm:$0xff]
  %v95 = vld [vmem:[%s1 + $0x80] sm:$0xff]
  %v96 = vld [vmem:[%s1 + $0x88] sm:$0xff]
  %v97 = vld [vmem:[%s1 + $0x90] sm:$0xff]
  %v98 = vld [vmem:[%s1 + $0x98] sm:$0xff]
  %v99 = vld [vmem:[%s1 + $0xa0] sm:$0xff]
  %v100 = vld [vmem:[%s1 + $0xa8] sm:$0xff]
  %v101 = vld [vmem:[%s1 + $0xb0] sm:$0xff]
  %v102 = vld [vmem:[%s1 + $0xb8] sm:$0xff]
  %v103 = vld [vmem:[%s1 + $0xc0] sm:$0xff]
  %v104 = vld [vmem:[%s1 + $0xc8] sm:$0xff]
  %v105 = vld [vmem:[%s1 + $0xd0] sm:$0xff]
  %v106 = vld [vmem:[%s1 + $0xd8] sm:$0xff]
  %v107 = vld [vmem:[%s1 + $0xe0] sm:$0xff]
  %v108 = vld [vmem:[%s1 + $0xe8] sm:$0xff]
  %v109 = vld [vmem:[%s1 + $0xf0] sm:$0xff]
  %v110 = vld [vmem:[%s1 + $0xf8] sm:$0xff]
  %v111 = vld [vmem:[%s1 + $0x100] sm:$0xff]
  %v112 = vld [vmem:[%s1 + $0x108] sm:$0xff]
  %v113 = vld [vmem:[%s1 + $0x110] sm:$0xff]
  %v114 = vld [vmem:[%s1 + $0x118] sm:$0xff]
  %v115 = vld [vmem:[%s1 + $0x120] sm:$0xff]
  %v116 = vld [vmem:[%s1 + $0x128] sm:$0xff]
  %v117 = vld [vmem:[%s1 + $0x130] sm:$0xff]
  %v118 = vld [vmem:[%s1 + $0x138] sm:$0xff]
  %v119 = vld [vmem:[%s1 + $0x140] sm:$0xff]
  %v120 = vld [vmem:[%s1 + $0x148] sm:$0xff]
  %v121 = vld [vmem:[%s1 + $0x150] sm:$0xff]
  %v122 = vld [vmem:[%s1 + $0x158] sm:$0xff]
  %v123 = vld [vmem:[%s1 + $0x160] sm:$0xff]
  %v124 = vld [vmem:[%s1 + $0x168] sm:$0xff]
  %v125 = vld [vmem:[%s1 + $0x170] sm:$0xff]
  %v126 = vld [vmem:[%s1 + $0x178] sm:$0xff]
  %v127 = vld [vmem:[%s1 + $0x180] sm:$0xff]
  %v128 = vld [vmem:[%s1 + $0x188] sm:$0xff]
  %v129 = vld [vmem:[%s1 + $0x190] sm:$0xff]
  %v130 = vld [vmem:[%s1 + $0x198] sm:$0xff]
  %v131 = vld [vmem:[%s1 + $0x1a0] sm:$0xff]
  %v132 = vld [vmem:[%s1 + $0x1a8] sm:$0xff]
  %v133 = vld [vmem:[%s1 + $0x1b0] sm:$0xff]
  %v134 = vld [vmem:[%s1 + $0x1b8] sm:$0xff]
  %v135 = vld [vmem:[%s1 + $0x1c0] sm:$0xff]
  %v136 = vld [vmem:[%s1 + $0x1c8] sm:$0xff]
  %v137 = vld [vmem:[%s1 + $0x1d0] sm:$0xff]
  %v138 = vld [vmem:[%s1 + $0x1d8] sm:$0xff]
  %v139 = vld [vmem:[%s1 + $0x1e0] sm:$0xff]
  %v140 = vld [vmem:[%s1 + $0x1e8] sm:$0xff]
  %v141 = vld [vmem:[%s1 + $0x1f0] sm:$0xff]
  %v142 = vld [vmem:[%s1 + $0x1f8] sm:$0xff]
  %v143 = vld [vmem:[%s1 + $0x200] sm:$0xff]
  %v144 = vld [vmem:[%s1 + $0x208] sm:$0xff]
  %v145 = vld [vmem:[%s1 + $0x210] sm:$0xff]
  %v146 = vld [vmem:[%s1 + $0x218] sm:$0xff]
  %v147 = vld [vmem:[%s1 + $0x220] sm:$0xff]
  %v148 = vld [vmem:[%s1 + $0x228] sm:$0xff]
  %v149 = vld [vmem:[%s1 + $0x230] sm:$0xff]
  %v150 = vld [vmem:[%s1 + $0x238] sm:$0xff]
  %v151 = vld [vmem:[%s2] sm:$0x1]
  %v153 = vlaneseq
  %v154 = vshrl.u32 %v153, 7
  %v155 = vsub.s32 0, %v154
  %v156 = vrot.slane %v151, %v155
  %vm158 = vcmask 523264
  %v160 = vsel %vm158, %v18, 0
  %v163 = vsel %vm158, %v23, 0
  %v166 = vsel %vm158, %v28, 0
  %v169 = vsel %vm158, %v33, 0
  %v172 = vsel %vm158, %v38, 0
  %v175 = vsel %vm158, %v43, 0
  %v178 = vsel %vm158, %v48, 0
  %v181 = vsel %vm158, %v53, 0
  %v184 = vsel %vm158, %v58, 0
  %v187 = vsel %vm158, %v63, 0
  %v190 = vsel %vm158, %v68, 0
  %v193 = vsel %vm158, %v73, 0
  %v196 = vsel %vm158, %v78, 0
  %198 = vmatprep.subr.mxu0 0.0
  %199 = vmatpush1.msra.mxu0 %v94
  %200 = vmatprep.subr.mxu0 0.0
  %201 = vmatpush1.msra.mxu0 %v93
  %202 = vmatprep.subr.mxu0 0.0
  %203 = vmatpush1.msra.mxu0 %v92
  %204 = vmatprep.subr.mxu0 0.0
  %205 = vmatpush1.msra.mxu0 %v91
  %206 = vmatprep.subr.mxu0 0.0
  %207 = vmatpush1.msra.mxu0 %v90
  %208 = vmatprep.subr.mxu0 0.0
  %209 = vmatpush1.msra.mxu0 %v89
  %210 = vmatprep.subr.mxu0 0.0
  %211 = vmatpush1.msra.mxu0 %v88
  %212 = vmatprep.subr.mxu0 0.0
  %213 = vmatpush1.msra.mxu0 %v87
  %214 = vmatprep.subr.mxu0 0.0
  %215 = vmatpush1.msra.mxu0 %v86
  %216 = vmatprep.subr.mxu0 0.0
  %217 = vmatpush1.msra.mxu0 %v85
  %218 = vmatprep.subr.mxu0 0.0
  %219 = vmatpush1.msra.mxu0 %v84
  %220 = vmatprep.subr.mxu0 0.0
  %221 = vmatpush1.msra.mxu0 %v83
  %222 = vmatprep.subr.mxu0 0.0
  %223 = vmatpush1.msra.mxu0 %v82
  %224 = vmatprep.subr.mxu0 0.0
  %225 = vmatpush1.msra.mxu0 %v81
  %226 = vmatprep.subr.mxu0 0.0
  %227 = vmatpush1.msra.mxu0 %v80
  %228 = vmatprep.subr.mxu0 0.0
  %229 = vmatpush1.msra.mxu0 %v79
  %230 = vmatprep.subr.mxu0 0.0
  %231 = vmatpush2.msra.mxu0 %v110
  %232 = vmatprep.subr.mxu0 0.0
  %233 = vmatpush2.msra.mxu0 %v109
  %234 = vmatprep.subr.mxu0 0.0
  %235 = vmatpush2.msra.mxu0 %v108
  %236 = vmatprep.subr.mxu0 0.0
  %237 = vmatpush2.msra.mxu0 %v107
  %238 = vmatprep.subr.mxu0 0.0
  %239 = vmatpush2.msra.mxu0 %v106
  %240 = vmatprep.subr.mxu0 0.0
  %241 = vmatpush2.msra.mxu0 %v105
  %242 = vmatprep.subr.mxu0 0.0
  %243 = vmatpush2.msra.mxu0 %v104
  %244 = vmatprep.subr.mxu0 0.0
  %245 = vmatpush2.msra.mxu0 %v103
  %246 = vmatprep.subr.mxu0 0.0
  %247 = vmatpush2.msra.mxu0 %v102
  %248 = vmatprep.subr.mxu0 0.0
  %249 = vmatpush2.msra.mxu0 %v101
  %250 = vmatprep.subr.mxu0 0.0
  %251 = vmatpush2.msra.mxu0 %v100
  %252 = vmatprep.subr.mxu0 0.0
  %253 = vmatpush2.msra.mxu0 %v99
  %254 = vmatprep.subr.mxu0 0.0
  %255 = vmatpush2.msra.mxu0 %v98
  %256 = vmatprep.subr.mxu0 0.0
  %257 = vmatpush2.msra.mxu0 %v97
  %258 = vmatprep.subr.mxu0 0.0
  %259 = vmatpush2.msra.mxu0 %v96
  %260 = vmatprep.subr.mxu0 0.0
  %261 = vmatpush2.msra.mxu0 %v95
  %262 = vmatprep.mubr.f32.mxu0 %v15
  %263 = vmatmul.mubr.f32.gmra.mxu0 %v14
  %v264 = vpop.f32.mrf.mxu0
  %v265 = vadd.f32 %v156, %v264
  %v266 = vpop.f32.mrf.mxu0
  %267 = vmatprep.mubr.f32.mxu0 %v20
  %268 = vmatmul.mubr.f32.gmra.mxu0 %v19
  %v269 = vpop.f32.mrf.mxu0
  %v270 = vadd.f32 %v156, %v269
  %v271 = vpop.f32.mrf.mxu0
  %272 = vmatprep.mubr.f32.mxu0 %v25
  %273 = vmatmul.mubr.f32.gmra.mxu0 %v24
  %v274 = vpop.f32.mrf.mxu0
  %v275 = vadd.f32 %v156, %v274
  %v276 = vpop.f32.mrf.mxu0
  %277 = vmatprep.mubr.f32.mxu0 %v30
  %278 = vmatmul.mubr.f32.gmra.mxu0 %v29
  %v279 = vpop.f32.mrf.mxu0
  %v280 = vadd.f32 %v156, %v279
  %v281 = vpop.f32.mrf.mxu0
  %282 = vmatprep.mubr.f32.mxu0 %v35
  %283 = vmatmul.mubr.f32.gmra.mxu0 %v34
  %v284 = vpop.f32.mrf.mxu0
  %v285 = vadd.f32 %v156, %v284
  %v286 = vpop.f32.mrf.mxu0
  %287 = vmatprep.mubr.f32.mxu0 %v40
  %288 = vmatmul.mubr.f32.gmra.mxu0 %v39
  %v289 = vpop.f32.mrf.mxu0
  %v290 = vadd.f32 %v156, %v289
  %v291 = vpop.f32.mrf.mxu0
  %292 = vmatprep.mubr.f32.mxu0 %v45
  %293 = vmatmul.mubr.f32.gmra.mxu0 %v44
  %v294 = vpop.f32.mrf.mxu0
  %v295 = vadd.f32 %v156, %v294
  %v296 = vpop.f32.mrf.mxu0
  %297 = vmatprep.mubr.f32.mxu0 %v50
  %298 = vmatmul.mubr.f32.gmra.mxu0 %v49
  %v299 = vpop.f32.mrf.mxu0
  %v300 = vadd.f32 %v156, %v299
  %v301 = vpop.f32.mrf.mxu0
  %302 = vmatprep.mubr.f32.mxu0 %v55
  %303 = vmatmul.mubr.f32.gmra.mxu0 %v54
  %v304 = vpop.f32.mrf.mxu0
  %v305 = vadd.f32 %v156, %v304
  %v306 = vpop.f32.mrf.mxu0
  %307 = vmatprep.mubr.f32.mxu0 %v60
  %308 = vmatmul.mubr.f32.gmra.mxu0 %v59
  %v309 = vpop.f32.mrf.mxu0
  %v310 = vadd.f32 %v156, %v309
  %v311 = vpop.f32.mrf.mxu0
  %312 = vmatprep.mubr.f32.mxu0 %v65
  %313 = vmatmul.mubr.f32.gmra.mxu0 %v64
  %v314 = vpop.f32.mrf.mxu0
  %v315 = vadd.f32 %v156, %v314
  %v316 = vpop.f32.mrf.mxu0
  %317 = vmatprep.mubr.f32.mxu0 %v70
  %318 = vmatmul.mubr.f32.gmra.mxu0 %v69
  %v319 = vpop.f32.mrf.mxu0
  %v320 = vadd.f32 %v156, %v319
  %v321 = vpop.f32.mrf.mxu0
  %322 = vmatprep.mubr.f32.mxu0 %v75
  %323 = vmatmul.mubr.f32.gmra.mxu0 %v74
  %v324 = vpop.f32.mrf.mxu0
  %v325 = vadd.f32 %v156, %v324
  %v326 = vpop.f32.mrf.mxu0
  %327 = vdwg.mxu0
  %328 = vmatprep.subr.mxu0 0.0
  %329 = vmatpush1.msra.mxu0 %v126
  %330 = vmatprep.subr.mxu0 0.0
  %331 = vmatpush1.msra.mxu0 %v125
  %332 = vmatprep.subr.mxu0 0.0
  %333 = vmatpush1.msra.mxu0 %v124
  %334 = vmatprep.subr.mxu0 0.0
  %335 = vmatpush1.msra.mxu0 %v123
  %336 = vmatprep.subr.mxu0 0.0
  %337 = vmatpush1.msra.mxu0 %v122
  %338 = vmatprep.subr.mxu0 0.0
  %339 = vmatpush1.msra.mxu0 %v121
  %340 = vmatprep.subr.mxu0 0.0
  %341 = vmatpush1.msra.mxu0 %v120
  %342 = vmatprep.subr.mxu0 0.0
  %343 = vmatpush1.msra.mxu0 %v119
  %344 = vmatprep.subr.mxu0 0.0
  %345 = vmatpush1.msra.mxu0 %v118
  %346 = vmatprep.subr.mxu0 0.0
  %347 = vmatpush1.msra.mxu0 %v117
  %348 = vmatprep.subr.mxu0 0.0
  %349 = vmatpush1.msra.mxu0 %v116
  %350 = vmatprep.subr.mxu0 0.0
  %351 = vmatpush1.msra.mxu0 %v115
  %352 = vmatprep.subr.mxu0 0.0
  %353 = vmatpush1.msra.mxu0 %v114
  %354 = vmatprep.subr.mxu0 0.0
  %355 = vmatpush1.msra.mxu0 %v113
  %356 = vmatprep.subr.mxu0 0.0
  %357 = vmatpush1.msra.mxu0 %v112
  %358 = vmatprep.subr.mxu0 0.0
  %359 = vmatpush1.msra.mxu0 %v111
  %360 = vmatprep.subr.mxu0 0.0
  %361 = vmatpush2.msra.mxu0 %v142
  %362 = vmatprep.subr.mxu0 0.0
  %363 = vmatpush2.msra.mxu0 %v141
  %364 = vmatprep.subr.mxu0 0.0
  %365 = vmatpush2.msra.mxu0 %v140
  %366 = vmatprep.subr.mxu0 0.0
  %367 = vmatpush2.msra.mxu0 %v139
  %368 = vmatprep.subr.mxu0 0.0
  %369 = vmatpush2.msra.mxu0 %v138
  %370 = vmatprep.subr.mxu0 0.0
  %371 = vmatpush2.msra.mxu0 %v137
  %372 = vmatprep.subr.mxu0 0.0
  %373 = vmatpush2.msra.mxu0 %v136
  %374 = vmatprep.subr.mxu0 0.0
  %375 = vmatpush2.msra.mxu0 %v135
  %376 = vmatprep.subr.mxu0 0.0
  %377 = vmatpush2.msra.mxu0 %v134
  %378 = vmatprep.subr.mxu0 0.0
  %379 = vmatpush2.msra.mxu0 %v133
  %380 = vmatprep.subr.mxu0 0.0
  %381 = vmatpush2.msra.mxu0 %v132
  %382 = vmatprep.subr.mxu0 0.0
  %383 = vmatpush2.msra.mxu0 %v131
  %384 = vmatprep.subr.mxu0 0.0
  %385 = vmatpush2.msra.mxu0 %v130
  %386 = vmatprep.subr.mxu0 0.0
  %387 = vmatpush2.msra.mxu0 %v129
  %388 = vmatprep.subr.mxu0 0.0
  %389 = vmatpush2.msra.mxu0 %v128
  %390 = vmatprep.subr.mxu0 0.0
  %391 = vmatpush2.msra.mxu0 %v127
  %392 = vmatprep.mubr.f32.mxu0 %v17
  %393 = vmatmul.mubr.f32.gmra.mxu0 %v16
  %v394 = vpop.f32.mrf.mxu0
  %v395 = vadd.f32 %v265, %v394
  %v396 = vpop.f32.mrf.mxu0
  %397 = vmatprep.mubr.f32.mxu0 %v22
  %398 = vmatmul.mubr.f32.gmra.mxu0 %v21
  %v399 = vpop.f32.mrf.mxu0
  %v400 = vadd.f32 %v270, %v399
  %v401 = vpop.f32.mrf.mxu0
  %402 = vmatprep.mubr.f32.mxu0 %v27
  %403 = vmatmul.mubr.f32.gmra.mxu0 %v26
  %v404 = vpop.f32.mrf.mxu0
  %v405 = vadd.f32 %v275, %v404
  %v406 = vpop.f32.mrf.mxu0
  %407 = vmatprep.mubr.f32.mxu0 %v32
  %408 = vmatmul.mubr.f32.gmra.mxu0 %v31
  %v409 = vpop.f32.mrf.mxu0
  %v410 = vadd.f32 %v280, %v409
  %v411 = vpop.f32.mrf.mxu0
  %412 = vmatprep.mubr.f32.mxu0 %v37
  %413 = vmatmul.mubr.f32.gmra.mxu0 %v36
  %v414 = vpop.f32.mrf.mxu0
  %v415 = vadd.f32 %v285, %v414
  %v416 = vpop.f32.mrf.mxu0
  %417 = vmatprep.mubr.f32.mxu0 %v42
  %418 = vmatmul.mubr.f32.gmra.mxu0 %v41
  %v419 = vpop.f32.mrf.mxu0
  %v420 = vadd.f32 %v290, %v419
  %v421 = vpop.f32.mrf.mxu0
  %422 = vmatprep.mubr.f32.mxu0 %v47
  %423 = vmatmul.mubr.f32.gmra.mxu0 %v46
  %v424 = vpop.f32.mrf.mxu0
  %v425 = vadd.f32 %v295, %v424
  %v426 = vpop.f32.mrf.mxu0
  %427 = vmatprep.mubr.f32.mxu0 %v52
  %428 = vmatmul.mubr.f32.gmra.mxu0 %v51
  %v429 = vpop.f32.mrf.mxu0
  %v430 = vadd.f32 %v300, %v429
  %v431 = vpop.f32.mrf.mxu0
  %432 = vmatprep.mubr.f32.mxu0 %v57
  %433 = vmatmul.mubr.f32.gmra.mxu0 %v56
  %v434 = vpop.f32.mrf.mxu0
  %v435 = vadd.f32 %v305, %v434
  %v436 = vpop.f32.mrf.mxu0
  %437 = vmatprep.mubr.f32.mxu0 %v62
  %438 = vmatmul.mubr.f32.gmra.mxu0 %v61
  %v439 = vpop.f32.mrf.mxu0
  %v440 = vadd.f32 %v310, %v439
  %v441 = vpop.f32.mrf.mxu0
  %442 = vmatprep.mubr.f32.mxu0 %v67
  %443 = vmatmul.mubr.f32.gmra.mxu0 %v66
  %v444 = vpop.f32.mrf.mxu0
  %v445 = vadd.f32 %v315, %v444
  %v446 = vpop.f32.mrf.mxu0
  %447 = vmatprep.mubr.f32.mxu0 %v72
  %448 = vmatmul.mubr.f32.gmra.mxu0 %v71
  %v449 = vpop.f32.mrf.mxu0
  %v450 = vadd.f32 %v320, %v449
  %v451 = vpop.f32.mrf.mxu0
  %452 = vmatprep.mubr.f32.mxu0 %v77
  %453 = vmatmul.mubr.f32.gmra.mxu0 %v76
  %v454 = vpop.f32.mrf.mxu0
  %v455 = vadd.f32 %v325, %v454
  %v456 = vpop.f32.mrf.mxu0
  %457 = vdwg.mxu0
  %458 = vmatprep.subr.mxu0 0.0
  %459 = vmatpush1.msra.mxu0 0.0
  %460 = vmatprep.subr.mxu0 0.0
  %461 = vmatpush1.msra.mxu0 0.0
  %462 = vmatprep.subr.mxu0 0.0
  %463 = vmatpush1.msra.mxu0 0.0
  %464 = vmatprep.subr.mxu0 0.0
  %465 = vmatpush1.msra.mxu0 0.0
  %466 = vmatprep.subr.mxu0 0.0
  %467 = vmatpush1.msra.mxu0 0.0
  %468 = vmatprep.subr.mxu0 0.0
  %469 = vmatpush1.msra.mxu0 0.0
  %470 = vmatprep.subr.mxu0 0.0
  %471 = vmatpush1.msra.mxu0 0.0
  %472 = vmatprep.subr.mxu0 0.0
  %473 = vmatpush1.msra.mxu0 0.0
  %474 = vmatprep.subr.mxu0 0.0
  %475 = vmatpush1.msra.mxu0 %v150
  %476 = vmatprep.subr.mxu0 0.0
  %477 = vmatpush1.msra.mxu0 %v149
  %478 = vmatprep.subr.mxu0 0.0
  %479 = vmatpush1.msra.mxu0 %v148
  %480 = vmatprep.subr.mxu0 0.0
  %481 = vmatpush1.msra.mxu0 %v147
  %482 = vmatprep.subr.mxu0 0.0
  %483 = vmatpush1.msra.mxu0 %v146
  %484 = vmatprep.subr.mxu0 0.0
  %485 = vmatpush1.msra.mxu0 %v145
  %486 = vmatprep.subr.mxu0 0.0
  %487 = vmatpush1.msra.mxu0 %v144
  %488 = vmatprep.subr.mxu0 0.0
  %489 = vmatpush1.msra.mxu0 %v143
  %490 = vmatprep.subr.mxu0 0.0
  %491 = vmatpush2.msra.mxu0 0.0
  %492 = vmatprep.subr.mxu0 0.0
  %493 = vmatpush2.msra.mxu0 0.0
  %494 = vmatprep.subr.mxu0 0.0
  %495 = vmatpush2.msra.mxu0 0.0
  %496 = vmatprep.subr.mxu0 0.0
  %497 = vmatpush2.msra.mxu0 0.0
  %498 = vmatprep.subr.mxu0 0.0
  %499 = vmatpush2.msra.mxu0 0.0
  %500 = vmatprep.subr.mxu0 0.0
  %501 = vmatpush2.msra.mxu0 0.0
  %502 = vmatprep.subr.mxu0 0.0
  %503 = vmatpush2.msra.mxu0 0.0
  %504 = vmatprep.subr.mxu0 0.0
  %505 = vmatpush2.msra.mxu0 0.0
  %506 = vmatprep.subr.mxu0 0.0
  %507 = vmatpush2.msra.mxu0 0.0
  %508 = vmatprep.subr.mxu0 0.0
  %509 = vmatpush2.msra.mxu0 0.0
  %510 = vmatprep.subr.mxu0 0.0
  %511 = vmatpush2.msra.mxu0 0.0
  %512 = vmatprep.subr.mxu0 0.0
  %513 = vmatpush2.msra.mxu0 0.0
  %514 = vmatprep.subr.mxu0 0.0
  %515 = vmatpush2.msra.mxu0 0.0
  %516 = vmatprep.subr.mxu0 0.0
  %517 = vmatpush2.msra.mxu0 0.0
  %518 = vmatprep.subr.mxu0 0.0
  %519 = vmatpush2.msra.mxu0 0.0
  %520 = vmatprep.subr.mxu0 0.0
  %521 = vmatpush2.msra.mxu0 0.0
  %522 = vmatprep.mubr.f32.mxu0 0.0
  %523 = vmatmul.mubr.f32.gmra.mxu0 %v160
  %v524 = vpop.f32.mrf.mxu0
  %v525 = vadd.f32 %v395, %v524
  %v526 = vpop.f32.mrf.mxu0
  %527 = vmatprep.mubr.f32.mxu0 0.0
  %528 = vmatmul.mubr.f32.gmra.mxu0 %v163
  %v529 = vpop.f32.mrf.mxu0
  %v530 = vadd.f32 %v400, %v529
  %v531 = vpop.f32.mrf.mxu0
  %532 = vmatprep.mubr.f32.mxu0 0.0
  %533 = vmatmul.mubr.f32.gmra.mxu0 %v166
  %v534 = vpop.f32.mrf.mxu0
  %v535 = vadd.f32 %v405, %v534
  %v536 = vpop.f32.mrf.mxu0
  %537 = vmatprep.mubr.f32.mxu0 0.0
  %538 = vmatmul.mubr.f32.gmra.mxu0 %v169
  %v539 = vpop.f32.mrf.mxu0
  %v540 = vadd.f32 %v410, %v539
  %v541 = vpop.f32.mrf.mxu0
  %542 = vmatprep.mubr.f32.mxu0 0.0
  %543 = vmatmul.mubr.f32.gmra.mxu0 %v172
  %v544 = vpop.f32.mrf.mxu0
  %v545 = vadd.f32 %v415, %v544
  %v546 = vpop.f32.mrf.mxu0
  %547 = vmatprep.mubr.f32.mxu0 0.0
  %548 = vmatmul.mubr.f32.gmra.mxu0 %v175
  %v549 = vpop.f32.mrf.mxu0
  %v550 = vadd.f32 %v420, %v549
  %v551 = vpop.f32.mrf.mxu0
  %552 = vmatprep.mubr.f32.mxu0 0.0
  %553 = vmatmul.mubr.f32.gmra.mxu0 %v178
  %v554 = vpop.f32.mrf.mxu0
  %v555 = vadd.f32 %v425, %v554
  %v556 = vpop.f32.mrf.mxu0
  %557 = vmatprep.mubr.f32.mxu0 0.0
  %558 = vmatmul.mubr.f32.gmra.mxu0 %v181
  %v559 = vpop.f32.mrf.mxu0
  %v560 = vadd.f32 %v430, %v559
  %v561 = vpop.f32.mrf.mxu0
  %562 = vmatprep.mubr.f32.mxu0 0.0
  %563 = vmatmul.mubr.f32.gmra.mxu0 %v184
  %v564 = vpop.f32.mrf.mxu0
  %v565 = vadd.f32 %v435, %v564
  %v566 = vpop.f32.mrf.mxu0
  %567 = vmatprep.mubr.f32.mxu0 0.0
  %568 = vmatmul.mubr.f32.gmra.mxu0 %v187
  %v569 = vpop.f32.mrf.mxu0
  %v570 = vadd.f32 %v440, %v569
  %v571 = vpop.f32.mrf.mxu0
  %572 = vmatprep.mubr.f32.mxu0 0.0
  %573 = vmatmul.mubr.f32.gmra.mxu0 %v190
  %v574 = vpop.f32.mrf.mxu0
  %v575 = vadd.f32 %v445, %v574
  %v576 = vpop.f32.mrf.mxu0
  %577 = vmatprep.mubr.f32.mxu0 0.0
  %578 = vmatmul.mubr.f32.gmra.mxu0 %v193
  %v579 = vpop.f32.mrf.mxu0
  %v580 = vadd.f32 %v450, %v579
  %v581 = vpop.f32.mrf.mxu0
  %582 = vmatprep.mubr.f32.mxu0 0.0
  %583 = vmatmul.mubr.f32.gmra.mxu0 %v196
  %v584 = vpop.f32.mrf.mxu0
  %v585 = vadd.f32 %v455, %v584
  %v586 = vpop.f32.mrf.mxu0
  %587 = vdwg.mxu0
  %v588 = vmax.f32 %v525, 0.0
  %v589 = vmax.f32 %v530, 0.0
  %v590 = vmax.f32 %v535, 0.0
  %v591 = vmax.f32 %v540, 0.0
  %v592 = vmax.f32 %v545, 0.0
  %v593 = vmax.f32 %v550, 0.0
  %v594 = vmax.f32 %v555, 0.0
  %v595 = vmax.f32 %v560, 0.0
  %v596 = vmax.f32 %v565, 0.0
  %v597 = vmax.f32 %v570, 0.0
  %v598 = vmax.f32 %v575, 0.0
  %v599 = vmax.f32 %v580, 0.0
  %v600 = vmax.f32 %v585, 0.0
  %601 = vst.msk [vmem:[%s3] sm:$0xff] %vm158, %v588
  %602 = vst.msk [vmem:[%s3 + $0x8] sm:$0xff] %vm158, %v589
  %603 = vst.msk [vmem:[%s3 + $0x10] sm:$0xff] %vm158, %v590
  %604 = vst.msk [vmem:[%s3 + $0x18] sm:$0xff] %vm158, %v591
  %605 = vst.msk [vmem:[%s3 + $0x20] sm:$0xff] %vm158, %v592
  %606 = vst.msk [vmem:[%s3 + $0x28] sm:$0xff] %vm158, %v593
  %607 = vst.msk [vmem:[%s3 + $0x30] sm:$0xff] %vm158, %v594
  %608 = vst.msk [vmem:[%s3 + $0x38] sm:$0xff] %vm158, %v595
  %609 = vst.msk [vmem:[%s3 + $0x40] sm:$0xff] %vm158, %v596
  %610 = vst.msk [vmem:[%s3 + $0x48] sm:$0xff] %vm158, %v597
  %611 = vst.msk [vmem:[%s3 + $0x50] sm:$0xff] %vm158, %v598
  %612 = vst.msk [vmem:[%s3 + $0x58] sm:$0xff] %vm158, %v599
  %vm613 = vcmask 517120
  %614 = vst.msk [vmem:[%s3 + $0x60] sm:$0x3] %vm613, %v600
  // Predicated region
  $region14: #{duelnet_forward.6} parent=0 // pred_check
    _
  $region15: #{duelnet_forward.6} parent=0 // pred_check_branch
    %616 = sbr.rel (0) target = $region17
  $region16: #{duelnet_forward.6} parent=0 // pred_region
    _
  $region17: #{duelnet_forward.6} parent=0 // pred_fallthru
    _
  // Predicated region
  $region18: #{duelnet_forward.6} parent=0 // pred_check
    _
  $region19: #{duelnet_forward.6} parent=0 // pred_check_branch
    %618 = sbr.rel (0) target = $region21
  $region20: #{duelnet_forward.6} parent=0 // pred_region
    _
  $region21: #{duelnet_forward.6} parent=0 // pred_fallthru
    _

// kernel: duelnet_forward.7
$region0: #{duelnet_forward.7}
  #allocation0 [shape = 'u32[]', space=smem, size = 0x4, offset = 0x4, fixed_abs, tag = 'smem constant byte address 0x4 - core index']
  #allocation1 [shape = 'u32[144,128]{1,0:T(1,128)}', space=vmem, size = 0x12000, scoped, tag = 'internal scratch']
  #allocation2 [shape = 'f32[1,1]{1,0:T(1,128)S(1)}', space=vmem, size = 0x200, scoped, tag = 'scoped memory for duelnet_forward.7']
  %s0 = inlined_call_operand.vmem [shape: f32[2,3136], index: 0, kind: input, shape index: {}]
  %s1 = inlined_call_operand.vmem [shape: bf16[3136,1024], index: 1, kind: input, shape index: {}]
  %s2 = inlined_call_operand.vmem [shape: f32[1,1024], index: 2, kind: input, shape index: {}]
  %s3 = inlined_call_operand.vmem [shape: f32[512,3], index: 3, kind: input, shape index: {}]
  %s4 = inlined_call_operand.vmem [shape: f32[1,3], index: 4, kind: input, shape index: {}]
  %s5 = inlined_call_operand.vmem [shape: f32[512,1], index: 5, kind: input, shape index: {}]
  %s6 = inlined_call_operand.<no memory space> [shape: f32[1,1], index: 6, kind: input, shape index: {}]
  %s7 = inlined_call_operand.hbm [shape: f32[2,3], index: 7, kind: output, shape index: {}]
  %s8 = sld [smem:[#allocation0]]
  $region38: #{duelnet_forward.7} parent=0
    _
  %s10 = ssub.s32 1, %s8
  %s11 = scalar_select 0, %s10, %s8
  %v12 = vstv %s6
  %13 = vst [vmem:[#allocation2] sm:$0x1] %v12
  $region1: #{duelnet_forward.7} parent=0
    #allocation3 [shape = 'u8[1024]{0}', space=vmem, size = 0x400, scoped, tag = 'output window, operand 0, single buffered']
    #allocation4 [shape = 's32[1]{0}', space=sflag, size = 0x4, scoped, tag = 'scoped memory for duelnet_forward.7']
    %14 = vsyncpa [#allocation4], 0
    // Predicated region
    $region2: #{duelnet_forward.7} parent=1 // pred_check
      _
    $region3: #{duelnet_forward.7} parent=1 // pred_check_branch
      %16 = sbr.rel (0) target = $region5
    $region4: #{duelnet_forward.7} parent=1 // pred_region
      _
    $region5: #{duelnet_forward.7} parent=1 // pred_fallthru
      _
    // Predicated region
    $region6: #{duelnet_forward.7} parent=1 // pred_check
      _
    $region7: #{duelnet_forward.7} parent=1 // pred_check_branch
      %18 = sbr.rel (0) target = $region9
    $region8: #{duelnet_forward.7} parent=1 // pred_region
      _
    $region9: #{duelnet_forward.7} parent=1 // pred_fallthru
      _
    // Predicated region
    $region10: #{duelnet_forward.7} parent=1 // pred_check
      _
    $region11: #{duelnet_forward.7} parent=1 // pred_check_branch
      %20 = sbr.rel (0) target = $region13
    $region12: #{duelnet_forward.7} parent=1 // pred_region
      _
    $region13: #{duelnet_forward.7} parent=1 // pred_fallthru
      _
    // Predicated region
    $region14: #{duelnet_forward.7} parent=1 // pred_check
      _
    $region15: #{duelnet_forward.7} parent=1 // pred_check_branch
      %22 = sbr.rel (0) target = $region17
    $region16: #{duelnet_forward.7} parent=1 // pred_region
      _
    $region17: #{duelnet_forward.7} parent=1 // pred_fallthru
      _
    // Predicated region
    $region18: #{duelnet_forward.7} parent=1 // pred_check
      _
    $region19: #{duelnet_forward.7} parent=1 // pred_check_branch
      %24 = sbr.rel (0) target = $region21
    $region20: #{duelnet_forward.7} parent=1 // pred_region
      _
    $region21: #{duelnet_forward.7} parent=1 // pred_fallthru
      _
    // Predicated region
    $region22: #{duelnet_forward.7} parent=1 // pred_check
      _
    $region23: #{duelnet_forward.7} parent=1 // pred_check_branch
      %26 = sbr.rel (0) target = $region25
    $region24: #{duelnet_forward.7} parent=1 // pred_region
      _
    $region25: #{duelnet_forward.7} parent=1 // pred_fallthru
      _
    // Predicated region
    $region26: #{duelnet_forward.7} parent=1 // pred_check
      _
    $region27: #{duelnet_forward.7} parent=1 // pred_check_branch
      %28 = sbr.rel (0) target = $region29
    $region28: #{duelnet_forward.7} parent=1 // pred_region
      _
    $region29: #{duelnet_forward.7} parent=1 // pred_fallthru
      _
    %v30 = vld [vmem:[%s0] sm:$0xff]
    %v31 = vld [vmem:[%s0 + $0x8] sm:$0xff]
    %v32 = vld [vmem:[%s0 + $0x10] sm:$0xff]
    %v33 = vld [vmem:[%s0 + $0x18] sm:$0xff]
    %v34 = vld [vmem:[%s0 + $0x20] sm:$0xff]
    %v35 = vld [vmem:[%s0 + $0x28] sm:$0xff]
    %v36 = vld [vmem:[%s0 + $0x30] sm:$0x3]
    %v44 = vcombine.high %v30, %v30
    %v46 = vunpack.c.l.s4 1983009808
    %v47 = vunpack.c.0.s8 %v46
    %v48 = vlaneseq
    %v49 = vshrl.u32 %v48, 7
    %v50 = vsub.s32 %v47, %v49
    %v51 = vrot.slane %v30, %v50
    %v53 = vunpack.c.l.s4 1983009808
    %v54 = vunpack.c.0.s8 %v53
    %v55 = vlaneseq
    %v56 = vshrl.u32 %v55, 7
    %v57 = vsub.s32 %v54, %v56
    %v58 = vrot.slane %v44, %v57
    %v59 = vcombine.high %v51, %v51
    %v60 = vcombine.high %v58, %v58
    %v61 = vcombine.high %v31, %v31
    %v63 = vunpack.c.l.s4 1983009808
    %v64 = vunpack.c.0.s8 %v63
    %v65 = vlaneseq
    %v66 = vshrl.u32 %v65, 7
    %v67 = vsub.s32 %v64, %v66
    %v68 = vrot.slane %v31, %v67
    %v70 = vunpack.c.l.s4 1983009808
    %v71 = vunpack.c.0.s8 %v70
    %v72 = vlaneseq
    %v73 = vshrl.u32 %v72, 7
    %v74 = vsub.s32 %v71, %v73
    %v75 = vrot.slane %v61, %v74
    %v76 = vcombine.high %v68, %v68
    %v77 = vcombine.high %v75, %v75
    %v78 = vcombine.high %v32, %v32
    %v80 = vunpack.c.l.s4 1983009808
    %v81 = vunpack.c.0.s8 %v80
    %v82 = vlaneseq
    %v83 = vshrl.u32 %v82, 7
    %v84 = vsub.s32 %v81, %v83
    %v85 = vrot.slane %v32, %v84
    %v87 = vunpack.c.l.s4 1983009808
    %v88 = vunpack.c.0.s8 %v87
    %v89 = vlaneseq
    %v90 = vshrl.u32 %v89, 7
    %v91 = vsub.s32 %v88, %v90
    %v92 = vrot.slane %v78, %v91
    %v93 = vcombine.high %v85, %v85
    %v94 = vcombine.high %v92, %v92
    %v95 = vcombine.high %v33, %v33
    %v97 = vunpack.c.l.s4 1983009808
    %v98 = vunpack.c.0.s8 %v97
    %v99 = vlaneseq
    %v100 = vshrl.u32 %v99, 7
    %v101 = vsub.s32 %v98, %v100
    %v102 = vrot.slane %v33, %v101
    %v104 = vunpack.c.l.s4 1983009808
    %v105 = vunpack.c.0.s8 %v104
    %v106 = vlaneseq
    %v107 = vshrl.u32 %v106, 7
    %v108 = vsub.s32 %v105, %v107
    %v109 = vrot.slane %v95, %v108
    %v110 = vcombine.high %v102, %v102
    %v111 = vcombine.high %v109, %v109
    %v112 = vcombine.high %v34, %v34
    %v114 = vunpack.c.l.s4 1983009808
    %v115 = vunpack.c.0.s8 %v114
    %v116 = vlaneseq
    %v117 = vshrl.u32 %v116, 7
    %v118 = vsub.s32 %v115, %v117
    %v119 = vrot.slane %v34, %v118
    %v121 = vunpack.c.l.s4 1983009808
    %v122 = vunpack.c.0.s8 %v121
    %v123 = vlaneseq
    %v124 = vshrl.u32 %v123, 7
    %v125 = vsub.s32 %v122, %v124
    %v126 = vrot.slane %v112, %v125
    %v127 = vcombine.high %v119, %v119
    %v128 = vcombine.high %v126, %v126
    %v129 = vcombine.high %v35, %v35
    %v131 = vunpack.c.l.s4 1983009808
    %v132 = vunpack.c.0.s8 %v131
    %v133 = vlaneseq
    %v134 = vshrl.u32 %v133, 7
    %v135 = vsub.s32 %v132, %v134
    %v136 = vrot.slane %v35, %v135
    %v138 = vunpack.c.l.s4 1983009808
    %v139 = vunpack.c.0.s8 %v138
    %v140 = vlaneseq
    %v141 = vshrl.u32 %v140, 7
    %v142 = vsub.s32 %v139, %v141
    %v143 = vrot.slane %v129, %v142
    %v144 = vcombine.high %v136, %v136
    %v145 = vcombine.high %v143, %v143
    %v147 = vunpack.c.l.s4 1983009808
    %v148 = vunpack.c.0.s8 %v147
    %v149 = vlaneseq
    %v150 = vshrl.u32 %v149, 7
    %v151 = vsub.s32 %v148, %v150
    %v152 = vrot.slane %v36, %v151
    %v178 = vpack.c.bf16 %v51, %v51
    %v179 = vpack.c.bf16 %v59, %v59
    %v180 = vpack.c.bf16 %v58, %v58
    %v181 = vpack.c.bf16 %v60, %v60
    %v182 = vpack.c.bf16 %v68, %v68
    %v183 = vpack.c.bf16 %v76, %v76
    %v184 = vpack.c.bf16 %v75, %v75
    %v185 = vpack.c.bf16 %v77, %v77
    %v186 = vpack.c.bf16 %v85, %v85
    %v187 = vpack.c.bf16 %v93, %v93
    %v188 = vpack.c.bf16 %v92, %v92
    %v189 = vpack.c.bf16 %v94, %v94
    %v190 = vpack.c.bf16 %v102, %v102
    %v191 = vpack.c.bf16 %v110, %v110
    %v192 = vpack.c.bf16 %v109, %v109
    %v193 = vpack.c.bf16 %v111, %v111
    %v194 = vpack.c.bf16 %v119, %v119
    %v195 = vpack.c.bf16 %v127, %v127
    %v196 = vpack.c.bf16 %v126, %v126
    %v197 = vpack.c.bf16 %v128, %v128
    %v198 = vpack.c.bf16 %v136, %v136
    %v199 = vpack.c.bf16 %v144, %v144
    %v200 = vpack.c.bf16 %v143, %v143
    %v201 = vpack.c.bf16 %v145, %v145
    %v202 = vpack.c.bf16 %v152, %v152
    %v203 = vld [vmem:[%s1] sm:$0xff]
    %v204 = vld [vmem:[%s1 + $0x8] sm:$0xff]
    %v205 = vld [vmem:[%s1 + $0x10] sm:$0xff]
    %v206 = vld [vmem:[%s1 + $0x18] sm:$0xff]
    %v207 = vld [vmem:[%s1 + $0x20] sm:$0xff]
    %v208 = vld [vmem:[%s1 + $0x28] sm:$0xff]
    %v209 = vld [vmem:[%s1 + $0x30] sm:$0xff]
    %v210 = vld [vmem:[%s1 + $0x38] sm:$0xff]
    %v211 = vld [vmem:[%s1 + $0x40] sm:$0xff]
    %v212 = vld [vmem:[%s1 + $0x48] sm:$0xff]
    %v213 = vld [vmem:[%s1 + $0x50] sm:$0xff]
    %v214 = vld [vmem:[%s1 + $0x58] sm:$0xff]
    %v215 = vld [vmem:[%s1 + $0x60] sm:$0xff]
    %v216 = vld [vmem:[%s1 + $0x68] sm:$0xff]
    %v217 = vld [vmem:[%s1 + $0x70] sm:$0xff]
    %v218 = vld [vmem:[%s1 + $0x78] sm:$0xff]
    %v219 = vld [vmem:[%s1 + $0x80] sm:$0xff]
    %v220 = vld [vmem:[%s1 + $0x88] sm:$0xff]
    %v221 = vld [vmem:[%s1 + $0x90] sm:$0xff]
    %v222 = vld [vmem:[%s1 + $0x98] sm:$0xff]
    %v223 = vld [vmem:[%s1 + $0xa0] sm:$0xff]
    %v224 = vld [vmem:[%s1 + $0xa8] sm:$0xff]
    %v225 = vld [vmem:[%s1 + $0xb0] sm:$0xff]
    %v226 = vld [vmem:[%s1 + $0xb8] sm:$0xff]
    %v227 = vld [vmem:[%s1 + $0xc0] sm:$0xff]
    %v228 = vld [vmem:[%s1 + $0xc8] sm:$0xff]
    %v229 = vld [vmem:[%s1 + $0xd0] sm:$0xff]
    %v230 = vld [vmem:[%s1 + $0xd8] sm:$0xff]
    %v231 = vld [vmem:[%s1 + $0xe0] sm:$0xff]
    %v232 = vld [vmem:[%s1 + $0xe8] sm:$0xff]
    %v233 = vld [vmem:[%s1 + $0xf0] sm:$0xff]
    %v234 = vld [vmem:[%s1 + $0xf8] sm:$0xff]
    %v235 = vld [vmem:[%s1 + $0x100] sm:$0xff]
    %v236 = vld [vmem:[%s1 + $0x108] sm:$0xff]
    %v237 = vld [vmem:[%s1 + $0x110] sm:$0xff]
    %v238 = vld [vmem:[%s1 + $0x118] sm:$0xff]
    %v239 = vld [vmem:[%s1 + $0x120] sm:$0xff]
    %v240 = vld [vmem:[%s1 + $0x128] sm:$0xff]
    %v241 = vld [vmem:[%s1 + $0x130] sm:$0xff]
    %v242 = vld [vmem:[%s1 + $0x138] sm:$0xff]
    %v243 = vld [vmem:[%s1 + $0x140] sm:$0xff]
    %v244 = vld [vmem:[%s1 + $0x148] sm:$0xff]
    %v245 = vld [vmem:[%s1 + $0x150] sm:$0xff]
    %v246 = vld [vmem:[%s1 + $0x158] sm:$0xff]
    %v247 = vld [vmem:[%s1 + $0x160] sm:$0xff]
    %v248 = vld [vmem:[%s1 + $0x168] sm:$0xff]
    %v249 = vld [vmem:[%s1 + $0x170] sm:$0xff]
    %v250 = vld [vmem:[%s1 + $0x178] sm:$0xff]
    %v251 = vld [vmem:[%s1 + $0x180] sm:$0xff]
    %v252 = vld [vmem:[%s1 + $0x188] sm:$0xff]
    %v253 = vld [vmem:[%s1 + $0x190] sm:$0xff]
    %v254 = vld [vmem:[%s1 + $0x198] sm:$0xff]
    %v255 = vld [vmem:[%s1 + $0x1a0] sm:$0xff]
    %v256 = vld [vmem:[%s1 + $0x1a8] sm:$0xff]
    %v257 = vld [vmem:[%s1 + $0x1b0] sm:$0xff]
    %v258 = vld [vmem:[%s1 + $0x1b8] sm:$0xff]
    %v259 = vld [vmem:[%s1 + $0x1c0] sm:$0xff]
    %v260 = vld [vmem:[%s1 + $0x1c8] sm:$0xff]
    %v261 = vld [vmem:[%s1 + $0x1d0] sm:$0xff]
    %v262 = vld [vmem:[%s1 + $0x1d8] sm:$0xff]
    %v263 = vld [vmem:[%s1 + $0x1e0] sm:$0xff]
    %v264 = vld [vmem:[%s1 + $0x1e8] sm:$0xff]
    %v265 = vld [vmem:[%s1 + $0x1f0] sm:$0xff]
    %v266 = vld [vmem:[%s1 + $0x1f8] sm:$0xff]
    %v267 = vld [vmem:[%s1 + $0x200] sm:$0xff]
    %v268 = vld [vmem:[%s1 + $0x208] sm:$0xff]
    %v269 = vld [vmem:[%s1 + $0x210] sm:$0xff]
    %v270 = vld [vmem:[%s1 + $0x218] sm:$0xff]
    %v271 = vld [vmem:[%s1 + $0x220] sm:$0xff]
    %v272 = vld [vmem:[%s1 + $0x228] sm:$0xff]
    %v273 = vld [vmem:[%s1 + $0x230] sm:$0xff]
    %v274 = vld [vmem:[%s1 + $0x238] sm:$0xff]
    %v275 = vld [vmem:[%s1 + $0x240] sm:$0xff]
    %v276 = vld [vmem:[%s1 + $0x248] sm:$0xff]
    %v277 = vld [vmem:[%s1 + $0x250] sm:$0xff]
    %v278 = vld [vmem:[%s1 + $0x258] sm:$0xff]
    %v279 = vld [vmem:[%s1 + $0x260] sm:$0xff]
    %v280 = vld [vmem:[%s1 + $0x268] sm:$0xff]
    %v281 = vld [vmem:[%s1 + $0x270] sm:$0xff]
    %v282 = vld [vmem:[%s1 + $0x278] sm:$0xff]
    %v283 = vld [vmem:[%s1 + $0x280] sm:$0xff]
    %v284 = vld [vmem:[%s1 + $0x288] sm:$0xff]
    %v285 = vld [vmem:[%s1 + $0x290] sm:$0xff]
    %v286 = vld [vmem:[%s1 + $0x298] sm:$0xff]
    %v287 = vld [vmem:[%s1 + $0x2a0] sm:$0xff]
    %v288 = vld [vmem:[%s1 + $0x2a8] sm:$0xff]
    %v289 = vld [vmem:[%s1 + $0x2b0] sm:$0xff]
    %v290 = vld [vmem:[%s1 + $0x2b8] sm:$0xff]
    %v291 = vld [vmem:[%s1 + $0x2c0] sm:$0xff]
    %v292 = vld [vmem:[%s1 + $0x2c8] sm:$0xff]
    %v293 = vld [vmem:[%s1 + $0x2d0] sm:$0xff]
    %v294 = vld [vmem:[%s1 + $0x2d8] sm:$0xff]
    %v295 = vld [vmem:[%s1 + $0x2e0] sm:$0xff]
    %v296 = vld [vmem:[%s1 + $0x2e8] sm:$0xff]
    %v297 = vld [vmem:[%s1 + $0x2f0] sm:$0xff]
    %v298 = vld [vmem:[%s1 + $0x2f8] sm:$0xff]
    %v299 = vld [vmem:[%s1 + $0x300] sm:$0xff]
    %v300 = vld [vmem:[%s1 + $0x308] sm:$0xff]
    %v301 = vld [vmem:[%s1 + $0x310] sm:$0xff]
    %v302 = vld [vmem:[%s1 + $0x318] sm:$0xff]
    %v303 = vld [vmem:[%s1 + $0x320] sm:$0xff]
    %v304 = vld [vmem:[%s1 + $0x328] sm:$0xff]
    %v305 = vld [vmem:[%s1 + $0x330] sm:$0xff]
    %v306 = vld [vmem:[%s1 + $0x338] sm:$0xff]
    %v307 = vld [vmem:[%s1 + $0x340] sm:$0xff]
    %v308 = vld [vmem:[%s1 + $0x348] sm:$0xff]
    %v309 = vld [vmem:[%s1 + $0x350] sm:$0xff]
    %v310 = vld [vmem:[%s1 + $0x358] sm:$0xff]
    %v311 = vld [vmem:[%s1 + $0x360] sm:$0xff]
    %v312 = vld [vmem:[%s1 + $0x368] sm:$0xff]
    %v313 = vld [vmem:[%s1 + $0x370] sm:$0xff]
    %v314 = vld [vmem:[%s1 + $0x378] sm:$0xff]
    %v315 = vld [vmem:[%s1 + $0x380] sm:$0xff]
    %v316 = vld [vmem:[%s1 + $0x388] sm:$0xff]
    %v317 = vld [vmem:[%s1 + $0x390] sm:$0xff]
    %v318 = vld [vmem:[%s1 + $0x398] sm:$0xff]
    %v319 = vld [vmem:[%s1 + $0x3a0] sm:$0xff]
    %v320 = vld [vmem:[%s1 + $0x3a8] sm:$0xff]
    %v321 = vld [vmem:[%s1 + $0x3b0] sm:$0xff]
    %v322 = vld [vmem:[%s1 + $0x3b8] sm:$0xff]
    %v323 = vld [vmem:[%s1 + $0x3c0] sm:$0xff]
    %v324 = vld [vmem:[%s1 + $0x3c8] sm:$0xff]
    %v325 = vld [vmem:[%s1 + $0x3d0] sm:$0xff]
    %v326 = vld [vmem:[%s1 + $0x3d8] sm:$0xff]
    %v327 = vld [vmem:[%s1 + $0x3e0] sm:$0xff]
    %v328 = vld [vmem:[%s1 + $0x3e8] sm:$0xff]
    %v329 = vld [vmem:[%s1 + $0x3f0] sm:$0xff]
    %v330 = vld [vmem:[%s1 + $0x3f8] sm:$0xff]
    %v331 = vld [vmem:[%s1 + $0x400] sm:$0xff]
    %v332 = vld [vmem:[%s1 + $0x408] sm:$0xff]
    %v333 = vld [vmem:[%s1 + $0x410] sm:$0xff]
    %v334 = vld [vmem:[%s1 + $0x418] sm:$0xff]
    %v335 = vld [vmem:[%s1 + $0x420] sm:$0xff]
    %v336 = vld [vmem:[%s1 + $0x428] sm:$0xff]
    %v337 = vld [vmem:[%s1 + $0x430] sm:$0xff]
    %v338 = vld [vmem:[%s1 + $0x438] sm:$0xff]
    %v339 = vld [vmem:[%s1 + $0x440] sm:$0xff]
    %v340 = vld [vmem:[%s1 + $0x448] sm:$0xff]
    %v341 = vld [vmem:[%s1 + $0x450] sm:$0xff]
    %v342 = vld [vmem:[%s1 + $0x458] sm:$0xff]
    %v343 = vld [vmem:[%s1 + $0x460] sm:$0xff]
    %v344 = vld [vmem:[%s1 + $0x468] sm:$0xff]
    %v345 = vld [vmem:[%s1 + $0x470] sm:$0xff]
    %v346 = vld [vmem:[%s1 + $0x478] sm:$0xff]
    %v347 = vld [vmem:[%s1 + $0x480] sm:$0xff]
    %v348 = vld [vmem:[%s1 + $0x488] sm:$0xff]
    %v349 = vld [vmem:[%s1 + $0x490] sm:$0xff]
    %v350 = vld [vmem:[%s1 + $0x498] sm:$0xff]
    %v351 = vld [vmem:[%s1 + $0x4a0] sm:$0xff]
    %v352 = vld [vmem:[%s1 + $0x4a8] sm:$0xff]
    %v353 = vld [vmem:[%s1 + $0x4b0] sm:$0xff]
    %v354 = vld [vmem:[%s1 + $0x4b8] sm:$0xff]
    %v355 = vld [vmem:[%s1 + $0x4c0] sm:$0xff]
    %v356 = vld [vmem:[%s1 + $0x4c8] sm:$0xff]
    %v357 = vld [vmem:[%s1 + $0x4d0] sm:$0xff]
    %v358 = vld [vmem:[%s1 + $0x4d8] sm:$0xff]
    %v359 = vld [vmem:[%s1 + $0x4e0] sm:$0xff]
    %v360 = vld [vmem:[%s1 + $0x4e8] sm:$0xff]
    %v361 = vld [vmem:[%s1 + $0x4f0] sm:$0xff]
    %v362 = vld [vmem:[%s1 + $0x4f8] sm:$0xff]
    %v363 = vld [vmem:[%s1 + $0x500] sm:$0xff]
    %v364 = vld [vmem:[%s1 + $0x508] sm:$0xff]
    %v365 = vld [vmem:[%s1 + $0x510] sm:$0xff]
    %v366 = vld [vmem:[%s1 + $0x518] sm:$0xff]
    %v367 = vld [vmem:[%s1 + $0x520] sm:$0xff]
    %v368 = vld [vmem:[%s1 + $0x528] sm:$0xff]
    %v369 = vld [vmem:[%s1 + $0x530] sm:$0xff]
    %v370 = vld [vmem:[%s1 + $0x538] sm:$0xff]
    %v371 = vld [vmem:[%s1 + $0x540] sm:$0xff]
    %v372 = vld [vmem:[%s1 + $0x548] sm:$0xff]
    %v373 = vld [vmem:[%s1 + $0x550] sm:$0xff]
    %v374 = vld [vmem:[%s1 + $0x558] sm:$0xff]
    %v375 = vld [vmem:[%s1 + $0x560] sm:$0xff]
    %v376 = vld [vmem:[%s1 + $0x568] sm:$0xff]
    %v377 = vld [vmem:[%s1 + $0x570] sm:$0xff]
    %v378 = vld [vmem:[%s1 + $0x578] sm:$0xff]
    %v379 = vld [vmem:[%s1 + $0x580] sm:$0xff]
    %v380 = vld [vmem:[%s1 + $0x588] sm:$0xff]
    %v381 = vld [vmem:[%s1 + $0x590] sm:$0xff]
    %v382 = vld [vmem:[%s1 + $0x598] sm:$0xff]
    %v383 = vld [vmem:[%s1 + $0x5a0] sm:$0xff]
    %v384 = vld [vmem:[%s1 + $0x5a8] sm:$0xff]
    %v385 = vld [vmem:[%s1 + $0x5b0] sm:$0xff]
    %v386 = vld [vmem:[%s1 + $0x5b8] sm:$0xff]
    %v387 = vld [vmem:[%s1 + $0x5c0] sm:$0xff]
    %v388 = vld [vmem:[%s1 + $0x5c8] sm:$0xff]
    %v389 = vld [vmem:[%s1 + $0x5d0] sm:$0xff]
    %v390 = vld [vmem:[%s1 + $0x5d8] sm:$0xff]
    %v391 = vld [vmem:[%s1 + $0x5e0] sm:$0xff]
    %v392 = vld [vmem:[%s1 + $0x5e8] sm:$0xff]
    %v393 = vld [vmem:[%s1 + $0x5f0] sm:$0xff]
    %v394 = vld [vmem:[%s1 + $0x5f8] sm:$0xff]
    %v395 = vld [vmem:[%s1 + $0x600] sm:$0xff]
    %v396 = vld [vmem:[%s1 + $0x608] sm:$0xff]
    %v397 = vld [vmem:[%s1 + $0x610] sm:$0xff]
    %v398 = vld [vmem:[%s1 + $0x618] sm:$0xff]
    %v399 = vld [vmem:[%s1 + $0x620] sm:$0xff]
    %v400 = vld [vmem:[%s1 + $0x628] sm:$0xff]
    %v401 = vld [vmem:[%s1 + $0x630] sm:$0xff]
    %v402 = vld [vmem:[%s1 + $0x638] sm:$0xff]
    %v403 = vld [vmem:[%s1 + $0x640] sm:$0xff]
    %v404 = vld [vmem:[%s1 + $0x648] sm:$0xff]
    %v405 = vld [vmem:[%s1 + $0x650] sm:$0xff]
    %v406 = vld [vmem:[%s1 + $0x658] sm:$0xff]
    %v407 = vld [vmem:[%s1 + $0x660] sm:$0xff]
    %v408 = vld [vmem:[%s1 + $0x668] sm:$0xff]
    %v409 = vld [vmem:[%s1 + $0x670] sm:$0xff]
    %v410 = vld [vmem:[%s1 + $0x678] sm:$0xff]
    %v411 = vld [vmem:[%s1 + $0x680] sm:$0xff]
    %v412 = vld [vmem:[%s1 + $0x688] sm:$0xff]
    %v413 = vld [vmem:[%s1 + $0x690] sm:$0xff]
    %v414 = vld [vmem:[%s1 + $0x698] sm:$0xff]
    %v415 = vld [vmem:[%s1 + $0x6a0] sm:$0xff]
    %v416 = vld [vmem:[%s1 + $0x6a8] sm:$0xff]
    %v417 = vld [vmem:[%s1 + $0x6b0] sm:$0xff]
    %v418 = vld [vmem:[%s1 + $0x6b8] sm:$0xff]
    %v419 = vld [vmem:[%s1 + $0x6c0] sm:$0xff]
    %v420 = vld [vmem:[%s1 + $0x6c8] sm:$0xff]
    %v421 = vld [vmem:[%s1 + $0x6d0] sm:$0xff]
    %v422 = vld [vmem:[%s1 + $0x6d8] sm:$0xff]
    %v423 = vld [vmem:[%s1 + $0x6e0] sm:$0xff]
    %v424 = vld [vmem:[%s1 + $0x6e8] sm:$0xff]
    %v425 = vld [vmem:[%s1 + $0x6f0] sm:$0xff]
    %v426 = vld [vmem:[%s1 + $0x6f8] sm:$0xff]
    %v427 = vld [vmem:[%s1 + $0x700] sm:$0xff]
    %v428 = vld [vmem:[%s1 + $0x708] sm:$0xff]
    %v429 = vld [vmem:[%s1 + $0x710] sm:$0xff]
    %v430 = vld [vmem:[%s1 + $0x718] sm:$0xff]
    %v431 = vld [vmem:[%s1 + $0x720] sm:$0xff]
    %v432 = vld [vmem:[%s1 + $0x728] sm:$0xff]
    %v433 = vld [vmem:[%s1 + $0x730] sm:$0xff]
    %v434 = vld [vmem:[%s1 + $0x738] sm:$0xff]
    %v435 = vld [vmem:[%s1 + $0x740] sm:$0xff]
    %v436 = vld [vmem:[%s1 + $0x748] sm:$0xff]
    %v437 = vld [vmem:[%s1 + $0x750] sm:$0xff]
    %v438 = vld [vmem:[%s1 + $0x758] sm:$0xff]
    %v439 = vld [vmem:[%s1 + $0x760] sm:$0xff]
    %v440 = vld [vmem:[%s1 + $0x768] sm:$0xff]
    %v441 = vld [vmem:[%s1 + $0x770] sm:$0xff]
    %v442 = vld [vmem:[%s1 + $0x778] sm:$0xff]
    %v443 = vld [vmem:[%s1 + $0x780] sm:$0xff]
    %v444 = vld [vmem:[%s1 + $0x788] sm:$0xff]
    %v445 = vld [vmem:[%s1 + $0x790] sm:$0xff]
    %v446 = vld [vmem:[%s1 + $0x798] sm:$0xff]
    %v447 = vld [vmem:[%s1 + $0x7a0] sm:$0xff]
    %v448 = vld [vmem:[%s1 + $0x7a8] sm:$0xff]
    %v449 = vld [vmem:[%s1 + $0x7b0] sm:$0xff]
    %v450 = vld [vmem:[%s1 + $0x7b8] sm:$0xff]
    %v451 = vld [vmem:[%s1 + $0x7c0] sm:$0xff]
    %v452 = vld [vmem:[%s1 + $0x7c8] sm:$0xff]
    %v453 = vld [vmem:[%s1 + $0x7d0] sm:$0xff]
    %v454 = vld [vmem:[%s1 + $0x7d8] sm:$0xff]
    %v455 = vld [vmem:[%s1 + $0x7e0] sm:$0xff]
    %v456 = vld [vmem:[%s1 + $0x7e8] sm:$0xff]
    %v457 = vld [vmem:[%s1 + $0x7f0] sm:$0xff]
    %v458 = vld [vmem:[%s1 + $0x7f8] sm:$0xff]
    %v459 = vld [vmem:[%s1 + $0x800] sm:$0xff]
    %v460 = vld [vmem:[%s1 + $0x808] sm:$0xff]
    %v461 = vld [vmem:[%s1 + $0x810] sm:$0xff]
    %v462 = vld [vmem:[%s1 + $0x818] sm:$0xff]
    %v463 = vld [vmem:[%s1 + $0x820] sm:$0xff]
    %v464 = vld [vmem:[%s1 + $0x828] sm:$0xff]
    %v465 = vld [vmem:[%s1 + $0x830] sm:$0xff]
    %v466 = vld [vmem:[%s1 + $0x838] sm:$0xff]
    %v467 = vld [vmem:[%s1 + $0x840] sm:$0xff]
    %v468 = vld [vmem:[%s1 + $0x848] sm:$0xff]
    %v469 = vld [vmem:[%s1 + $0x850] sm:$0xff]
    %v470 = vld [vmem:[%s1 + $0x858] sm:$0xff]
    %v471 = vld [vmem:[%s1 + $0x860] sm:$0xff]
    %v472 = vld [vmem:[%s1 + $0x868] sm:$0xff]
    %v473 = vld [vmem:[%s1 + $0x870] sm:$0xff]
    %v474 = vld [vmem:[%s1 + $0x878] sm:$0xff]
    %v475 = vld [vmem:[%s1 + $0x880] sm:$0xff]
    %v476 = vld [vmem:[%s1 + $0x888] sm:$0xff]
    %v477 = vld [vmem:[%s1 + $0x890] sm:$0xff]
    %v478 = vld [vmem:[%s1 + $0x898] sm:$0xff]
    %v479 = vld [vmem:[%s1 + $0x8a0] sm:$0xff]
    %v480 = vld [vmem:[%s1 + $0x8a8] sm:$0xff]
    %v481 = vld [vmem:[%s1 + $0x8b0] sm:$0xff]
    %v482 = vld [vmem:[%s1 + $0x8b8] sm:$0xff]
    %v483 = vld [vmem:[%s1 + $0x8c0] sm:$0xff]
    %v484 = vld [vmem:[%s1 + $0x8c8] sm:$0xff]
    %v485 = vld [vmem:[%s1 + $0x8d0] sm:$0xff]
    %v486 = vld [vmem:[%s1 + $0x8d8] sm:$0xff]
    %v487 = vld [vmem:[%s1 + $0x8e0] sm:$0xff]
    %v488 = vld [vmem:[%s1 + $0x8e8] sm:$0xff]
    %v489 = vld [vmem:[%s1 + $0x8f0] sm:$0xff]
    %v490 = vld [vmem:[%s1 + $0x8f8] sm:$0xff]
    %v491 = vld [vmem:[%s1 + $0x900] sm:$0xff]
    %v492 = vld [vmem:[%s1 + $0x908] sm:$0xff]
    %v493 = vld [vmem:[%s1 + $0x910] sm:$0xff]
    %v494 = vld [vmem:[%s1 + $0x918] sm:$0xff]
    %v495 = vld [vmem:[%s1 + $0x920] sm:$0xff]
    %v496 = vld [vmem:[%s1 + $0x928] sm:$0xff]
    %v497 = vld [vmem:[%s1 + $0x930] sm:$0xff]
    %v498 = vld [vmem:[%s1 + $0x938] sm:$0xff]
    %v499 = vld [vmem:[%s1 + $0x940] sm:$0xff]
    %v500 = vld [vmem:[%s1 + $0x948] sm:$0xff]
    %v501 = vld [vmem:[%s1 + $0x950] sm:$0xff]
    %v502 = vld [vmem:[%s1 + $0x958] sm:$0xff]
    %v503 = vld [vmem:[%s1 + $0x960] sm:$0xff]
    %v504 = vld [vmem:[%s1 + $0x968] sm:$0xff]
    %v505 = vld [vmem:[%s1 + $0x970] sm:$0xff]
    %v506 = vld [vmem:[%s1 + $0x978] sm:$0xff]
    %v507 = vld [vmem:[%s1 + $0x980] sm:$0xff]
    %v508 = vld [vmem:[%s1 + $0x988] sm:$0xff]
    %v509 = vld [vmem:[%s1 + $0x990] sm:$0xff]
    %v510 = vld [vmem:[%s1 + $0x998] sm:$0xff]
    %v511 = vld [vmem:[%s1 + $0x9a0] sm:$0xff]
    %v512 = vld [vmem:[%s1 + $0x9a8] sm:$0xff]
    %v513 = vld [vmem:[%s1 + $0x9b0] sm:$0xff]
    %v514 = vld [vmem:[%s1 + $0x9b8] sm:$0xff]
    %v515 = vld [vmem:[%s1 + $0x9c0] sm:$0xff]
    %v516 = vld [vmem:[%s1 + $0x9c8] sm:$0xff]
    %v517 = vld [vmem:[%s1 + $0x9d0] sm:$0xff]
    %v518 = vld [vmem:[%s1 + $0x9d8] sm:$0xff]
    %v519 = vld [vmem:[%s1 + $0x9e0] sm:$0xff]
    %v520 = vld [vmem:[%s1 + $0x9e8] sm:$0xff]
    %v521 = vld [vmem:[%s1 + $0x9f0] sm:$0xff]
    %v522 = vld [vmem:[%s1 + $0x9f8] sm:$0xff]
    %v523 = vld [vmem:[%s1 + $0xa00] sm:$0xff]
    %v524 = vld [vmem:[%s1 + $0xa08] sm:$0xff]
    %v525 = vld [vmem:[%s1 + $0xa10] sm:$0xff]
    %v526 = vld [vmem:[%s1 + $0xa18] sm:$0xff]
    %v527 = vld [vmem:[%s1 + $0xa20] sm:$0xff]
    %v528 = vld [vmem:[%s1 + $0xa28] sm:$0xff]
    %v529 = vld [vmem:[%s1 + $0xa30] sm:$0xff]
    %v530 = vld [vmem:[%s1 + $0xa38] sm:$0xff]
    %v531 = vld [vmem:[%s1 + $0xa40] sm:$0xff]
    %v532 = vld [vmem:[%s1 + $0xa48] sm:$0xff]
    %v533 = vld [vmem:[%s1 + $0xa50] sm:$0xff]
    %v534 = vld [vmem:[%s1 + $0xa58] sm:$0xff]
    %v535 = vld [vmem:[%s1 + $0xa60] sm:$0xff]
    %v536 = vld [vmem:[%s1 + $0xa68] sm:$0xff]
    %v537 = vld [vmem:[%s1 + $0xa70] sm:$0xff]
    %v538 = vld [vmem:[%s1 + $0xa78] sm:$0xff]
    %v539 = vld [vmem:[%s1 + $0xa80] sm:$0xff]
    %v540 = vld [vmem:[%s1 + $0xa88] sm:$0xff]
    %v541 = vld [vmem:[%s1 + $0xa90] sm:$0xff]
    %v542 = vld [vmem:[%s1 + $0xa98] sm:$0xff]
    %v543 = vld [vmem:[%s1 + $0xaa0] sm:$0xff]
    %v544 = vld [vmem:[%s1 + $0xaa8] sm:$0xff]
    %v545 = vld [vmem:[%s1 + $0xab0] sm:$0xff]
    %v546 = vld [vmem:[%s1 + $0xab8] sm:$0xff]
    %v547 = vld [vmem:[%s1 + $0xac0] sm:$0xff]
    %v548 = vld [vmem:[%s1 + $0xac8] sm:$0xff]
    %v549 = vld [vmem:[%s1 + $0xad0] sm:$0xff]
    %v550 = vld [vmem:[%s1 + $0xad8] sm:$0xff]
    %v551 = vld [vmem:[%s1 + $0xae0] sm:$0xff]
    %v552 = vld [vmem:[%s1 + $0xae8] sm:$0xff]
    %v553 = vld [vmem:[%s1 + $0xaf0] sm:$0xff]
    %v554 = vld [vmem:[%s1 + $0xaf8] sm:$0xff]
    %v555 = vld [vmem:[%s1 + $0xb00] sm:$0xff]
    %v556 = vld [vmem:[%s1 + $0xb08] sm:$0xff]
    %v557 = vld [vmem:[%s1 + $0xb10] sm:$0xff]
    %v558 = vld [vmem:[%s1 + $0xb18] sm:$0xff]
    %v559 = vld [vmem:[%s1 + $0xb20] sm:$0xff]
    %v560 = vld [vmem:[%s1 + $0xb28] sm:$0xff]
    %v561 = vld [vmem:[%s1 + $0xb30] sm:$0xff]
    %v562 = vld [vmem:[%s1 + $0xb38] sm:$0xff]
    %v563 = vld [vmem:[%s1 + $0xb40] sm:$0xff]
    %v564 = vld [vmem:[%s1 + $0xb48] sm:$0xff]
    %v565 = vld [vmem:[%s1 + $0xb50] sm:$0xff]
    %v566 = vld [vmem:[%s1 + $0xb58] sm:$0xff]
    %v567 = vld [vmem:[%s1 + $0xb60] sm:$0xff]
    %v568 = vld [vmem:[%s1 + $0xb68] sm:$0xff]
    %v569 = vld [vmem:[%s1 + $0xb70] sm:$0xff]
    %v570 = vld [vmem:[%s1 + $0xb78] sm:$0xff]
    %v571 = vld [vmem:[%s1 + $0xb80] sm:$0xff]
    %v572 = vld [vmem:[%s1 + $0xb88] sm:$0xff]
    %v573 = vld [vmem:[%s1 + $0xb90] sm:$0xff]
    %v574 = vld [vmem:[%s1 + $0xb98] sm:$0xff]
    %v575 = vld [vmem:[%s1 + $0xba0] sm:$0xff]
    %v576 = vld [vmem:[%s1 + $0xba8] sm:$0xff]
    %v577 = vld [vmem:[%s1 + $0xbb0] sm:$0xff]
    %v578 = vld [vmem:[%s1 + $0xbb8] sm:$0xff]
    %v579 = vld [vmem:[%s1 + $0xbc0] sm:$0xff]
    %v580 = vld [vmem:[%s1 + $0xbc8] sm:$0xff]
    %v581 = vld [vmem:[%s1 + $0xbd0] sm:$0xff]
    %v582 = vld [vmem:[%s1 + $0xbd8] sm:$0xff]
    %v583 = vld [vmem:[%s1 + $0xbe0] sm:$0xff]
    %v584 = vld [vmem:[%s1 + $0xbe8] sm:$0xff]
    %v585 = vld [vmem:[%s1 + $0xbf0] sm:$0xff]
    %v586 = vld [vmem:[%s1 + $0xbf8] sm:$0xff]
    %v587 = vld [vmem:[%s1 + $0xc00] sm:$0xff]
    %v588 = vld [vmem:[%s1 + $0xc08] sm:$0xff]
    %v589 = vld [vmem:[%s1 + $0xc10] sm:$0xff]
    %v590 = vld [vmem:[%s1 + $0xc18] sm:$0xff]
    %v591 = vld [vmem:[%s1 + $0xc20] sm:$0xff]
    %v592 = vld [vmem:[%s1 + $0xc28] sm:$0xff]
    %v593 = vld [vmem:[%s1 + $0xc30] sm:$0xff]
    %v594 = vld [vmem:[%s1 + $0xc38] sm:$0xff]
    %v595 = vld [vmem:[%s1 + $0xc40] sm:$0xff]
    %v596 = vld [vmem:[%s1 + $0xc48] sm:$0xff]
    %v597 = vld [vmem:[%s1 + $0xc50] sm:$0xff]
    %v598 = vld [vmem:[%s1 + $0xc58] sm:$0xff]
    %v599 = vld [vmem:[%s1 + $0xc60] sm:$0xff]
    %v600 = vld [vmem:[%s1 + $0xc68] sm:$0xff]
    %v601 = vld [vmem:[%s1 + $0xc70] sm:$0xff]
    %v602 = vld [vmem:[%s1 + $0xc78] sm:$0xff]
    %v603 = vld [vmem:[%s1 + $0xc80] sm:$0xff]
    %v604 = vld [vmem:[%s1 + $0xc88] sm:$0xff]
    %v605 = vld [vmem:[%s1 + $0xc90] sm:$0xff]
    %v606 = vld [vmem:[%s1 + $0xc98] sm:$0xff]
    %v607 = vld [vmem:[%s1 + $0xca0] sm:$0xff]
    %v608 = vld [vmem:[%s1 + $0xca8] sm:$0xff]
    %v609 = vld [vmem:[%s1 + $0xcb0] sm:$0xff]
    %v610 = vld [vmem:[%s1 + $0xcb8] sm:$0xff]
    %v611 = vld [vmem:[%s1 + $0xcc0] sm:$0xff]
    %v612 = vld [vmem:[%s1 + $0xcc8] sm:$0xff]
    %v613 = vld [vmem:[%s1 + $0xcd0] sm:$0xff]
    %v614 = vld [vmem:[%s1 + $0xcd8] sm:$0xff]
    %v615 = vld [vmem:[%s1 + $0xce0] sm:$0xff]
    %v616 = vld [vmem:[%s1 + $0xce8] sm:$0xff]
    %v617 = vld [vmem:[%s1 + $0xcf0] sm:$0xff]
    %v618 = vld [vmem:[%s1 + $0xcf8] sm:$0xff]
    %v619 = vld [vmem:[%s1 + $0xd00] sm:$0xff]
    %v620 = vld [vmem:[%s1 + $0xd08] sm:$0xff]
    %v621 = vld [vmem:[%s1 + $0xd10] sm:$0xff]
    %v622 = vld [vmem:[%s1 + $0xd18] sm:$0xff]
    %v623 = vld [vmem:[%s1 + $0xd20] sm:$0xff]
    %v624 = vld [vmem:[%s1 + $0xd28] sm:$0xff]
    %v625 = vld [vmem:[%s1 + $0xd30] sm:$0xff]
    %v626 = vld [vmem:[%s1 + $0xd38] sm:$0xff]
    %v627 = vld [vmem:[%s1 + $0xd40] sm:$0xff]
    %v628 = vld [vmem:[%s1 + $0xd48] sm:$0xff]
    %v629 = vld [vmem:[%s1 + $0xd50] sm:$0xff]
    %v630 = vld [vmem:[%s1 + $0xd58] sm:$0xff]
    %v631 = vld [vmem:[%s1 + $0xd60] sm:$0xff]
    %v632 = vld [vmem:[%s1 + $0xd68] sm:$0xff]
    %v633 = vld [vmem:[%s1 + $0xd70] sm:$0xff]
    %v634 = vld [vmem:[%s1 + $0xd78] sm:$0xff]
    %v635 = vld [vmem:[%s1 + $0xd80] sm:$0xff]
    %v636 = vld [vmem:[%s1 + $0xd88] sm:$0xff]
    %v637 = vld [vmem:[%s1 + $0xd90] sm:$0xff]
    %v638 = vld [vmem:[%s1 + $0xd98] sm:$0xff]
    %v639 = vld [vmem:[%s1 + $0xda0] sm:$0xff]
    %v640 = vld [vmem:[%s1 + $0xda8] sm:$0xff]
    %v641 = vld [vmem:[%s1 + $0xdb0] sm:$0xff]
    %v642 = vld [vmem:[%s1 + $0xdb8] sm:$0xff]
    %v643 = vld [vmem:[%s1 + $0xdc0] sm:$0xff]
    %v644 = vld [vmem:[%s1 + $0xdc8] sm:$0xff]
    %v645 = vld [vmem:[%s1 + $0xdd0] sm:$0xff]
    %v646 = vld [vmem:[%s1 + $0xdd8] sm:$0xff]
    %v647 = vld [vmem:[%s1 + $0xde0] sm:$0xff]
    %v648 = vld [vmem:[%s1 + $0xde8] sm:$0xff]
    %v649 = vld [vmem:[%s1 + $0xdf0] sm:$0xff]
    %v650 = vld [vmem:[%s1 + $0xdf8] sm:$0xff]
    %v651 = vld [vmem:[%s1 + $0xe00] sm:$0xff]
    %v652 = vld [vmem:[%s1 + $0xe08] sm:$0xff]
    %v653 = vld [vmem:[%s1 + $0xe10] sm:$0xff]
    %v654 = vld [vmem:[%s1 + $0xe18] sm:$0xff]
    %v655 = vld [vmem:[%s1 + $0xe20] sm:$0xff]
    %v656 = vld [vmem:[%s1 + $0xe28] sm:$0xff]
    %v657 = vld [vmem:[%s1 + $0xe30] sm:$0xff]
    %v658 = vld [vmem:[%s1 + $0xe38] sm:$0xff]
    %v659 = vld [vmem:[%s1 + $0xe40] sm:$0xff]
    %v660 = vld [vmem:[%s1 + $0xe48] sm:$0xff]
    %v661 = vld [vmem:[%s1 + $0xe50] sm:$0xff]
    %v662 = vld [vmem:[%s1 + $0xe58] sm:$0xff]
    %v663 = vld [vmem:[%s1 + $0xe60] sm:$0xff]
    %v664 = vld [vmem:[%s1 + $0xe68] sm:$0xff]
    %v665 = vld [vmem:[%s1 + $0xe70] sm:$0xff]
    %v666 = vld [vmem:[%s1 + $0xe78] sm:$0xff]
    %v667 = vld [vmem:[%s1 + $0xe80] sm:$0xff]
    %v668 = vld [vmem:[%s1 + $0xe88] sm:$0xff]
    %v669 = vld [vmem:[%s1 + $0xe90] sm:$0xff]
    %v670 = vld [vmem:[%s1 + $0xe98] sm:$0xff]
    %v671 = vld [vmem:[%s1 + $0xea0] sm:$0xff]
    %v672 = vld [vmem:[%s1 + $0xea8] sm:$0xff]
    %v673 = vld [vmem:[%s1 + $0xeb0] sm:$0xff]
    %v674 = vld [vmem:[%s1 + $0xeb8] sm:$0xff]
    %v675 = vld [vmem:[%s1 + $0xec0] sm:$0xff]
    %v676 = vld [vmem:[%s1 + $0xec8] sm:$0xff]
    %v677 = vld [vmem:[%s1 + $0xed0] sm:$0xff]
    %v678 = vld [vmem:[%s1 + $0xed8] sm:$0xff]
    %v679 = vld [vmem:[%s1 + $0xee0] sm:$0xff]
    %v680 = vld [vmem:[%s1 + $0xee8] sm:$0xff]
    %v681 = vld [vmem:[%s1 + $0xef0] sm:$0xff]
    %v682 = vld [vmem:[%s1 + $0xef8] sm:$0xff]
    %v683 = vld [vmem:[%s1 + $0xf00] sm:$0xff]
    %v684 = vld [vmem:[%s1 + $0xf08] sm:$0xff]
    %v685 = vld [vmem:[%s1 + $0xf10] sm:$0xff]
    %v686 = vld [vmem:[%s1 + $0xf18] sm:$0xff]
    %v687 = vld [vmem:[%s1 + $0xf20] sm:$0xff]
    %v688 = vld [vmem:[%s1 + $0xf28] sm:$0xff]
    %v689 = vld [vmem:[%s1 + $0xf30] sm:$0xff]
    %v690 = vld [vmem:[%s1 + $0xf38] sm:$0xff]
    %v691 = vld [vmem:[%s1 + $0xf40] sm:$0xff]
    %v692 = vld [vmem:[%s1 + $0xf48] sm:$0xff]
    %v693 = vld [vmem:[%s1 + $0xf50] sm:$0xff]
    %v694 = vld [vmem:[%s1 + $0xf58] sm:$0xff]
    %v695 = vld [vmem:[%s1 + $0xf60] sm:$0xff]
    %v696 = vld [vmem:[%s1 + $0xf68] sm:$0xff]
    %v697 = vld [vmem:[%s1 + $0xf70] sm:$0xff]
    %v698 = vld [vmem:[%s1 + $0xf78] sm:$0xff]
    %v699 = vld [vmem:[%s1 + $0xf80] sm:$0xff]
    %v700 = vld [vmem:[%s1 + $0xf88] sm:$0xff]
    %v701 = vld [vmem:[%s1 + $0xf90] sm:$0xff]
    %v702 = vld [vmem:[%s1 + $0xf98] sm:$0xff]
    %v703 = vld [vmem:[%s1 + $0xfa0] sm:$0xff]
    %v704 = vld [vmem:[%s1 + $0xfa8] sm:$0xff]
    %v705 = vld [vmem:[%s1 + $0xfb0] sm:$0xff]
    %v706 = vld [vmem:[%s1 + $0xfb8] sm:$0xff]
    %v707 = vld [vmem:[%s1 + $0xfc0] sm:$0xff]
    %v708 = vld [vmem:[%s1 + $0xfc8] sm:$0xff]
    %v709 = vld [vmem:[%s1 + $0xfd0] sm:$0xff]
    %v710 = vld [vmem:[%s1 + $0xfd8] sm:$0xff]
    %v711 = vld [vmem:[%s1 + $0xfe0] sm:$0xff]
    %v712 = vld [vmem:[%s1 + $0xfe8] sm:$0xff]
    %v713 = vld [vmem:[%s1 + $0xff0] sm:$0xff]
    %v714 = vld [vmem:[%s1 + $0xff8] sm:$0xff]
    %v715 = vld [vmem:[%s1 + $0x1000] sm:$0xff]
    %v716 = vld [vmem:[%s1 + $0x1008] sm:$0xff]
    %v717 = vld [vmem:[%s1 + $0x1010] sm:$0xff]
    %v718 = vld [vmem:[%s1 + $0x1018] sm:$0xff]
    %v719 = vld [vmem:[%s1 + $0x1020] sm:$0xff]
    %v720 = vld [vmem:[%s1 + $0x1028] sm:$0xff]
    %v721 = vld [vmem:[%s1 + $0x1030] sm:$0xff]
    %v722 = vld [vmem:[%s1 + $0x1038] sm:$0xff]
    %v723 = vld [vmem:[%s1 + $0x1040] sm:$0xff]
    %v724 = vld [vmem:[%s1 + $0x1048] sm:$0xff]
    %v725 = vld [vmem:[%s1 + $0x1050] sm:$0xff]
    %v726 = vld [vmem:[%s1 + $0x1058] sm:$0xff]
    %v727 = vld [vmem:[%s1 + $0x1060] sm:$0xff]
    %v728 = vld [vmem:[%s1 + $0x1068] sm:$0xff]
    %v729 = vld [vmem:[%s1 + $0x1070] sm:$0xff]
    %v730 = vld [vmem:[%s1 + $0x1078] sm:$0xff]
    %v731 = vld [vmem:[%s1 + $0x1080] sm:$0xff]
    %v732 = vld [vmem:[%s1 + $0x1088] sm:$0xff]
    %v733 = vld [vmem:[%s1 + $0x1090] sm:$0xff]
    %v734 = vld [vmem:[%s1 + $0x1098] sm:$0xff]
    %v735 = vld [vmem:[%s1 + $0x10a0] sm:$0xff]
    %v736 = vld [vmem:[%s1 + $0x10a8] sm:$0xff]
    %v737 = vld [vmem:[%s1 + $0x10b0] sm:$0xff]
    %v738 = vld [vmem:[%s1 + $0x10b8] sm:$0xff]
    %v739 = vld [vmem:[%s1 + $0x10c0] sm:$0xff]
    %v740 = vld [vmem:[%s1 + $0x10c8] sm:$0xff]
    %v741 = vld [vmem:[%s1 + $0x10d0] sm:$0xff]
    %v742 = vld [vmem:[%s1 + $0x10d8] sm:$0xff]
    %v743 = vld [vmem:[%s1 + $0x10e0] sm:$0xff]
    %v744 = vld [vmem:[%s1 + $0x10e8] sm:$0xff]
    %v745 = vld [vmem:[%s1 + $0x10f0] sm:$0xff]
    %v746 = vld [vmem:[%s1 + $0x10f8] sm:$0xff]
    %v747 = vld [vmem:[%s1 + $0x1100] sm:$0xff]
    %v748 = vld [vmem:[%s1 + $0x1108] sm:$0xff]
    %v749 = vld [vmem:[%s1 + $0x1110] sm:$0xff]
    %v750 = vld [vmem:[%s1 + $0x1118] sm:$0xff]
    %v751 = vld [vmem:[%s1 + $0x1120] sm:$0xff]
    %v752 = vld [vmem:[%s1 + $0x1128] sm:$0xff]
    %v753 = vld [vmem:[%s1 + $0x1130] sm:$0xff]
    %v754 = vld [vmem:[%s1 + $0x1138] sm:$0xff]
    %v755 = vld [vmem:[%s1 + $0x1140] sm:$0xff]
    %v756 = vld [vmem:[%s1 + $0x1148] sm:$0xff]
    %v757 = vld [vmem:[%s1 + $0x1150] sm:$0xff]
    %v758 = vld [vmem:[%s1 + $0x1158] sm:$0xff]
    %v759 = vld [vmem:[%s1 + $0x1160] sm:$0xff]
    %v760 = vld [vmem:[%s1 + $0x1168] sm:$0xff]
    %v761 = vld [vmem:[%s1 + $0x1170] sm:$0xff]
    %v762 = vld [vmem:[%s1 + $0x1178] sm:$0xff]
    %v763 = vld [vmem:[%s1 + $0x1180] sm:$0xff]
    %v764 = vld [vmem:[%s1 + $0x1188] sm:$0xff]
    %v765 = vld [vmem:[%s1 + $0x1190] sm:$0xff]
    %v766 = vld [vmem:[%s1 + $0x1198] sm:$0xff]
    %v767 = vld [vmem:[%s1 + $0x11a0] sm:$0xff]
    %v768 = vld [vmem:[%s1 + $0x11a8] sm:$0xff]
    %v769 = vld [vmem:[%s1 + $0x11b0] sm:$0xff]
    %v770 = vld [vmem:[%s1 + $0x11b8] sm:$0xff]
    %v771 = vld [vmem:[%s1 + $0x11c0] sm:$0xff]
    %v772 = vld [vmem:[%s1 + $0x11c8] sm:$0xff]
    %v773 = vld [vmem:[%s1 + $0x11d0] sm:$0xff]
    %v774 = vld [vmem:[%s1 + $0x11d8] sm:$0xff]
    %v775 = vld [vmem:[%s1 + $0x11e0] sm:$0xff]
    %v776 = vld [vmem:[%s1 + $0x11e8] sm:$0xff]
    %v777 = vld [vmem:[%s1 + $0x11f0] sm:$0xff]
    %v778 = vld [vmem:[%s1 + $0x11f8] sm:$0xff]
    %v779 = vld [vmem:[%s1 + $0x1200] sm:$0xff]
    %v780 = vld [vmem:[%s1 + $0x1208] sm:$0xff]
    %v781 = vld [vmem:[%s1 + $0x1210] sm:$0xff]
    %v782 = vld [vmem:[%s1 + $0x1218] sm:$0xff]
    %v783 = vld [vmem:[%s1 + $0x1220] sm:$0xff]
    %v784 = vld [vmem:[%s1 + $0x1228] sm:$0xff]
    %v785 = vld [vmem:[%s1 + $0x1230] sm:$0xff]
    %v786 = vld [vmem:[%s1 + $0x1238] sm:$0xff]
    %v787 = vld [vmem:[%s1 + $0x1240] sm:$0xff]
    %v788 = vld [vmem:[%s1 + $0x1248] sm:$0xff]
    %v789 = vld [vmem:[%s1 + $0x1250] sm:$0xff]
    %v790 = vld [vmem:[%s1 + $0x1258] sm:$0xff]
    %v791 = vld [vmem:[%s1 + $0x1260] sm:$0xff]
    %v792 = vld [vmem:[%s1 + $0x1268] sm:$0xff]
    %v793 = vld [vmem:[%s1 + $0x1270] sm:$0xff]
    %v794 = vld [vmem:[%s1 + $0x1278] sm:$0xff]
    %v795 = vld [vmem:[%s1 + $0x1280] sm:$0xff]
    %v796 = vld [vmem:[%s1 + $0x1288] sm:$0xff]
    %v797 = vld [vmem:[%s1 + $0x1290] sm:$0xff]
    %v798 = vld [vmem:[%s1 + $0x1298] sm:$0xff]
    %v799 = vld [vmem:[%s1 + $0x12a0] sm:$0xff]
    %v800 = vld [vmem:[%s1 + $0x12a8] sm:$0xff]
    %v801 = vld [vmem:[%s1 + $0x12b0] sm:$0xff]
    %v802 = vld [vmem:[%s1 + $0x12b8] sm:$0xff]
    %v803 = vld [vmem:[%s1 + $0x12c0] sm:$0xff]
    %v804 = vld [vmem:[%s1 + $0x12c8] sm:$0xff]
    %v805 = vld [vmem:[%s1 + $0x12d0] sm:$0xff]
    %v806 = vld [vmem:[%s1 + $0x12d8] sm:$0xff]
    %v807 = vld [vmem:[%s1 + $0x12e0] sm:$0xff]
    %v808 = vld [vmem:[%s1 + $0x12e8] sm:$0xff]
    %v809 = vld [vmem:[%s1 + $0x12f0] sm:$0xff]
    %v810 = vld [vmem:[%s1 + $0x12f8] sm:$0xff]
    %v811 = vld [vmem:[%s1 + $0x1300] sm:$0xff]
    %v812 = vld [vmem:[%s1 + $0x1308] sm:$0xff]
    %v813 = vld [vmem:[%s1 + $0x1310] sm:$0xff]
    %v814 = vld [vmem:[%s1 + $0x1318] sm:$0xff]
    %v815 = vld [vmem:[%s1 + $0x1320] sm:$0xff]
    %v816 = vld [vmem:[%s1 + $0x1328] sm:$0xff]
    %v817 = vld [vmem:[%s1 + $0x1330] sm:$0xff]
    %v818 = vld [vmem:[%s1 + $0x1338] sm:$0xff]
    %v819 = vld [vmem:[%s1 + $0x1340] sm:$0xff]
    %v820 = vld [vmem:[%s1 + $0x1348] sm:$0xff]
    %v821 = vld [vmem:[%s1 + $0x1350] sm:$0xff]
    %v822 = vld [vmem:[%s1 + $0x1358] sm:$0xff]
    %v823 = vld [vmem:[%s1 + $0x1360] sm:$0xff]
    %v824 = vld [vmem:[%s1 + $0x1368] sm:$0xff]
    %v825 = vld [vmem:[%s1 + $0x1370] sm:$0xff]
    %v826 = vld [vmem:[%s1 + $0x1378] sm:$0xff]
    %v827 = vld [vmem:[%s1 + $0x1380] sm:$0xff]
    %v828 = vld [vmem:[%s1 + $0x1388] sm:$0xff]
    %v829 = vld [vmem:[%s1 + $0x1390] sm:$0xff]
    %v830 = vld [vmem:[%s1 + $0x1398] sm:$0xff]
    %v831 = vld [vmem:[%s1 + $0x13a0] sm:$0xff]
    %v832 = vld [vmem:[%s1 + $0x13a8] sm:$0xff]
    %v833 = vld [vmem:[%s1 + $0x13b0] sm:$0xff]
    %v834 = vld [vmem:[%s1 + $0x13b8] sm:$0xff]
    %v835 = vld [vmem:[%s1 + $0x13c0] sm:$0xff]
    %v836 = vld [vmem:[%s1 + $0x13c8] sm:$0xff]
    %v837 = vld [vmem:[%s1 + $0x13d0] sm:$0xff]
    %v838 = vld [vmem:[%s1 + $0x13d8] sm:$0xff]
    %v839 = vld [vmem:[%s1 + $0x13e0] sm:$0xff]
    %v840 = vld [vmem:[%s1 + $0x13e8] sm:$0xff]
    %v841 = vld [vmem:[%s1 + $0x13f0] sm:$0xff]
    %v842 = vld [vmem:[%s1 + $0x13f8] sm:$0xff]
    %v843 = vld [vmem:[%s1 + $0x1400] sm:$0xff]
    %v844 = vld [vmem:[%s1 + $0x1408] sm:$0xff]
    %v845 = vld [vmem:[%s1 + $0x1410] sm:$0xff]
    %v846 = vld [vmem:[%s1 + $0x1418] sm:$0xff]
    %v847 = vld [vmem:[%s1 + $0x1420] sm:$0xff]
    %v848 = vld [vmem:[%s1 + $0x1428] sm:$0xff]
    %v849 = vld [vmem:[%s1 + $0x1430] sm:$0xff]
    %v850 = vld [vmem:[%s1 + $0x1438] sm:$0xff]
    %v851 = vld [vmem:[%s1 + $0x1440] sm:$0xff]
    %v852 = vld [vmem:[%s1 + $0x1448] sm:$0xff]
    %v853 = vld [vmem:[%s1 + $0x1450] sm:$0xff]
    %v854 = vld [vmem:[%s1 + $0x1458] sm:$0xff]
    %v855 = vld [vmem:[%s1 + $0x1460] sm:$0xff]
    %v856 = vld [vmem:[%s1 + $0x1468] sm:$0xff]
    %v857 = vld [vmem:[%s1 + $0x1470] sm:$0xff]
    %v858 = vld [vmem:[%s1 + $0x1478] sm:$0xff]
    %v859 = vld [vmem:[%s1 + $0x1480] sm:$0xff]
    %v860 = vld [vmem:[%s1 + $0x1488] sm:$0xff]
    %v861 = vld [vmem:[%s1 + $0x1490] sm:$0xff]
    %v862 = vld [vmem:[%s1 + $0x1498] sm:$0xff]
    %v863 = vld [vmem:[%s1 + $0x14a0] sm:$0xff]
    %v864 = vld [vmem:[%s1 + $0x14a8] sm:$0xff]
    %v865 = vld [vmem:[%s1 + $0x14b0] sm:$0xff]
    %v866 = vld [vmem:[%s1 + $0x14b8] sm:$0xff]
    %v867 = vld [vmem:[%s1 + $0x14c0] sm:$0xff]
    %v868 = vld [vmem:[%s1 + $0x14c8] sm:$0xff]
    %v869 = vld [vmem:[%s1 + $0x14d0] sm:$0xff]
    %v870 = vld [vmem:[%s1 + $0x14d8] sm:$0xff]
    %v871 = vld [vmem:[%s1 + $0x14e0] sm:$0xff]
    %v872 = vld [vmem:[%s1 + $0x14e8] sm:$0xff]
    %v873 = vld [vmem:[%s1 + $0x14f0] sm:$0xff]
    %v874 = vld [vmem:[%s1 + $0x14f8] sm:$0xff]
    %v875 = vld [vmem:[%s1 + $0x1500] sm:$0xff]
    %v876 = vld [vmem:[%s1 + $0x1508] sm:$0xff]
    %v877 = vld [vmem:[%s1 + $0x1510] sm:$0xff]
    %v878 = vld [vmem:[%s1 + $0x1518] sm:$0xff]
    %v879 = vld [vmem:[%s1 + $0x1520] sm:$0xff]
    %v880 = vld [vmem:[%s1 + $0x1528] sm:$0xff]
    %v881 = vld [vmem:[%s1 + $0x1530] sm:$0xff]
    %v882 = vld [vmem:[%s1 + $0x1538] sm:$0xff]
    %v883 = vld [vmem:[%s1 + $0x1540] sm:$0xff]
    %v884 = vld [vmem:[%s1 + $0x1548] sm:$0xff]
    %v885 = vld [vmem:[%s1 + $0x1550] sm:$0xff]
    %v886 = vld [vmem:[%s1 + $0x1558] sm:$0xff]
    %v887 = vld [vmem:[%s1 + $0x1560] sm:$0xff]
    %v888 = vld [vmem:[%s1 + $0x1568] sm:$0xff]
    %v889 = vld [vmem:[%s1 + $0x1570] sm:$0xff]
    %v890 = vld [vmem:[%s1 + $0x1578] sm:$0xff]
    %v891 = vld [vmem:[%s1 + $0x1580] sm:$0xff]
    %v892 = vld [vmem:[%s1 + $0x1588] sm:$0xff]
    %v893 = vld [vmem:[%s1 + $0x1590] sm:$0xff]
    %v894 = vld [vmem:[%s1 + $0x1598] sm:$0xff]
    %v895 = vld [vmem:[%s1 + $0x15a0] sm:$0xff]
    %v896 = vld [vmem:[%s1 + $0x15a8] sm:$0xff]
    %v897 = vld [vmem:[%s1 + $0x15b0] sm:$0xff]
    %v898 = vld [vmem:[%s1 + $0x15b8] sm:$0xff]
    %v899 = vld [vmem:[%s1 + $0x15c0] sm:$0xff]
    %v900 = vld [vmem:[%s1 + $0x15c8] sm:$0xff]
    %v901 = vld [vmem:[%s1 + $0x15d0] sm:$0xff]
    %v902 = vld [vmem:[%s1 + $0x15d8] sm:$0xff]
    %v903 = vld [vmem:[%s1 + $0x15e0] sm:$0xff]
    %v904 = vld [vmem:[%s1 + $0x15e8] sm:$0xff]
    %v905 = vld [vmem:[%s1 + $0x15f0] sm:$0xff]
    %v906 = vld [vmem:[%s1 + $0x15f8] sm:$0xff]
    %v907 = vld [vmem:[%s1 + $0x1600] sm:$0xff]
    %v908 = vld [vmem:[%s1 + $0x1608] sm:$0xff]
    %v909 = vld [vmem:[%s1 + $0x1610] sm:$0xff]
    %v910 = vld [vmem:[%s1 + $0x1618] sm:$0xff]
    %v911 = vld [vmem:[%s1 + $0x1620] sm:$0xff]
    %v912 = vld [vmem:[%s1 + $0x1628] sm:$0xff]
    %v913 = vld [vmem:[%s1 + $0x1630] sm:$0xff]
    %v914 = vld [vmem:[%s1 + $0x1638] sm:$0xff]
    %v915 = vld [vmem:[%s1 + $0x1640] sm:$0xff]
    %v916 = vld [vmem:[%s1 + $0x1648] sm:$0xff]
    %v917 = vld [vmem:[%s1 + $0x1650] sm:$0xff]
    %v918 = vld [vmem:[%s1 + $0x1658] sm:$0xff]
    %v919 = vld [vmem:[%s1 + $0x1660] sm:$0xff]
    %v920 = vld [vmem:[%s1 + $0x1668] sm:$0xff]
    %v921 = vld [vmem:[%s1 + $0x1670] sm:$0xff]
    %v922 = vld [vmem:[%s1 + $0x1678] sm:$0xff]
    %v923 = vld [vmem:[%s1 + $0x1680] sm:$0xff]
    %v924 = vld [vmem:[%s1 + $0x1688] sm:$0xff]
    %v925 = vld [vmem:[%s1 + $0x1690] sm:$0xff]
    %v926 = vld [vmem:[%s1 + $0x1698] sm:$0xff]
    %v927 = vld [vmem:[%s1 + $0x16a0] sm:$0xff]
    %v928 = vld [vmem:[%s1 + $0x16a8] sm:$0xff]
    %v929 = vld [vmem:[%s1 + $0x16b0] sm:$0xff]
    %v930 = vld [vmem:[%s1 + $0x16b8] sm:$0xff]
    %v931 = vld [vmem:[%s1 + $0x16c0] sm:$0xff]
    %v932 = vld [vmem:[%s1 + $0x16c8] sm:$0xff]
    %v933 = vld [vmem:[%s1 + $0x16d0] sm:$0xff]
    %v934 = vld [vmem:[%s1 + $0x16d8] sm:$0xff]
    %v935 = vld [vmem:[%s1 + $0x16e0] sm:$0xff]
    %v936 = vld [vmem:[%s1 + $0x16e8] sm:$0xff]
    %v937 = vld [vmem:[%s1 + $0x16f0] sm:$0xff]
    %v938 = vld [vmem:[%s1 + $0x16f8] sm:$0xff]
    %v939 = vld [vmem:[%s1 + $0x1700] sm:$0xff]
    %v940 = vld [vmem:[%s1 + $0x1708] sm:$0xff]
    %v941 = vld [vmem:[%s1 + $0x1710] sm:$0xff]
    %v942 = vld [vmem:[%s1 + $0x1718] sm:$0xff]
    %v943 = vld [vmem:[%s1 + $0x1720] sm:$0xff]
    %v944 = vld [vmem:[%s1 + $0x1728] sm:$0xff]
    %v945 = vld [vmem:[%s1 + $0x1730] sm:$0xff]
    %v946 = vld [vmem:[%s1 + $0x1738] sm:$0xff]
    %v947 = vld [vmem:[%s1 + $0x1740] sm:$0xff]
    %v948 = vld [vmem:[%s1 + $0x1748] sm:$0xff]
    %v949 = vld [vmem:[%s1 + $0x1750] sm:$0xff]
    %v950 = vld [vmem:[%s1 + $0x1758] sm:$0xff]
    %v951 = vld [vmem:[%s1 + $0x1760] sm:$0xff]
    %v952 = vld [vmem:[%s1 + $0x1768] sm:$0xff]
    %v953 = vld [vmem:[%s1 + $0x1770] sm:$0xff]
    %v954 = vld [vmem:[%s1 + $0x1778] sm:$0xff]
    %v955 = vld [vmem:[%s1 + $0x1780] sm:$0xff]
    %v956 = vld [vmem:[%s1 + $0x1788] sm:$0xff]
    %v957 = vld [vmem:[%s1 + $0x1790] sm:$0xff]
    %v958 = vld [vmem:[%s1 + $0x1798] sm:$0xff]
    %v959 = vld [vmem:[%s1 + $0x17a0] sm:$0xff]
    %v960 = vld [vmem:[%s1 + $0x17a8] sm:$0xff]
    %v961 = vld [vmem:[%s1 + $0x17b0] sm:$0xff]
    %v962 = vld [vmem:[%s1 + $0x17b8] sm:$0xff]
    %v963 = vld [vmem:[%s1 + $0x17c0] sm:$0xff]
    %v964 = vld [vmem:[%s1 + $0x17c8] sm:$0xff]
    %v965 = vld [vmem:[%s1 + $0x17d0] sm:$0xff]
    %v966 = vld [vmem:[%s1 + $0x17d8] sm:$0xff]
    %v967 = vld [vmem:[%s1 + $0x17e0] sm:$0xff]
    %v968 = vld [vmem:[%s1 + $0x17e8] sm:$0xff]
    %v969 = vld [vmem:[%s1 + $0x17f0] sm:$0xff]
    %v970 = vld [vmem:[%s1 + $0x17f8] sm:$0xff]
    %v971 = vld [vmem:[%s1 + $0x1800] sm:$0xff]
    %v972 = vld [vmem:[%s1 + $0x1808] sm:$0xff]
    %v973 = vld [vmem:[%s1 + $0x1810] sm:$0xff]
    %v974 = vld [vmem:[%s1 + $0x1818] sm:$0xff]
    %v975 = vld [vmem:[%s1 + $0x1820] sm:$0xff]
    %v976 = vld [vmem:[%s1 + $0x1828] sm:$0xff]
    %v977 = vld [vmem:[%s1 + $0x1830] sm:$0xff]
    %v978 = vld [vmem:[%s1 + $0x1838] sm:$0xff]
    %v979 = vld [vmem:[%s1 + $0x1840] sm:$0xff]
    %v980 = vld [vmem:[%s1 + $0x1848] sm:$0xff]
    %v981 = vld [vmem:[%s1 + $0x1850] sm:$0xff]
    %v982 = vld [vmem:[%s1 + $0x1858] sm:$0xff]
    %v983 = vld [vmem:[%s1 + $0x1860] sm:$0xff]
    %v984 = vld [vmem:[%s1 + $0x1868] sm:$0xff]
    %v985 = vld [vmem:[%s1 + $0x1870] sm:$0xff]
    %v986 = vld [vmem:[%s1 + $0x1878] sm:$0xff]
    %v987 = vld [vmem:[%s1 + $0x1880] sm:$0xff]
    %v988 = vld [vmem:[%s1 + $0x1888] sm:$0xff]
    %v989 = vld [vmem:[%s1 + $0x1890] sm:$0xff]
    %v990 = vld [vmem:[%s1 + $0x1898] sm:$0xff]
    %v991 = vld [vmem:[%s1 + $0x18a0] sm:$0xff]
    %v992 = vld [vmem:[%s1 + $0x18a8] sm:$0xff]
    %v993 = vld [vmem:[%s1 + $0x18b0] sm:$0xff]
    %v994 = vld [vmem:[%s1 + $0x18b8] sm:$0xff]
    %v995 = vld [vmem:[%s1 + $0x18c0] sm:$0xff]
    %v996 = vld [vmem:[%s1 + $0x18c8] sm:$0xff]
    %v997 = vld [vmem:[%s1 + $0x18d0] sm:$0xff]
    %v998 = vld [vmem:[%s1 + $0x18d8] sm:$0xff]
    %v999 = vld [vmem:[%s1 + $0x18e0] sm:$0xff]
    %v1000 = vld [vmem:[%s1 + $0x18e8] sm:$0xff]
    %v1001 = vld [vmem:[%s1 + $0x18f0] sm:$0xff]
    %v1002 = vld [vmem:[%s1 + $0x18f8] sm:$0xff]
    %v1003 = vld [vmem:[%s1 + $0x1900] sm:$0xff]
    %v1004 = vld [vmem:[%s1 + $0x1908] sm:$0xff]
    %v1005 = vld [vmem:[%s1 + $0x1910] sm:$0xff]
    %v1006 = vld [vmem:[%s1 + $0x1918] sm:$0xff]
    %v1007 = vld [vmem:[%s1 + $0x1920] sm:$0xff]
    %v1008 = vld [vmem:[%s1 + $0x1928] sm:$0xff]
    %v1009 = vld [vmem:[%s1 + $0x1930] sm:$0xff]
    %v1010 = vld [vmem:[%s1 + $0x1938] sm:$0xff]
    %v1011 = vld [vmem:[%s1 + $0x1940] sm:$0xff]
    %v1012 = vld [vmem:[%s1 + $0x1948] sm:$0xff]
    %v1013 = vld [vmem:[%s1 + $0x1950] sm:$0xff]
    %v1014 = vld [vmem:[%s1 + $0x1958] sm:$0xff]
    %v1015 = vld [vmem:[%s1 + $0x1960] sm:$0xff]
    %v1016 = vld [vmem:[%s1 + $0x1968] sm:$0xff]
    %v1017 = vld [vmem:[%s1 + $0x1970] sm:$0xff]
    %v1018 = vld [vmem:[%s1 + $0x1978] sm:$0xff]
    %v1019 = vld [vmem:[%s1 + $0x1980] sm:$0xff]
    %v1020 = vld [vmem:[%s1 + $0x1988] sm:$0xff]
    %v1021 = vld [vmem:[%s1 + $0x1990] sm:$0xff]
    %v1022 = vld [vmem:[%s1 + $0x1998] sm:$0xff]
    %v1023 = vld [vmem:[%s1 + $0x19a0] sm:$0xff]
    %v1024 = vld [vmem:[%s1 + $0x19a8] sm:$0xff]
    %v1025 = vld [vmem:[%s1 + $0x19b0] sm:$0xff]
    %v1026 = vld [vmem:[%s1 + $0x19b8] sm:$0xff]
    %v1027 = vld [vmem:[%s1 + $0x19c0] sm:$0xff]
    %v1028 = vld [vmem:[%s1 + $0x19c8] sm:$0xff]
    %v1029 = vld [vmem:[%s1 + $0x19d0] sm:$0xff]
    %v1030 = vld [vmem:[%s1 + $0x19d8] sm:$0xff]
    %v1031 = vld [vmem:[%s1 + $0x19e0] sm:$0xff]
    %v1032 = vld [vmem:[%s1 + $0x19e8] sm:$0xff]
    %v1033 = vld [vmem:[%s1 + $0x19f0] sm:$0xff]
    %v1034 = vld [vmem:[%s1 + $0x19f8] sm:$0xff]
    %v1035 = vld [vmem:[%s1 + $0x1a00] sm:$0xff]
    %v1036 = vld [vmem:[%s1 + $0x1a08] sm:$0xff]
    %v1037 = vld [vmem:[%s1 + $0x1a10] sm:$0xff]
    %v1038 = vld [vmem:[%s1 + $0x1a18] sm:$0xff]
    %v1039 = vld [vmem:[%s1 + $0x1a20] sm:$0xff]
    %v1040 = vld [vmem:[%s1 + $0x1a28] sm:$0xff]
    %v1041 = vld [vmem:[%s1 + $0x1a30] sm:$0xff]
    %v1042 = vld [vmem:[%s1 + $0x1a38] sm:$0xff]
    %v1043 = vld [vmem:[%s1 + $0x1a40] sm:$0xff]
    %v1044 = vld [vmem:[%s1 + $0x1a48] sm:$0xff]
    %v1045 = vld [vmem:[%s1 + $0x1a50] sm:$0xff]
    %v1046 = vld [vmem:[%s1 + $0x1a58] sm:$0xff]
    %v1047 = vld [vmem:[%s1 + $0x1a60] sm:$0xff]
    %v1048 = vld [vmem:[%s1 + $0x1a68] sm:$0xff]
    %v1049 = vld [vmem:[%s1 + $0x1a70] sm:$0xff]
    %v1050 = vld [vmem:[%s1 + $0x1a78] sm:$0xff]
    %v1051 = vld [vmem:[%s1 + $0x1a80] sm:$0xff]
    %v1052 = vld [vmem:[%s1 + $0x1a88] sm:$0xff]
    %v1053 = vld [vmem:[%s1 + $0x1a90] sm:$0xff]
    %v1054 = vld [vmem:[%s1 + $0x1a98] sm:$0xff]
    %v1055 = vld [vmem:[%s1 + $0x1aa0] sm:$0xff]
    %v1056 = vld [vmem:[%s1 + $0x1aa8] sm:$0xff]
    %v1057 = vld [vmem:[%s1 + $0x1ab0] sm:$0xff]
    %v1058 = vld [vmem:[%s1 + $0x1ab8] sm:$0xff]
    %v1059 = vld [vmem:[%s1 + $0x1ac0] sm:$0xff]
    %v1060 = vld [vmem:[%s1 + $0x1ac8] sm:$0xff]
    %v1061 = vld [vmem:[%s1 + $0x1ad0] sm:$0xff]
    %v1062 = vld [vmem:[%s1 + $0x1ad8] sm:$0xff]
    %v1063 = vld [vmem:[%s1 + $0x1ae0] sm:$0xff]
    %v1064 = vld [vmem:[%s1 + $0x1ae8] sm:$0xff]
    %v1065 = vld [vmem:[%s1 + $0x1af0] sm:$0xff]
    %v1066 = vld [vmem:[%s1 + $0x1af8] sm:$0xff]
    %v1067 = vld [vmem:[%s1 + $0x1b00] sm:$0xff]
    %v1068 = vld [vmem:[%s1 + $0x1b08] sm:$0xff]
    %v1069 = vld [vmem:[%s1 + $0x1b10] sm:$0xff]
    %v1070 = vld [vmem:[%s1 + $0x1b18] sm:$0xff]
    %v1071 = vld [vmem:[%s1 + $0x1b20] sm:$0xff]
    %v1072 = vld [vmem:[%s1 + $0x1b28] sm:$0xff]
    %v1073 = vld [vmem:[%s1 + $0x1b30] sm:$0xff]
    %v1074 = vld [vmem:[%s1 + $0x1b38] sm:$0xff]
    %v1075 = vld [vmem:[%s1 + $0x1b40] sm:$0xff]
    %v1076 = vld [vmem:[%s1 + $0x1b48] sm:$0xff]
    %v1077 = vld [vmem:[%s1 + $0x1b50] sm:$0xff]
    %v1078 = vld [vmem:[%s1 + $0x1b58] sm:$0xff]
    %v1079 = vld [vmem:[%s1 + $0x1b60] sm:$0xff]
    %v1080 = vld [vmem:[%s1 + $0x1b68] sm:$0xff]
    %v1081 = vld [vmem:[%s1 + $0x1b70] sm:$0xff]
    %v1082 = vld [vmem:[%s1 + $0x1b78] sm:$0xff]
    %v1083 = vld [vmem:[%s1 + $0x1b80] sm:$0xff]
    %v1084 = vld [vmem:[%s1 + $0x1b88] sm:$0xff]
    %v1085 = vld [vmem:[%s1 + $0x1b90] sm:$0xff]
    %v1086 = vld [vmem:[%s1 + $0x1b98] sm:$0xff]
    %v1087 = vld [vmem:[%s1 + $0x1ba0] sm:$0xff]
    %v1088 = vld [vmem:[%s1 + $0x1ba8] sm:$0xff]
    %v1089 = vld [vmem:[%s1 + $0x1bb0] sm:$0xff]
    %v1090 = vld [vmem:[%s1 + $0x1bb8] sm:$0xff]
    %v1091 = vld [vmem:[%s1 + $0x1bc0] sm:$0xff]
    %v1092 = vld [vmem:[%s1 + $0x1bc8] sm:$0xff]
    %v1093 = vld [vmem:[%s1 + $0x1bd0] sm:$0xff]
    %v1094 = vld [vmem:[%s1 + $0x1bd8] sm:$0xff]
    %v1095 = vld [vmem:[%s1 + $0x1be0] sm:$0xff]
    %v1096 = vld [vmem:[%s1 + $0x1be8] sm:$0xff]
    %v1097 = vld [vmem:[%s1 + $0x1bf0] sm:$0xff]
    %v1098 = vld [vmem:[%s1 + $0x1bf8] sm:$0xff]
    %v1099 = vld [vmem:[%s1 + $0x1c00] sm:$0xff]
    %v1100 = vld [vmem:[%s1 + $0x1c08] sm:$0xff]
    %v1101 = vld [vmem:[%s1 + $0x1c10] sm:$0xff]
    %v1102 = vld [vmem:[%s1 + $0x1c18] sm:$0xff]
    %v1103 = vld [vmem:[%s1 + $0x1c20] sm:$0xff]
    %v1104 = vld [vmem:[%s1 + $0x1c28] sm:$0xff]
    %v1105 = vld [vmem:[%s1 + $0x1c30] sm:$0xff]
    %v1106 = vld [vmem:[%s1 + $0x1c38] sm:$0xff]
    %v1107 = vld [vmem:[%s1 + $0x1c40] sm:$0xff]
    %v1108 = vld [vmem:[%s1 + $0x1c48] sm:$0xff]
    %v1109 = vld [vmem:[%s1 + $0x1c50] sm:$0xff]
    %v1110 = vld [vmem:[%s1 + $0x1c58] sm:$0xff]
    %v1111 = vld [vmem:[%s1 + $0x1c60] sm:$0xff]
    %v1112 = vld [vmem:[%s1 + $0x1c68] sm:$0xff]
    %v1113 = vld [vmem:[%s1 + $0x1c70] sm:$0xff]
    %v1114 = vld [vmem:[%s1 + $0x1c78] sm:$0xff]
    %v1115 = vld [vmem:[%s1 + $0x1c80] sm:$0xff]
    %v1116 = vld [vmem:[%s1 + $0x1c88] sm:$0xff]
    %v1117 = vld [vmem:[%s1 + $0x1c90] sm:$0xff]
    %v1118 = vld [vmem:[%s1 + $0x1c98] sm:$0xff]
    %v1119 = vld [vmem:[%s1 + $0x1ca0] sm:$0xff]
    %v1120 = vld [vmem:[%s1 + $0x1ca8] sm:$0xff]
    %v1121 = vld [vmem:[%s1 + $0x1cb0] sm:$0xff]
    %v1122 = vld [vmem:[%s1 + $0x1cb8] sm:$0xff]
    %v1123 = vld [vmem:[%s1 + $0x1cc0] sm:$0xff]
    %v1124 = vld [vmem:[%s1 + $0x1cc8] sm:$0xff]
    %v1125 = vld [vmem:[%s1 + $0x1cd0] sm:$0xff]
    %v1126 = vld [vmem:[%s1 + $0x1cd8] sm:$0xff]
    %v1127 = vld [vmem:[%s1 + $0x1ce0] sm:$0xff]
    %v1128 = vld [vmem:[%s1 + $0x1ce8] sm:$0xff]
    %v1129 = vld [vmem:[%s1 + $0x1cf0] sm:$0xff]
    %v1130 = vld [vmem:[%s1 + $0x1cf8] sm:$0xff]
    %v1131 = vld [vmem:[%s1 + $0x1d00] sm:$0xff]
    %v1132 = vld [vmem:[%s1 + $0x1d08] sm:$0xff]
    %v1133 = vld [vmem:[%s1 + $0x1d10] sm:$0xff]
    %v1134 = vld [vmem:[%s1 + $0x1d18] sm:$0xff]
    %v1135 = vld [vmem:[%s1 + $0x1d20] sm:$0xff]
    %v1136 = vld [vmem:[%s1 + $0x1d28] sm:$0xff]
    %v1137 = vld [vmem:[%s1 + $0x1d30] sm:$0xff]
    %v1138 = vld [vmem:[%s1 + $0x1d38] sm:$0xff]
    %v1139 = vld [vmem:[%s1 + $0x1d40] sm:$0xff]
    %v1140 = vld [vmem:[%s1 + $0x1d48] sm:$0xff]
    %v1141 = vld [vmem:[%s1 + $0x1d50] sm:$0xff]
    %v1142 = vld [vmem:[%s1 + $0x1d58] sm:$0xff]
    %v1143 = vld [vmem:[%s1 + $0x1d60] sm:$0xff]
    %v1144 = vld [vmem:[%s1 + $0x1d68] sm:$0xff]
    %v1145 = vld [vmem:[%s1 + $0x1d70] sm:$0xff]
    %v1146 = vld [vmem:[%s1 + $0x1d78] sm:$0xff]
    %v1147 = vld [vmem:[%s1 + $0x1d80] sm:$0xff]
    %v1148 = vld [vmem:[%s1 + $0x1d88] sm:$0xff]
    %v1149 = vld [vmem:[%s1 + $0x1d90] sm:$0xff]
    %v1150 = vld [vmem:[%s1 + $0x1d98] sm:$0xff]
    %v1151 = vld [vmem:[%s1 + $0x1da0] sm:$0xff]
    %v1152 = vld [vmem:[%s1 + $0x1da8] sm:$0xff]
    %v1153 = vld [vmem:[%s1 + $0x1db0] sm:$0xff]
    %v1154 = vld [vmem:[%s1 + $0x1db8] sm:$0xff]
    %v1155 = vld [vmem:[%s1 + $0x1dc0] sm:$0xff]
    %v1156 = vld [vmem:[%s1 + $0x1dc8] sm:$0xff]
    %v1157 = vld [vmem:[%s1 + $0x1dd0] sm:$0xff]
    %v1158 = vld [vmem:[%s1 + $0x1dd8] sm:$0xff]
    %v1159 = vld [vmem:[%s1 + $0x1de0] sm:$0xff]
    %v1160 = vld [vmem:[%s1 + $0x1de8] sm:$0xff]
    %v1161 = vld [vmem:[%s1 + $0x1df0] sm:$0xff]
    %v1162 = vld [vmem:[%s1 + $0x1df8] sm:$0xff]
    %v1163 = vld [vmem:[%s1 + $0x1e00] sm:$0xff]
    %v1164 = vld [vmem:[%s1 + $0x1e08] sm:$0xff]
    %v1165 = vld [vmem:[%s1 + $0x1e10] sm:$0xff]
    %v1166 = vld [vmem:[%s1 + $0x1e18] sm:$0xff]
    %v1167 = vld [vmem:[%s1 + $0x1e20] sm:$0xff]
    %v1168 = vld [vmem:[%s1 + $0x1e28] sm:$0xff]
    %v1169 = vld [vmem:[%s1 + $0x1e30] sm:$0xff]
    %v1170 = vld [vmem:[%s1 + $0x1e38] sm:$0xff]
    %v1171 = vld [vmem:[%s1 + $0x1e40] sm:$0xff]
    %v1172 = vld [vmem:[%s1 + $0x1e48] sm:$0xff]
    %v1173 = vld [vmem:[%s1 + $0x1e50] sm:$0xff]
    %v1174 = vld [vmem:[%s1 + $0x1e58] sm:$0xff]
    %v1175 = vld [vmem:[%s1 + $0x1e60] sm:$0xff]
    %v1176 = vld [vmem:[%s1 + $0x1e68] sm:$0xff]
    %v1177 = vld [vmem:[%s1 + $0x1e70] sm:$0xff]
    %v1178 = vld [vmem:[%s1 + $0x1e78] sm:$0xff]
    %v1179 = vld [vmem:[%s1 + $0x1e80] sm:$0xff]
    %v1180 = vld [vmem:[%s1 + $0x1e88] sm:$0xff]
    %v1181 = vld [vmem:[%s1 + $0x1e90] sm:$0xff]
    %v1182 = vld [vmem:[%s1 + $0x1e98] sm:$0xff]
    %v1183 = vld [vmem:[%s1 + $0x1ea0] sm:$0xff]
    %v1184 = vld [vmem:[%s1 + $0x1ea8] sm:$0xff]
    %v1185 = vld [vmem:[%s1 + $0x1eb0] sm:$0xff]
    %v1186 = vld [vmem:[%s1 + $0x1eb8] sm:$0xff]
    %v1187 = vld [vmem:[%s1 + $0x1ec0] sm:$0xff]
    %v1188 = vld [vmem:[%s1 + $0x1ec8] sm:$0xff]
    %v1189 = vld [vmem:[%s1 + $0x1ed0] sm:$0xff]
    %v1190 = vld [vmem:[%s1 + $0x1ed8] sm:$0xff]
    %v1191 = vld [vmem:[%s1 + $0x1ee0] sm:$0xff]
    %v1192 = vld [vmem:[%s1 + $0x1ee8] sm:$0xff]
    %v1193 = vld [vmem:[%s1 + $0x1ef0] sm:$0xff]
    %v1194 = vld [vmem:[%s1 + $0x1ef8] sm:$0xff]
    %v1195 = vld [vmem:[%s1 + $0x1f00] sm:$0xff]
    %v1196 = vld [vmem:[%s1 + $0x1f08] sm:$0xff]
    %v1197 = vld [vmem:[%s1 + $0x1f10] sm:$0xff]
    %v1198 = vld [vmem:[%s1 + $0x1f18] sm:$0xff]
    %v1199 = vld [vmem:[%s1 + $0x1f20] sm:$0xff]
    %v1200 = vld [vmem:[%s1 + $0x1f28] sm:$0xff]
    %v1201 = vld [vmem:[%s1 + $0x1f30] sm:$0xff]
    %v1202 = vld [vmem:[%s1 + $0x1f38] sm:$0xff]
    %v1203 = vld [vmem:[%s1 + $0x1f40] sm:$0xff]
    %v1204 = vld [vmem:[%s1 + $0x1f48] sm:$0xff]
    %v1205 = vld [vmem:[%s1 + $0x1f50] sm:$0xff]
    %v1206 = vld [vmem:[%s1 + $0x1f58] sm:$0xff]
    %v1207 = vld [vmem:[%s1 + $0x1f60] sm:$0xff]
    %v1208 = vld [vmem:[%s1 + $0x1f68] sm:$0xff]
    %v1209 = vld [vmem:[%s1 + $0x1f70] sm:$0xff]
    %v1210 = vld [vmem:[%s1 + $0x1f78] sm:$0xff]
    %v1211 = vld [vmem:[%s1 + $0x1f80] sm:$0xff]
    %v1212 = vld [vmem:[%s1 + $0x1f88] sm:$0xff]
    %v1213 = vld [vmem:[%s1 + $0x1f90] sm:$0xff]
    %v1214 = vld [vmem:[%s1 + $0x1f98] sm:$0xff]
    %v1215 = vld [vmem:[%s1 + $0x1fa0] sm:$0xff]
    %v1216 = vld [vmem:[%s1 + $0x1fa8] sm:$0xff]
    %v1217 = vld [vmem:[%s1 + $0x1fb0] sm:$0xff]
    %v1218 = vld [vmem:[%s1 + $0x1fb8] sm:$0xff]
    %v1219 = vld [vmem:[%s1 + $0x1fc0] sm:$0xff]
    %v1220 = vld [vmem:[%s1 + $0x1fc8] sm:$0xff]
    %v1221 = vld [vmem:[%s1 + $0x1fd0] sm:$0xff]
    %v1222 = vld [vmem:[%s1 + $0x1fd8] sm:$0xff]
    %v1223 = vld [vmem:[%s1 + $0x1fe0] sm:$0xff]
    %v1224 = vld [vmem:[%s1 + $0x1fe8] sm:$0xff]
    %v1225 = vld [vmem:[%s1 + $0x1ff0] sm:$0xff]
    %v1226 = vld [vmem:[%s1 + $0x1ff8] sm:$0xff]
    %v1227 = vld [vmem:[%s1 + $0x2000] sm:$0xff]
    %v1228 = vld [vmem:[%s1 + $0x2008] sm:$0xff]
    %v1229 = vld [vmem:[%s1 + $0x2010] sm:$0xff]
    %v1230 = vld [vmem:[%s1 + $0x2018] sm:$0xff]
    %v1231 = vld [vmem:[%s1 + $0x2020] sm:$0xff]
    %v1232 = vld [vmem:[%s1 + $0x2028] sm:$0xff]
    %v1233 = vld [vmem:[%s1 + $0x2030] sm:$0xff]
    %v1234 = vld [vmem:[%s1 + $0x2038] sm:$0xff]
    %v1235 = vld [vmem:[%s1 + $0x2040] sm:$0xff]
    %v1236 = vld [vmem:[%s1 + $0x2048] sm:$0xff]
    %v1237 = vld [vmem:[%s1 + $0x2050] sm:$0xff]
    %v1238 = vld [vmem:[%s1 + $0x2058] sm:$0xff]
    %v1239 = vld [vmem:[%s1 + $0x2060] sm:$0xff]
    %v1240 = vld [vmem:[%s1 + $0x2068] sm:$0xff]
    %v1241 = vld [vmem:[%s1 + $0x2070] sm:$0xff]
    %v1242 = vld [vmem:[%s1 + $0x2078] sm:$0xff]
    %v1243 = vld [vmem:[%s1 + $0x2080] sm:$0xff]
    %v1244 = vld [vmem:[%s1 + $0x2088] sm:$0xff]
    %v1245 = vld [vmem:[%s1 + $0x2090] sm:$0xff]
    %v1246 = vld [vmem:[%s1 + $0x2098] sm:$0xff]
    %v1247 = vld [vmem:[%s1 + $0x20a0] sm:$0xff]
    %v1248 = vld [vmem:[%s1 + $0x20a8] sm:$0xff]
    %v1249 = vld [vmem:[%s1 + $0x20b0] sm:$0xff]
    %v1250 = vld [vmem:[%s1 + $0x20b8] sm:$0xff]
    %v1251 = vld [vmem:[%s1 + $0x20c0] sm:$0xff]
    %v1252 = vld [vmem:[%s1 + $0x20c8] sm:$0xff]
    %v1253 = vld [vmem:[%s1 + $0x20d0] sm:$0xff]
    %v1254 = vld [vmem:[%s1 + $0x20d8] sm:$0xff]
    %v1255 = vld [vmem:[%s1 + $0x20e0] sm:$0xff]
    %v1256 = vld [vmem:[%s1 + $0x20e8] sm:$0xff]
    %v1257 = vld [vmem:[%s1 + $0x20f0] sm:$0xff]
    %v1258 = vld [vmem:[%s1 + $0x20f8] sm:$0xff]
    %v1259 = vld [vmem:[%s1 + $0x2100] sm:$0xff]
    %v1260 = vld [vmem:[%s1 + $0x2108] sm:$0xff]
    %v1261 = vld [vmem:[%s1 + $0x2110] sm:$0xff]
    %v1262 = vld [vmem:[%s1 + $0x2118] sm:$0xff]
    %v1263 = vld [vmem:[%s1 + $0x2120] sm:$0xff]
    %v1264 = vld [vmem:[%s1 + $0x2128] sm:$0xff]
    %v1265 = vld [vmem:[%s1 + $0x2130] sm:$0xff]
    %v1266 = vld [vmem:[%s1 + $0x2138] sm:$0xff]
    %v1267 = vld [vmem:[%s1 + $0x2140] sm:$0xff]
    %v1268 = vld [vmem:[%s1 + $0x2148] sm:$0xff]
    %v1269 = vld [vmem:[%s1 + $0x2150] sm:$0xff]
    %v1270 = vld [vmem:[%s1 + $0x2158] sm:$0xff]
    %v1271 = vld [vmem:[%s1 + $0x2160] sm:$0xff]
    %v1272 = vld [vmem:[%s1 + $0x2168] sm:$0xff]
    %v1273 = vld [vmem:[%s1 + $0x2170] sm:$0xff]
    %v1274 = vld [vmem:[%s1 + $0x2178] sm:$0xff]
    %v1275 = vld [vmem:[%s1 + $0x2180] sm:$0xff]
    %v1276 = vld [vmem:[%s1 + $0x2188] sm:$0xff]
    %v1277 = vld [vmem:[%s1 + $0x2190] sm:$0xff]
    %v1278 = vld [vmem:[%s1 + $0x2198] sm:$0xff]
    %v1279 = vld [vmem:[%s1 + $0x21a0] sm:$0xff]
    %v1280 = vld [vmem:[%s1 + $0x21a8] sm:$0xff]
    %v1281 = vld [vmem:[%s1 + $0x21b0] sm:$0xff]
    %v1282 = vld [vmem:[%s1 + $0x21b8] sm:$0xff]
    %v1283 = vld [vmem:[%s1 + $0x21c0] sm:$0xff]
    %v1284 = vld [vmem:[%s1 + $0x21c8] sm:$0xff]
    %v1285 = vld [vmem:[%s1 + $0x21d0] sm:$0xff]
    %v1286 = vld [vmem:[%s1 + $0x21d8] sm:$0xff]
    %v1287 = vld [vmem:[%s1 + $0x21e0] sm:$0xff]
    %v1288 = vld [vmem:[%s1 + $0x21e8] sm:$0xff]
    %v1289 = vld [vmem:[%s1 + $0x21f0] sm:$0xff]
    %v1290 = vld [vmem:[%s1 + $0x21f8] sm:$0xff]
    %v1291 = vld [vmem:[%s1 + $0x2200] sm:$0xff]
    %v1292 = vld [vmem:[%s1 + $0x2208] sm:$0xff]
    %v1293 = vld [vmem:[%s1 + $0x2210] sm:$0xff]
    %v1294 = vld [vmem:[%s1 + $0x2218] sm:$0xff]
    %v1295 = vld [vmem:[%s1 + $0x2220] sm:$0xff]
    %v1296 = vld [vmem:[%s1 + $0x2228] sm:$0xff]
    %v1297 = vld [vmem:[%s1 + $0x2230] sm:$0xff]
    %v1298 = vld [vmem:[%s1 + $0x2238] sm:$0xff]
    %v1299 = vld [vmem:[%s1 + $0x2240] sm:$0xff]
    %v1300 = vld [vmem:[%s1 + $0x2248] sm:$0xff]
    %v1301 = vld [vmem:[%s1 + $0x2250] sm:$0xff]
    %v1302 = vld [vmem:[%s1 + $0x2258] sm:$0xff]
    %v1303 = vld [vmem:[%s1 + $0x2260] sm:$0xff]
    %v1304 = vld [vmem:[%s1 + $0x2268] sm:$0xff]
    %v1305 = vld [vmem:[%s1 + $0x2270] sm:$0xff]
    %v1306 = vld [vmem:[%s1 + $0x2278] sm:$0xff]
    %v1307 = vld [vmem:[%s1 + $0x2280] sm:$0xff]
    %v1308 = vld [vmem:[%s1 + $0x2288] sm:$0xff]
    %v1309 = vld [vmem:[%s1 + $0x2290] sm:$0xff]
    %v1310 = vld [vmem:[%s1 + $0x2298] sm:$0xff]
    %v1311 = vld [vmem:[%s1 + $0x22a0] sm:$0xff]
    %v1312 = vld [vmem:[%s1 + $0x22a8] sm:$0xff]
    %v1313 = vld [vmem:[%s1 + $0x22b0] sm:$0xff]
    %v1314 = vld [vmem:[%s1 + $0x22b8] sm:$0xff]
    %v1315 = vld [vmem:[%s1 + $0x22c0] sm:$0xff]
    %v1316 = vld [vmem:[%s1 + $0x22c8] sm:$0xff]
    %v1317 = vld [vmem:[%s1 + $0x22d0] sm:$0xff]
    %v1318 = vld [vmem:[%s1 + $0x22d8] sm:$0xff]
    %v1319 = vld [vmem:[%s1 + $0x22e0] sm:$0xff]
    %v1320 = vld [vmem:[%s1 + $0x22e8] sm:$0xff]
    %v1321 = vld [vmem:[%s1 + $0x22f0] sm:$0xff]
    %v1322 = vld [vmem:[%s1 + $0x22f8] sm:$0xff]
    %v1323 = vld [vmem:[%s1 + $0x2300] sm:$0xff]
    %v1324 = vld [vmem:[%s1 + $0x2308] sm:$0xff]
    %v1325 = vld [vmem:[%s1 + $0x2310] sm:$0xff]
    %v1326 = vld [vmem:[%s1 + $0x2318] sm:$0xff]
    %v1327 = vld [vmem:[%s1 + $0x2320] sm:$0xff]
    %v1328 = vld [vmem:[%s1 + $0x2328] sm:$0xff]
    %v1329 = vld [vmem:[%s1 + $0x2330] sm:$0xff]
    %v1330 = vld [vmem:[%s1 + $0x2338] sm:$0xff]
    %v1331 = vld [vmem:[%s1 + $0x2340] sm:$0xff]
    %v1332 = vld [vmem:[%s1 + $0x2348] sm:$0xff]
    %v1333 = vld [vmem:[%s1 + $0x2350] sm:$0xff]
    %v1334 = vld [vmem:[%s1 + $0x2358] sm:$0xff]
    %v1335 = vld [vmem:[%s1 + $0x2360] sm:$0xff]
    %v1336 = vld [vmem:[%s1 + $0x2368] sm:$0xff]
    %v1337 = vld [vmem:[%s1 + $0x2370] sm:$0xff]
    %v1338 = vld [vmem:[%s1 + $0x2378] sm:$0xff]
    %v1339 = vld [vmem:[%s1 + $0x2380] sm:$0xff]
    %v1340 = vld [vmem:[%s1 + $0x2388] sm:$0xff]
    %v1341 = vld [vmem:[%s1 + $0x2390] sm:$0xff]
    %v1342 = vld [vmem:[%s1 + $0x2398] sm:$0xff]
    %v1343 = vld [vmem:[%s1 + $0x23a0] sm:$0xff]
    %v1344 = vld [vmem:[%s1 + $0x23a8] sm:$0xff]
    %v1345 = vld [vmem:[%s1 + $0x23b0] sm:$0xff]
    %v1346 = vld [vmem:[%s1 + $0x23b8] sm:$0xff]
    %v1347 = vld [vmem:[%s1 + $0x23c0] sm:$0xff]
    %v1348 = vld [vmem:[%s1 + $0x23c8] sm:$0xff]
    %v1349 = vld [vmem:[%s1 + $0x23d0] sm:$0xff]
    %v1350 = vld [vmem:[%s1 + $0x23d8] sm:$0xff]
    %v1351 = vld [vmem:[%s1 + $0x23e0] sm:$0xff]
    %v1352 = vld [vmem:[%s1 + $0x23e8] sm:$0xff]
    %v1353 = vld [vmem:[%s1 + $0x23f0] sm:$0xff]
    %v1354 = vld [vmem:[%s1 + $0x23f8] sm:$0xff]
    %v1355 = vld [vmem:[%s1 + $0x2400] sm:$0xff]
    %v1356 = vld [vmem:[%s1 + $0x2408] sm:$0xff]
    %v1357 = vld [vmem:[%s1 + $0x2410] sm:$0xff]
    %v1358 = vld [vmem:[%s1 + $0x2418] sm:$0xff]
    %v1359 = vld [vmem:[%s1 + $0x2420] sm:$0xff]
    %v1360 = vld [vmem:[%s1 + $0x2428] sm:$0xff]
    %v1361 = vld [vmem:[%s1 + $0x2430] sm:$0xff]
    %v1362 = vld [vmem:[%s1 + $0x2438] sm:$0xff]
    %v1363 = vld [vmem:[%s1 + $0x2440] sm:$0xff]
    %v1364 = vld [vmem:[%s1 + $0x2448] sm:$0xff]
    %v1365 = vld [vmem:[%s1 + $0x2450] sm:$0xff]
    %v1366 = vld [vmem:[%s1 + $0x2458] sm:$0xff]
    %v1367 = vld [vmem:[%s1 + $0x2460] sm:$0xff]
    %v1368 = vld [vmem:[%s1 + $0x2468] sm:$0xff]
    %v1369 = vld [vmem:[%s1 + $0x2470] sm:$0xff]
    %v1370 = vld [vmem:[%s1 + $0x2478] sm:$0xff]
    %v1371 = vld [vmem:[%s1 + $0x2480] sm:$0xff]
    %v1372 = vld [vmem:[%s1 + $0x2488] sm:$0xff]
    %v1373 = vld [vmem:[%s1 + $0x2490] sm:$0xff]
    %v1374 = vld [vmem:[%s1 + $0x2498] sm:$0xff]
    %v1375 = vld [vmem:[%s1 + $0x24a0] sm:$0xff]
    %v1376 = vld [vmem:[%s1 + $0x24a8] sm:$0xff]
    %v1377 = vld [vmem:[%s1 + $0x24b0] sm:$0xff]
    %v1378 = vld [vmem:[%s1 + $0x24b8] sm:$0xff]
    %v1379 = vld [vmem:[%s1 + $0x24c0] sm:$0xff]
    %v1380 = vld [vmem:[%s1 + $0x24c8] sm:$0xff]
    %v1381 = vld [vmem:[%s1 + $0x24d0] sm:$0xff]
    %v1382 = vld [vmem:[%s1 + $0x24d8] sm:$0xff]
    %v1383 = vld [vmem:[%s1 + $0x24e0] sm:$0xff]
    %v1384 = vld [vmem:[%s1 + $0x24e8] sm:$0xff]
    %v1385 = vld [vmem:[%s1 + $0x24f0] sm:$0xff]
    %v1386 = vld [vmem:[%s1 + $0x24f8] sm:$0xff]
    %v1387 = vld [vmem:[%s1 + $0x2500] sm:$0xff]
    %v1388 = vld [vmem:[%s1 + $0x2508] sm:$0xff]
    %v1389 = vld [vmem:[%s1 + $0x2510] sm:$0xff]
    %v1390 = vld [vmem:[%s1 + $0x2518] sm:$0xff]
    %v1391 = vld [vmem:[%s1 + $0x2520] sm:$0xff]
    %v1392 = vld [vmem:[%s1 + $0x2528] sm:$0xff]
    %v1393 = vld [vmem:[%s1 + $0x2530] sm:$0xff]
    %v1394 = vld [vmem:[%s1 + $0x2538] sm:$0xff]
    %v1395 = vld [vmem:[%s1 + $0x2540] sm:$0xff]
    %v1396 = vld [vmem:[%s1 + $0x2548] sm:$0xff]
    %v1397 = vld [vmem:[%s1 + $0x2550] sm:$0xff]
    %v1398 = vld [vmem:[%s1 + $0x2558] sm:$0xff]
    %v1399 = vld [vmem:[%s1 + $0x2560] sm:$0xff]
    %v1400 = vld [vmem:[%s1 + $0x2568] sm:$0xff]
    %v1401 = vld [vmem:[%s1 + $0x2570] sm:$0xff]
    %v1402 = vld [vmem:[%s1 + $0x2578] sm:$0xff]
    %v1403 = vld [vmem:[%s1 + $0x2580] sm:$0xff]
    %v1404 = vld [vmem:[%s1 + $0x2588] sm:$0xff]
    %v1405 = vld [vmem:[%s1 + $0x2590] sm:$0xff]
    %v1406 = vld [vmem:[%s1 + $0x2598] sm:$0xff]
    %v1407 = vld [vmem:[%s1 + $0x25a0] sm:$0xff]
    %v1408 = vld [vmem:[%s1 + $0x25a8] sm:$0xff]
    %v1409 = vld [vmem:[%s1 + $0x25b0] sm:$0xff]
    %v1410 = vld [vmem:[%s1 + $0x25b8] sm:$0xff]
    %v1411 = vld [vmem:[%s1 + $0x25c0] sm:$0xff]
    %v1412 = vld [vmem:[%s1 + $0x25c8] sm:$0xff]
    %v1413 = vld [vmem:[%s1 + $0x25d0] sm:$0xff]
    %v1414 = vld [vmem:[%s1 + $0x25d8] sm:$0xff]
    %v1415 = vld [vmem:[%s1 + $0x25e0] sm:$0xff]
    %v1416 = vld [vmem:[%s1 + $0x25e8] sm:$0xff]
    %v1417 = vld [vmem:[%s1 + $0x25f0] sm:$0xff]
    %v1418 = vld [vmem:[%s1 + $0x25f8] sm:$0xff]
    %v1419 = vld [vmem:[%s1 + $0x2600] sm:$0xff]
    %v1420 = vld [vmem:[%s1 + $0x2608] sm:$0xff]
    %v1421 = vld [vmem:[%s1 + $0x2610] sm:$0xff]
    %v1422 = vld [vmem:[%s1 + $0x2618] sm:$0xff]
    %v1423 = vld [vmem:[%s1 + $0x2620] sm:$0xff]
    %v1424 = vld [vmem:[%s1 + $0x2628] sm:$0xff]
    %v1425 = vld [vmem:[%s1 + $0x2630] sm:$0xff]
    %v1426 = vld [vmem:[%s1 + $0x2638] sm:$0xff]
    %v1427 = vld [vmem:[%s1 + $0x2640] sm:$0xff]
    %v1428 = vld [vmem:[%s1 + $0x2648] sm:$0xff]
    %v1429 = vld [vmem:[%s1 + $0x2650] sm:$0xff]
    %v1430 = vld [vmem:[%s1 + $0x2658] sm:$0xff]
    %v1431 = vld [vmem:[%s1 + $0x2660] sm:$0xff]
    %v1432 = vld [vmem:[%s1 + $0x2668] sm:$0xff]
    %v1433 = vld [vmem:[%s1 + $0x2670] sm:$0xff]
    %v1434 = vld [vmem:[%s1 + $0x2678] sm:$0xff]
    %v1435 = vld [vmem:[%s1 + $0x2680] sm:$0xff]
    %v1436 = vld [vmem:[%s1 + $0x2688] sm:$0xff]
    %v1437 = vld [vmem:[%s1 + $0x2690] sm:$0xff]
    %v1438 = vld [vmem:[%s1 + $0x2698] sm:$0xff]
    %v1439 = vld [vmem:[%s1 + $0x26a0] sm:$0xff]
    %v1440 = vld [vmem:[%s1 + $0x26a8] sm:$0xff]
    %v1441 = vld [vmem:[%s1 + $0x26b0] sm:$0xff]
    %v1442 = vld [vmem:[%s1 + $0x26b8] sm:$0xff]
    %v1443 = vld [vmem:[%s1 + $0x26c0] sm:$0xff]
    %v1444 = vld [vmem:[%s1 + $0x26c8] sm:$0xff]
    %v1445 = vld [vmem:[%s1 + $0x26d0] sm:$0xff]
    %v1446 = vld [vmem:[%s1 + $0x26d8] sm:$0xff]
    %v1447 = vld [vmem:[%s1 + $0x26e0] sm:$0xff]
    %v1448 = vld [vmem:[%s1 + $0x26e8] sm:$0xff]
    %v1449 = vld [vmem:[%s1 + $0x26f0] sm:$0xff]
    %v1450 = vld [vmem:[%s1 + $0x26f8] sm:$0xff]
    %v1451 = vld [vmem:[%s1 + $0x2700] sm:$0xff]
    %v1452 = vld [vmem:[%s1 + $0x2708] sm:$0xff]
    %v1453 = vld [vmem:[%s1 + $0x2710] sm:$0xff]
    %v1454 = vld [vmem:[%s1 + $0x2718] sm:$0xff]
    %v1455 = vld [vmem:[%s1 + $0x2720] sm:$0xff]
    %v1456 = vld [vmem:[%s1 + $0x2728] sm:$0xff]
    %v1457 = vld [vmem:[%s1 + $0x2730] sm:$0xff]
    %v1458 = vld [vmem:[%s1 + $0x2738] sm:$0xff]
    %v1459 = vld [vmem:[%s1 + $0x2740] sm:$0xff]
    %v1460 = vld [vmem:[%s1 + $0x2748] sm:$0xff]
    %v1461 = vld [vmem:[%s1 + $0x2750] sm:$0xff]
    %v1462 = vld [vmem:[%s1 + $0x2758] sm:$0xff]
    %v1463 = vld [vmem:[%s1 + $0x2760] sm:$0xff]
    %v1464 = vld [vmem:[%s1 + $0x2768] sm:$0xff]
    %v1465 = vld [vmem:[%s1 + $0x2770] sm:$0xff]
    %v1466 = vld [vmem:[%s1 + $0x2778] sm:$0xff]
    %v1467 = vld [vmem:[%s1 + $0x2780] sm:$0xff]
    %v1468 = vld [vmem:[%s1 + $0x2788] sm:$0xff]
    %v1469 = vld [vmem:[%s1 + $0x2790] sm:$0xff]
    %v1470 = vld [vmem:[%s1 + $0x2798] sm:$0xff]
    %v1471 = vld [vmem:[%s1 + $0x27a0] sm:$0xff]
    %v1472 = vld [vmem:[%s1 + $0x27a8] sm:$0xff]
    %v1473 = vld [vmem:[%s1 + $0x27b0] sm:$0xff]
    %v1474 = vld [vmem:[%s1 + $0x27b8] sm:$0xff]
    %v1475 = vld [vmem:[%s1 + $0x27c0] sm:$0xff]
    %v1476 = vld [vmem:[%s1 + $0x27c8] sm:$0xff]
    %v1477 = vld [vmem:[%s1 + $0x27d0] sm:$0xff]
    %v1478 = vld [vmem:[%s1 + $0x27d8] sm:$0xff]
    %v1479 = vld [vmem:[%s1 + $0x27e0] sm:$0xff]
    %v1480 = vld [vmem:[%s1 + $0x27e8] sm:$0xff]
    %v1481 = vld [vmem:[%s1 + $0x27f0] sm:$0xff]
    %v1482 = vld [vmem:[%s1 + $0x27f8] sm:$0xff]
    %v1483 = vld [vmem:[%s1 + $0x2800] sm:$0xff]
    %v1484 = vld [vmem:[%s1 + $0x2808] sm:$0xff]
    %v1485 = vld [vmem:[%s1 + $0x2810] sm:$0xff]
    %v1486 = vld [vmem:[%s1 + $0x2818] sm:$0xff]
    %v1487 = vld [vmem:[%s1 + $0x2820] sm:$0xff]
    %v1488 = vld [vmem:[%s1 + $0x2828] sm:$0xff]
    %v1489 = vld [vmem:[%s1 + $0x2830] sm:$0xff]
    %v1490 = vld [vmem:[%s1 + $0x2838] sm:$0xff]
    %v1491 = vld [vmem:[%s1 + $0x2840] sm:$0xff]
    %v1492 = vld [vmem:[%s1 + $0x2848] sm:$0xff]
    %v1493 = vld [vmem:[%s1 + $0x2850] sm:$0xff]
    %v1494 = vld [vmem:[%s1 + $0x2858] sm:$0xff]
    %v1495 = vld [vmem:[%s1 + $0x2860] sm:$0xff]
    %v1496 = vld [vmem:[%s1 + $0x2868] sm:$0xff]
    %v1497 = vld [vmem:[%s1 + $0x2870] sm:$0xff]
    %v1498 = vld [vmem:[%s1 + $0x2878] sm:$0xff]
    %v1499 = vld [vmem:[%s1 + $0x2880] sm:$0xff]
    %v1500 = vld [vmem:[%s1 + $0x2888] sm:$0xff]
    %v1501 = vld [vmem:[%s1 + $0x2890] sm:$0xff]
    %v1502 = vld [vmem:[%s1 + $0x2898] sm:$0xff]
    %v1503 = vld [vmem:[%s1 + $0x28a0] sm:$0xff]
    %v1504 = vld [vmem:[%s1 + $0x28a8] sm:$0xff]
    %v1505 = vld [vmem:[%s1 + $0x28b0] sm:$0xff]
    %v1506 = vld [vmem:[%s1 + $0x28b8] sm:$0xff]
    %v1507 = vld [vmem:[%s1 + $0x28c0] sm:$0xff]
    %v1508 = vld [vmem:[%s1 + $0x28c8] sm:$0xff]
    %v1509 = vld [vmem:[%s1 + $0x28d0] sm:$0xff]
    %v1510 = vld [vmem:[%s1 + $0x28d8] sm:$0xff]
    %v1511 = vld [vmem:[%s1 + $0x28e0] sm:$0xff]
    %v1512 = vld [vmem:[%s1 + $0x28e8] sm:$0xff]
    %v1513 = vld [vmem:[%s1 + $0x28f0] sm:$0xff]
    %v1514 = vld [vmem:[%s1 + $0x28f8] sm:$0xff]
    %v1515 = vld [vmem:[%s1 + $0x2900] sm:$0xff]
    %v1516 = vld [vmem:[%s1 + $0x2908] sm:$0xff]
    %v1517 = vld [vmem:[%s1 + $0x2910] sm:$0xff]
    %v1518 = vld [vmem:[%s1 + $0x2918] sm:$0xff]
    %v1519 = vld [vmem:[%s1 + $0x2920] sm:$0xff]
    %v1520 = vld [vmem:[%s1 + $0x2928] sm:$0xff]
    %v1521 = vld [vmem:[%s1 + $0x2930] sm:$0xff]
    %v1522 = vld [vmem:[%s1 + $0x2938] sm:$0xff]
    %v1523 = vld [vmem:[%s1 + $0x2940] sm:$0xff]
    %v1524 = vld [vmem:[%s1 + $0x2948] sm:$0xff]
    %v1525 = vld [vmem:[%s1 + $0x2950] sm:$0xff]
    %v1526 = vld [vmem:[%s1 + $0x2958] sm:$0xff]
    %v1527 = vld [vmem:[%s1 + $0x2960] sm:$0xff]
    %v1528 = vld [vmem:[%s1 + $0x2968] sm:$0xff]
    %v1529 = vld [vmem:[%s1 + $0x2970] sm:$0xff]
    %v1530 = vld [vmem:[%s1 + $0x2978] sm:$0xff]
    %v1531 = vld [vmem:[%s1 + $0x2980] sm:$0xff]
    %v1532 = vld [vmem:[%s1 + $0x2988] sm:$0xff]
    %v1533 = vld [vmem:[%s1 + $0x2990] sm:$0xff]
    %v1534 = vld [vmem:[%s1 + $0x2998] sm:$0xff]
    %v1535 = vld [vmem:[%s1 + $0x29a0] sm:$0xff]
    %v1536 = vld [vmem:[%s1 + $0x29a8] sm:$0xff]
    %v1537 = vld [vmem:[%s1 + $0x29b0] sm:$0xff]
    %v1538 = vld [vmem:[%s1 + $0x29b8] sm:$0xff]
    %v1539 = vld [vmem:[%s1 + $0x29c0] sm:$0xff]
    %v1540 = vld [vmem:[%s1 + $0x29c8] sm:$0xff]
    %v1541 = vld [vmem:[%s1 + $0x29d0] sm:$0xff]
    %v1542 = vld [vmem:[%s1 + $0x29d8] sm:$0xff]
    %v1543 = vld [vmem:[%s1 + $0x29e0] sm:$0xff]
    %v1544 = vld [vmem:[%s1 + $0x29e8] sm:$0xff]
    %v1545 = vld [vmem:[%s1 + $0x29f0] sm:$0xff]
    %v1546 = vld [vmem:[%s1 + $0x29f8] sm:$0xff]
    %v1547 = vld [vmem:[%s1 + $0x2a00] sm:$0xff]
    %v1548 = vld [vmem:[%s1 + $0x2a08] sm:$0xff]
    %v1549 = vld [vmem:[%s1 + $0x2a10] sm:$0xff]
    %v1550 = vld [vmem:[%s1 + $0x2a18] sm:$0xff]
    %v1551 = vld [vmem:[%s1 + $0x2a20] sm:$0xff]
    %v1552 = vld [vmem:[%s1 + $0x2a28] sm:$0xff]
    %v1553 = vld [vmem:[%s1 + $0x2a30] sm:$0xff]
    %v1554 = vld [vmem:[%s1 + $0x2a38] sm:$0xff]
    %v1555 = vld [vmem:[%s1 + $0x2a40] sm:$0xff]
    %v1556 = vld [vmem:[%s1 + $0x2a48] sm:$0xff]
    %v1557 = vld [vmem:[%s1 + $0x2a50] sm:$0xff]
    %v1558 = vld [vmem:[%s1 + $0x2a58] sm:$0xff]
    %v1559 = vld [vmem:[%s1 + $0x2a60] sm:$0xff]
    %v1560 = vld [vmem:[%s1 + $0x2a68] sm:$0xff]
    %v1561 = vld [vmem:[%s1 + $0x2a70] sm:$0xff]
    %v1562 = vld [vmem:[%s1 + $0x2a78] sm:$0xff]
    %v1563 = vld [vmem:[%s1 + $0x2a80] sm:$0xff]
    %v1564 = vld [vmem:[%s1 + $0x2a88] sm:$0xff]
    %v1565 = vld [vmem:[%s1 + $0x2a90] sm:$0xff]
    %v1566 = vld [vmem:[%s1 + $0x2a98] sm:$0xff]
    %v1567 = vld [vmem:[%s1 + $0x2aa0] sm:$0xff]
    %v1568 = vld [vmem:[%s1 + $0x2aa8] sm:$0xff]
    %v1569 = vld [vmem:[%s1 + $0x2ab0] sm:$0xff]
    %v1570 = vld [vmem:[%s1 + $0x2ab8] sm:$0xff]
    %v1571 = vld [vmem:[%s1 + $0x2ac0] sm:$0xff]
    %v1572 = vld [vmem:[%s1 + $0x2ac8] sm:$0xff]
    %v1573 = vld [vmem:[%s1 + $0x2ad0] sm:$0xff]
    %v1574 = vld [vmem:[%s1 + $0x2ad8] sm:$0xff]
    %v1575 = vld [vmem:[%s1 + $0x2ae0] sm:$0xff]
    %v1576 = vld [vmem:[%s1 + $0x2ae8] sm:$0xff]
    %v1577 = vld [vmem:[%s1 + $0x2af0] sm:$0xff]
    %v1578 = vld [vmem:[%s1 + $0x2af8] sm:$0xff]
    %v1579 = vld [vmem:[%s1 + $0x2b00] sm:$0xff]
    %v1580 = vld [vmem:[%s1 + $0x2b08] sm:$0xff]
    %v1581 = vld [vmem:[%s1 + $0x2b10] sm:$0xff]
    %v1582 = vld [vmem:[%s1 + $0x2b18] sm:$0xff]
    %v1583 = vld [vmem:[%s1 + $0x2b20] sm:$0xff]
    %v1584 = vld [vmem:[%s1 + $0x2b28] sm:$0xff]
    %v1585 = vld [vmem:[%s1 + $0x2b30] sm:$0xff]
    %v1586 = vld [vmem:[%s1 + $0x2b38] sm:$0xff]
    %v1587 = vld [vmem:[%s1 + $0x2b40] sm:$0xff]
    %v1588 = vld [vmem:[%s1 + $0x2b48] sm:$0xff]
    %v1589 = vld [vmem:[%s1 + $0x2b50] sm:$0xff]
    %v1590 = vld [vmem:[%s1 + $0x2b58] sm:$0xff]
    %v1591 = vld [vmem:[%s1 + $0x2b60] sm:$0xff]
    %v1592 = vld [vmem:[%s1 + $0x2b68] sm:$0xff]
    %v1593 = vld [vmem:[%s1 + $0x2b70] sm:$0xff]
    %v1594 = vld [vmem:[%s1 + $0x2b78] sm:$0xff]
    %v1595 = vld [vmem:[%s1 + $0x2b80] sm:$0xff]
    %v1596 = vld [vmem:[%s1 + $0x2b88] sm:$0xff]
    %v1597 = vld [vmem:[%s1 + $0x2b90] sm:$0xff]
    %v1598 = vld [vmem:[%s1 + $0x2b98] sm:$0xff]
    %v1599 = vld [vmem:[%s1 + $0x2ba0] sm:$0xff]
    %v1600 = vld [vmem:[%s1 + $0x2ba8] sm:$0xff]
    %v1601 = vld [vmem:[%s1 + $0x2bb0] sm:$0xff]
    %v1602 = vld [vmem:[%s1 + $0x2bb8] sm:$0xff]
    %v1603 = vld [vmem:[%s1 + $0x2bc0] sm:$0xff]
    %v1604 = vld [vmem:[%s1 + $0x2bc8] sm:$0xff]
    %v1605 = vld [vmem:[%s1 + $0x2bd0] sm:$0xff]
    %v1606 = vld [vmem:[%s1 + $0x2bd8] sm:$0xff]
    %v1607 = vld [vmem:[%s1 + $0x2be0] sm:$0xff]
    %v1608 = vld [vmem:[%s1 + $0x2be8] sm:$0xff]
    %v1609 = vld [vmem:[%s1 + $0x2bf0] sm:$0xff]
    %v1610 = vld [vmem:[%s1 + $0x2bf8] sm:$0xff]
    %v1611 = vld [vmem:[%s1 + $0x2c00] sm:$0xff]
    %v1612 = vld [vmem:[%s1 + $0x2c08] sm:$0xff]
    %v1613 = vld [vmem:[%s1 + $0x2c10] sm:$0xff]
    %v1614 = vld [vmem:[%s1 + $0x2c18] sm:$0xff]
    %v1615 = vld [vmem:[%s1 + $0x2c20] sm:$0xff]
    %v1616 = vld [vmem:[%s1 + $0x2c28] sm:$0xff]
    %v1617 = vld [vmem:[%s1 + $0x2c30] sm:$0xff]
    %v1618 = vld [vmem:[%s1 + $0x2c38] sm:$0xff]
    %v1619 = vld [vmem:[%s1 + $0x2c40] sm:$0xff]
    %v1620 = vld [vmem:[%s1 + $0x2c48] sm:$0xff]
    %v1621 = vld [vmem:[%s1 + $0x2c50] sm:$0xff]
    %v1622 = vld [vmem:[%s1 + $0x2c58] sm:$0xff]
    %v1623 = vld [vmem:[%s1 + $0x2c60] sm:$0xff]
    %v1624 = vld [vmem:[%s1 + $0x2c68] sm:$0xff]
    %v1625 = vld [vmem:[%s1 + $0x2c70] sm:$0xff]
    %v1626 = vld [vmem:[%s1 + $0x2c78] sm:$0xff]
    %v1627 = vld [vmem:[%s1 + $0x2c80] sm:$0xff]
    %v1628 = vld [vmem:[%s1 + $0x2c88] sm:$0xff]
    %v1629 = vld [vmem:[%s1 + $0x2c90] sm:$0xff]
    %v1630 = vld [vmem:[%s1 + $0x2c98] sm:$0xff]
    %v1631 = vld [vmem:[%s1 + $0x2ca0] sm:$0xff]
    %v1632 = vld [vmem:[%s1 + $0x2ca8] sm:$0xff]
    %v1633 = vld [vmem:[%s1 + $0x2cb0] sm:$0xff]
    %v1634 = vld [vmem:[%s1 + $0x2cb8] sm:$0xff]
    %v1635 = vld [vmem:[%s1 + $0x2cc0] sm:$0xff]
    %v1636 = vld [vmem:[%s1 + $0x2cc8] sm:$0xff]
    %v1637 = vld [vmem:[%s1 + $0x2cd0] sm:$0xff]
    %v1638 = vld [vmem:[%s1 + $0x2cd8] sm:$0xff]
    %v1639 = vld [vmem:[%s1 + $0x2ce0] sm:$0xff]
    %v1640 = vld [vmem:[%s1 + $0x2ce8] sm:$0xff]
    %v1641 = vld [vmem:[%s1 + $0x2cf0] sm:$0xff]
    %v1642 = vld [vmem:[%s1 + $0x2cf8] sm:$0xff]
    %v1643 = vld [vmem:[%s1 + $0x2d00] sm:$0xff]
    %v1644 = vld [vmem:[%s1 + $0x2d08] sm:$0xff]
    %v1645 = vld [vmem:[%s1 + $0x2d10] sm:$0xff]
    %v1646 = vld [vmem:[%s1 + $0x2d18] sm:$0xff]
    %v1647 = vld [vmem:[%s1 + $0x2d20] sm:$0xff]
    %v1648 = vld [vmem:[%s1 + $0x2d28] sm:$0xff]
    %v1649 = vld [vmem:[%s1 + $0x2d30] sm:$0xff]
    %v1650 = vld [vmem:[%s1 + $0x2d38] sm:$0xff]
    %v1651 = vld [vmem:[%s1 + $0x2d40] sm:$0xff]
    %v1652 = vld [vmem:[%s1 + $0x2d48] sm:$0xff]
    %v1653 = vld [vmem:[%s1 + $0x2d50] sm:$0xff]
    %v1654 = vld [vmem:[%s1 + $0x2d58] sm:$0xff]
    %v1655 = vld [vmem:[%s1 + $0x2d60] sm:$0xff]
    %v1656 = vld [vmem:[%s1 + $0x2d68] sm:$0xff]
    %v1657 = vld [vmem:[%s1 + $0x2d70] sm:$0xff]
    %v1658 = vld [vmem:[%s1 + $0x2d78] sm:$0xff]
    %v1659 = vld [vmem:[%s1 + $0x2d80] sm:$0xff]
    %v1660 = vld [vmem:[%s1 + $0x2d88] sm:$0xff]
    %v1661 = vld [vmem:[%s1 + $0x2d90] sm:$0xff]
    %v1662 = vld [vmem:[%s1 + $0x2d98] sm:$0xff]
    %v1663 = vld [vmem:[%s1 + $0x2da0] sm:$0xff]
    %v1664 = vld [vmem:[%s1 + $0x2da8] sm:$0xff]
    %v1665 = vld [vmem:[%s1 + $0x2db0] sm:$0xff]
    %v1666 = vld [vmem:[%s1 + $0x2db8] sm:$0xff]
    %v1667 = vld [vmem:[%s1 + $0x2dc0] sm:$0xff]
    %v1668 = vld [vmem:[%s1 + $0x2dc8] sm:$0xff]
    %v1669 = vld [vmem:[%s1 + $0x2dd0] sm:$0xff]
    %v1670 = vld [vmem:[%s1 + $0x2dd8] sm:$0xff]
    %v1671 = vld [vmem:[%s1 + $0x2de0] sm:$0xff]
    %v1672 = vld [vmem:[%s1 + $0x2de8] sm:$0xff]
    %v1673 = vld [vmem:[%s1 + $0x2df0] sm:$0xff]
    %v1674 = vld [vmem:[%s1 + $0x2df8] sm:$0xff]
    %v1675 = vld [vmem:[%s1 + $0x2e00] sm:$0xff]
    %v1676 = vld [vmem:[%s1 + $0x2e08] sm:$0xff]
    %v1677 = vld [vmem:[%s1 + $0x2e10] sm:$0xff]
    %v1678 = vld [vmem:[%s1 + $0x2e18] sm:$0xff]
    %v1679 = vld [vmem:[%s1 + $0x2e20] sm:$0xff]
    %v1680 = vld [vmem:[%s1 + $0x2e28] sm:$0xff]
    %v1681 = vld [vmem:[%s1 + $0x2e30] sm:$0xff]
    %v1682 = vld [vmem:[%s1 + $0x2e38] sm:$0xff]
    %v1683 = vld [vmem:[%s1 + $0x2e40] sm:$0xff]
    %v1684 = vld [vmem:[%s1 + $0x2e48] sm:$0xff]
    %v1685 = vld [vmem:[%s1 + $0x2e50] sm:$0xff]
    %v1686 = vld [vmem:[%s1 + $0x2e58] sm:$0xff]
    %v1687 = vld [vmem:[%s1 + $0x2e60] sm:$0xff]
    %v1688 = vld [vmem:[%s1 + $0x2e68] sm:$0xff]
    %v1689 = vld [vmem:[%s1 + $0x2e70] sm:$0xff]
    %v1690 = vld [vmem:[%s1 + $0x2e78] sm:$0xff]
    %v1691 = vld [vmem:[%s1 + $0x2e80] sm:$0xff]
    %v1692 = vld [vmem:[%s1 + $0x2e88] sm:$0xff]
    %v1693 = vld [vmem:[%s1 + $0x2e90] sm:$0xff]
    %v1694 = vld [vmem:[%s1 + $0x2e98] sm:$0xff]
    %v1695 = vld [vmem:[%s1 + $0x2ea0] sm:$0xff]
    %v1696 = vld [vmem:[%s1 + $0x2ea8] sm:$0xff]
    %v1697 = vld [vmem:[%s1 + $0x2eb0] sm:$0xff]
    %v1698 = vld [vmem:[%s1 + $0x2eb8] sm:$0xff]
    %v1699 = vld [vmem:[%s1 + $0x2ec0] sm:$0xff]
    %v1700 = vld [vmem:[%s1 + $0x2ec8] sm:$0xff]
    %v1701 = vld [vmem:[%s1 + $0x2ed0] sm:$0xff]
    %v1702 = vld [vmem:[%s1 + $0x2ed8] sm:$0xff]
    %v1703 = vld [vmem:[%s1 + $0x2ee0] sm:$0xff]
    %v1704 = vld [vmem:[%s1 + $0x2ee8] sm:$0xff]
    %v1705 = vld [vmem:[%s1 + $0x2ef0] sm:$0xff]
    %v1706 = vld [vmem:[%s1 + $0x2ef8] sm:$0xff]
    %v1707 = vld [vmem:[%s1 + $0x2f00] sm:$0xff]
    %v1708 = vld [vmem:[%s1 + $0x2f08] sm:$0xff]
    %v1709 = vld [vmem:[%s1 + $0x2f10] sm:$0xff]
    %v1710 = vld [vmem:[%s1 + $0x2f18] sm:$0xff]
    %v1711 = vld [vmem:[%s1 + $0x2f20] sm:$0xff]
    %v1712 = vld [vmem:[%s1 + $0x2f28] sm:$0xff]
    %v1713 = vld [vmem:[%s1 + $0x2f30] sm:$0xff]
    %v1714 = vld [vmem:[%s1 + $0x2f38] sm:$0xff]
    %v1715 = vld [vmem:[%s1 + $0x2f40] sm:$0xff]
    %v1716 = vld [vmem:[%s1 + $0x2f48] sm:$0xff]
    %v1717 = vld [vmem:[%s1 + $0x2f50] sm:$0xff]
    %v1718 = vld [vmem:[%s1 + $0x2f58] sm:$0xff]
    %v1719 = vld [vmem:[%s1 + $0x2f60] sm:$0xff]
    %v1720 = vld [vmem:[%s1 + $0x2f68] sm:$0xff]
    %v1721 = vld [vmem:[%s1 + $0x2f70] sm:$0xff]
    %v1722 = vld [vmem:[%s1 + $0x2f78] sm:$0xff]
    %v1723 = vld [vmem:[%s1 + $0x2f80] sm:$0xff]
    %v1724 = vld [vmem:[%s1 + $0x2f88] sm:$0xff]
    %v1725 = vld [vmem:[%s1 + $0x2f90] sm:$0xff]
    %v1726 = vld [vmem:[%s1 + $0x2f98] sm:$0xff]
    %v1727 = vld [vmem:[%s1 + $0x2fa0] sm:$0xff]
    %v1728 = vld [vmem:[%s1 + $0x2fa8] sm:$0xff]
    %v1729 = vld [vmem:[%s1 + $0x2fb0] sm:$0xff]
    %v1730 = vld [vmem:[%s1 + $0x2fb8] sm:$0xff]
    %v1731 = vld [vmem:[%s1 + $0x2fc0] sm:$0xff]
    %v1732 = vld [vmem:[%s1 + $0x2fc8] sm:$0xff]
    %v1733 = vld [vmem:[%s1 + $0x2fd0] sm:$0xff]
    %v1734 = vld [vmem:[%s1 + $0x2fd8] sm:$0xff]
    %v1735 = vld [vmem:[%s1 + $0x2fe0] sm:$0xff]
    %v1736 = vld [vmem:[%s1 + $0x2fe8] sm:$0xff]
    %v1737 = vld [vmem:[%s1 + $0x2ff0] sm:$0xff]
    %v1738 = vld [vmem:[%s1 + $0x2ff8] sm:$0xff]
    %v1739 = vld [vmem:[%s1 + $0x3000] sm:$0xff]
    %v1740 = vld [vmem:[%s1 + $0x3008] sm:$0xff]
    %v1741 = vld [vmem:[%s1 + $0x3010] sm:$0xff]
    %v1742 = vld [vmem:[%s1 + $0x3018] sm:$0xff]
    %v1743 = vld [vmem:[%s1 + $0x3020] sm:$0xff]
    %v1744 = vld [vmem:[%s1 + $0x3028] sm:$0xff]
    %v1745 = vld [vmem:[%s1 + $0x3030] sm:$0xff]
    %v1746 = vld [vmem:[%s1 + $0x3038] sm:$0xff]
    %v1747 = vld [vmem:[%s1 + $0x3040] sm:$0xff]
    %v1748 = vld [vmem:[%s1 + $0x3048] sm:$0xff]
    %v1749 = vld [vmem:[%s1 + $0x3050] sm:$0xff]
    %v1750 = vld [vmem:[%s1 + $0x3058] sm:$0xff]
    %v1751 = vld [vmem:[%s1 + $0x3060] sm:$0xff]
    %v1752 = vld [vmem:[%s1 + $0x3068] sm:$0xff]
    %v1753 = vld [vmem:[%s1 + $0x3070] sm:$0xff]
    %v1754 = vld [vmem:[%s1 + $0x3078] sm:$0xff]
    %v1755 = vld [vmem:[%s1 + $0x3080] sm:$0xff]
    %v1756 = vld [vmem:[%s1 + $0x3088] sm:$0xff]
    %v1757 = vld [vmem:[%s1 + $0x3090] sm:$0xff]
    %v1758 = vld [vmem:[%s1 + $0x3098] sm:$0xff]
    %v1759 = vld [vmem:[%s1 + $0x30a0] sm:$0xff]
    %v1760 = vld [vmem:[%s1 + $0x30a8] sm:$0xff]
    %v1761 = vld [vmem:[%s1 + $0x30b0] sm:$0xff]
    %v1762 = vld [vmem:[%s1 + $0x30b8] sm:$0xff]
    %v1763 = vld [vmem:[%s1 + $0x30c0] sm:$0xff]
    %v1764 = vld [vmem:[%s1 + $0x30c8] sm:$0xff]
    %v1765 = vld [vmem:[%s1 + $0x30d0] sm:$0xff]
    %v1766 = vld [vmem:[%s1 + $0x30d8] sm:$0xff]
    %v1767 = vld [vmem:[%s1 + $0x30e0] sm:$0xff]
    %v1768 = vld [vmem:[%s1 + $0x30e8] sm:$0xff]
    %v1769 = vld [vmem:[%s1 + $0x30f0] sm:$0xff]
    %v1770 = vld [vmem:[%s1 + $0x30f8] sm:$0xff]
    %v1771 = vld [vmem:[%s2] sm:$0xff]
    %v1773 = vlaneseq
    %v1774 = vshrl.u32 %v1773, 7
    %v1775 = vsub.s32 0, %v1774
    %v1776 = vrot.slane %v1771, %v1775
    %v1777 = vlaneseq
    %v1778 = vshrl.u32 %v1777, 7
    %v1779 = vsub.s32 1, %v1778
    %v1780 = vrot.slane %v1771, %v1779
    %v1781 = vlaneseq
    %v1782 = vshrl.u32 %v1781, 7
    %v1783 = vsub.s32 2, %v1782
    %v1784 = vrot.slane %v1771, %v1783
    %v1785 = vlaneseq
    %v1786 = vshrl.u32 %v1785, 7
    %v1787 = vsub.s32 3, %v1786
    %v1788 = vrot.slane %v1771, %v1787
    %v1789 = vlaneseq
    %v1790 = vshrl.u32 %v1789, 7
    %v1791 = vsub.s32 4, %v1790
    %v1792 = vrot.slane %v1771, %v1791
    %v1793 = vlaneseq
    %v1794 = vshrl.u32 %v1793, 7
    %v1795 = vsub.s32 5, %v1794
    %v1796 = vrot.slane %v1771, %v1795
    %v1797 = vlaneseq
    %v1798 = vshrl.u32 %v1797, 7
    %v1799 = vsub.s32 6, %v1798
    %v1800 = vrot.slane %v1771, %v1799
    %v1801 = vlaneseq
    %v1802 = vshrl.u32 %v1801, 7
    %v1803 = vsub.s32 7, %v1802
    %v1804 = vrot.slane %v1771, %v1803
    %v3381 = vunpack.c.l.b16 %v203
    %v3382 = vunpack.c.h.b16 %v203
    %v3383 = vunpack.c.l.b16 %v204
    %v3384 = vunpack.c.h.b16 %v204
    %v3385 = vunpack.c.l.b16 %v205
    %v3386 = vunpack.c.h.b16 %v205
    %v3387 = vunpack.c.l.b16 %v206
    %v3388 = vunpack.c.h.b16 %v206
    %v3389 = vunpack.c.l.b16 %v207
    %v3390 = vunpack.c.h.b16 %v207
    %v3391 = vunpack.c.l.b16 %v208
    %v3392 = vunpack.c.h.b16 %v208
    %v3393 = vunpack.c.l.b16 %v209
    %v3394 = vunpack.c.h.b16 %v209
    %v3395 = vunpack.c.l.b16 %v210
    %v3396 = vunpack.c.h.b16 %v210
    %v3397 = vunpack.c.l.b16 %v211
    %v3398 = vunpack.c.h.b16 %v211
    %v3399 = vunpack.c.l.b16 %v212
    %v3400 = vunpack.c.h.b16 %v212
    %v3401 = vunpack.c.l.b16 %v213
    %v3402 = vunpack.c.h.b16 %v213
    %v3403 = vunpack.c.l.b16 %v214
    %v3404 = vunpack.c.h.b16 %v214
    %v3405 = vunpack.c.l.b16 %v215
    %v3406 = vunpack.c.h.b16 %v215
    %v3407 = vunpack.c.l.b16 %v216
    %v3408 = vunpack.c.h.b16 %v216
    %v3409 = vunpack.c.l.b16 %v217
    %v3410 = vunpack.c.h.b16 %v217
    %v3411 = vunpack.c.l.b16 %v218
    %v3412 = vunpack.c.h.b16 %v218
    %v3413 = vunpack.c.l.b16 %v219
    %v3414 = vunpack.c.h.b16 %v219
    %v3415 = vunpack.c.l.b16 %v220
    %v3416 = vunpack.c.h.b16 %v220
    %v3417 = vunpack.c.l.b16 %v221
    %v3418 = vunpack.c.h.b16 %v221
    %v3419 = vunpack.c.l.b16 %v222
    %v3420 = vunpack.c.h.b16 %v222
    %v3421 = vunpack.c.l.b16 %v223
    %v3422 = vunpack.c.h.b16 %v223
    %v3423 = vunpack.c.l.b16 %v224
    %v3424 = vunpack.c.h.b16 %v224
    %v3425 = vunpack.c.l.b16 %v225
    %v3426 = vunpack.c.h.b16 %v225
    %v3427 = vunpack.c.l.b16 %v226
    %v3428 = vunpack.c.h.b16 %v226
    %v3429 = vunpack.c.l.b16 %v227
    %v3430 = vunpack.c.h.b16 %v227
    %v3431 = vunpack.c.l.b16 %v228
    %v3432 = vunpack.c.h.b16 %v228
    %v3433 = vunpack.c.l.b16 %v229
    %v3434 = vunpack.c.h.b16 %v229
    %v3435 = vunpack.c.l.b16 %v230
    %v3436 = vunpack.c.h.b16 %v230
    %v3437 = vunpack.c.l.b16 %v231
    %v3438 = vunpack.c.h.b16 %v231
    %v3439 = vunpack.c.l.b16 %v232
    %v3440 = vunpack.c.h.b16 %v232
    %v3441 = vunpack.c.l.b16 %v233
    %v3442 = vunpack.c.h.b16 %v233
    %v3443 = vunpack.c.l.b16 %v234
    %v3444 = vunpack.c.h.b16 %v234
    %v3445 = vunpack.c.l.b16 %v235
    %v3446 = vunpack.c.h.b16 %v235
    %v3447 = vunpack.c.l.b16 %v236
    %v3448 = vunpack.c.h.b16 %v236
    %v3449 = vunpack.c.l.b16 %v237
    %v3450 = vunpack.c.h.b16 %v237
    %v3451 = vunpack.c.l.b16 %v238
    %v3452 = vunpack.c.h.b16 %v238
    %v3453 = vunpack.c.l.b16 %v239
    %v3454 = vunpack.c.h.b16 %v239
    %v3455 = vunpack.c.l.b16 %v240
    %v3456 = vunpack.c.h.b16 %v240
    %v3457 = vunpack.c.l.b16 %v241
    %v3458 = vunpack.c.h.b16 %v241
    %v3459 = vunpack.c.l.b16 %v242
    %v3460 = vunpack.c.h.b16 %v242
    %v3461 = vunpack.c.l.b16 %v243
    %v3462 = vunpack.c.h.b16 %v243
    %v3463 = vunpack.c.l.b16 %v244
    %v3464 = vunpack.c.h.b16 %v244
    %v3465 = vunpack.c.l.b16 %v245
    %v3466 = vunpack.c.h.b16 %v245
    %v3467 = vunpack.c.l.b16 %v246
    %v3468 = vunpack.c.h.b16 %v246
    %v3469 = vunpack.c.l.b16 %v247
    %v3470 = vunpack.c.h.b16 %v247
    %v3471 = vunpack.c.l.b16 %v248
    %v3472 = vunpack.c.h.b16 %v248
    %v3473 = vunpack.c.l.b16 %v249
    %v3474 = vunpack.c.h.b16 %v249
    %v3475 = vunpack.c.l.b16 %v250
    %v3476 = vunpack.c.h.b16 %v250
    %v3477 = vunpack.c.l.b16 %v251
    %v3478 = vunpack.c.h.b16 %v251
    %v3479 = vunpack.c.l.b16 %v252
    %v3480 = vunpack.c.h.b16 %v252
    %v3481 = vunpack.c.l.b16 %v253
    %v3482 = vunpack.c.h.b16 %v253
    %v3483 = vunpack.c.l.b16 %v254
    %v3484 = vunpack.c.h.b16 %v254
    %v3485 = vunpack.c.l.b16 %v255
    %v3486 = vunpack.c.h.b16 %v255
    %v3487 = vunpack.c.l.b16 %v256
    %v3488 = vunpack.c.h.b16 %v256
    %v3489 = vunpack.c.l.b16 %v257
    %v3490 = vunpack.c.h.b16 %v257
    %v3491 = vunpack.c.l.b16 %v258
    %v3492 = vunpack.c.h.b16 %v258
    %v3493 = vunpack.c.l.b16 %v259
    %v3494 = vunpack.c.h.b16 %v259
    %v3495 = vunpack.c.l.b16 %v260
    %v3496 = vunpack.c.h.b16 %v260
    %v3497 = vunpack.c.l.b16 %v261
    %v3498 = vunpack.c.h.b16 %v261
    %v3499 = vunpack.c.l.b16 %v262
    %v3500 = vunpack.c.h.b16 %v262
    %v3501 = vunpack.c.l.b16 %v263
    %v3502 = vunpack.c.h.b16 %v263
    %v3503 = vunpack.c.l.b16 %v264
    %v3504 = vunpack.c.h.b16 %v264
    %v3505 = vunpack.c.l.b16 %v265
    %v3506 = vunpack.c.h.b16 %v265
    %v3507 = vunpack.c.l.b16 %v266
    %v3508 = vunpack.c.h.b16 %v266
    %v3509 = vunpack.c.l.b16 %v267
    %v3510 = vunpack.c.h.b16 %v267
    %v3511 = vunpack.c.l.b16 %v268
    %v3512 = vunpack.c.h.b16 %v268
    %v3513 = vunpack.c.l.b16 %v269
    %v3514 = vunpack.c.h.b16 %v269
    %v3515 = vunpack.c.l.b16 %v270
    %v3516 = vunpack.c.h.b16 %v270
    %v3517 = vunpack.c.l.b16 %v271
    %v3518 = vunpack.c.h.b16 %v271
    %v3519 = vunpack.c.l.b16 %v272
    %v3520 = vunpack.c.h.b16 %v272
    %v3521 = vunpack.c.l.b16 %v273
    %v3522 = vunpack.c.h.b16 %v273
    %v3523 = vunpack.c.l.b16 %v274
    %v3524 = vunpack.c.h.b16 %v274
    %v3525 = vunpack.c.l.b16 %v275
    %v3526 = vunpack.c.h.b16 %v275
    %v3527 = vunpack.c.l.b16 %v276
    %v3528 = vunpack.c.h.b16 %v276
    %v3529 = vunpack.c.l.b16 %v277
    %v3530 = vunpack.c.h.b16 %v277
    %v3531 = vunpack.c.l.b16 %v278
    %v3532 = vunpack.c.h.b16 %v278
    %v3533 = vunpack.c.l.b16 %v279
    %v3534 = vunpack.c.h.b16 %v279
    %v3535 = vunpack.c.l.b16 %v280
    %v3536 = vunpack.c.h.b16 %v280
    %v3537 = vunpack.c.l.b16 %v281
    %v3538 = vunpack.c.h.b16 %v281
    %v3539 = vunpack.c.l.b16 %v282
    %v3540 = vunpack.c.h.b16 %v282
    %v3541 = vunpack.c.l.b16 %v283
    %v3542 = vunpack.c.h.b16 %v283
    %v3543 = vunpack.c.l.b16 %v284
    %v3544 = vunpack.c.h.b16 %v284
    %v3545 = vunpack.c.l.b16 %v285
    %v3546 = vunpack.c.h.b16 %v285
    %v3547 = vunpack.c.l.b16 %v286
    %v3548 = vunpack.c.h.b16 %v286
    %v3549 = vunpack.c.l.b16 %v287
    %v3550 = vunpack.c.h.b16 %v287
    %v3551 = vunpack.c.l.b16 %v288
    %v3552 = vunpack.c.h.b16 %v288
    %v3553 = vunpack.c.l.b16 %v289
    %v3554 = vunpack.c.h.b16 %v289
    %v3555 = vunpack.c.l.b16 %v290
    %v3556 = vunpack.c.h.b16 %v290
    %v3557 = vunpack.c.l.b16 %v291
    %v3558 = vunpack.c.h.b16 %v291
    %v3559 = vunpack.c.l.b16 %v292
    %v3560 = vunpack.c.h.b16 %v292
    %v3561 = vunpack.c.l.b16 %v293
    %v3562 = vunpack.c.h.b16 %v293
    %v3563 = vunpack.c.l.b16 %v294
    %v3564 = vunpack.c.h.b16 %v294
    %v3565 = vunpack.c.l.b16 %v295
    %v3566 = vunpack.c.h.b16 %v295
    %v3567 = vunpack.c.l.b16 %v296
    %v3568 = vunpack.c.h.b16 %v296
    %v3569 = vunpack.c.l.b16 %v297
    %v3570 = vunpack.c.h.b16 %v297
    %v3571 = vunpack.c.l.b16 %v298
    %v3572 = vunpack.c.h.b16 %v298
    %v3573 = vunpack.c.l.b16 %v299
    %v3574 = vunpack.c.h.b16 %v299
    %v3575 = vunpack.c.l.b16 %v300
    %v3576 = vunpack.c.h.b16 %v300
    %v3577 = vunpack.c.l.b16 %v301
    %v3578 = vunpack.c.h.b16 %v301
    %v3579 = vunpack.c.l.b16 %v302
    %v3580 = vunpack.c.h.b16 %v302
    %v3581 = vunpack.c.l.b16 %v303
    %v3582 = vunpack.c.h.b16 %v303
    %v3583 = vunpack.c.l.b16 %v304
    %v3584 = vunpack.c.h.b16 %v304
    %v3585 = vunpack.c.l.b16 %v305
    %v3586 = vunpack.c.h.b16 %v305
    %v3587 = vunpack.c.l.b16 %v306
    %v3588 = vunpack.c.h.b16 %v306
    %v3589 = vunpack.c.l.b16 %v307
    %v3590 = vunpack.c.h.b16 %v307
    %v3591 = vunpack.c.l.b16 %v308
    %v3592 = vunpack.c.h.b16 %v308
    %v3593 = vunpack.c.l.b16 %v309
    %v3594 = vunpack.c.h.b16 %v309
    %v3595 = vunpack.c.l.b16 %v310
    %v3596 = vunpack.c.h.b16 %v310
    %v3597 = vunpack.c.l.b16 %v311
    %v3598 = vunpack.c.h.b16 %v311
    %v3599 = vunpack.c.l.b16 %v312
    %v3600 = vunpack.c.h.b16 %v312
    %v3601 = vunpack.c.l.b16 %v313
    %v3602 = vunpack.c.h.b16 %v313
    %v3603 = vunpack.c.l.b16 %v314
    %v3604 = vunpack.c.h.b16 %v314
    %v3605 = vunpack.c.l.b16 %v315
    %v3606 = vunpack.c.h.b16 %v315
    %v3607 = vunpack.c.l.b16 %v316
    %v3608 = vunpack.c.h.b16 %v316
    %v3609 = vunpack.c.l.b16 %v317
    %v3610 = vunpack.c.h.b16 %v317
    %v3611 = vunpack.c.l.b16 %v318
    %v3612 = vunpack.c.h.b16 %v318
    %v3613 = vunpack.c.l.b16 %v319
    %v3614 = vunpack.c.h.b16 %v319
    %v3615 = vunpack.c.l.b16 %v320
    %v3616 = vunpack.c.h.b16 %v320
    %v3617 = vunpack.c.l.b16 %v321
    %v3618 = vunpack.c.h.b16 %v321
    %v3619 = vunpack.c.l.b16 %v322
    %v3620 = vunpack.c.h.b16 %v322
    %v3621 = vunpack.c.l.b16 %v323
    %v3622 = vunpack.c.h.b16 %v323
    %v3623 = vunpack.c.l.b16 %v324
    %v3624 = vunpack.c.h.b16 %v324
    %v3625 = vunpack.c.l.b16 %v325
    %v3626 = vunpack.c.h.b16 %v325
    %v3627 = vunpack.c.l.b16 %v326
    %v3628 = vunpack.c.h.b16 %v326
    %v3629 = vunpack.c.l.b16 %v327
    %v3630 = vunpack.c.h.b16 %v327
    %v3631 = vunpack.c.l.b16 %v328
    %v3632 = vunpack.c.h.b16 %v328
    %v3633 = vunpack.c.l.b16 %v329
    %v3634 = vunpack.c.h.b16 %v329
    %v3635 = vunpack.c.l.b16 %v330
    %v3636 = vunpack.c.h.b16 %v330
    %v3637 = vunpack.c.l.b16 %v331
    %v3638 = vunpack.c.h.b16 %v331
    %v3639 = vunpack.c.l.b16 %v332
    %v3640 = vunpack.c.h.b16 %v332
    %v3641 = vunpack.c.l.b16 %v333
    %v3642 = vunpack.c.h.b16 %v333
    %v3643 = vunpack.c.l.b16 %v334
    %v3644 = vunpack.c.h.b16 %v334
    %v3645 = vunpack.c.l.b16 %v335
    %v3646 = vunpack.c.h.b16 %v335
    %v3647 = vunpack.c.l.b16 %v336
    %v3648 = vunpack.c.h.b16 %v336
    %v3649 = vunpack.c.l.b16 %v337
    %v3650 = vunpack.c.h.b16 %v337
    %v3651 = vunpack.c.l.b16 %v338
    %v3652 = vunpack.c.h.b16 %v338
    %v3653 = vunpack.c.l.b16 %v339
    %v3654 = vunpack.c.h.b16 %v339
    %v3655 = vunpack.c.l.b16 %v340
    %v3656 = vunpack.c.h.b16 %v340
    %v3657 = vunpack.c.l.b16 %v341
    %v3658 = vunpack.c.h.b16 %v341
    %v3659 = vunpack.c.l.b16 %v342
    %v3660 = vunpack.c.h.b16 %v342
    %v3661 = vunpack.c.l.b16 %v343
    %v3662 = vunpack.c.h.b16 %v343
    %v3663 = vunpack.c.l.b16 %v344
    %v3664 = vunpack.c.h.b16 %v344
    %v3665 = vunpack.c.l.b16 %v345
    %v3666 = vunpack.c.h.b16 %v345
    %v3667 = vunpack.c.l.b16 %v346
    %v3668 = vunpack.c.h.b16 %v346
    %v3669 = vunpack.c.l.b16 %v347
    %v3670 = vunpack.c.h.b16 %v347
    %v3671 = vunpack.c.l.b16 %v348
    %v3672 = vunpack.c.h.b16 %v348
    %v3673 = vunpack.c.l.b16 %v349
    %v3674 = vunpack.c.h.b16 %v349
    %v3675 = vunpack.c.l.b16 %v350
    %v3676 = vunpack.c.h.b16 %v350
    %v3677 = vunpack.c.l.b16 %v351
    %v3678 = vunpack.c.h.b16 %v351
    %v3679 = vunpack.c.l.b16 %v352
    %v3680 = vunpack.c.h.b16 %v352
    %v3681 = vunpack.c.l.b16 %v353
    %v3682 = vunpack.c.h.b16 %v353
    %v3683 = vunpack.c.l.b16 %v354
    %v3684 = vunpack.c.h.b16 %v354
    %v3685 = vunpack.c.l.b16 %v355
    %v3686 = vunpack.c.h.b16 %v355
    %v3687 = vunpack.c.l.b16 %v356
    %v3688 = vunpack.c.h.b16 %v356
    %v3689 = vunpack.c.l.b16 %v357
    %v3690 = vunpack.c.h.b16 %v357
    %v3691 = vunpack.c.l.b16 %v358
    %v3692 = vunpack.c.h.b16 %v358
    %v3693 = vunpack.c.l.b16 %v359
    %v3694 = vunpack.c.h.b16 %v359
    %v3695 = vunpack.c.l.b16 %v360
    %v3696 = vunpack.c.h.b16 %v360
    %v3697 = vunpack.c.l.b16 %v361
    %v3698 = vunpack.c.h.b16 %v361
    %v3699 = vunpack.c.l.b16 %v362
    %v3700 = vunpack.c.h.b16 %v362
    %v3701 = vunpack.c.l.b16 %v363
    %v3702 = vunpack.c.h.b16 %v363
    %v3703 = vunpack.c.l.b16 %v364
    %v3704 = vunpack.c.h.b16 %v364
    %v3705 = vunpack.c.l.b16 %v365
    %v3706 = vunpack.c.h.b16 %v365
    %v3707 = vunpack.c.l.b16 %v366
    %v3708 = vunpack.c.h.b16 %v366
    %v3709 = vunpack.c.l.b16 %v367
    %v3710 = vunpack.c.h.b16 %v367
    %v3711 = vunpack.c.l.b16 %v368
    %v3712 = vunpack.c.h.b16 %v368
    %v3713 = vunpack.c.l.b16 %v369
    %v3714 = vunpack.c.h.b16 %v369
    %v3715 = vunpack.c.l.b16 %v370
    %v3716 = vunpack.c.h.b16 %v370
    %v3717 = vunpack.c.l.b16 %v371
    %v3718 = vunpack.c.h.b16 %v371
    %v3719 = vunpack.c.l.b16 %v372
    %v3720 = vunpack.c.h.b16 %v372
    %v3721 = vunpack.c.l.b16 %v373
    %v3722 = vunpack.c.h.b16 %v373
    %v3723 = vunpack.c.l.b16 %v374
    %v3724 = vunpack.c.h.b16 %v374
    %v3725 = vunpack.c.l.b16 %v375
    %v3726 = vunpack.c.h.b16 %v375
    %v3727 = vunpack.c.l.b16 %v376
    %v3728 = vunpack.c.h.b16 %v376
    %v3729 = vunpack.c.l.b16 %v377
    %v3730 = vunpack.c.h.b16 %v377
    %v3731 = vunpack.c.l.b16 %v378
    %v3732 = vunpack.c.h.b16 %v378
    %v3733 = vunpack.c.l.b16 %v379
    %v3734 = vunpack.c.h.b16 %v379
    %v3735 = vunpack.c.l.b16 %v380
    %v3736 = vunpack.c.h.b16 %v380
    %v3737 = vunpack.c.l.b16 %v381
    %v3738 = vunpack.c.h.b16 %v381
    %v3739 = vunpack.c.l.b16 %v382
    %v3740 = vunpack.c.h.b16 %v382
    %v3741 = vunpack.c.l.b16 %v383
    %v3742 = vunpack.c.h.b16 %v383
    %v3743 = vunpack.c.l.b16 %v384
    %v3744 = vunpack.c.h.b16 %v384
    %v3745 = vunpack.c.l.b16 %v385
    %v3746 = vunpack.c.h.b16 %v385
    %v3747 = vunpack.c.l.b16 %v386
    %v3748 = vunpack.c.h.b16 %v386
    %v3749 = vunpack.c.l.b16 %v387
    %v3750 = vunpack.c.h.b16 %v387
    %v3751 = vunpack.c.l.b16 %v388
    %v3752 = vunpack.c.h.b16 %v388
    %v3753 = vunpack.c.l.b16 %v389
    %v3754 = vunpack.c.h.b16 %v389
    %v3755 = vunpack.c.l.b16 %v390
    %v3756 = vunpack.c.h.b16 %v390
    %v3757 = vunpack.c.l.b16 %v391
    %v3758 = vunpack.c.h.b16 %v391
    %v3759 = vunpack.c.l.b16 %v392
    %v3760 = vunpack.c.h.b16 %v392
    %v3761 = vunpack.c.l.b16 %v393
    %v3762 = vunpack.c.h.b16 %v393
    %v3763 = vunpack.c.l.b16 %v394
    %v3764 = vunpack.c.h.b16 %v394
    %v3765 = vunpack.c.l.b16 %v395
    %v3766 = vunpack.c.h.b16 %v395
    %v3767 = vunpack.c.l.b16 %v396
    %v3768 = vunpack.c.h.b16 %v396
    %v3769 = vunpack.c.l.b16 %v397
    %v3770 = vunpack.c.h.b16 %v397
    %v3771 = vunpack.c.l.b16 %v398
    %v3772 = vunpack.c.h.b16 %v398
    %v3773 = vunpack.c.l.b16 %v399
    %v3774 = vunpack.c.h.b16 %v399
    %v3775 = vunpack.c.l.b16 %v400
    %v3776 = vunpack.c.h.b16 %v400
    %v3777 = vunpack.c.l.b16 %v401
    %v3778 = vunpack.c.h.b16 %v401
    %v3779 = vunpack.c.l.b16 %v402
    %v3780 = vunpack.c.h.b16 %v402
    %v3781 = vunpack.c.l.b16 %v403
    %v3782 = vunpack.c.h.b16 %v403
    %v3783 = vunpack.c.l.b16 %v404
    %v3784 = vunpack.c.h.b16 %v404
    %v3785 = vunpack.c.l.b16 %v405
    %v3786 = vunpack.c.h.b16 %v405
    %v3787 = vunpack.c.l.b16 %v406
    %v3788 = vunpack.c.h.b16 %v406
    %v3789 = vunpack.c.l.b16 %v407
    %v3790 = vunpack.c.h.b16 %v407
    %v3791 = vunpack.c.l.b16 %v408
    %v3792 = vunpack.c.h.b16 %v408
    %v3793 = vunpack.c.l.b16 %v409
    %v3794 = vunpack.c.h.b16 %v409
    %v3795 = vunpack.c.l.b16 %v410
    %v3796 = vunpack.c.h.b16 %v410
    %v3797 = vunpack.c.l.b16 %v411
    %v3798 = vunpack.c.h.b16 %v411
    %v3799 = vunpack.c.l.b16 %v412
    %v3800 = vunpack.c.h.b16 %v412
    %v3801 = vunpack.c.l.b16 %v413
    %v3802 = vunpack.c.h.b16 %v413
    %v3803 = vunpack.c.l.b16 %v414
    %v3804 = vunpack.c.h.b16 %v414
    %v3805 = vunpack.c.l.b16 %v415
    %v3806 = vunpack.c.h.b16 %v415
    %v3807 = vunpack.c.l.b16 %v416
    %v3808 = vunpack.c.h.b16 %v416
    %v3809 = vunpack.c.l.b16 %v417
    %v3810 = vunpack.c.h.b16 %v417
    %v3811 = vunpack.c.l.b16 %v418
    %v3812 = vunpack.c.h.b16 %v418
    %v3813 = vunpack.c.l.b16 %v419
    %v3814 = vunpack.c.h.b16 %v419
    %v3815 = vunpack.c.l.b16 %v420
    %v3816 = vunpack.c.h.b16 %v420
    %v3817 = vunpack.c.l.b16 %v421
    %v3818 = vunpack.c.h.b16 %v421
    %v3819 = vunpack.c.l.b16 %v422
    %v3820 = vunpack.c.h.b16 %v422
    %v3821 = vunpack.c.l.b16 %v423
    %v3822 = vunpack.c.h.b16 %v423
    %v3823 = vunpack.c.l.b16 %v424
    %v3824 = vunpack.c.h.b16 %v424
    %v3825 = vunpack.c.l.b16 %v425
    %v3826 = vunpack.c.h.b16 %v425
    %v3827 = vunpack.c.l.b16 %v426
    %v3828 = vunpack.c.h.b16 %v426
    %v3829 = vunpack.c.l.b16 %v427
    %v3830 = vunpack.c.h.b16 %v427
    %v3831 = vunpack.c.l.b16 %v428
    %v3832 = vunpack.c.h.b16 %v428
    %v3833 = vunpack.c.l.b16 %v429
    %v3834 = vunpack.c.h.b16 %v429
    %v3835 = vunpack.c.l.b16 %v430
    %v3836 = vunpack.c.h.b16 %v430
    %v3837 = vunpack.c.l.b16 %v431
    %v3838 = vunpack.c.h.b16 %v431
    %v3839 = vunpack.c.l.b16 %v432
    %v3840 = vunpack.c.h.b16 %v432
    %v3841 = vunpack.c.l.b16 %v433
    %v3842 = vunpack.c.h.b16 %v433
    %v3843 = vunpack.c.l.b16 %v434
    %v3844 = vunpack.c.h.b16 %v434
    %v3845 = vunpack.c.l.b16 %v435
    %v3846 = vunpack.c.h.b16 %v435
    %v3847 = vunpack.c.l.b16 %v436
    %v3848 = vunpack.c.h.b16 %v436
    %v3849 = vunpack.c.l.b16 %v437
    %v3850 = vunpack.c.h.b16 %v437
    %v3851 = vunpack.c.l.b16 %v438
    %v3852 = vunpack.c.h.b16 %v438
    %v3853 = vunpack.c.l.b16 %v439
    %v3854 = vunpack.c.h.b16 %v439
    %v3855 = vunpack.c.l.b16 %v440
    %v3856 = vunpack.c.h.b16 %v440
    %v3857 = vunpack.c.l.b16 %v441
    %v3858 = vunpack.c.h.b16 %v441
    %v3859 = vunpack.c.l.b16 %v442
    %v3860 = vunpack.c.h.b16 %v442
    %v3861 = vunpack.c.l.b16 %v443
    %v3862 = vunpack.c.h.b16 %v443
    %v3863 = vunpack.c.l.b16 %v444
    %v3864 = vunpack.c.h.b16 %v444
    %v3865 = vunpack.c.l.b16 %v445
    %v3866 = vunpack.c.h.b16 %v445
    %v3867 = vunpack.c.l.b16 %v446
    %v3868 = vunpack.c.h.b16 %v446
    %v3869 = vunpack.c.l.b16 %v447
    %v3870 = vunpack.c.h.b16 %v447
    %v3871 = vunpack.c.l.b16 %v448
    %v3872 = vunpack.c.h.b16 %v448
    %v3873 = vunpack.c.l.b16 %v449
    %v3874 = vunpack.c.h.b16 %v449
    %v3875 = vunpack.c.l.b16 %v450
    %v3876 = vunpack.c.h.b16 %v450
    %v3877 = vunpack.c.l.b16 %v451
    %v3878 = vunpack.c.h.b16 %v451
    %v3879 = vunpack.c.l.b16 %v452
    %v3880 = vunpack.c.h.b16 %v452
    %v3881 = vunpack.c.l.b16 %v453
    %v3882 = vunpack.c.h.b16 %v453
    %v3883 = vunpack.c.l.b16 %v454
    %v3884 = vunpack.c.h.b16 %v454
    %v3885 = vunpack.c.l.b16 %v455
    %v3886 = vunpack.c.h.b16 %v455
    %v3887 = vunpack.c.l.b16 %v456
    %v3888 = vunpack.c.h.b16 %v456
    %v3889 = vunpack.c.l.b16 %v457
    %v3890 = vunpack.c.h.b16 %v457
    %v3891 = vunpack.c.l.b16 %v458
    %v3892 = vunpack.c.h.b16 %v458
    %v3893 = vunpack.c.l.b16 %v459
    %v3894 = vunpack.c.h.b16 %v459
    %v3895 = vunpack.c.l.b16 %v460
    %v3896 = vunpack.c.h.b16 %v460
    %v3897 = vunpack.c.l.b16 %v461
    %v3898 = vunpack.c.h.b16 %v461
    %v3899 = vunpack.c.l.b16 %v462
    %v3900 = vunpack.c.h.b16 %v462
    %v3901 = vunpack.c.l.b16 %v463
    %v3902 = vunpack.c.h.b16 %v463
    %v3903 = vunpack.c.l.b16 %v464
    %v3904 = vunpack.c.h.b16 %v464
    %v3905 = vunpack.c.l.b16 %v465
    %v3906 = vunpack.c.h.b16 %v465
    %v3907 = vunpack.c.l.b16 %v466
    %v3908 = vunpack.c.h.b16 %v466
    %v3909 = vunpack.c.l.b16 %v467
    %v3910 = vunpack.c.h.b16 %v467
    %v3911 = vunpack.c.l.b16 %v468
    %v3912 = vunpack.c.h.b16 %v468
    %v3913 = vunpack.c.l.b16 %v469
    %v3914 = vunpack.c.h.b16 %v469
    %v3915 = vunpack.c.l.b16 %v470
    %v3916 = vunpack.c.h.b16 %v470
    %v3917 = vunpack.c.l.b16 %v471
    %v3918 = vunpack.c.h.b16 %v471
    %v3919 = vunpack.c.l.b16 %v472
    %v3920 = vunpack.c.h.b16 %v472
    %v3921 = vunpack.c.l.b16 %v473
    %v3922 = vunpack.c.h.b16 %v473
    %v3923 = vunpack.c.l.b16 %v474
    %v3924 = vunpack.c.h.b16 %v474
    %v3925 = vunpack.c.l.b16 %v475
    %v3926 = vunpack.c.h.b16 %v475
    %v3927 = vunpack.c.l.b16 %v476
    %v3928 = vunpack.c.h.b16 %v476
    %v3929 = vunpack.c.l.b16 %v477
    %v3930 = vunpack.c.h.b16 %v477
    %v3931 = vunpack.c.l.b16 %v478
    %v3932 = vunpack.c.h.b16 %v478
    %v3933 = vunpack.c.l.b16 %v479
    %v3934 = vunpack.c.h.b16 %v479
    %v3935 = vunpack.c.l.b16 %v480
    %v3936 = vunpack.c.h.b16 %v480
    %v3937 = vunpack.c.l.b16 %v481
    %v3938 = vunpack.c.h.b16 %v481
    %v3939 = vunpack.c.l.b16 %v482
    %v3940 = vunpack.c.h.b16 %v482
    %v3941 = vunpack.c.l.b16 %v483
    %v3942 = vunpack.c.h.b16 %v483
    %v3943 = vunpack.c.l.b16 %v484
    %v3944 = vunpack.c.h.b16 %v484
    %v3945 = vunpack.c.l.b16 %v485
    %v3946 = vunpack.c.h.b16 %v485
    %v3947 = vunpack.c.l.b16 %v486
    %v3948 = vunpack.c.h.b16 %v486
    %v3949 = vunpack.c.l.b16 %v487
    %v3950 = vunpack.c.h.b16 %v487
    %v3951 = vunpack.c.l.b16 %v488
    %v3952 = vunpack.c.h.b16 %v488
    %v3953 = vunpack.c.l.b16 %v489
    %v3954 = vunpack.c.h.b16 %v489
    %v3955 = vunpack.c.l.b16 %v490
    %v3956 = vunpack.c.h.b16 %v490
    %v3957 = vunpack.c.l.b16 %v491
    %v3958 = vunpack.c.h.b16 %v491
    %v3959 = vunpack.c.l.b16 %v492
    %v3960 = vunpack.c.h.b16 %v492
    %v3961 = vunpack.c.l.b16 %v493
    %v3962 = vunpack.c.h.b16 %v493
    %v3963 = vunpack.c.l.b16 %v494
    %v3964 = vunpack.c.h.b16 %v494
    %v3965 = vunpack.c.l.b16 %v495
    %v3966 = vunpack.c.h.b16 %v495
    %v3967 = vunpack.c.l.b16 %v496
    %v3968 = vunpack.c.h.b16 %v496
    %v3969 = vunpack.c.l.b16 %v497
    %v3970 = vunpack.c.h.b16 %v497
    %v3971 = vunpack.c.l.b16 %v498
    %v3972 = vunpack.c.h.b16 %v498
    %v3973 = vunpack.c.l.b16 %v499
    %v3974 = vunpack.c.h.b16 %v499
    %v3975 = vunpack.c.l.b16 %v500
    %v3976 = vunpack.c.h.b16 %v500
    %v3977 = vunpack.c.l.b16 %v501
    %v3978 = vunpack.c.h.b16 %v501
    %v3979 = vunpack.c.l.b16 %v502
    %v3980 = vunpack.c.h.b16 %v502
    %v3981 = vunpack.c.l.b16 %v503
    %v3982 = vunpack.c.h.b16 %v503
    %v3983 = vunpack.c.l.b16 %v504
    %v3984 = vunpack.c.h.b16 %v504
    %v3985 = vunpack.c.l.b16 %v505
    %v3986 = vunpack.c.h.b16 %v505
    %v3987 = vunpack.c.l.b16 %v506
    %v3988 = vunpack.c.h.b16 %v506
    %v3989 = vunpack.c.l.b16 %v507
    %v3990 = vunpack.c.h.b16 %v507
    %v3991 = vunpack.c.l.b16 %v508
    %v3992 = vunpack.c.h.b16 %v508
    %v3993 = vunpack.c.l.b16 %v509
    %v3994 = vunpack.c.h.b16 %v509
    %v3995 = vunpack.c.l.b16 %v510
    %v3996 = vunpack.c.h.b16 %v510
    %v3997 = vunpack.c.l.b16 %v511
    %v3998 = vunpack.c.h.b16 %v511
    %v3999 = vunpack.c.l.b16 %v512
    %v4000 = vunpack.c.h.b16 %v512
    %v4001 = vunpack.c.l.b16 %v513
    %v4002 = vunpack.c.h.b16 %v513
    %v4003 = vunpack.c.l.b16 %v514
    %v4004 = vunpack.c.h.b16 %v514
    %v4005 = vunpack.c.l.b16 %v515
    %v4006 = vunpack.c.h.b16 %v515
    %v4007 = vunpack.c.l.b16 %v516
    %v4008 = vunpack.c.h.b16 %v516
    %v4009 = vunpack.c.l.b16 %v517
    %v4010 = vunpack.c.h.b16 %v517
    %v4011 = vunpack.c.l.b16 %v518
    %v4012 = vunpack.c.h.b16 %v518
    %v4013 = vunpack.c.l.b16 %v519
    %v4014 = vunpack.c.h.b16 %v519
    %v4015 = vunpack.c.l.b16 %v520
    %v4016 = vunpack.c.h.b16 %v520
    %v4017 = vunpack.c.l.b16 %v521
    %v4018 = vunpack.c.h.b16 %v521
    %v4019 = vunpack.c.l.b16 %v522
    %v4020 = vunpack.c.h.b16 %v522
    %v4021 = vunpack.c.l.b16 %v523
    %v4022 = vunpack.c.h.b16 %v523
    %v4023 = vunpack.c.l.b16 %v524
    %v4024 = vunpack.c.h.b16 %v524
    %v4025 = vunpack.c.l.b16 %v525
    %v4026 = vunpack.c.h.b16 %v525
    %v4027 = vunpack.c.l.b16 %v526
    %v4028 = vunpack.c.h.b16 %v526
    %v4029 = vunpack.c.l.b16 %v527
    %v4030 = vunpack.c.h.b16 %v527
    %v4031 = vunpack.c.l.b16 %v528
    %v4032 = vunpack.c.h.b16 %v528
    %v4033 = vunpack.c.l.b16 %v529
    %v4034 = vunpack.c.h.b16 %v529
    %v4035 = vunpack.c.l.b16 %v530
    %v4036 = vunpack.c.h.b16 %v530
    %v4037 = vunpack.c.l.b16 %v531
    %v4038 = vunpack.c.h.b16 %v531
    %v4039 = vunpack.c.l.b16 %v532
    %v4040 = vunpack.c.h.b16 %v532
    %v4041 = vunpack.c.l.b16 %v533
    %v4042 = vunpack.c.h.b16 %v533
    %v4043 = vunpack.c.l.b16 %v534
    %v4044 = vunpack.c.h.b16 %v534
    %v4045 = vunpack.c.l.b16 %v535
    %v4046 = vunpack.c.h.b16 %v535
    %v4047 = vunpack.c.l.b16 %v536
    %v4048 = vunpack.c.h.b16 %v536
    %v4049 = vunpack.c.l.b16 %v537
    %v4050 = vunpack.c.h.b16 %v537
    %v4051 = vunpack.c.l.b16 %v538
    %v4052 = vunpack.c.h.b16 %v538
    %v4053 = vunpack.c.l.b16 %v539
    %v4054 = vunpack.c.h.b16 %v539
    %v4055 = vunpack.c.l.b16 %v540
    %v4056 = vunpack.c.h.b16 %v540
    %v4057 = vunpack.c.l.b16 %v541
    %v4058 = vunpack.c.h.b16 %v541
    %v4059 = vunpack.c.l.b16 %v542
    %v4060 = vunpack.c.h.b16 %v542
    %v4061 = vunpack.c.l.b16 %v543
    %v4062 = vunpack.c.h.b16 %v543
    %v4063 = vunpack.c.l.b16 %v544
    %v4064 = vunpack.c.h.b16 %v544
    %v4065 = vunpack.c.l.b16 %v545
    %v4066 = vunpack.c.h.b16 %v545
    %v4067 = vunpack.c.l.b16 %v546
    %v4068 = vunpack.c.h.b16 %v546
    %v4069 = vunpack.c.l.b16 %v547
    %v4070 = vunpack.c.h.b16 %v547
    %v4071 = vunpack.c.l.b16 %v548
    %v4072 = vunpack.c.h.b16 %v548
    %v4073 = vunpack.c.l.b16 %v549
    %v4074 = vunpack.c.h.b16 %v549
    %v4075 = vunpack.c.l.b16 %v550
    %v4076 = vunpack.c.h.b16 %v550
    %v4077 = vunpack.c.l.b16 %v551
    %v4078 = vunpack.c.h.b16 %v551
    %v4079 = vunpack.c.l.b16 %v552
    %v4080 = vunpack.c.h.b16 %v552
    %v4081 = vunpack.c.l.b16 %v553
    %v4082 = vunpack.c.h.b16 %v553
    %v4083 = vunpack.c.l.b16 %v554
    %v4084 = vunpack.c.h.b16 %v554
    %v4085 = vunpack.c.l.b16 %v555
    %v4086 = vunpack.c.h.b16 %v555
    %v4087 = vunpack.c.l.b16 %v556
    %v4088 = vunpack.c.h.b16 %v556
    %v4089 = vunpack.c.l.b16 %v557
    %v4090 = vunpack.c.h.b16 %v557
    %v4091 = vunpack.c.l.b16 %v558
    %v4092 = vunpack.c.h.b16 %v558
    %v4093 = vunpack.c.l.b16 %v559
    %v4094 = vunpack.c.h.b16 %v559
    %v4095 = vunpack.c.l.b16 %v560
    %v4096 = vunpack.c.h.b16 %v560
    %v4097 = vunpack.c.l.b16 %v561
    %v4098 = vunpack.c.h.b16 %v561
    %v4099 = vunpack.c.l.b16 %v562
    %v4100 = vunpack.c.h.b16 %v562
    %v4101 = vunpack.c.l.b16 %v563
    %v4102 = vunpack.c.h.b16 %v563
    %v4103 = vunpack.c.l.b16 %v564
    %v4104 = vunpack.c.h.b16 %v564
    %v4105 = vunpack.c.l.b16 %v565
    %v4106 = vunpack.c.h.b16 %v565
    %v4107 = vunpack.c.l.b16 %v566
    %v4108 = vunpack.c.h.b16 %v566
    %v4109 = vunpack.c.l.b16 %v567
    %v4110 = vunpack.c.h.b16 %v567
    %v4111 = vunpack.c.l.b16 %v568
    %v4112 = vunpack.c.h.b16 %v568
    %v4113 = vunpack.c.l.b16 %v569
    %v4114 = vunpack.c.h.b16 %v569
    %v4115 = vunpack.c.l.b16 %v570
    %v4116 = vunpack.c.h.b16 %v570
    %v4117 = vunpack.c.l.b16 %v571
    %v4118 = vunpack.c.h.b16 %v571
    %v4119 = vunpack.c.l.b16 %v572
    %v4120 = vunpack.c.h.b16 %v572
    %v4121 = vunpack.c.l.b16 %v573
    %v4122 = vunpack.c.h.b16 %v573
    %v4123 = vunpack.c.l.b16 %v574
    %v4124 = vunpack.c.h.b16 %v574
    %v4125 = vunpack.c.l.b16 %v575
    %v4126 = vunpack.c.h.b16 %v575
    %v4127 = vunpack.c.l.b16 %v576
    %v4128 = vunpack.c.h.b16 %v576
    %v4129 = vunpack.c.l.b16 %v577
    %v4130 = vunpack.c.h.b16 %v577
    %v4131 = vunpack.c.l.b16 %v578
    %v4132 = vunpack.c.h.b16 %v578
    %v4133 = vunpack.c.l.b16 %v579
    %v4134 = vunpack.c.h.b16 %v579
    %v4135 = vunpack.c.l.b16 %v580
    %v4136 = vunpack.c.h.b16 %v580
    %v4137 = vunpack.c.l.b16 %v581
    %v4138 = vunpack.c.h.b16 %v581
    %v4139 = vunpack.c.l.b16 %v582
    %v4140 = vunpack.c.h.b16 %v582
    %v4141 = vunpack.c.l.b16 %v583
    %v4142 = vunpack.c.h.b16 %v583
    %v4143 = vunpack.c.l.b16 %v584
    %v4144 = vunpack.c.h.b16 %v584
    %v4145 = vunpack.c.l.b16 %v585
    %v4146 = vunpack.c.h.b16 %v585
    %v4147 = vunpack.c.l.b16 %v586
    %v4148 = vunpack.c.h.b16 %v586
    %v4149 = vunpack.c.l.b16 %v587
    %v4150 = vunpack.c.h.b16 %v587
    %v4151 = vunpack.c.l.b16 %v588
    %v4152 = vunpack.c.h.b16 %v588
    %v4153 = vunpack.c.l.b16 %v589
    %v4154 = vunpack.c.h.b16 %v589
    %v4155 = vunpack.c.l.b16 %v590
    %v4156 = vunpack.c.h.b16 %v590
    %v4157 = vunpack.c.l.b16 %v591
    %v4158 = vunpack.c.h.b16 %v591
    %v4159 = vunpack.c.l.b16 %v592
    %v4160 = vunpack.c.h.b16 %v592
    %v4161 = vunpack.c.l.b16 %v593
    %v4162 = vunpack.c.h.b16 %v593
    %v4163 = vunpack.c.l.b16 %v594
    %v4164 = vunpack.c.h.b16 %v594
    %v4165 = vunpack.c.l.b16 %v595
    %v4166 = vunpack.c.h.b16 %v595
    %v4167 = vunpack.c.l.b16 %v596
    %v4168 = vunpack.c.h.b16 %v596
    %v4169 = vunpack.c.l.b16 %v597
    %v4170 = vunpack.c.h.b16 %v597
    %v4171 = vunpack.c.l.b16 %v598
    %v4172 = vunpack.c.h.b16 %v598
    %v4173 = vunpack.c.l.b16 %v599
    %v4174 = vunpack.c.h.b16 %v599
    %v4175 = vunpack.c.l.b16 %v600
    %v4176 = vunpack.c.h.b16 %v600
    %v4177 = vunpack.c.l.b16 %v601
    %v4178 = vunpack.c.h.b16 %v601
    %v4179 = vunpack.c.l.b16 %v602
    %v4180 = vunpack.c.h.b16 %v602
    %v4181 = vunpack.c.l.b16 %v603
    %v4182 = vunpack.c.h.b16 %v603
    %v4183 = vunpack.c.l.b16 %v604
    %v4184 = vunpack.c.h.b16 %v604
    %v4185 = vunpack.c.l.b16 %v605
    %v4186 = vunpack.c.h.b16 %v605
    %v4187 = vunpack.c.l.b16 %v606
    %v4188 = vunpack.c.h.b16 %v606
    %v4189 = vunpack.c.l.b16 %v607
    %v4190 = vunpack.c.h.b16 %v607
    %v4191 = vunpack.c.l.b16 %v608
    %v4192 = vunpack.c.h.b16 %v608
    %v4193 = vunpack.c.l.b16 %v609
    %v4194 = vunpack.c.h.b16 %v609
    %v4195 = vunpack.c.l.b16 %v610
    %v4196 = vunpack.c.h.b16 %v610
    %v4197 = vunpack.c.l.b16 %v611
    %v4198 = vunpack.c.h.b16 %v611
    %v4199 = vunpack.c.l.b16 %v612
    %v4200 = vunpack.c.h.b16 %v612
    %v4201 = vunpack.c.l.b16 %v613
    %v4202 = vunpack.c.h.b16 %v613
    %v4203 = vunpack.c.l.b16 %v614
    %v4204 = vunpack.c.h.b16 %v614
    %v4205 = vunpack.c.l.b16 %v615
    %v4206 = vunpack.c.h.b16 %v615
    %v4207 = vunpack.c.l.b16 %v616
    %v4208 = vunpack.c.h.b16 %v616
    %v4209 = vunpack.c.l.b16 %v617
    %v4210 = vunpack.c.h.b16 %v617
    %v4211 = vunpack.c.l.b16 %v618
    %v4212 = vunpack.c.h.b16 %v618
    %v4213 = vunpack.c.l.b16 %v619
    %v4214 = vunpack.c.h.b16 %v619
    %v4215 = vunpack.c.l.b16 %v620
    %v4216 = vunpack.c.h.b16 %v620
    %v4217 = vunpack.c.l.b16 %v621
    %v4218 = vunpack.c.h.b16 %v621
    %v4219 = vunpack.c.l.b16 %v622
    %v4220 = vunpack.c.h.b16 %v622
    %v4221 = vunpack.c.l.b16 %v623
    %v4222 = vunpack.c.h.b16 %v623
    %v4223 = vunpack.c.l.b16 %v624
    %v4224 = vunpack.c.h.b16 %v624
    %v4225 = vunpack.c.l.b16 %v625
    %v4226 = vunpack.c.h.b16 %v625
    %v4227 = vunpack.c.l.b16 %v626
    %v4228 = vunpack.c.h.b16 %v626
    %v4229 = vunpack.c.l.b16 %v627
    %v4230 = vunpack.c.h.b16 %v627
    %v4231 = vunpack.c.l.b16 %v628
    %v4232 = vunpack.c.h.b16 %v628
    %v4233 = vunpack.c.l.b16 %v629
    %v4234 = vunpack.c.h.b16 %v629
    %v4235 = vunpack.c.l.b16 %v630
    %v4236 = vunpack.c.h.b16 %v630
    %v4237 = vunpack.c.l.b16 %v631
    %v4238 = vunpack.c.h.b16 %v631
    %v4239 = vunpack.c.l.b16 %v632
    %v4240 = vunpack.c.h.b16 %v632
    %v4241 = vunpack.c.l.b16 %v633
    %v4242 = vunpack.c.h.b16 %v633
    %v4243 = vunpack.c.l.b16 %v634
    %v4244 = vunpack.c.h.b16 %v634
    %v4245 = vunpack.c.l.b16 %v635
    %v4246 = vunpack.c.h.b16 %v635
    %v4247 = vunpack.c.l.b16 %v636
    %v4248 = vunpack.c.h.b16 %v636
    %v4249 = vunpack.c.l.b16 %v637
    %v4250 = vunpack.c.h.b16 %v637
    %v4251 = vunpack.c.l.b16 %v638
    %v4252 = vunpack.c.h.b16 %v638
    %v4253 = vunpack.c.l.b16 %v639
    %v4254 = vunpack.c.h.b16 %v639
    %v4255 = vunpack.c.l.b16 %v640
    %v4256 = vunpack.c.h.b16 %v640
    %v4257 = vunpack.c.l.b16 %v641
    %v4258 = vunpack.c.h.b16 %v641
    %v4259 = vunpack.c.l.b16 %v642
    %v4260 = vunpack.c.h.b16 %v642
    %v4261 = vunpack.c.l.b16 %v643
    %v4262 = vunpack.c.h.b16 %v643
    %v4263 = vunpack.c.l.b16 %v644
    %v4264 = vunpack.c.h.b16 %v644
    %v4265 = vunpack.c.l.b16 %v645
    %v4266 = vunpack.c.h.b16 %v645
    %v4267 = vunpack.c.l.b16 %v646
    %v4268 = vunpack.c.h.b16 %v646
    %v4269 = vunpack.c.l.b16 %v647
    %v4270 = vunpack.c.h.b16 %v647
    %v4271 = vunpack.c.l.b16 %v648
    %v4272 = vunpack.c.h.b16 %v648
    %v4273 = vunpack.c.l.b16 %v649
    %v4274 = vunpack.c.h.b16 %v649
    %v4275 = vunpack.c.l.b16 %v650
    %v4276 = vunpack.c.h.b16 %v650
    %v4277 = vunpack.c.l.b16 %v651
    %v4278 = vunpack.c.h.b16 %v651
    %v4279 = vunpack.c.l.b16 %v652
    %v4280 = vunpack.c.h.b16 %v652
    %v4281 = vunpack.c.l.b16 %v653
    %v4282 = vunpack.c.h.b16 %v653
    %v4283 = vunpack.c.l.b16 %v654
    %v4284 = vunpack.c.h.b16 %v654
    %v4285 = vunpack.c.l.b16 %v655
    %v4286 = vunpack.c.h.b16 %v655
    %v4287 = vunpack.c.l.b16 %v656
    %v4288 = vunpack.c.h.b16 %v656
    %v4289 = vunpack.c.l.b16 %v657
    %v4290 = vunpack.c.h.b16 %v657
    %v4291 = vunpack.c.l.b16 %v658
    %v4292 = vunpack.c.h.b16 %v658
    %v4293 = vunpack.c.l.b16 %v659
    %v4294 = vunpack.c.h.b16 %v659
    %v4295 = vunpack.c.l.b16 %v660
    %v4296 = vunpack.c.h.b16 %v660
    %v4297 = vunpack.c.l.b16 %v661
    %v4298 = vunpack.c.h.b16 %v661
    %v4299 = vunpack.c.l.b16 %v662
    %v4300 = vunpack.c.h.b16 %v662
    %v4301 = vunpack.c.l.b16 %v663
    %v4302 = vunpack.c.h.b16 %v663
    %v4303 = vunpack.c.l.b16 %v664
    %v4304 = vunpack.c.h.b16 %v664
    %v4305 = vunpack.c.l.b16 %v665
    %v4306 = vunpack.c.h.b16 %v665
    %v4307 = vunpack.c.l.b16 %v666
    %v4308 = vunpack.c.h.b16 %v666
    %v4309 = vunpack.c.l.b16 %v667
    %v4310 = vunpack.c.h.b16 %v667
    %v4311 = vunpack.c.l.b16 %v668
    %v4312 = vunpack.c.h.b16 %v668
    %v4313 = vunpack.c.l.b16 %v669
    %v4314 = vunpack.c.h.b16 %v669
    %v4315 = vunpack.c.l.b16 %v670
    %v4316 = vunpack.c.h.b16 %v670
    %v4317 = vunpack.c.l.b16 %v671
    %v4318 = vunpack.c.h.b16 %v671
    %v4319 = vunpack.c.l.b16 %v672
    %v4320 = vunpack.c.h.b16 %v672
    %v4321 = vunpack.c.l.b16 %v673
    %v4322 = vunpack.c.h.b16 %v673
    %v4323 = vunpack.c.l.b16 %v674
    %v4324 = vunpack.c.h.b16 %v674
    %v4325 = vunpack.c.l.b16 %v675
    %v4326 = vunpack.c.h.b16 %v675
    %v4327 = vunpack.c.l.b16 %v676
    %v4328 = vunpack.c.h.b16 %v676
    %v4329 = vunpack.c.l.b16 %v677
    %v4330 = vunpack.c.h.b16 %v677
    %v4331 = vunpack.c.l.b16 %v678
    %v4332 = vunpack.c.h.b16 %v678
    %v4333 = vunpack.c.l.b16 %v679
    %v4334 = vunpack.c.h.b16 %v679
    %v4335 = vunpack.c.l.b16 %v680
    %v4336 = vunpack.c.h.b16 %v680
    %v4337 = vunpack.c.l.b16 %v681
    %v4338 = vunpack.c.h.b16 %v681
    %v4339 = vunpack.c.l.b16 %v682
    %v4340 = vunpack.c.h.b16 %v682
    %v4341 = vunpack.c.l.b16 %v683
    %v4342 = vunpack.c.h.b16 %v683
    %v4343 = vunpack.c.l.b16 %v684
    %v4344 = vunpack.c.h.b16 %v684
    %v4345 = vunpack.c.l.b16 %v685
    %v4346 = vunpack.c.h.b16 %v685
    %v4347 = vunpack.c.l.b16 %v686
    %v4348 = vunpack.c.h.b16 %v686
    %v4349 = vunpack.c.l.b16 %v687
    %v4350 = vunpack.c.h.b16 %v687
    %v4351 = vunpack.c.l.b16 %v688
    %v4352 = vunpack.c.h.b16 %v688
    %v4353 = vunpack.c.l.b16 %v689
    %v4354 = vunpack.c.h.b16 %v689
    %v4355 = vunpack.c.l.b16 %v690
    %v4356 = vunpack.c.h.b16 %v690
    %v4357 = vunpack.c.l.b16 %v691
    %v4358 = vunpack.c.h.b16 %v691
    %v4359 = vunpack.c.l.b16 %v692
    %v4360 = vunpack.c.h.b16 %v692
    %v4361 = vunpack.c.l.b16 %v693
    %v4362 = vunpack.c.h.b16 %v693
    %v4363 = vunpack.c.l.b16 %v694
    %v4364 = vunpack.c.h.b16 %v694
    %v4365 = vunpack.c.l.b16 %v695
    %v4366 = vunpack.c.h.b16 %v695
    %v4367 = vunpack.c.l.b16 %v696
    %v4368 = vunpack.c.h.b16 %v696
    %v4369 = vunpack.c.l.b16 %v697
    %v4370 = vunpack.c.h.b16 %v697
    %v4371 = vunpack.c.l.b16 %v698
    %v4372 = vunpack.c.h.b16 %v698
    %v4373 = vunpack.c.l.b16 %v699
    %v4374 = vunpack.c.h.b16 %v699
    %v4375 = vunpack.c.l.b16 %v700
    %v4376 = vunpack.c.h.b16 %v700
    %v4377 = vunpack.c.l.b16 %v701
    %v4378 = vunpack.c.h.b16 %v701
    %v4379 = vunpack.c.l.b16 %v702
    %v4380 = vunpack.c.h.b16 %v702
    %v4381 = vunpack.c.l.b16 %v703
    %v4382 = vunpack.c.h.b16 %v703
    %v4383 = vunpack.c.l.b16 %v704
    %v4384 = vunpack.c.h.b16 %v704
    %v4385 = vunpack.c.l.b16 %v705
    %v4386 = vunpack.c.h.b16 %v705
    %v4387 = vunpack.c.l.b16 %v706
    %v4388 = vunpack.c.h.b16 %v706
    %v4389 = vunpack.c.l.b16 %v707
    %v4390 = vunpack.c.h.b16 %v707
    %v4391 = vunpack.c.l.b16 %v708
    %v4392 = vunpack.c.h.b16 %v708
    %v4393 = vunpack.c.l.b16 %v709
    %v4394 = vunpack.c.h.b16 %v709
    %v4395 = vunpack.c.l.b16 %v710
    %v4396 = vunpack.c.h.b16 %v710
    %v4397 = vunpack.c.l.b16 %v711
    %v4398 = vunpack.c.h.b16 %v711
    %v4399 = vunpack.c.l.b16 %v712
    %v4400 = vunpack.c.h.b16 %v712
    %v4401 = vunpack.c.l.b16 %v713
    %v4402 = vunpack.c.h.b16 %v713
    %v4403 = vunpack.c.l.b16 %v714
    %v4404 = vunpack.c.h.b16 %v714
    %v4405 = vunpack.c.l.b16 %v715
    %v4406 = vunpack.c.h.b16 %v715
    %v4407 = vunpack.c.l.b16 %v716
    %v4408 = vunpack.c.h.b16 %v716
    %v4409 = vunpack.c.l.b16 %v717
    %v4410 = vunpack.c.h.b16 %v717
    %v4411 = vunpack.c.l.b16 %v718
    %v4412 = vunpack.c.h.b16 %v718
    %v4413 = vunpack.c.l.b16 %v719
    %v4414 = vunpack.c.h.b16 %v719
    %v4415 = vunpack.c.l.b16 %v720
    %v4416 = vunpack.c.h.b16 %v720
    %v4417 = vunpack.c.l.b16 %v721
    %v4418 = vunpack.c.h.b16 %v721
    %v4419 = vunpack.c.l.b16 %v722
    %v4420 = vunpack.c.h.b16 %v722
    %v4421 = vunpack.c.l.b16 %v723
    %v4422 = vunpack.c.h.b16 %v723
    %v4423 = vunpack.c.l.b16 %v724
    %v4424 = vunpack.c.h.b16 %v724
    %v4425 = vunpack.c.l.b16 %v725
    %v4426 = vunpack.c.h.b16 %v725
    %v4427 = vunpack.c.l.b16 %v726
    %v4428 = vunpack.c.h.b16 %v726
    %v4429 = vunpack.c.l.b16 %v727
    %v4430 = vunpack.c.h.b16 %v727
    %v4431 = vunpack.c.l.b16 %v728
    %v4432 = vunpack.c.h.b16 %v728
    %v4433 = vunpack.c.l.b16 %v729
    %v4434 = vunpack.c.h.b16 %v729
    %v4435 = vunpack.c.l.b16 %v730
    %v4436 = vunpack.c.h.b16 %v730
    %v4437 = vunpack.c.l.b16 %v731
    %v4438 = vunpack.c.h.b16 %v731
    %v4439 = vunpack.c.l.b16 %v732
    %v4440 = vunpack.c.h.b16 %v732
    %v4441 = vunpack.c.l.b16 %v733
    %v4442 = vunpack.c.h.b16 %v733
    %v4443 = vunpack.c.l.b16 %v734
    %v4444 = vunpack.c.h.b16 %v734
    %v4445 = vunpack.c.l.b16 %v735
    %v4446 = vunpack.c.h.b16 %v735
    %v4447 = vunpack.c.l.b16 %v736
    %v4448 = vunpack.c.h.b16 %v736
    %v4449 = vunpack.c.l.b16 %v737
    %v4450 = vunpack.c.h.b16 %v737
    %v4451 = vunpack.c.l.b16 %v738
    %v4452 = vunpack.c.h.b16 %v738
    %v4453 = vunpack.c.l.b16 %v739
    %v4454 = vunpack.c.h.b16 %v739
    %v4455 = vunpack.c.l.b16 %v740
    %v4456 = vunpack.c.h.b16 %v740
    %v4457 = vunpack.c.l.b16 %v741
    %v4458 = vunpack.c.h.b16 %v741
    %v4459 = vunpack.c.l.b16 %v742
    %v4460 = vunpack.c.h.b16 %v742
    %v4461 = vunpack.c.l.b16 %v743
    %v4462 = vunpack.c.h.b16 %v743
    %v4463 = vunpack.c.l.b16 %v744
    %v4464 = vunpack.c.h.b16 %v744
    %v4465 = vunpack.c.l.b16 %v745
    %v4466 = vunpack.c.h.b16 %v745
    %v4467 = vunpack.c.l.b16 %v746
    %v4468 = vunpack.c.h.b16 %v746
    %v4469 = vunpack.c.l.b16 %v747
    %v4470 = vunpack.c.h.b16 %v747
    %v4471 = vunpack.c.l.b16 %v748
    %v4472 = vunpack.c.h.b16 %v748
    %v4473 = vunpack.c.l.b16 %v749
    %v4474 = vunpack.c.h.b16 %v749
    %v4475 = vunpack.c.l.b16 %v750
    %v4476 = vunpack.c.h.b16 %v750
    %v4477 = vunpack.c.l.b16 %v751
    %v4478 = vunpack.c.h.b16 %v751
    %v4479 = vunpack.c.l.b16 %v752
    %v4480 = vunpack.c.h.b16 %v752
    %v4481 = vunpack.c.l.b16 %v753
    %v4482 = vunpack.c.h.b16 %v753
    %v4483 = vunpack.c.l.b16 %v754
    %v4484 = vunpack.c.h.b16 %v754
    %v4485 = vunpack.c.l.b16 %v755
    %v4486 = vunpack.c.h.b16 %v755
    %v4487 = vunpack.c.l.b16 %v756
    %v4488 = vunpack.c.h.b16 %v756
    %v4489 = vunpack.c.l.b16 %v757
    %v4490 = vunpack.c.h.b16 %v757
    %v4491 = vunpack.c.l.b16 %v758
    %v4492 = vunpack.c.h.b16 %v758
    %v4493 = vunpack.c.l.b16 %v759
    %v4494 = vunpack.c.h.b16 %v759
    %v4495 = vunpack.c.l.b16 %v760
    %v4496 = vunpack.c.h.b16 %v760
    %v4497 = vunpack.c.l.b16 %v761
    %v4498 = vunpack.c.h.b16 %v761
    %v4499 = vunpack.c.l.b16 %v762
    %v4500 = vunpack.c.h.b16 %v762
    %v4501 = vunpack.c.l.b16 %v763
    %v4502 = vunpack.c.h.b16 %v763
    %v4503 = vunpack.c.l.b16 %v764
    %v4504 = vunpack.c.h.b16 %v764
    %v4505 = vunpack.c.l.b16 %v765
    %v4506 = vunpack.c.h.b16 %v765
    %v4507 = vunpack.c.l.b16 %v766
    %v4508 = vunpack.c.h.b16 %v766
    %v4509 = vunpack.c.l.b16 %v767
    %v4510 = vunpack.c.h.b16 %v767
    %v4511 = vunpack.c.l.b16 %v768
    %v4512 = vunpack.c.h.b16 %v768
    %v4513 = vunpack.c.l.b16 %v769
    %v4514 = vunpack.c.h.b16 %v769
    %v4515 = vunpack.c.l.b16 %v770
    %v4516 = vunpack.c.h.b16 %v770
    %v4517 = vunpack.c.l.b16 %v771
    %v4518 = vunpack.c.h.b16 %v771
    %v4519 = vunpack.c.l.b16 %v772
    %v4520 = vunpack.c.h.b16 %v772
    %v4521 = vunpack.c.l.b16 %v773
    %v4522 = vunpack.c.h.b16 %v773
    %v4523 = vunpack.c.l.b16 %v774
    %v4524 = vunpack.c.h.b16 %v774
    %v4525 = vunpack.c.l.b16 %v775
    %v4526 = vunpack.c.h.b16 %v775
    %v4527 = vunpack.c.l.b16 %v776
    %v4528 = vunpack.c.h.b16 %v776
    %v4529 = vunpack.c.l.b16 %v777
    %v4530 = vunpack.c.h.b16 %v777
    %v4531 = vunpack.c.l.b16 %v778
    %v4532 = vunpack.c.h.b16 %v778
    %v4533 = vunpack.c.l.b16 %v779
    %v4534 = vunpack.c.h.b16 %v779
    %v4535 = vunpack.c.l.b16 %v780
    %v4536 = vunpack.c.h.b16 %v780
    %v4537 = vunpack.c.l.b16 %v781
    %v4538 = vunpack.c.h.b16 %v781
    %v4539 = vunpack.c.l.b16 %v782
    %v4540 = vunpack.c.h.b16 %v782
    %v4541 = vunpack.c.l.b16 %v783
    %v4542 = vunpack.c.h.b16 %v783
    %v4543 = vunpack.c.l.b16 %v784
    %v4544 = vunpack.c.h.b16 %v784
    %v4545 = vunpack.c.l.b16 %v785
    %v4546 = vunpack.c.h.b16 %v785
    %v4547 = vunpack.c.l.b16 %v786
    %v4548 = vunpack.c.h.b16 %v786
    %v4549 = vunpack.c.l.b16 %v787
    %v4550 = vunpack.c.h.b16 %v787
    %v4551 = vunpack.c.l.b16 %v788
    %v4552 = vunpack.c.h.b16 %v788
    %v4553 = vunpack.c.l.b16 %v789
    %v4554 = vunpack.c.h.b16 %v789
    %v4555 = vunpack.c.l.b16 %v790
    %v4556 = vunpack.c.h.b16 %v790
    %v4557 = vunpack.c.l.b16 %v791
    %v4558 = vunpack.c.h.b16 %v791
    %v4559 = vunpack.c.l.b16 %v792
    %v4560 = vunpack.c.h.b16 %v792
    %v4561 = vunpack.c.l.b16 %v793
    %v4562 = vunpack.c.h.b16 %v793
    %v4563 = vunpack.c.l.b16 %v794
    %v4564 = vunpack.c.h.b16 %v794
    %v4565 = vunpack.c.l.b16 %v795
    %v4566 = vunpack.c.h.b16 %v795
    %v4567 = vunpack.c.l.b16 %v796
    %v4568 = vunpack.c.h.b16 %v796
    %v4569 = vunpack.c.l.b16 %v797
    %v4570 = vunpack.c.h.b16 %v797
    %v4571 = vunpack.c.l.b16 %v798
    %v4572 = vunpack.c.h.b16 %v798
    %v4573 = vunpack.c.l.b16 %v799
    %v4574 = vunpack.c.h.b16 %v799
    %v4575 = vunpack.c.l.b16 %v800
    %v4576 = vunpack.c.h.b16 %v800
    %v4577 = vunpack.c.l.b16 %v801
    %v4578 = vunpack.c.h.b16 %v801
    %v4579 = vunpack.c.l.b16 %v802
    %v4580 = vunpack.c.h.b16 %v802
    %v4581 = vunpack.c.l.b16 %v803
    %v4582 = vunpack.c.h.b16 %v803
    %v4583 = vunpack.c.l.b16 %v804
    %v4584 = vunpack.c.h.b16 %v804
    %v4585 = vunpack.c.l.b16 %v805
    %v4586 = vunpack.c.h.b16 %v805
    %v4587 = vunpack.c.l.b16 %v806
    %v4588 = vunpack.c.h.b16 %v806
    %v4589 = vunpack.c.l.b16 %v807
    %v4590 = vunpack.c.h.b16 %v807
    %v4591 = vunpack.c.l.b16 %v808
    %v4592 = vunpack.c.h.b16 %v808
    %v4593 = vunpack.c.l.b16 %v809
    %v4594 = vunpack.c.h.b16 %v809
    %v4595 = vunpack.c.l.b16 %v810
    %v4596 = vunpack.c.h.b16 %v810
    %v4597 = vunpack.c.l.b16 %v811
    %v4598 = vunpack.c.h.b16 %v811
    %v4599 = vunpack.c.l.b16 %v812
    %v4600 = vunpack.c.h.b16 %v812
    %v4601 = vunpack.c.l.b16 %v813
    %v4602 = vunpack.c.h.b16 %v813
    %v4603 = vunpack.c.l.b16 %v814
    %v4604 = vunpack.c.h.b16 %v814
    %v4605 = vunpack.c.l.b16 %v815
    %v4606 = vunpack.c.h.b16 %v815
    %v4607 = vunpack.c.l.b16 %v816
    %v4608 = vunpack.c.h.b16 %v816
    %v4609 = vunpack.c.l.b16 %v817
    %v4610 = vunpack.c.h.b16 %v817
    %v4611 = vunpack.c.l.b16 %v818
    %v4612 = vunpack.c.h.b16 %v818
    %v4613 = vunpack.c.l.b16 %v819
    %v4614 = vunpack.c.h.b16 %v819
    %v4615 = vunpack.c.l.b16 %v820
    %v4616 = vunpack.c.h.b16 %v820
    %v4617 = vunpack.c.l.b16 %v821
    %v4618 = vunpack.c.h.b16 %v821
    %v4619 = vunpack.c.l.b16 %v822
    %v4620 = vunpack.c.h.b16 %v822
    %v4621 = vunpack.c.l.b16 %v823
    %v4622 = vunpack.c.h.b16 %v823
    %v4623 = vunpack.c.l.b16 %v824
    %v4624 = vunpack.c.h.b16 %v824
    %v4625 = vunpack.c.l.b16 %v825
    %v4626 = vunpack.c.h.b16 %v825
    %v4627 = vunpack.c.l.b16 %v826
    %v4628 = vunpack.c.h.b16 %v826
    %v4629 = vunpack.c.l.b16 %v827
    %v4630 = vunpack.c.h.b16 %v827
    %v4631 = vunpack.c.l.b16 %v828
    %v4632 = vunpack.c.h.b16 %v828
    %v4633 = vunpack.c.l.b16 %v829
    %v4634 = vunpack.c.h.b16 %v829
    %v4635 = vunpack.c.l.b16 %v830
    %v4636 = vunpack.c.h.b16 %v830
    %v4637 = vunpack.c.l.b16 %v831
    %v4638 = vunpack.c.h.b16 %v831
    %v4639 = vunpack.c.l.b16 %v832
    %v4640 = vunpack.c.h.b16 %v832
    %v4641 = vunpack.c.l.b16 %v833
    %v4642 = vunpack.c.h.b16 %v833
    %v4643 = vunpack.c.l.b16 %v834
    %v4644 = vunpack.c.h.b16 %v834
    %v4645 = vunpack.c.l.b16 %v835
    %v4646 = vunpack.c.h.b16 %v835
    %v4647 = vunpack.c.l.b16 %v836
    %v4648 = vunpack.c.h.b16 %v836
    %v4649 = vunpack.c.l.b16 %v837
    %v4650 = vunpack.c.h.b16 %v837
    %v4651 = vunpack.c.l.b16 %v838
    %v4652 = vunpack.c.h.b16 %v838
    %v4653 = vunpack.c.l.b16 %v839
    %v4654 = vunpack.c.h.b16 %v839
    %v4655 = vunpack.c.l.b16 %v840
    %v4656 = vunpack.c.h.b16 %v840
    %v4657 = vunpack.c.l.b16 %v841
    %v4658 = vunpack.c.h.b16 %v841
    %v4659 = vunpack.c.l.b16 %v842
    %v4660 = vunpack.c.h.b16 %v842
    %v4661 = vunpack.c.l.b16 %v843
    %v4662 = vunpack.c.h.b16 %v843
    %v4663 = vunpack.c.l.b16 %v844
    %v4664 = vunpack.c.h.b16 %v844
    %v4665 = vunpack.c.l.b16 %v845
    %v4666 = vunpack.c.h.b16 %v845
    %v4667 = vunpack.c.l.b16 %v846
    %v4668 = vunpack.c.h.b16 %v846
    %v4669 = vunpack.c.l.b16 %v847
    %v4670 = vunpack.c.h.b16 %v847
    %v4671 = vunpack.c.l.b16 %v848
    %v4672 = vunpack.c.h.b16 %v848
    %v4673 = vunpack.c.l.b16 %v849
    %v4674 = vunpack.c.h.b16 %v849
    %v4675 = vunpack.c.l.b16 %v850
    %v4676 = vunpack.c.h.b16 %v850
    %v4677 = vunpack.c.l.b16 %v851
    %v4678 = vunpack.c.h.b16 %v851
    %v4679 = vunpack.c.l.b16 %v852
    %v4680 = vunpack.c.h.b16 %v852
    %v4681 = vunpack.c.l.b16 %v853
    %v4682 = vunpack.c.h.b16 %v853
    %v4683 = vunpack.c.l.b16 %v854
    %v4684 = vunpack.c.h.b16 %v854
    %v4685 = vunpack.c.l.b16 %v855
    %v4686 = vunpack.c.h.b16 %v855
    %v4687 = vunpack.c.l.b16 %v856
    %v4688 = vunpack.c.h.b16 %v856
    %v4689 = vunpack.c.l.b16 %v857
    %v4690 = vunpack.c.h.b16 %v857
    %v4691 = vunpack.c.l.b16 %v858
    %v4692 = vunpack.c.h.b16 %v858
    %v4693 = vunpack.c.l.b16 %v859
    %v4694 = vunpack.c.h.b16 %v859
    %v4695 = vunpack.c.l.b16 %v860
    %v4696 = vunpack.c.h.b16 %v860
    %v4697 = vunpack.c.l.b16 %v861
    %v4698 = vunpack.c.h.b16 %v861
    %v4699 = vunpack.c.l.b16 %v862
    %v4700 = vunpack.c.h.b16 %v862
    %v4701 = vunpack.c.l.b16 %v863
    %v4702 = vunpack.c.h.b16 %v863
    %v4703 = vunpack.c.l.b16 %v864
    %v4704 = vunpack.c.h.b16 %v864
    %v4705 = vunpack.c.l.b16 %v865
    %v4706 = vunpack.c.h.b16 %v865
    %v4707 = vunpack.c.l.b16 %v866
    %v4708 = vunpack.c.h.b16 %v866
    %v4709 = vunpack.c.l.b16 %v867
    %v4710 = vunpack.c.h.b16 %v867
    %v4711 = vunpack.c.l.b16 %v868
    %v4712 = vunpack.c.h.b16 %v868
    %v4713 = vunpack.c.l.b16 %v869
    %v4714 = vunpack.c.h.b16 %v869
    %v4715 = vunpack.c.l.b16 %v870
    %v4716 = vunpack.c.h.b16 %v870
    %v4717 = vunpack.c.l.b16 %v871
    %v4718 = vunpack.c.h.b16 %v871
    %v4719 = vunpack.c.l.b16 %v872
    %v4720 = vunpack.c.h.b16 %v872
    %v4721 = vunpack.c.l.b16 %v873
    %v4722 = vunpack.c.h.b16 %v873
    %v4723 = vunpack.c.l.b16 %v874
    %v4724 = vunpack.c.h.b16 %v874
    %v4725 = vunpack.c.l.b16 %v875
    %v4726 = vunpack.c.h.b16 %v875
    %v4727 = vunpack.c.l.b16 %v876
    %v4728 = vunpack.c.h.b16 %v876
    %v4729 = vunpack.c.l.b16 %v877
    %v4730 = vunpack.c.h.b16 %v877
    %v4731 = vunpack.c.l.b16 %v878
    %v4732 = vunpack.c.h.b16 %v878
    %v4733 = vunpack.c.l.b16 %v879
    %v4734 = vunpack.c.h.b16 %v879
    %v4735 = vunpack.c.l.b16 %v880
    %v4736 = vunpack.c.h.b16 %v880
    %v4737 = vunpack.c.l.b16 %v881
    %v4738 = vunpack.c.h.b16 %v881
    %v4739 = vunpack.c.l.b16 %v882
    %v4740 = vunpack.c.h.b16 %v882
    %v4741 = vunpack.c.l.b16 %v883
    %v4742 = vunpack.c.h.b16 %v883
    %v4743 = vunpack.c.l.b16 %v884
    %v4744 = vunpack.c.h.b16 %v884
    %v4745 = vunpack.c.l.b16 %v885
    %v4746 = vunpack.c.h.b16 %v885
    %v4747 = vunpack.c.l.b16 %v886
    %v4748 = vunpack.c.h.b16 %v886
    %v4749 = vunpack.c.l.b16 %v887
    %v4750 = vunpack.c.h.b16 %v887
    %v4751 = vunpack.c.l.b16 %v888
    %v4752 = vunpack.c.h.b16 %v888
    %v4753 = vunpack.c.l.b16 %v889
    %v4754 = vunpack.c.h.b16 %v889
    %v4755 = vunpack.c.l.b16 %v890
    %v4756 = vunpack.c.h.b16 %v890
    %v4757 = vunpack.c.l.b16 %v891
    %v4758 = vunpack.c.h.b16 %v891
    %v4759 = vunpack.c.l.b16 %v892
    %v4760 = vunpack.c.h.b16 %v892
    %v4761 = vunpack.c.l.b16 %v893
    %v4762 = vunpack.c.h.b16 %v893
    %v4763 = vunpack.c.l.b16 %v894
    %v4764 = vunpack.c.h.b16 %v894
    %v4765 = vunpack.c.l.b16 %v895
    %v4766 = vunpack.c.h.b16 %v895
    %v4767 = vunpack.c.l.b16 %v896
    %v4768 = vunpack.c.h.b16 %v896
    %v4769 = vunpack.c.l.b16 %v897
    %v4770 = vunpack.c.h.b16 %v897
    %v4771 = vunpack.c.l.b16 %v898
    %v4772 = vunpack.c.h.b16 %v898
    %v4773 = vunpack.c.l.b16 %v899
    %v4774 = vunpack.c.h.b16 %v899
    %v4775 = vunpack.c.l.b16 %v900
    %v4776 = vunpack.c.h.b16 %v900
    %v4777 = vunpack.c.l.b16 %v901
    %v4778 = vunpack.c.h.b16 %v901
    %v4779 = vunpack.c.l.b16 %v902
    %v4780 = vunpack.c.h.b16 %v902
    %v4781 = vunpack.c.l.b16 %v903
    %v4782 = vunpack.c.h.b16 %v903
    %v4783 = vunpack.c.l.b16 %v904
    %v4784 = vunpack.c.h.b16 %v904
    %v4785 = vunpack.c.l.b16 %v905
    %v4786 = vunpack.c.h.b16 %v905
    %v4787 = vunpack.c.l.b16 %v906
    %v4788 = vunpack.c.h.b16 %v906
    %v4789 = vunpack.c.l.b16 %v907
    %v4790 = vunpack.c.h.b16 %v907
    %v4791 = vunpack.c.l.b16 %v908
    %v4792 = vunpack.c.h.b16 %v908
    %v4793 = vunpack.c.l.b16 %v909
    %v4794 = vunpack.c.h.b16 %v909
    %v4795 = vunpack.c.l.b16 %v910
    %v4796 = vunpack.c.h.b16 %v910
    %v4797 = vunpack.c.l.b16 %v911
    %v4798 = vunpack.c.h.b16 %v911
    %v4799 = vunpack.c.l.b16 %v912
    %v4800 = vunpack.c.h.b16 %v912
    %v4801 = vunpack.c.l.b16 %v913
    %v4802 = vunpack.c.h.b16 %v913
    %v4803 = vunpack.c.l.b16 %v914
    %v4804 = vunpack.c.h.b16 %v914
    %v4805 = vunpack.c.l.b16 %v915
    %v4806 = vunpack.c.h.b16 %v915
    %v4807 = vunpack.c.l.b16 %v916
    %v4808 = vunpack.c.h.b16 %v916
    %v4809 = vunpack.c.l.b16 %v917
    %v4810 = vunpack.c.h.b16 %v917
    %v4811 = vunpack.c.l.b16 %v918
    %v4812 = vunpack.c.h.b16 %v918
    %v4813 = vunpack.c.l.b16 %v919
    %v4814 = vunpack.c.h.b16 %v919
    %v4815 = vunpack.c.l.b16 %v920
    %v4816 = vunpack.c.h.b16 %v920
    %v4817 = vunpack.c.l.b16 %v921
    %v4818 = vunpack.c.h.b16 %v921
    %v4819 = vunpack.c.l.b16 %v922
    %v4820 = vunpack.c.h.b16 %v922
    %v4821 = vunpack.c.l.b16 %v923
    %v4822 = vunpack.c.h.b16 %v923
    %v4823 = vunpack.c.l.b16 %v924
    %v4824 = vunpack.c.h.b16 %v924
    %v4825 = vunpack.c.l.b16 %v925
    %v4826 = vunpack.c.h.b16 %v925
    %v4827 = vunpack.c.l.b16 %v926
    %v4828 = vunpack.c.h.b16 %v926
    %v4829 = vunpack.c.l.b16 %v927
    %v4830 = vunpack.c.h.b16 %v927
    %v4831 = vunpack.c.l.b16 %v928
    %v4832 = vunpack.c.h.b16 %v928
    %v4833 = vunpack.c.l.b16 %v929
    %v4834 = vunpack.c.h.b16 %v929
    %v4835 = vunpack.c.l.b16 %v930
    %v4836 = vunpack.c.h.b16 %v930
    %v4837 = vunpack.c.l.b16 %v931
    %v4838 = vunpack.c.h.b16 %v931
    %v4839 = vunpack.c.l.b16 %v932
    %v4840 = vunpack.c.h.b16 %v932
    %v4841 = vunpack.c.l.b16 %v933
    %v4842 = vunpack.c.h.b16 %v933
    %v4843 = vunpack.c.l.b16 %v934
    %v4844 = vunpack.c.h.b16 %v934
    %v4845 = vunpack.c.l.b16 %v935
    %v4846 = vunpack.c.h.b16 %v935
    %v4847 = vunpack.c.l.b16 %v936
    %v4848 = vunpack.c.h.b16 %v936
    %v4849 = vunpack.c.l.b16 %v937
    %v4850 = vunpack.c.h.b16 %v937
    %v4851 = vunpack.c.l.b16 %v938
    %v4852 = vunpack.c.h.b16 %v938
    %v4853 = vunpack.c.l.b16 %v939
    %v4854 = vunpack.c.h.b16 %v939
    %v4855 = vunpack.c.l.b16 %v940
    %v4856 = vunpack.c.h.b16 %v940
    %v4857 = vunpack.c.l.b16 %v941
    %v4858 = vunpack.c.h.b16 %v941
    %v4859 = vunpack.c.l.b16 %v942
    %v4860 = vunpack.c.h.b16 %v942
    %v4861 = vunpack.c.l.b16 %v943
    %v4862 = vunpack.c.h.b16 %v943
    %v4863 = vunpack.c.l.b16 %v944
    %v4864 = vunpack.c.h.b16 %v944
    %v4865 = vunpack.c.l.b16 %v945
    %v4866 = vunpack.c.h.b16 %v945
    %v4867 = vunpack.c.l.b16 %v946
    %v4868 = vunpack.c.h.b16 %v946
    %v4869 = vunpack.c.l.b16 %v947
    %v4870 = vunpack.c.h.b16 %v947
    %v4871 = vunpack.c.l.b16 %v948
    %v4872 = vunpack.c.h.b16 %v948
    %v4873 = vunpack.c.l.b16 %v949
    %v4874 = vunpack.c.h.b16 %v949
    %v4875 = vunpack.c.l.b16 %v950
    %v4876 = vunpack.c.h.b16 %v950
    %v4877 = vunpack.c.l.b16 %v951
    %v4878 = vunpack.c.h.b16 %v951
    %v4879 = vunpack.c.l.b16 %v952
    %v4880 = vunpack.c.h.b16 %v952
    %v4881 = vunpack.c.l.b16 %v953
    %v4882 = vunpack.c.h.b16 %v953
    %v4883 = vunpack.c.l.b16 %v954
    %v4884 = vunpack.c.h.b16 %v954
    %v4885 = vunpack.c.l.b16 %v955
    %v4886 = vunpack.c.h.b16 %v955
    %v4887 = vunpack.c.l.b16 %v956
    %v4888 = vunpack.c.h.b16 %v956
    %v4889 = vunpack.c.l.b16 %v957
    %v4890 = vunpack.c.h.b16 %v957
    %v4891 = vunpack.c.l.b16 %v958
    %v4892 = vunpack.c.h.b16 %v958
    %v4893 = vunpack.c.l.b16 %v959
    %v4894 = vunpack.c.h.b16 %v959
    %v4895 = vunpack.c.l.b16 %v960
    %v4896 = vunpack.c.h.b16 %v960
    %v4897 = vunpack.c.l.b16 %v961
    %v4898 = vunpack.c.h.b16 %v961
    %v4899 = vunpack.c.l.b16 %v962
    %v4900 = vunpack.c.h.b16 %v962
    %v4901 = vunpack.c.l.b16 %v963
    %v4902 = vunpack.c.h.b16 %v963
    %v4903 = vunpack.c.l.b16 %v964
    %v4904 = vunpack.c.h.b16 %v964
    %v4905 = vunpack.c.l.b16 %v965
    %v4906 = vunpack.c.h.b16 %v965
    %v4907 = vunpack.c.l.b16 %v966
    %v4908 = vunpack.c.h.b16 %v966
    %v4909 = vunpack.c.l.b16 %v967
    %v4910 = vunpack.c.h.b16 %v967
    %v4911 = vunpack.c.l.b16 %v968
    %v4912 = vunpack.c.h.b16 %v968
    %v4913 = vunpack.c.l.b16 %v969
    %v4914 = vunpack.c.h.b16 %v969
    %v4915 = vunpack.c.l.b16 %v970
    %v4916 = vunpack.c.h.b16 %v970
    %v4917 = vunpack.c.l.b16 %v971
    %v4918 = vunpack.c.h.b16 %v971
    %v4919 = vunpack.c.l.b16 %v972
    %v4920 = vunpack.c.h.b16 %v972
    %v4921 = vunpack.c.l.b16 %v973
    %v4922 = vunpack.c.h.b16 %v973
    %v4923 = vunpack.c.l.b16 %v974
    %v4924 = vunpack.c.h.b16 %v974
    %v4925 = vunpack.c.l.b16 %v975
    %v4926 = vunpack.c.h.b16 %v975
    %v4927 = vunpack.c.l.b16 %v976
    %v4928 = vunpack.c.h.b16 %v976
    %v4929 = vunpack.c.l.b16 %v977
    %v4930 = vunpack.c.h.b16 %v977
    %v4931 = vunpack.c.l.b16 %v978
    %v4932 = vunpack.c.h.b16 %v978
    %v4933 = vunpack.c.l.b16 %v979
    %v4934 = vunpack.c.h.b16 %v979
    %v4935 = vunpack.c.l.b16 %v980
    %v4936 = vunpack.c.h.b16 %v980
    %v4937 = vunpack.c.l.b16 %v981
    %v4938 = vunpack.c.h.b16 %v981
    %v4939 = vunpack.c.l.b16 %v982
    %v4940 = vunpack.c.h.b16 %v982
    %v4941 = vunpack.c.l.b16 %v983
    %v4942 = vunpack.c.h.b16 %v983
    %v4943 = vunpack.c.l.b16 %v984
    %v4944 = vunpack.c.h.b16 %v984
    %v4945 = vunpack.c.l.b16 %v985
    %v4946 = vunpack.c.h.b16 %v985
    %v4947 = vunpack.c.l.b16 %v986
    %v4948 = vunpack.c.h.b16 %v986
    %v4949 = vunpack.c.l.b16 %v987
    %v4950 = vunpack.c.h.b16 %v987
    %v4951 = vunpack.c.l.b16 %v988
    %v4952 = vunpack.c.h.b16 %v988
    %v4953 = vunpack.c.l.b16 %v989
    %v4954 = vunpack.c.h.b16 %v989
    %v4955 = vunpack.c.l.b16 %v990
    %v4956 = vunpack.c.h.b16 %v990
    %v4957 = vunpack.c.l.b16 %v991
    %v4958 = vunpack.c.h.b16 %v991
    %v4959 = vunpack.c.l.b16 %v992
    %v4960 = vunpack.c.h.b16 %v992
    %v4961 = vunpack.c.l.b16 %v993
    %v4962 = vunpack.c.h.b16 %v993
    %v4963 = vunpack.c.l.b16 %v994
    %v4964 = vunpack.c.h.b16 %v994
    %v4965 = vunpack.c.l.b16 %v995
    %v4966 = vunpack.c.h.b16 %v995
    %v4967 = vunpack.c.l.b16 %v996
    %v4968 = vunpack.c.h.b16 %v996
    %v4969 = vunpack.c.l.b16 %v997
    %v4970 = vunpack.c.h.b16 %v997
    %v4971 = vunpack.c.l.b16 %v998
    %v4972 = vunpack.c.h.b16 %v998
    %v4973 = vunpack.c.l.b16 %v999
    %v4974 = vunpack.c.h.b16 %v999
    %v4975 = vunpack.c.l.b16 %v1000
    %v4976 = vunpack.c.h.b16 %v1000
    %v4977 = vunpack.c.l.b16 %v1001
    %v4978 = vunpack.c.h.b16 %v1001
    %v4979 = vunpack.c.l.b16 %v1002
    %v4980 = vunpack.c.h.b16 %v1002
    %v4981 = vunpack.c.l.b16 %v1003
    %v4982 = vunpack.c.h.b16 %v1003
    %v4983 = vunpack.c.l.b16 %v1004
    %v4984 = vunpack.c.h.b16 %v1004
    %v4985 = vunpack.c.l.b16 %v1005
    %v4986 = vunpack.c.h.b16 %v1005
    %v4987 = vunpack.c.l.b16 %v1006
    %v4988 = vunpack.c.h.b16 %v1006
    %v4989 = vunpack.c.l.b16 %v1007
    %v4990 = vunpack.c.h.b16 %v1007
    %v4991 = vunpack.c.l.b16 %v1008
    %v4992 = vunpack.c.h.b16 %v1008
    %v4993 = vunpack.c.l.b16 %v1009
    %v4994 = vunpack.c.h.b16 %v1009
    %v4995 = vunpack.c.l.b16 %v1010
    %v4996 = vunpack.c.h.b16 %v1010
    %v4997 = vunpack.c.l.b16 %v1011
    %v4998 = vunpack.c.h.b16 %v1011
    %v4999 = vunpack.c.l.b16 %v1012
    %v5000 = vunpack.c.h.b16 %v1012
    %v5001 = vunpack.c.l.b16 %v1013
    %v5002 = vunpack.c.h.b16 %v1013
    %v5003 = vunpack.c.l.b16 %v1014
    %v5004 = vunpack.c.h.b16 %v1014
    %v5005 = vunpack.c.l.b16 %v1015
    %v5006 = vunpack.c.h.b16 %v1015
    %v5007 = vunpack.c.l.b16 %v1016
    %v5008 = vunpack.c.h.b16 %v1016
    %v5009 = vunpack.c.l.b16 %v1017
    %v5010 = vunpack.c.h.b16 %v1017
    %v5011 = vunpack.c.l.b16 %v1018
    %v5012 = vunpack.c.h.b16 %v1018
    %v5013 = vunpack.c.l.b16 %v1019
    %v5014 = vunpack.c.h.b16 %v1019
    %v5015 = vunpack.c.l.b16 %v1020
    %v5016 = vunpack.c.h.b16 %v1020
    %v5017 = vunpack.c.l.b16 %v1021
    %v5018 = vunpack.c.h.b16 %v1021
    %v5019 = vunpack.c.l.b16 %v1022
    %v5020 = vunpack.c.h.b16 %v1022
    %v5021 = vunpack.c.l.b16 %v1023
    %v5022 = vunpack.c.h.b16 %v1023
    %v5023 = vunpack.c.l.b16 %v1024
    %v5024 = vunpack.c.h.b16 %v1024
    %v5025 = vunpack.c.l.b16 %v1025
    %v5026 = vunpack.c.h.b16 %v1025
    %v5027 = vunpack.c.l.b16 %v1026
    %v5028 = vunpack.c.h.b16 %v1026
    %v5029 = vunpack.c.l.b16 %v1027
    %v5030 = vunpack.c.h.b16 %v1027
    %v5031 = vunpack.c.l.b16 %v1028
    %v5032 = vunpack.c.h.b16 %v1028
    %v5033 = vunpack.c.l.b16 %v1029
    %v5034 = vunpack.c.h.b16 %v1029
    %v5035 = vunpack.c.l.b16 %v1030
    %v5036 = vunpack.c.h.b16 %v1030
    %v5037 = vunpack.c.l.b16 %v1031
    %v5038 = vunpack.c.h.b16 %v1031
    %v5039 = vunpack.c.l.b16 %v1032
    %v5040 = vunpack.c.h.b16 %v1032
    %v5041 = vunpack.c.l.b16 %v1033
    %v5042 = vunpack.c.h.b16 %v1033
    %v5043 = vunpack.c.l.b16 %v1034
    %v5044 = vunpack.c.h.b16 %v1034
    %v5045 = vunpack.c.l.b16 %v1035
    %v5046 = vunpack.c.h.b16 %v1035
    %v5047 = vunpack.c.l.b16 %v1036
    %v5048 = vunpack.c.h.b16 %v1036
    %v5049 = vunpack.c.l.b16 %v1037
    %v5050 = vunpack.c.h.b16 %v1037
    %v5051 = vunpack.c.l.b16 %v1038
    %v5052 = vunpack.c.h.b16 %v1038
    %v5053 = vunpack.c.l.b16 %v1039
    %v5054 = vunpack.c.h.b16 %v1039
    %v5055 = vunpack.c.l.b16 %v1040
    %v5056 = vunpack.c.h.b16 %v1040
    %v5057 = vunpack.c.l.b16 %v1041
    %v5058 = vunpack.c.h.b16 %v1041
    %v5059 = vunpack.c.l.b16 %v1042
    %v5060 = vunpack.c.h.b16 %v1042
    %v5061 = vunpack.c.l.b16 %v1043
    %v5062 = vunpack.c.h.b16 %v1043
    %v5063 = vunpack.c.l.b16 %v1044
    %v5064 = vunpack.c.h.b16 %v1044
    %v5065 = vunpack.c.l.b16 %v1045
    %v5066 = vunpack.c.h.b16 %v1045
    %v5067 = vunpack.c.l.b16 %v1046
    %v5068 = vunpack.c.h.b16 %v1046
    %v5069 = vunpack.c.l.b16 %v1047
    %v5070 = vunpack.c.h.b16 %v1047
    %v5071 = vunpack.c.l.b16 %v1048
    %v5072 = vunpack.c.h.b16 %v1048
    %v5073 = vunpack.c.l.b16 %v1049
    %v5074 = vunpack.c.h.b16 %v1049
    %v5075 = vunpack.c.l.b16 %v1050
    %v5076 = vunpack.c.h.b16 %v1050
    %v5077 = vunpack.c.l.b16 %v1051
    %v5078 = vunpack.c.h.b16 %v1051
    %v5079 = vunpack.c.l.b16 %v1052
    %v5080 = vunpack.c.h.b16 %v1052
    %v5081 = vunpack.c.l.b16 %v1053
    %v5082 = vunpack.c.h.b16 %v1053
    %v5083 = vunpack.c.l.b16 %v1054
    %v5084 = vunpack.c.h.b16 %v1054
    %v5085 = vunpack.c.l.b16 %v1055
    %v5086 = vunpack.c.h.b16 %v1055
    %v5087 = vunpack.c.l.b16 %v1056
    %v5088 = vunpack.c.h.b16 %v1056
    %v5089 = vunpack.c.l.b16 %v1057
    %v5090 = vunpack.c.h.b16 %v1057
    %v5091 = vunpack.c.l.b16 %v1058
    %v5092 = vunpack.c.h.b16 %v1058
    %v5093 = vunpack.c.l.b16 %v1059
    %v5094 = vunpack.c.h.b16 %v1059
    %v5095 = vunpack.c.l.b16 %v1060
    %v5096 = vunpack.c.h.b16 %v1060
    %v5097 = vunpack.c.l.b16 %v1061
    %v5098 = vunpack.c.h.b16 %v1061
    %v5099 = vunpack.c.l.b16 %v1062
    %v5100 = vunpack.c.h.b16 %v1062
    %v5101 = vunpack.c.l.b16 %v1063
    %v5102 = vunpack.c.h.b16 %v1063
    %v5103 = vunpack.c.l.b16 %v1064
    %v5104 = vunpack.c.h.b16 %v1064
    %v5105 = vunpack.c.l.b16 %v1065
    %v5106 = vunpack.c.h.b16 %v1065
    %v5107 = vunpack.c.l.b16 %v1066
    %v5108 = vunpack.c.h.b16 %v1066
    %v5109 = vunpack.c.l.b16 %v1067
    %v5110 = vunpack.c.h.b16 %v1067
    %v5111 = vunpack.c.l.b16 %v1068
    %v5112 = vunpack.c.h.b16 %v1068
    %v5113 = vunpack.c.l.b16 %v1069
    %v5114 = vunpack.c.h.b16 %v1069
    %v5115 = vunpack.c.l.b16 %v1070
    %v5116 = vunpack.c.h.b16 %v1070
    %v5117 = vunpack.c.l.b16 %v1071
    %v5118 = vunpack.c.h.b16 %v1071
    %v5119 = vunpack.c.l.b16 %v1072
    %v5120 = vunpack.c.h.b16 %v1072
    %v5121 = vunpack.c.l.b16 %v1073
    %v5122 = vunpack.c.h.b16 %v1073
    %v5123 = vunpack.c.l.b16 %v1074
    %v5124 = vunpack.c.h.b16 %v1074
    %v5125 = vunpack.c.l.b16 %v1075
    %v5126 = vunpack.c.h.b16 %v1075
    %v5127 = vunpack.c.l.b16 %v1076
    %v5128 = vunpack.c.h.b16 %v1076
    %v5129 = vunpack.c.l.b16 %v1077
    %v5130 = vunpack.c.h.b16 %v1077
    %v5131 = vunpack.c.l.b16 %v1078
    %v5132 = vunpack.c.h.b16 %v1078
    %v5133 = vunpack.c.l.b16 %v1079
    %v5134 = vunpack.c.h.b16 %v1079
    %v5135 = vunpack.c.l.b16 %v1080
    %v5136 = vunpack.c.h.b16 %v1080
    %v5137 = vunpack.c.l.b16 %v1081
    %v5138 = vunpack.c.h.b16 %v1081
    %v5139 = vunpack.c.l.b16 %v1082
    %v5140 = vunpack.c.h.b16 %v1082
    %v5141 = vunpack.c.l.b16 %v1083
    %v5142 = vunpack.c.h.b16 %v1083
    %v5143 = vunpack.c.l.b16 %v1084
    %v5144 = vunpack.c.h.b16 %v1084
    %v5145 = vunpack.c.l.b16 %v1085
    %v5146 = vunpack.c.h.b16 %v1085
    %v5147 = vunpack.c.l.b16 %v1086
    %v5148 = vunpack.c.h.b16 %v1086
    %v5149 = vunpack.c.l.b16 %v1087
    %v5150 = vunpack.c.h.b16 %v1087
    %v5151 = vunpack.c.l.b16 %v1088
    %v5152 = vunpack.c.h.b16 %v1088
    %v5153 = vunpack.c.l.b16 %v1089
    %v5154 = vunpack.c.h.b16 %v1089
    %v5155 = vunpack.c.l.b16 %v1090
    %v5156 = vunpack.c.h.b16 %v1090
    %v5157 = vunpack.c.l.b16 %v1091
    %v5158 = vunpack.c.h.b16 %v1091
    %v5159 = vunpack.c.l.b16 %v1092
    %v5160 = vunpack.c.h.b16 %v1092
    %v5161 = vunpack.c.l.b16 %v1093
    %v5162 = vunpack.c.h.b16 %v1093
    %v5163 = vunpack.c.l.b16 %v1094
    %v5164 = vunpack.c.h.b16 %v1094
    %v5165 = vunpack.c.l.b16 %v1095
    %v5166 = vunpack.c.h.b16 %v1095
    %v5167 = vunpack.c.l.b16 %v1096
    %v5168 = vunpack.c.h.b16 %v1096
    %v5169 = vunpack.c.l.b16 %v1097
    %v5170 = vunpack.c.h.b16 %v1097
    %v5171 = vunpack.c.l.b16 %v1098
    %v5172 = vunpack.c.h.b16 %v1098
    %v5173 = vunpack.c.l.b16 %v1099
    %v5174 = vunpack.c.h.b16 %v1099
    %v5175 = vunpack.c.l.b16 %v1100
    %v5176 = vunpack.c.h.b16 %v1100
    %v5177 = vunpack.c.l.b16 %v1101
    %v5178 = vunpack.c.h.b16 %v1101
    %v5179 = vunpack.c.l.b16 %v1102
    %v5180 = vunpack.c.h.b16 %v1102
    %v5181 = vunpack.c.l.b16 %v1103
    %v5182 = vunpack.c.h.b16 %v1103
    %v5183 = vunpack.c.l.b16 %v1104
    %v5184 = vunpack.c.h.b16 %v1104
    %v5185 = vunpack.c.l.b16 %v1105
    %v5186 = vunpack.c.h.b16 %v1105
    %v5187 = vunpack.c.l.b16 %v1106
    %v5188 = vunpack.c.h.b16 %v1106
    %v5189 = vunpack.c.l.b16 %v1107
    %v5190 = vunpack.c.h.b16 %v1107
    %v5191 = vunpack.c.l.b16 %v1108
    %v5192 = vunpack.c.h.b16 %v1108
    %v5193 = vunpack.c.l.b16 %v1109
    %v5194 = vunpack.c.h.b16 %v1109
    %v5195 = vunpack.c.l.b16 %v1110
    %v5196 = vunpack.c.h.b16 %v1110
    %v5197 = vunpack.c.l.b16 %v1111
    %v5198 = vunpack.c.h.b16 %v1111
    %v5199 = vunpack.c.l.b16 %v1112
    %v5200 = vunpack.c.h.b16 %v1112
    %v5201 = vunpack.c.l.b16 %v1113
    %v5202 = vunpack.c.h.b16 %v1113
    %v5203 = vunpack.c.l.b16 %v1114
    %v5204 = vunpack.c.h.b16 %v1114
    %v5205 = vunpack.c.l.b16 %v1115
    %v5206 = vunpack.c.h.b16 %v1115
    %v5207 = vunpack.c.l.b16 %v1116
    %v5208 = vunpack.c.h.b16 %v1116
    %v5209 = vunpack.c.l.b16 %v1117
    %v5210 = vunpack.c.h.b16 %v1117
    %v5211 = vunpack.c.l.b16 %v1118
    %v5212 = vunpack.c.h.b16 %v1118
    %v5213 = vunpack.c.l.b16 %v1119
    %v5214 = vunpack.c.h.b16 %v1119
    %v5215 = vunpack.c.l.b16 %v1120
    %v5216 = vunpack.c.h.b16 %v1120
    %v5217 = vunpack.c.l.b16 %v1121
    %v5218 = vunpack.c.h.b16 %v1121
    %v5219 = vunpack.c.l.b16 %v1122
    %v5220 = vunpack.c.h.b16 %v1122
    %v5221 = vunpack.c.l.b16 %v1123
    %v5222 = vunpack.c.h.b16 %v1123
    %v5223 = vunpack.c.l.b16 %v1124
    %v5224 = vunpack.c.h.b16 %v1124
    %v5225 = vunpack.c.l.b16 %v1125
    %v5226 = vunpack.c.h.b16 %v1125
    %v5227 = vunpack.c.l.b16 %v1126
    %v5228 = vunpack.c.h.b16 %v1126
    %v5229 = vunpack.c.l.b16 %v1127
    %v5230 = vunpack.c.h.b16 %v1127
    %v5231 = vunpack.c.l.b16 %v1128
    %v5232 = vunpack.c.h.b16 %v1128
    %v5233 = vunpack.c.l.b16 %v1129
    %v5234 = vunpack.c.h.b16 %v1129
    %v5235 = vunpack.c.l.b16 %v1130
    %v5236 = vunpack.c.h.b16 %v1130
    %v5237 = vunpack.c.l.b16 %v1131
    %v5238 = vunpack.c.h.b16 %v1131
    %v5239 = vunpack.c.l.b16 %v1132
    %v5240 = vunpack.c.h.b16 %v1132
    %v5241 = vunpack.c.l.b16 %v1133
    %v5242 = vunpack.c.h.b16 %v1133
    %v5243 = vunpack.c.l.b16 %v1134
    %v5244 = vunpack.c.h.b16 %v1134
    %v5245 = vunpack.c.l.b16 %v1135
    %v5246 = vunpack.c.h.b16 %v1135
    %v5247 = vunpack.c.l.b16 %v1136
    %v5248 = vunpack.c.h.b16 %v1136
    %v5249 = vunpack.c.l.b16 %v1137
    %v5250 = vunpack.c.h.b16 %v1137
    %v5251 = vunpack.c.l.b16 %v1138
    %v5252 = vunpack.c.h.b16 %v1138
    %v5253 = vunpack.c.l.b16 %v1139
    %v5254 = vunpack.c.h.b16 %v1139
    %v5255 = vunpack.c.l.b16 %v1140
    %v5256 = vunpack.c.h.b16 %v1140
    %v5257 = vunpack.c.l.b16 %v1141
    %v5258 = vunpack.c.h.b16 %v1141
    %v5259 = vunpack.c.l.b16 %v1142
    %v5260 = vunpack.c.h.b16 %v1142
    %v5261 = vunpack.c.l.b16 %v1143
    %v5262 = vunpack.c.h.b16 %v1143
    %v5263 = vunpack.c.l.b16 %v1144
    %v5264 = vunpack.c.h.b16 %v1144
    %v5265 = vunpack.c.l.b16 %v1145
    %v5266 = vunpack.c.h.b16 %v1145
    %v5267 = vunpack.c.l.b16 %v1146
    %v5268 = vunpack.c.h.b16 %v1146
    %v5269 = vunpack.c.l.b16 %v1147
    %v5270 = vunpack.c.h.b16 %v1147
    %v5271 = vunpack.c.l.b16 %v1148
    %v5272 = vunpack.c.h.b16 %v1148
    %v5273 = vunpack.c.l.b16 %v1149
    %v5274 = vunpack.c.h.b16 %v1149
    %v5275 = vunpack.c.l.b16 %v1150
    %v5276 = vunpack.c.h.b16 %v1150
    %v5277 = vunpack.c.l.b16 %v1151
    %v5278 = vunpack.c.h.b16 %v1151
    %v5279 = vunpack.c.l.b16 %v1152
    %v5280 = vunpack.c.h.b16 %v1152
    %v5281 = vunpack.c.l.b16 %v1153
    %v5282 = vunpack.c.h.b16 %v1153
    %v5283 = vunpack.c.l.b16 %v1154
    %v5284 = vunpack.c.h.b16 %v1154
    %v5285 = vunpack.c.l.b16 %v1155
    %v5286 = vunpack.c.h.b16 %v1155
    %v5287 = vunpack.c.l.b16 %v1156
    %v5288 = vunpack.c.h.b16 %v1156
    %v5289 = vunpack.c.l.b16 %v1157
    %v5290 = vunpack.c.h.b16 %v1157
    %v5291 = vunpack.c.l.b16 %v1158
    %v5292 = vunpack.c.h.b16 %v1158
    %v5293 = vunpack.c.l.b16 %v1159
    %v5294 = vunpack.c.h.b16 %v1159
    %v5295 = vunpack.c.l.b16 %v1160
    %v5296 = vunpack.c.h.b16 %v1160
    %v5297 = vunpack.c.l.b16 %v1161
    %v5298 = vunpack.c.h.b16 %v1161
    %v5299 = vunpack.c.l.b16 %v1162
    %v5300 = vunpack.c.h.b16 %v1162
    %v5301 = vunpack.c.l.b16 %v1163
    %v5302 = vunpack.c.h.b16 %v1163
    %v5303 = vunpack.c.l.b16 %v1164
    %v5304 = vunpack.c.h.b16 %v1164
    %v5305 = vunpack.c.l.b16 %v1165
    %v5306 = vunpack.c.h.b16 %v1165
    %v5307 = vunpack.c.l.b16 %v1166
    %v5308 = vunpack.c.h.b16 %v1166
    %v5309 = vunpack.c.l.b16 %v1167
    %v5310 = vunpack.c.h.b16 %v1167
    %v5311 = vunpack.c.l.b16 %v1168
    %v5312 = vunpack.c.h.b16 %v1168
    %v5313 = vunpack.c.l.b16 %v1169
    %v5314 = vunpack.c.h.b16 %v1169
    %v5315 = vunpack.c.l.b16 %v1170
    %v5316 = vunpack.c.h.b16 %v1170
    %v5317 = vunpack.c.l.b16 %v1171
    %v5318 = vunpack.c.h.b16 %v1171
    %v5319 = vunpack.c.l.b16 %v1172
    %v5320 = vunpack.c.h.b16 %v1172
    %v5321 = vunpack.c.l.b16 %v1173
    %v5322 = vunpack.c.h.b16 %v1173
    %v5323 = vunpack.c.l.b16 %v1174
    %v5324 = vunpack.c.h.b16 %v1174
    %v5325 = vunpack.c.l.b16 %v1175
    %v5326 = vunpack.c.h.b16 %v1175
    %v5327 = vunpack.c.l.b16 %v1176
    %v5328 = vunpack.c.h.b16 %v1176
    %v5329 = vunpack.c.l.b16 %v1177
    %v5330 = vunpack.c.h.b16 %v1177
    %v5331 = vunpack.c.l.b16 %v1178
    %v5332 = vunpack.c.h.b16 %v1178
    %v5333 = vunpack.c.l.b16 %v1179
    %v5334 = vunpack.c.h.b16 %v1179
    %v5335 = vunpack.c.l.b16 %v1180
    %v5336 = vunpack.c.h.b16 %v1180
    %v5337 = vunpack.c.l.b16 %v1181
    %v5338 = vunpack.c.h.b16 %v1181
    %v5339 = vunpack.c.l.b16 %v1182
    %v5340 = vunpack.c.h.b16 %v1182
    %v5341 = vunpack.c.l.b16 %v1183
    %v5342 = vunpack.c.h.b16 %v1183
    %v5343 = vunpack.c.l.b16 %v1184
    %v5344 = vunpack.c.h.b16 %v1184
    %v5345 = vunpack.c.l.b16 %v1185
    %v5346 = vunpack.c.h.b16 %v1185
    %v5347 = vunpack.c.l.b16 %v1186
    %v5348 = vunpack.c.h.b16 %v1186
    %v5349 = vunpack.c.l.b16 %v1187
    %v5350 = vunpack.c.h.b16 %v1187
    %v5351 = vunpack.c.l.b16 %v1188
    %v5352 = vunpack.c.h.b16 %v1188
    %v5353 = vunpack.c.l.b16 %v1189
    %v5354 = vunpack.c.h.b16 %v1189
    %v5355 = vunpack.c.l.b16 %v1190
    %v5356 = vunpack.c.h.b16 %v1190
    %v5357 = vunpack.c.l.b16 %v1191
    %v5358 = vunpack.c.h.b16 %v1191
    %v5359 = vunpack.c.l.b16 %v1192
    %v5360 = vunpack.c.h.b16 %v1192
    %v5361 = vunpack.c.l.b16 %v1193
    %v5362 = vunpack.c.h.b16 %v1193
    %v5363 = vunpack.c.l.b16 %v1194
    %v5364 = vunpack.c.h.b16 %v1194
    %v5365 = vunpack.c.l.b16 %v1195
    %v5366 = vunpack.c.h.b16 %v1195
    %v5367 = vunpack.c.l.b16 %v1196
    %v5368 = vunpack.c.h.b16 %v1196
    %v5369 = vunpack.c.l.b16 %v1197
    %v5370 = vunpack.c.h.b16 %v1197
    %v5371 = vunpack.c.l.b16 %v1198
    %v5372 = vunpack.c.h.b16 %v1198
    %v5373 = vunpack.c.l.b16 %v1199
    %v5374 = vunpack.c.h.b16 %v1199
    %v5375 = vunpack.c.l.b16 %v1200
    %v5376 = vunpack.c.h.b16 %v1200
    %v5377 = vunpack.c.l.b16 %v1201
    %v5378 = vunpack.c.h.b16 %v1201
    %v5379 = vunpack.c.l.b16 %v1202
    %v5380 = vunpack.c.h.b16 %v1202
    %v5381 = vunpack.c.l.b16 %v1203
    %v5382 = vunpack.c.h.b16 %v1203
    %v5383 = vunpack.c.l.b16 %v1204
    %v5384 = vunpack.c.h.b16 %v1204
    %v5385 = vunpack.c.l.b16 %v1205
    %v5386 = vunpack.c.h.b16 %v1205
    %v5387 = vunpack.c.l.b16 %v1206
    %v5388 = vunpack.c.h.b16 %v1206
    %v5389 = vunpack.c.l.b16 %v1207
    %v5390 = vunpack.c.h.b16 %v1207
    %v5391 = vunpack.c.l.b16 %v1208
    %v5392 = vunpack.c.h.b16 %v1208
    %v5393 = vunpack.c.l.b16 %v1209
    %v5394 = vunpack.c.h.b16 %v1209
    %v5395 = vunpack.c.l.b16 %v1210
    %v5396 = vunpack.c.h.b16 %v1210
    %v5397 = vunpack.c.l.b16 %v1211
    %v5398 = vunpack.c.h.b16 %v1211
    %v5399 = vunpack.c.l.b16 %v1212
    %v5400 = vunpack.c.h.b16 %v1212
    %v5401 = vunpack.c.l.b16 %v1213
    %v5402 = vunpack.c.h.b16 %v1213
    %v5403 = vunpack.c.l.b16 %v1214
    %v5404 = vunpack.c.h.b16 %v1214
    %v5405 = vunpack.c.l.b16 %v1215
    %v5406 = vunpack.c.h.b16 %v1215
    %v5407 = vunpack.c.l.b16 %v1216
    %v5408 = vunpack.c.h.b16 %v1216
    %v5409 = vunpack.c.l.b16 %v1217
    %v5410 = vunpack.c.h.b16 %v1217
    %v5411 = vunpack.c.l.b16 %v1218
    %v5412 = vunpack.c.h.b16 %v1218
    %v5413 = vunpack.c.l.b16 %v1219
    %v5414 = vunpack.c.h.b16 %v1219
    %v5415 = vunpack.c.l.b16 %v1220
    %v5416 = vunpack.c.h.b16 %v1220
    %v5417 = vunpack.c.l.b16 %v1221
    %v5418 = vunpack.c.h.b16 %v1221
    %v5419 = vunpack.c.l.b16 %v1222
    %v5420 = vunpack.c.h.b16 %v1222
    %v5421 = vunpack.c.l.b16 %v1223
    %v5422 = vunpack.c.h.b16 %v1223
    %v5423 = vunpack.c.l.b16 %v1224
    %v5424 = vunpack.c.h.b16 %v1224
    %v5425 = vunpack.c.l.b16 %v1225
    %v5426 = vunpack.c.h.b16 %v1225
    %v5427 = vunpack.c.l.b16 %v1226
    %v5428 = vunpack.c.h.b16 %v1226
    %v5429 = vunpack.c.l.b16 %v1227
    %v5430 = vunpack.c.h.b16 %v1227
    %v5431 = vunpack.c.l.b16 %v1228
    %v5432 = vunpack.c.h.b16 %v1228
    %v5433 = vunpack.c.l.b16 %v1229
    %v5434 = vunpack.c.h.b16 %v1229
    %v5435 = vunpack.c.l.b16 %v1230
    %v5436 = vunpack.c.h.b16 %v1230
    %v5437 = vunpack.c.l.b16 %v1231
    %v5438 = vunpack.c.h.b16 %v1231
    %v5439 = vunpack.c.l.b16 %v1232
    %v5440 = vunpack.c.h.b16 %v1232
    %v5441 = vunpack.c.l.b16 %v1233
    %v5442 = vunpack.c.h.b16 %v1233
    %v5443 = vunpack.c.l.b16 %v1234
    %v5444 = vunpack.c.h.b16 %v1234
    %v5445 = vunpack.c.l.b16 %v1235
    %v5446 = vunpack.c.h.b16 %v1235
    %v5447 = vunpack.c.l.b16 %v1236
    %v5448 = vunpack.c.h.b16 %v1236
    %v5449 = vunpack.c.l.b16 %v1237
    %v5450 = vunpack.c.h.b16 %v1237
    %v5451 = vunpack.c.l.b16 %v1238
    %v5452 = vunpack.c.h.b16 %v1238
    %v5453 = vunpack.c.l.b16 %v1239
    %v5454 = vunpack.c.h.b16 %v1239
    %v5455 = vunpack.c.l.b16 %v1240
    %v5456 = vunpack.c.h.b16 %v1240
    %v5457 = vunpack.c.l.b16 %v1241
    %v5458 = vunpack.c.h.b16 %v1241
    %v5459 = vunpack.c.l.b16 %v1242
    %v5460 = vunpack.c.h.b16 %v1242
    %v5461 = vunpack.c.l.b16 %v1243
    %v5462 = vunpack.c.h.b16 %v1243
    %v5463 = vunpack.c.l.b16 %v1244
    %v5464 = vunpack.c.h.b16 %v1244
    %v5465 = vunpack.c.l.b16 %v1245
    %v5466 = vunpack.c.h.b16 %v1245
    %v5467 = vunpack.c.l.b16 %v1246
    %v5468 = vunpack.c.h.b16 %v1246
    %v5469 = vunpack.c.l.b16 %v1247
    %v5470 = vunpack.c.h.b16 %v1247
    %v5471 = vunpack.c.l.b16 %v1248
    %v5472 = vunpack.c.h.b16 %v1248
    %v5473 = vunpack.c.l.b16 %v1249
    %v5474 = vunpack.c.h.b16 %v1249
    %v5475 = vunpack.c.l.b16 %v1250
    %v5476 = vunpack.c.h.b16 %v1250
    %v5477 = vunpack.c.l.b16 %v1251
    %v5478 = vunpack.c.h.b16 %v1251
    %v5479 = vunpack.c.l.b16 %v1252
    %v5480 = vunpack.c.h.b16 %v1252
    %v5481 = vunpack.c.l.b16 %v1253
    %v5482 = vunpack.c.h.b16 %v1253
    %v5483 = vunpack.c.l.b16 %v1254
    %v5484 = vunpack.c.h.b16 %v1254
    %v5485 = vunpack.c.l.b16 %v1255
    %v5486 = vunpack.c.h.b16 %v1255
    %v5487 = vunpack.c.l.b16 %v1256
    %v5488 = vunpack.c.h.b16 %v1256
    %v5489 = vunpack.c.l.b16 %v1257
    %v5490 = vunpack.c.h.b16 %v1257
    %v5491 = vunpack.c.l.b16 %v1258
    %v5492 = vunpack.c.h.b16 %v1258
    %v5493 = vunpack.c.l.b16 %v1259
    %v5494 = vunpack.c.h.b16 %v1259
    %v5495 = vunpack.c.l.b16 %v1260
    %v5496 = vunpack.c.h.b16 %v1260
    %v5497 = vunpack.c.l.b16 %v1261
    %v5498 = vunpack.c.h.b16 %v1261
    %v5499 = vunpack.c.l.b16 %v1262
    %v5500 = vunpack.c.h.b16 %v1262
    %v5501 = vunpack.c.l.b16 %v1263
    %v5502 = vunpack.c.h.b16 %v1263
    %v5503 = vunpack.c.l.b16 %v1264
    %v5504 = vunpack.c.h.b16 %v1264
    %v5505 = vunpack.c.l.b16 %v1265
    %v5506 = vunpack.c.h.b16 %v1265
    %v5507 = vunpack.c.l.b16 %v1266
    %v5508 = vunpack.c.h.b16 %v1266
    %v5509 = vunpack.c.l.b16 %v1267
    %v5510 = vunpack.c.h.b16 %v1267
    %v5511 = vunpack.c.l.b16 %v1268
    %v5512 = vunpack.c.h.b16 %v1268
    %v5513 = vunpack.c.l.b16 %v1269
    %v5514 = vunpack.c.h.b16 %v1269
    %v5515 = vunpack.c.l.b16 %v1270
    %v5516 = vunpack.c.h.b16 %v1270
    %v5517 = vunpack.c.l.b16 %v1271
    %v5518 = vunpack.c.h.b16 %v1271
    %v5519 = vunpack.c.l.b16 %v1272
    %v5520 = vunpack.c.h.b16 %v1272
    %v5521 = vunpack.c.l.b16 %v1273
    %v5522 = vunpack.c.h.b16 %v1273
    %v5523 = vunpack.c.l.b16 %v1274
    %v5524 = vunpack.c.h.b16 %v1274
    %v5525 = vunpack.c.l.b16 %v1275
    %v5526 = vunpack.c.h.b16 %v1275
    %v5527 = vunpack.c.l.b16 %v1276
    %v5528 = vunpack.c.h.b16 %v1276
    %v5529 = vunpack.c.l.b16 %v1277
    %v5530 = vunpack.c.h.b16 %v1277
    %v5531 = vunpack.c.l.b16 %v1278
    %v5532 = vunpack.c.h.b16 %v1278
    %v5533 = vunpack.c.l.b16 %v1279
    %v5534 = vunpack.c.h.b16 %v1279
    %v5535 = vunpack.c.l.b16 %v1280
    %v5536 = vunpack.c.h.b16 %v1280
    %v5537 = vunpack.c.l.b16 %v1281
    %v5538 = vunpack.c.h.b16 %v1281
    %v5539 = vunpack.c.l.b16 %v1282
    %v5540 = vunpack.c.h.b16 %v1282
    %v5541 = vunpack.c.l.b16 %v1283
    %v5542 = vunpack.c.h.b16 %v1283
    %v5543 = vunpack.c.l.b16 %v1284
    %v5544 = vunpack.c.h.b16 %v1284
    %v5545 = vunpack.c.l.b16 %v1285
    %v5546 = vunpack.c.h.b16 %v1285
    %v5547 = vunpack.c.l.b16 %v1286
    %v5548 = vunpack.c.h.b16 %v1286
    %v5549 = vunpack.c.l.b16 %v1287
    %v5550 = vunpack.c.h.b16 %v1287
    %v5551 = vunpack.c.l.b16 %v1288
    %v5552 = vunpack.c.h.b16 %v1288
    %v5553 = vunpack.c.l.b16 %v1289
    %v5554 = vunpack.c.h.b16 %v1289
    %v5555 = vunpack.c.l.b16 %v1290
    %v5556 = vunpack.c.h.b16 %v1290
    %v5557 = vunpack.c.l.b16 %v1291
    %v5558 = vunpack.c.h.b16 %v1291
    %v5559 = vunpack.c.l.b16 %v1292
    %v5560 = vunpack.c.h.b16 %v1292
    %v5561 = vunpack.c.l.b16 %v1293
    %v5562 = vunpack.c.h.b16 %v1293
    %v5563 = vunpack.c.l.b16 %v1294
    %v5564 = vunpack.c.h.b16 %v1294
    %v5565 = vunpack.c.l.b16 %v1295
    %v5566 = vunpack.c.h.b16 %v1295
    %v5567 = vunpack.c.l.b16 %v1296
    %v5568 = vunpack.c.h.b16 %v1296
    %v5569 = vunpack.c.l.b16 %v1297
    %v5570 = vunpack.c.h.b16 %v1297
    %v5571 = vunpack.c.l.b16 %v1298
    %v5572 = vunpack.c.h.b16 %v1298
    %v5573 = vunpack.c.l.b16 %v1299
    %v5574 = vunpack.c.h.b16 %v1299
    %v5575 = vunpack.c.l.b16 %v1300
    %v5576 = vunpack.c.h.b16 %v1300
    %v5577 = vunpack.c.l.b16 %v1301
    %v5578 = vunpack.c.h.b16 %v1301
    %v5579 = vunpack.c.l.b16 %v1302
    %v5580 = vunpack.c.h.b16 %v1302
    %v5581 = vunpack.c.l.b16 %v1303
    %v5582 = vunpack.c.h.b16 %v1303
    %v5583 = vunpack.c.l.b16 %v1304
    %v5584 = vunpack.c.h.b16 %v1304
    %v5585 = vunpack.c.l.b16 %v1305
    %v5586 = vunpack.c.h.b16 %v1305
    %v5587 = vunpack.c.l.b16 %v1306
    %v5588 = vunpack.c.h.b16 %v1306
    %v5589 = vunpack.c.l.b16 %v1307
    %v5590 = vunpack.c.h.b16 %v1307
    %v5591 = vunpack.c.l.b16 %v1308
    %v5592 = vunpack.c.h.b16 %v1308
    %v5593 = vunpack.c.l.b16 %v1309
    %v5594 = vunpack.c.h.b16 %v1309
    %v5595 = vunpack.c.l.b16 %v1310
    %v5596 = vunpack.c.h.b16 %v1310
    %v5597 = vunpack.c.l.b16 %v1311
    %v5598 = vunpack.c.h.b16 %v1311
    %v5599 = vunpack.c.l.b16 %v1312
    %v5600 = vunpack.c.h.b16 %v1312
    %v5601 = vunpack.c.l.b16 %v1313
    %v5602 = vunpack.c.h.b16 %v1313
    %v5603 = vunpack.c.l.b16 %v1314
    %v5604 = vunpack.c.h.b16 %v1314
    %v5605 = vunpack.c.l.b16 %v1315
    %v5606 = vunpack.c.h.b16 %v1315
    %v5607 = vunpack.c.l.b16 %v1316
    %v5608 = vunpack.c.h.b16 %v1316
    %v5609 = vunpack.c.l.b16 %v1317
    %v5610 = vunpack.c.h.b16 %v1317
    %v5611 = vunpack.c.l.b16 %v1318
    %v5612 = vunpack.c.h.b16 %v1318
    %v5613 = vunpack.c.l.b16 %v1319
    %v5614 = vunpack.c.h.b16 %v1319
    %v5615 = vunpack.c.l.b16 %v1320
    %v5616 = vunpack.c.h.b16 %v1320
    %v5617 = vunpack.c.l.b16 %v1321
    %v5618 = vunpack.c.h.b16 %v1321
    %v5619 = vunpack.c.l.b16 %v1322
    %v5620 = vunpack.c.h.b16 %v1322
    %v5621 = vunpack.c.l.b16 %v1323
    %v5622 = vunpack.c.h.b16 %v1323
    %v5623 = vunpack.c.l.b16 %v1324
    %v5624 = vunpack.c.h.b16 %v1324
    %v5625 = vunpack.c.l.b16 %v1325
    %v5626 = vunpack.c.h.b16 %v1325
    %v5627 = vunpack.c.l.b16 %v1326
    %v5628 = vunpack.c.h.b16 %v1326
    %v5629 = vunpack.c.l.b16 %v1327
    %v5630 = vunpack.c.h.b16 %v1327
    %v5631 = vunpack.c.l.b16 %v1328
    %v5632 = vunpack.c.h.b16 %v1328
    %v5633 = vunpack.c.l.b16 %v1329
    %v5634 = vunpack.c.h.b16 %v1329
    %v5635 = vunpack.c.l.b16 %v1330
    %v5636 = vunpack.c.h.b16 %v1330
    %v5637 = vunpack.c.l.b16 %v1331
    %v5638 = vunpack.c.h.b16 %v1331
    %v5639 = vunpack.c.l.b16 %v1332
    %v5640 = vunpack.c.h.b16 %v1332
    %v5641 = vunpack.c.l.b16 %v1333
    %v5642 = vunpack.c.h.b16 %v1333
    %v5643 = vunpack.c.l.b16 %v1334
    %v5644 = vunpack.c.h.b16 %v1334
    %v5645 = vunpack.c.l.b16 %v1335
    %v5646 = vunpack.c.h.b16 %v1335
    %v5647 = vunpack.c.l.b16 %v1336
    %v5648 = vunpack.c.h.b16 %v1336
    %v5649 = vunpack.c.l.b16 %v1337
    %v5650 = vunpack.c.h.b16 %v1337
    %v5651 = vunpack.c.l.b16 %v1338
    %v5652 = vunpack.c.h.b16 %v1338
    %v5653 = vunpack.c.l.b16 %v1339
    %v5654 = vunpack.c.h.b16 %v1339
    %v5655 = vunpack.c.l.b16 %v1340
    %v5656 = vunpack.c.h.b16 %v1340
    %v5657 = vunpack.c.l.b16 %v1341
    %v5658 = vunpack.c.h.b16 %v1341
    %v5659 = vunpack.c.l.b16 %v1342
    %v5660 = vunpack.c.h.b16 %v1342
    %v5661 = vunpack.c.l.b16 %v1343
    %v5662 = vunpack.c.h.b16 %v1343
    %v5663 = vunpack.c.l.b16 %v1344
    %v5664 = vunpack.c.h.b16 %v1344
    %v5665 = vunpack.c.l.b16 %v1345
    %v5666 = vunpack.c.h.b16 %v1345
    %v5667 = vunpack.c.l.b16 %v1346
    %v5668 = vunpack.c.h.b16 %v1346
    %v5669 = vunpack.c.l.b16 %v1347
    %v5670 = vunpack.c.h.b16 %v1347
    %v5671 = vunpack.c.l.b16 %v1348
    %v5672 = vunpack.c.h.b16 %v1348
    %v5673 = vunpack.c.l.b16 %v1349
    %v5674 = vunpack.c.h.b16 %v1349
    %v5675 = vunpack.c.l.b16 %v1350
    %v5676 = vunpack.c.h.b16 %v1350
    %v5677 = vunpack.c.l.b16 %v1351
    %v5678 = vunpack.c.h.b16 %v1351
    %v5679 = vunpack.c.l.b16 %v1352
    %v5680 = vunpack.c.h.b16 %v1352
    %v5681 = vunpack.c.l.b16 %v1353
    %v5682 = vunpack.c.h.b16 %v1353
    %v5683 = vunpack.c.l.b16 %v1354
    %v5684 = vunpack.c.h.b16 %v1354
    %v5685 = vunpack.c.l.b16 %v1355
    %v5686 = vunpack.c.h.b16 %v1355
    %v5687 = vunpack.c.l.b16 %v1356
    %v5688 = vunpack.c.h.b16 %v1356
    %v5689 = vunpack.c.l.b16 %v1357
    %v5690 = vunpack.c.h.b16 %v1357
    %v5691 = vunpack.c.l.b16 %v1358
    %v5692 = vunpack.c.h.b16 %v1358
    %v5693 = vunpack.c.l.b16 %v1359
    %v5694 = vunpack.c.h.b16 %v1359
    %v5695 = vunpack.c.l.b16 %v1360
    %v5696 = vunpack.c.h.b16 %v1360
    %v5697 = vunpack.c.l.b16 %v1361
    %v5698 = vunpack.c.h.b16 %v1361
    %v5699 = vunpack.c.l.b16 %v1362
    %v5700 = vunpack.c.h.b16 %v1362
    %v5701 = vunpack.c.l.b16 %v1363
    %v5702 = vunpack.c.h.b16 %v1363
    %v5703 = vunpack.c.l.b16 %v1364
    %v5704 = vunpack.c.h.b16 %v1364
    %v5705 = vunpack.c.l.b16 %v1365
    %v5706 = vunpack.c.h.b16 %v1365
    %v5707 = vunpack.c.l.b16 %v1366
    %v5708 = vunpack.c.h.b16 %v1366
    %v5709 = vunpack.c.l.b16 %v1367
    %v5710 = vunpack.c.h.b16 %v1367
    %v5711 = vunpack.c.l.b16 %v1368
    %v5712 = vunpack.c.h.b16 %v1368
    %v5713 = vunpack.c.l.b16 %v1369
    %v5714 = vunpack.c.h.b16 %v1369
    %v5715 = vunpack.c.l.b16 %v1370
    %v5716 = vunpack.c.h.b16 %v1370
    %v5717 = vunpack.c.l.b16 %v1371
    %v5718 = vunpack.c.h.b16 %v1371
    %v5719 = vunpack.c.l.b16 %v1372
    %v5720 = vunpack.c.h.b16 %v1372
    %v5721 = vunpack.c.l.b16 %v1373
    %v5722 = vunpack.c.h.b16 %v1373
    %v5723 = vunpack.c.l.b16 %v1374
    %v5724 = vunpack.c.h.b16 %v1374
    %v5725 = vunpack.c.l.b16 %v1375
    %v5726 = vunpack.c.h.b16 %v1375
    %v5727 = vunpack.c.l.b16 %v1376
    %v5728 = vunpack.c.h.b16 %v1376
    %v5729 = vunpack.c.l.b16 %v1377
    %v5730 = vunpack.c.h.b16 %v1377
    %v5731 = vunpack.c.l.b16 %v1378
    %v5732 = vunpack.c.h.b16 %v1378
    %v5733 = vunpack.c.l.b16 %v1379
    %v5734 = vunpack.c.h.b16 %v1379
    %v5735 = vunpack.c.l.b16 %v1380
    %v5736 = vunpack.c.h.b16 %v1380
    %v5737 = vunpack.c.l.b16 %v1381
    %v5738 = vunpack.c.h.b16 %v1381
    %v5739 = vunpack.c.l.b16 %v1382
    %v5740 = vunpack.c.h.b16 %v1382
    %v5741 = vunpack.c.l.b16 %v1383
    %v5742 = vunpack.c.h.b16 %v1383
    %v5743 = vunpack.c.l.b16 %v1384
    %v5744 = vunpack.c.h.b16 %v1384
    %v5745 = vunpack.c.l.b16 %v1385
    %v5746 = vunpack.c.h.b16 %v1385
    %v5747 = vunpack.c.l.b16 %v1386
    %v5748 = vunpack.c.h.b16 %v1386
    %v5749 = vunpack.c.l.b16 %v1387
    %v5750 = vunpack.c.h.b16 %v1387
    %v5751 = vunpack.c.l.b16 %v1388
    %v5752 = vunpack.c.h.b16 %v1388
    %v5753 = vunpack.c.l.b16 %v1389
    %v5754 = vunpack.c.h.b16 %v1389
    %v5755 = vunpack.c.l.b16 %v1390
    %v5756 = vunpack.c.h.b16 %v1390
    %v5757 = vunpack.c.l.b16 %v1391
    %v5758 = vunpack.c.h.b16 %v1391
    %v5759 = vunpack.c.l.b16 %v1392
    %v5760 = vunpack.c.h.b16 %v1392
    %v5761 = vunpack.c.l.b16 %v1393
    %v5762 = vunpack.c.h.b16 %v1393
    %v5763 = vunpack.c.l.b16 %v1394
    %v5764 = vunpack.c.h.b16 %v1394
    %v5765 = vunpack.c.l.b16 %v1395
    %v5766 = vunpack.c.h.b16 %v1395
    %v5767 = vunpack.c.l.b16 %v1396
    %v5768 = vunpack.c.h.b16 %v1396
    %v5769 = vunpack.c.l.b16 %v1397
    %v5770 = vunpack.c.h.b16 %v1397
    %v5771 = vunpack.c.l.b16 %v1398
    %v5772 = vunpack.c.h.b16 %v1398
    %v5773 = vunpack.c.l.b16 %v1399
    %v5774 = vunpack.c.h.b16 %v1399
    %v5775 = vunpack.c.l.b16 %v1400
    %v5776 = vunpack.c.h.b16 %v1400
    %v5777 = vunpack.c.l.b16 %v1401
    %v5778 = vunpack.c.h.b16 %v1401
    %v5779 = vunpack.c.l.b16 %v1402
    %v5780 = vunpack.c.h.b16 %v1402
    %v5781 = vunpack.c.l.b16 %v1403
    %v5782 = vunpack.c.h.b16 %v1403
    %v5783 = vunpack.c.l.b16 %v1404
    %v5784 = vunpack.c.h.b16 %v1404
    %v5785 = vunpack.c.l.b16 %v1405
    %v5786 = vunpack.c.h.b16 %v1405
    %v5787 = vunpack.c.l.b16 %v1406
    %v5788 = vunpack.c.h.b16 %v1406
    %v5789 = vunpack.c.l.b16 %v1407
    %v5790 = vunpack.c.h.b16 %v1407
    %v5791 = vunpack.c.l.b16 %v1408
    %v5792 = vunpack.c.h.b16 %v1408
    %v5793 = vunpack.c.l.b16 %v1409
    %v5794 = vunpack.c.h.b16 %v1409
    %v5795 = vunpack.c.l.b16 %v1410
    %v5796 = vunpack.c.h.b16 %v1410
    %v5797 = vunpack.c.l.b16 %v1411
    %v5798 = vunpack.c.h.b16 %v1411
    %v5799 = vunpack.c.l.b16 %v1412
    %v5800 = vunpack.c.h.b16 %v1412
    %v5801 = vunpack.c.l.b16 %v1413
    %v5802 = vunpack.c.h.b16 %v1413
    %v5803 = vunpack.c.l.b16 %v1414
    %v5804 = vunpack.c.h.b16 %v1414
    %v5805 = vunpack.c.l.b16 %v1415
    %v5806 = vunpack.c.h.b16 %v1415
    %v5807 = vunpack.c.l.b16 %v1416
    %v5808 = vunpack.c.h.b16 %v1416
    %v5809 = vunpack.c.l.b16 %v1417
    %v5810 = vunpack.c.h.b16 %v1417
    %v5811 = vunpack.c.l.b16 %v1418
    %v5812 = vunpack.c.h.b16 %v1418
    %v5813 = vunpack.c.l.b16 %v1419
    %v5814 = vunpack.c.h.b16 %v1419
    %v5815 = vunpack.c.l.b16 %v1420
    %v5816 = vunpack.c.h.b16 %v1420
    %v5817 = vunpack.c.l.b16 %v1421
    %v5818 = vunpack.c.h.b16 %v1421
    %v5819 = vunpack.c.l.b16 %v1422
    %v5820 = vunpack.c.h.b16 %v1422
    %v5821 = vunpack.c.l.b16 %v1423
    %v5822 = vunpack.c.h.b16 %v1423
    %v5823 = vunpack.c.l.b16 %v1424
    %v5824 = vunpack.c.h.b16 %v1424
    %v5825 = vunpack.c.l.b16 %v1425
    %v5826 = vunpack.c.h.b16 %v1425
    %v5827 = vunpack.c.l.b16 %v1426
    %v5828 = vunpack.c.h.b16 %v1426
    %v5829 = vunpack.c.l.b16 %v1427
    %v5830 = vunpack.c.h.b16 %v1427
    %v5831 = vunpack.c.l.b16 %v1428
    %v5832 = vunpack.c.h.b16 %v1428
    %v5833 = vunpack.c.l.b16 %v1429
    %v5834 = vunpack.c.h.b16 %v1429
    %v5835 = vunpack.c.l.b16 %v1430
    %v5836 = vunpack.c.h.b16 %v1430
    %v5837 = vunpack.c.l.b16 %v1431
    %v5838 = vunpack.c.h.b16 %v1431
    %v5839 = vunpack.c.l.b16 %v1432
    %v5840 = vunpack.c.h.b16 %v1432
    %v5841 = vunpack.c.l.b16 %v1433
    %v5842 = vunpack.c.h.b16 %v1433
    %v5843 = vunpack.c.l.b16 %v1434
    %v5844 = vunpack.c.h.b16 %v1434
    %v5845 = vunpack.c.l.b16 %v1435
    %v5846 = vunpack.c.h.b16 %v1435
    %v5847 = vunpack.c.l.b16 %v1436
    %v5848 = vunpack.c.h.b16 %v1436
    %v5849 = vunpack.c.l.b16 %v1437
    %v5850 = vunpack.c.h.b16 %v1437
    %v5851 = vunpack.c.l.b16 %v1438
    %v5852 = vunpack.c.h.b16 %v1438
    %v5853 = vunpack.c.l.b16 %v1439
    %v5854 = vunpack.c.h.b16 %v1439
    %v5855 = vunpack.c.l.b16 %v1440
    %v5856 = vunpack.c.h.b16 %v1440
    %v5857 = vunpack.c.l.b16 %v1441
    %v5858 = vunpack.c.h.b16 %v1441
    %v5859 = vunpack.c.l.b16 %v1442
    %v5860 = vunpack.c.h.b16 %v1442
    %v5861 = vunpack.c.l.b16 %v1443
    %v5862 = vunpack.c.h.b16 %v1443
    %v5863 = vunpack.c.l.b16 %v1444
    %v5864 = vunpack.c.h.b16 %v1444
    %v5865 = vunpack.c.l.b16 %v1445
    %v5866 = vunpack.c.h.b16 %v1445
    %v5867 = vunpack.c.l.b16 %v1446
    %v5868 = vunpack.c.h.b16 %v1446
    %v5869 = vunpack.c.l.b16 %v1447
    %v5870 = vunpack.c.h.b16 %v1447
    %v5871 = vunpack.c.l.b16 %v1448
    %v5872 = vunpack.c.h.b16 %v1448
    %v5873 = vunpack.c.l.b16 %v1449
    %v5874 = vunpack.c.h.b16 %v1449
    %v5875 = vunpack.c.l.b16 %v1450
    %v5876 = vunpack.c.h.b16 %v1450
    %v5877 = vunpack.c.l.b16 %v1451
    %v5878 = vunpack.c.h.b16 %v1451
    %v5879 = vunpack.c.l.b16 %v1452
    %v5880 = vunpack.c.h.b16 %v1452
    %v5881 = vunpack.c.l.b16 %v1453
    %v5882 = vunpack.c.h.b16 %v1453
    %v5883 = vunpack.c.l.b16 %v1454
    %v5884 = vunpack.c.h.b16 %v1454
    %v5885 = vunpack.c.l.b16 %v1455
    %v5886 = vunpack.c.h.b16 %v1455
    %v5887 = vunpack.c.l.b16 %v1456
    %v5888 = vunpack.c.h.b16 %v1456
    %v5889 = vunpack.c.l.b16 %v1457
    %v5890 = vunpack.c.h.b16 %v1457
    %v5891 = vunpack.c.l.b16 %v1458
    %v5892 = vunpack.c.h.b16 %v1458
    %v5893 = vunpack.c.l.b16 %v1459
    %v5894 = vunpack.c.h.b16 %v1459
    %v5895 = vunpack.c.l.b16 %v1460
    %v5896 = vunpack.c.h.b16 %v1460
    %v5897 = vunpack.c.l.b16 %v1461
    %v5898 = vunpack.c.h.b16 %v1461
    %v5899 = vunpack.c.l.b16 %v1462
    %v5900 = vunpack.c.h.b16 %v1462
    %v5901 = vunpack.c.l.b16 %v1463
    %v5902 = vunpack.c.h.b16 %v1463
    %v5903 = vunpack.c.l.b16 %v1464
    %v5904 = vunpack.c.h.b16 %v1464
    %v5905 = vunpack.c.l.b16 %v1465
    %v5906 = vunpack.c.h.b16 %v1465
    %v5907 = vunpack.c.l.b16 %v1466
    %v5908 = vunpack.c.h.b16 %v1466
    %v5909 = vunpack.c.l.b16 %v1467
    %v5910 = vunpack.c.h.b16 %v1467
    %v5911 = vunpack.c.l.b16 %v1468
    %v5912 = vunpack.c.h.b16 %v1468
    %v5913 = vunpack.c.l.b16 %v1469
    %v5914 = vunpack.c.h.b16 %v1469
    %v5915 = vunpack.c.l.b16 %v1470
    %v5916 = vunpack.c.h.b16 %v1470
    %v5917 = vunpack.c.l.b16 %v1471
    %v5918 = vunpack.c.h.b16 %v1471
    %v5919 = vunpack.c.l.b16 %v1472
    %v5920 = vunpack.c.h.b16 %v1472
    %v5921 = vunpack.c.l.b16 %v1473
    %v5922 = vunpack.c.h.b16 %v1473
    %v5923 = vunpack.c.l.b16 %v1474
    %v5924 = vunpack.c.h.b16 %v1474
    %v5925 = vunpack.c.l.b16 %v1475
    %v5926 = vunpack.c.h.b16 %v1475
    %v5927 = vunpack.c.l.b16 %v1476
    %v5928 = vunpack.c.h.b16 %v1476
    %v5929 = vunpack.c.l.b16 %v1477
    %v5930 = vunpack.c.h.b16 %v1477
    %v5931 = vunpack.c.l.b16 %v1478
    %v5932 = vunpack.c.h.b16 %v1478
    %v5933 = vunpack.c.l.b16 %v1479
    %v5934 = vunpack.c.h.b16 %v1479
    %v5935 = vunpack.c.l.b16 %v1480
    %v5936 = vunpack.c.h.b16 %v1480
    %v5937 = vunpack.c.l.b16 %v1481
    %v5938 = vunpack.c.h.b16 %v1481
    %v5939 = vunpack.c.l.b16 %v1482
    %v5940 = vunpack.c.h.b16 %v1482
    %v5941 = vunpack.c.l.b16 %v1483
    %v5942 = vunpack.c.h.b16 %v1483
    %v5943 = vunpack.c.l.b16 %v1484
    %v5944 = vunpack.c.h.b16 %v1484
    %v5945 = vunpack.c.l.b16 %v1485
    %v5946 = vunpack.c.h.b16 %v1485
    %v5947 = vunpack.c.l.b16 %v1486
    %v5948 = vunpack.c.h.b16 %v1486
    %v5949 = vunpack.c.l.b16 %v1487
    %v5950 = vunpack.c.h.b16 %v1487
    %v5951 = vunpack.c.l.b16 %v1488
    %v5952 = vunpack.c.h.b16 %v1488
    %v5953 = vunpack.c.l.b16 %v1489
    %v5954 = vunpack.c.h.b16 %v1489
    %v5955 = vunpack.c.l.b16 %v1490
    %v5956 = vunpack.c.h.b16 %v1490
    %v5957 = vunpack.c.l.b16 %v1491
    %v5958 = vunpack.c.h.b16 %v1491
    %v5959 = vunpack.c.l.b16 %v1492
    %v5960 = vunpack.c.h.b16 %v1492
    %v5961 = vunpack.c.l.b16 %v1493
    %v5962 = vunpack.c.h.b16 %v1493
    %v5963 = vunpack.c.l.b16 %v1494
    %v5964 = vunpack.c.h.b16 %v1494
    %v5965 = vunpack.c.l.b16 %v1495
    %v5966 = vunpack.c.h.b16 %v1495
    %v5967 = vunpack.c.l.b16 %v1496
    %v5968 = vunpack.c.h.b16 %v1496
    %v5969 = vunpack.c.l.b16 %v1497
    %v5970 = vunpack.c.h.b16 %v1497
    %v5971 = vunpack.c.l.b16 %v1498
    %v5972 = vunpack.c.h.b16 %v1498
    %v5973 = vunpack.c.l.b16 %v1499
    %v5974 = vunpack.c.h.b16 %v1499
    %v5975 = vunpack.c.l.b16 %v1500
    %v5976 = vunpack.c.h.b16 %v1500
    %v5977 = vunpack.c.l.b16 %v1501
    %v5978 = vunpack.c.h.b16 %v1501
    %v5979 = vunpack.c.l.b16 %v1502
    %v5980 = vunpack.c.h.b16 %v1502
    %v5981 = vunpack.c.l.b16 %v1503
    %v5982 = vunpack.c.h.b16 %v1503
    %v5983 = vunpack.c.l.b16 %v1504
    %v5984 = vunpack.c.h.b16 %v1504
    %v5985 = vunpack.c.l.b16 %v1505
    %v5986 = vunpack.c.h.b16 %v1505
    %v5987 = vunpack.c.l.b16 %v1506
    %v5988 = vunpack.c.h.b16 %v1506
    %v5989 = vunpack.c.l.b16 %v1507
    %v5990 = vunpack.c.h.b16 %v1507
    %v5991 = vunpack.c.l.b16 %v1508
    %v5992 = vunpack.c.h.b16 %v1508
    %v5993 = vunpack.c.l.b16 %v1509
    %v5994 = vunpack.c.h.b16 %v1509
    %v5995 = vunpack.c.l.b16 %v1510
    %v5996 = vunpack.c.h.b16 %v1510
    %v5997 = vunpack.c.l.b16 %v1511
    %v5998 = vunpack.c.h.b16 %v1511
    %v5999 = vunpack.c.l.b16 %v1512
    %v6000 = vunpack.c.h.b16 %v1512
    %v6001 = vunpack.c.l.b16 %v1513
    %v6002 = vunpack.c.h.b16 %v1513
    %v6003 = vunpack.c.l.b16 %v1514
    %v6004 = vunpack.c.h.b16 %v1514
    %v6005 = vunpack.c.l.b16 %v1515
    %v6006 = vunpack.c.h.b16 %v1515
    %v6007 = vunpack.c.l.b16 %v1516
    %v6008 = vunpack.c.h.b16 %v1516
    %v6009 = vunpack.c.l.b16 %v1517
    %v6010 = vunpack.c.h.b16 %v1517
    %v6011 = vunpack.c.l.b16 %v1518
    %v6012 = vunpack.c.h.b16 %v1518
    %v6013 = vunpack.c.l.b16 %v1519
    %v6014 = vunpack.c.h.b16 %v1519
    %v6015 = vunpack.c.l.b16 %v1520
    %v6016 = vunpack.c.h.b16 %v1520
    %v6017 = vunpack.c.l.b16 %v1521
    %v6018 = vunpack.c.h.b16 %v1521
    %v6019 = vunpack.c.l.b16 %v1522
    %v6020 = vunpack.c.h.b16 %v1522
    %v6021 = vunpack.c.l.b16 %v1523
    %v6022 = vunpack.c.h.b16 %v1523
    %v6023 = vunpack.c.l.b16 %v1524
    %v6024 = vunpack.c.h.b16 %v1524
    %v6025 = vunpack.c.l.b16 %v1525
    %v6026 = vunpack.c.h.b16 %v1525
    %v6027 = vunpack.c.l.b16 %v1526
    %v6028 = vunpack.c.h.b16 %v1526
    %v6029 = vunpack.c.l.b16 %v1527
    %v6030 = vunpack.c.h.b16 %v1527
    %v6031 = vunpack.c.l.b16 %v1528
    %v6032 = vunpack.c.h.b16 %v1528
    %v6033 = vunpack.c.l.b16 %v1529
    %v6034 = vunpack.c.h.b16 %v1529
    %v6035 = vunpack.c.l.b16 %v1530
    %v6036 = vunpack.c.h.b16 %v1530
    %v6037 = vunpack.c.l.b16 %v1531
    %v6038 = vunpack.c.h.b16 %v1531
    %v6039 = vunpack.c.l.b16 %v1532
    %v6040 = vunpack.c.h.b16 %v1532
    %v6041 = vunpack.c.l.b16 %v1533
    %v6042 = vunpack.c.h.b16 %v1533
    %v6043 = vunpack.c.l.b16 %v1534
    %v6044 = vunpack.c.h.b16 %v1534
    %v6045 = vunpack.c.l.b16 %v1535
    %v6046 = vunpack.c.h.b16 %v1535
    %v6047 = vunpack.c.l.b16 %v1536
    %v6048 = vunpack.c.h.b16 %v1536
    %v6049 = vunpack.c.l.b16 %v1537
    %v6050 = vunpack.c.h.b16 %v1537
    %v6051 = vunpack.c.l.b16 %v1538
    %v6052 = vunpack.c.h.b16 %v1538
    %v6053 = vunpack.c.l.b16 %v1539
    %v6054 = vunpack.c.h.b16 %v1539
    %v6055 = vunpack.c.l.b16 %v1540
    %v6056 = vunpack.c.h.b16 %v1540
    %v6057 = vunpack.c.l.b16 %v1541
    %v6058 = vunpack.c.h.b16 %v1541
    %v6059 = vunpack.c.l.b16 %v1542
    %v6060 = vunpack.c.h.b16 %v1542
    %v6061 = vunpack.c.l.b16 %v1543
    %v6062 = vunpack.c.h.b16 %v1543
    %v6063 = vunpack.c.l.b16 %v1544
    %v6064 = vunpack.c.h.b16 %v1544
    %v6065 = vunpack.c.l.b16 %v1545
    %v6066 = vunpack.c.h.b16 %v1545
    %v6067 = vunpack.c.l.b16 %v1546
    %v6068 = vunpack.c.h.b16 %v1546
    %v6069 = vunpack.c.l.b16 %v1547
    %v6070 = vunpack.c.h.b16 %v1547
    %v6071 = vunpack.c.l.b16 %v1548
    %v6072 = vunpack.c.h.b16 %v1548
    %v6073 = vunpack.c.l.b16 %v1549
    %v6074 = vunpack.c.h.b16 %v1549
    %v6075 = vunpack.c.l.b16 %v1550
    %v6076 = vunpack.c.h.b16 %v1550
    %v6077 = vunpack.c.l.b16 %v1551
    %v6078 = vunpack.c.h.b16 %v1551
    %v6079 = vunpack.c.l.b16 %v1552
    %v6080 = vunpack.c.h.b16 %v1552
    %v6081 = vunpack.c.l.b16 %v1553
    %v6082 = vunpack.c.h.b16 %v1553
    %v6083 = vunpack.c.l.b16 %v1554
    %v6084 = vunpack.c.h.b16 %v1554
    %v6085 = vunpack.c.l.b16 %v1555
    %v6086 = vunpack.c.h.b16 %v1555
    %v6087 = vunpack.c.l.b16 %v1556
    %v6088 = vunpack.c.h.b16 %v1556
    %v6089 = vunpack.c.l.b16 %v1557
    %v6090 = vunpack.c.h.b16 %v1557
    %v6091 = vunpack.c.l.b16 %v1558
    %v6092 = vunpack.c.h.b16 %v1558
    %v6093 = vunpack.c.l.b16 %v1559
    %v6094 = vunpack.c.h.b16 %v1559
    %v6095 = vunpack.c.l.b16 %v1560
    %v6096 = vunpack.c.h.b16 %v1560
    %v6097 = vunpack.c.l.b16 %v1561
    %v6098 = vunpack.c.h.b16 %v1561
    %v6099 = vunpack.c.l.b16 %v1562
    %v6100 = vunpack.c.h.b16 %v1562
    %v6101 = vunpack.c.l.b16 %v1563
    %v6102 = vunpack.c.h.b16 %v1563
    %v6103 = vunpack.c.l.b16 %v1564
    %v6104 = vunpack.c.h.b16 %v1564
    %v6105 = vunpack.c.l.b16 %v1565
    %v6106 = vunpack.c.h.b16 %v1565
    %v6107 = vunpack.c.l.b16 %v1566
    %v6108 = vunpack.c.h.b16 %v1566
    %v6109 = vunpack.c.l.b16 %v1567
    %v6110 = vunpack.c.h.b16 %v1567
    %v6111 = vunpack.c.l.b16 %v1568
    %v6112 = vunpack.c.h.b16 %v1568
    %v6113 = vunpack.c.l.b16 %v1569
    %v6114 = vunpack.c.h.b16 %v1569
    %v6115 = vunpack.c.l.b16 %v1570
    %v6116 = vunpack.c.h.b16 %v1570
    %v6117 = vunpack.c.l.b16 %v1571
    %v6118 = vunpack.c.h.b16 %v1571
    %v6119 = vunpack.c.l.b16 %v1572
    %v6120 = vunpack.c.h.b16 %v1572
    %v6121 = vunpack.c.l.b16 %v1573
    %v6122 = vunpack.c.h.b16 %v1573
    %v6123 = vunpack.c.l.b16 %v1574
    %v6124 = vunpack.c.h.b16 %v1574
    %v6125 = vunpack.c.l.b16 %v1575
    %v6126 = vunpack.c.h.b16 %v1575
    %v6127 = vunpack.c.l.b16 %v1576
    %v6128 = vunpack.c.h.b16 %v1576
    %v6129 = vunpack.c.l.b16 %v1577
    %v6130 = vunpack.c.h.b16 %v1577
    %v6131 = vunpack.c.l.b16 %v1578
    %v6132 = vunpack.c.h.b16 %v1578
    %v6133 = vunpack.c.l.b16 %v1579
    %v6134 = vunpack.c.h.b16 %v1579
    %v6135 = vunpack.c.l.b16 %v1580
    %v6136 = vunpack.c.h.b16 %v1580
    %v6137 = vunpack.c.l.b16 %v1581
    %v6138 = vunpack.c.h.b16 %v1581
    %v6139 = vunpack.c.l.b16 %v1582
    %v6140 = vunpack.c.h.b16 %v1582
    %v6141 = vunpack.c.l.b16 %v1583
    %v6142 = vunpack.c.h.b16 %v1583
    %v6143 = vunpack.c.l.b16 %v1584
    %v6144 = vunpack.c.h.b16 %v1584
    %v6145 = vunpack.c.l.b16 %v1585
    %v6146 = vunpack.c.h.b16 %v1585
    %v6147 = vunpack.c.l.b16 %v1586
    %v6148 = vunpack.c.h.b16 %v1586
    %v6149 = vunpack.c.l.b16 %v1587
    %v6150 = vunpack.c.h.b16 %v1587
    %v6151 = vunpack.c.l.b16 %v1588
    %v6152 = vunpack.c.h.b16 %v1588
    %v6153 = vunpack.c.l.b16 %v1589
    %v6154 = vunpack.c.h.b16 %v1589
    %v6155 = vunpack.c.l.b16 %v1590
    %v6156 = vunpack.c.h.b16 %v1590
    %v6157 = vunpack.c.l.b16 %v1591
    %v6158 = vunpack.c.h.b16 %v1591
    %v6159 = vunpack.c.l.b16 %v1592
    %v6160 = vunpack.c.h.b16 %v1592
    %v6161 = vunpack.c.l.b16 %v1593
    %v6162 = vunpack.c.h.b16 %v1593
    %v6163 = vunpack.c.l.b16 %v1594
    %v6164 = vunpack.c.h.b16 %v1594
    %v6165 = vunpack.c.l.b16 %v1595
    %v6166 = vunpack.c.h.b16 %v1595
    %v6167 = vunpack.c.l.b16 %v1596
    %v6168 = vunpack.c.h.b16 %v1596
    %v6169 = vunpack.c.l.b16 %v1597
    %v6170 = vunpack.c.h.b16 %v1597
    %v6171 = vunpack.c.l.b16 %v1598
    %v6172 = vunpack.c.h.b16 %v1598
    %v6173 = vunpack.c.l.b16 %v1599
    %v6174 = vunpack.c.h.b16 %v1599
    %v6175 = vunpack.c.l.b16 %v1600
    %v6176 = vunpack.c.h.b16 %v1600
    %v6177 = vunpack.c.l.b16 %v1601
    %v6178 = vunpack.c.h.b16 %v1601
    %v6179 = vunpack.c.l.b16 %v1602
    %v6180 = vunpack.c.h.b16 %v1602
    %v6181 = vunpack.c.l.b16 %v1603
    %v6182 = vunpack.c.h.b16 %v1603
    %v6183 = vunpack.c.l.b16 %v1604
    %v6184 = vunpack.c.h.b16 %v1604
    %v6185 = vunpack.c.l.b16 %v1605
    %v6186 = vunpack.c.h.b16 %v1605
    %v6187 = vunpack.c.l.b16 %v1606
    %v6188 = vunpack.c.h.b16 %v1606
    %v6189 = vunpack.c.l.b16 %v1607
    %v6190 = vunpack.c.h.b16 %v1607
    %v6191 = vunpack.c.l.b16 %v1608
    %v6192 = vunpack.c.h.b16 %v1608
    %v6193 = vunpack.c.l.b16 %v1609
    %v6194 = vunpack.c.h.b16 %v1609
    %v6195 = vunpack.c.l.b16 %v1610
    %v6196 = vunpack.c.h.b16 %v1610
    %v6197 = vunpack.c.l.b16 %v1611
    %v6198 = vunpack.c.h.b16 %v1611
    %v6199 = vunpack.c.l.b16 %v1612
    %v6200 = vunpack.c.h.b16 %v1612
    %v6201 = vunpack.c.l.b16 %v1613
    %v6202 = vunpack.c.h.b16 %v1613
    %v6203 = vunpack.c.l.b16 %v1614
    %v6204 = vunpack.c.h.b16 %v1614
    %v6205 = vunpack.c.l.b16 %v1615
    %v6206 = vunpack.c.h.b16 %v1615
    %v6207 = vunpack.c.l.b16 %v1616
    %v6208 = vunpack.c.h.b16 %v1616
    %v6209 = vunpack.c.l.b16 %v1617
    %v6210 = vunpack.c.h.b16 %v1617
    %v6211 = vunpack.c.l.b16 %v1618
    %v6212 = vunpack.c.h.b16 %v1618
    %v6213 = vunpack.c.l.b16 %v1619
    %v6214 = vunpack.c.h.b16 %v1619
    %v6215 = vunpack.c.l.b16 %v1620
    %v6216 = vunpack.c.h.b16 %v1620
    %v6217 = vunpack.c.l.b16 %v1621
    %v6218 = vunpack.c.h.b16 %v1621
    %v6219 = vunpack.c.l.b16 %v1622
    %v6220 = vunpack.c.h.b16 %v1622
    %v6221 = vunpack.c.l.b16 %v1623
    %v6222 = vunpack.c.h.b16 %v1623
    %v6223 = vunpack.c.l.b16 %v1624
    %v6224 = vunpack.c.h.b16 %v1624
    %v6225 = vunpack.c.l.b16 %v1625
    %v6226 = vunpack.c.h.b16 %v1625
    %v6227 = vunpack.c.l.b16 %v1626
    %v6228 = vunpack.c.h.b16 %v1626
    %v6229 = vunpack.c.l.b16 %v1627
    %v6230 = vunpack.c.h.b16 %v1627
    %v6231 = vunpack.c.l.b16 %v1628
    %v6232 = vunpack.c.h.b16 %v1628
    %v6233 = vunpack.c.l.b16 %v1629
    %v6234 = vunpack.c.h.b16 %v1629
    %v6235 = vunpack.c.l.b16 %v1630
    %v6236 = vunpack.c.h.b16 %v1630
    %v6237 = vunpack.c.l.b16 %v1631
    %v6238 = vunpack.c.h.b16 %v1631
    %v6239 = vunpack.c.l.b16 %v1632
    %v6240 = vunpack.c.h.b16 %v1632
    %v6241 = vunpack.c.l.b16 %v1633
    %v6242 = vunpack.c.h.b16 %v1633
    %v6243 = vunpack.c.l.b16 %v1634
    %v6244 = vunpack.c.h.b16 %v1634
    %v6245 = vunpack.c.l.b16 %v1635
    %v6246 = vunpack.c.h.b16 %v1635
    %v6247 = vunpack.c.l.b16 %v1636
    %v6248 = vunpack.c.h.b16 %v1636
    %v6249 = vunpack.c.l.b16 %v1637
    %v6250 = vunpack.c.h.b16 %v1637
    %v6251 = vunpack.c.l.b16 %v1638
    %v6252 = vunpack.c.h.b16 %v1638
    %v6253 = vunpack.c.l.b16 %v1639
    %v6254 = vunpack.c.h.b16 %v1639
    %v6255 = vunpack.c.l.b16 %v1640
    %v6256 = vunpack.c.h.b16 %v1640
    %v6257 = vunpack.c.l.b16 %v1641
    %v6258 = vunpack.c.h.b16 %v1641
    %v6259 = vunpack.c.l.b16 %v1642
    %v6260 = vunpack.c.h.b16 %v1642
    %v6261 = vunpack.c.l.b16 %v1643
    %v6262 = vunpack.c.h.b16 %v1643
    %v6263 = vunpack.c.l.b16 %v1644
    %v6264 = vunpack.c.h.b16 %v1644
    %v6265 = vunpack.c.l.b16 %v1645
    %v6266 = vunpack.c.h.b16 %v1645
    %v6267 = vunpack.c.l.b16 %v1646
    %v6268 = vunpack.c.h.b16 %v1646
    %v6269 = vunpack.c.l.b16 %v1647
    %v6270 = vunpack.c.h.b16 %v1647
    %v6271 = vunpack.c.l.b16 %v1648
    %v6272 = vunpack.c.h.b16 %v1648
    %v6273 = vunpack.c.l.b16 %v1649
    %v6274 = vunpack.c.h.b16 %v1649
    %v6275 = vunpack.c.l.b16 %v1650
    %v6276 = vunpack.c.h.b16 %v1650
    %v6277 = vunpack.c.l.b16 %v1651
    %v6278 = vunpack.c.h.b16 %v1651
    %v6279 = vunpack.c.l.b16 %v1652
    %v6280 = vunpack.c.h.b16 %v1652
    %v6281 = vunpack.c.l.b16 %v1653
    %v6282 = vunpack.c.h.b16 %v1653
    %v6283 = vunpack.c.l.b16 %v1654
    %v6284 = vunpack.c.h.b16 %v1654
    %v6285 = vunpack.c.l.b16 %v1655
    %v6286 = vunpack.c.h.b16 %v1655
    %v6287 = vunpack.c.l.b16 %v1656
    %v6288 = vunpack.c.h.b16 %v1656
    %v6289 = vunpack.c.l.b16 %v1657
    %v6290 = vunpack.c.h.b16 %v1657
    %v6291 = vunpack.c.l.b16 %v1658
    %v6292 = vunpack.c.h.b16 %v1658
    %v6293 = vunpack.c.l.b16 %v1659
    %v6294 = vunpack.c.h.b16 %v1659
    %v6295 = vunpack.c.l.b16 %v1660
    %v6296 = vunpack.c.h.b16 %v1660
    %v6297 = vunpack.c.l.b16 %v1661
    %v6298 = vunpack.c.h.b16 %v1661
    %v6299 = vunpack.c.l.b16 %v1662
    %v6300 = vunpack.c.h.b16 %v1662
    %v6301 = vunpack.c.l.b16 %v1663
    %v6302 = vunpack.c.h.b16 %v1663
    %v6303 = vunpack.c.l.b16 %v1664
    %v6304 = vunpack.c.h.b16 %v1664
    %v6305 = vunpack.c.l.b16 %v1665
    %v6306 = vunpack.c.h.b16 %v1665
    %v6307 = vunpack.c.l.b16 %v1666
    %v6308 = vunpack.c.h.b16 %v1666
    %v6309 = vunpack.c.l.b16 %v1667
    %v6310 = vunpack.c.h.b16 %v1667
    %v6311 = vunpack.c.l.b16 %v1668
    %v6312 = vunpack.c.h.b16 %v1668
    %v6313 = vunpack.c.l.b16 %v1669
    %v6314 = vunpack.c.h.b16 %v1669
    %v6315 = vunpack.c.l.b16 %v1670
    %v6316 = vunpack.c.h.b16 %v1670
    %v6317 = vunpack.c.l.b16 %v1671
    %v6318 = vunpack.c.h.b16 %v1671
    %v6319 = vunpack.c.l.b16 %v1672
    %v6320 = vunpack.c.h.b16 %v1672
    %v6321 = vunpack.c.l.b16 %v1673
    %v6322 = vunpack.c.h.b16 %v1673
    %v6323 = vunpack.c.l.b16 %v1674
    %v6324 = vunpack.c.h.b16 %v1674
    %v6325 = vunpack.c.l.b16 %v1675
    %v6326 = vunpack.c.h.b16 %v1675
    %v6327 = vunpack.c.l.b16 %v1676
    %v6328 = vunpack.c.h.b16 %v1676
    %v6329 = vunpack.c.l.b16 %v1677
    %v6330 = vunpack.c.h.b16 %v1677
    %v6331 = vunpack.c.l.b16 %v1678
    %v6332 = vunpack.c.h.b16 %v1678
    %v6333 = vunpack.c.l.b16 %v1679
    %v6334 = vunpack.c.h.b16 %v1679
    %v6335 = vunpack.c.l.b16 %v1680
    %v6336 = vunpack.c.h.b16 %v1680
    %v6337 = vunpack.c.l.b16 %v1681
    %v6338 = vunpack.c.h.b16 %v1681
    %v6339 = vunpack.c.l.b16 %v1682
    %v6340 = vunpack.c.h.b16 %v1682
    %v6341 = vunpack.c.l.b16 %v1683
    %v6342 = vunpack.c.h.b16 %v1683
    %v6343 = vunpack.c.l.b16 %v1684
    %v6344 = vunpack.c.h.b16 %v1684
    %v6345 = vunpack.c.l.b16 %v1685
    %v6346 = vunpack.c.h.b16 %v1685
    %v6347 = vunpack.c.l.b16 %v1686
    %v6348 = vunpack.c.h.b16 %v1686
    %v6349 = vunpack.c.l.b16 %v1687
    %v6350 = vunpack.c.h.b16 %v1687
    %v6351 = vunpack.c.l.b16 %v1688
    %v6352 = vunpack.c.h.b16 %v1688
    %v6353 = vunpack.c.l.b16 %v1689
    %v6354 = vunpack.c.h.b16 %v1689
    %v6355 = vunpack.c.l.b16 %v1690
    %v6356 = vunpack.c.h.b16 %v1690
    %v6357 = vunpack.c.l.b16 %v1691
    %v6358 = vunpack.c.h.b16 %v1691
    %v6359 = vunpack.c.l.b16 %v1692
    %v6360 = vunpack.c.h.b16 %v1692
    %v6361 = vunpack.c.l.b16 %v1693
    %v6362 = vunpack.c.h.b16 %v1693
    %v6363 = vunpack.c.l.b16 %v1694
    %v6364 = vunpack.c.h.b16 %v1694
    %v6365 = vunpack.c.l.b16 %v1695
    %v6366 = vunpack.c.h.b16 %v1695
    %v6367 = vunpack.c.l.b16 %v1696
    %v6368 = vunpack.c.h.b16 %v1696
    %v6369 = vunpack.c.l.b16 %v1697
    %v6370 = vunpack.c.h.b16 %v1697
    %v6371 = vunpack.c.l.b16 %v1698
    %v6372 = vunpack.c.h.b16 %v1698
    %v6373 = vunpack.c.l.b16 %v1699
    %v6374 = vunpack.c.h.b16 %v1699
    %v6375 = vunpack.c.l.b16 %v1700
    %v6376 = vunpack.c.h.b16 %v1700
    %v6377 = vunpack.c.l.b16 %v1701
    %v6378 = vunpack.c.h.b16 %v1701
    %v6379 = vunpack.c.l.b16 %v1702
    %v6380 = vunpack.c.h.b16 %v1702
    %v6381 = vunpack.c.l.b16 %v1703
    %v6382 = vunpack.c.h.b16 %v1703
    %v6383 = vunpack.c.l.b16 %v1704
    %v6384 = vunpack.c.h.b16 %v1704
    %v6385 = vunpack.c.l.b16 %v1705
    %v6386 = vunpack.c.h.b16 %v1705
    %v6387 = vunpack.c.l.b16 %v1706
    %v6388 = vunpack.c.h.b16 %v1706
    %v6389 = vunpack.c.l.b16 %v1707
    %v6390 = vunpack.c.h.b16 %v1707
    %v6391 = vunpack.c.l.b16 %v1708
    %v6392 = vunpack.c.h.b16 %v1708
    %v6393 = vunpack.c.l.b16 %v1709
    %v6394 = vunpack.c.h.b16 %v1709
    %v6395 = vunpack.c.l.b16 %v1710
    %v6396 = vunpack.c.h.b16 %v1710
    %v6397 = vunpack.c.l.b16 %v1711
    %v6398 = vunpack.c.h.b16 %v1711
    %v6399 = vunpack.c.l.b16 %v1712
    %v6400 = vunpack.c.h.b16 %v1712
    %v6401 = vunpack.c.l.b16 %v1713
    %v6402 = vunpack.c.h.b16 %v1713
    %v6403 = vunpack.c.l.b16 %v1714
    %v6404 = vunpack.c.h.b16 %v1714
    %v6405 = vunpack.c.l.b16 %v1715
    %v6406 = vunpack.c.h.b16 %v1715
    %v6407 = vunpack.c.l.b16 %v1716
    %v6408 = vunpack.c.h.b16 %v1716
    %v6409 = vunpack.c.l.b16 %v1717
    %v6410 = vunpack.c.h.b16 %v1717
    %v6411 = vunpack.c.l.b16 %v1718
    %v6412 = vunpack.c.h.b16 %v1718
    %v6413 = vunpack.c.l.b16 %v1719
    %v6414 = vunpack.c.h.b16 %v1719
    %v6415 = vunpack.c.l.b16 %v1720
    %v6416 = vunpack.c.h.b16 %v1720
    %v6417 = vunpack.c.l.b16 %v1721
    %v6418 = vunpack.c.h.b16 %v1721
    %v6419 = vunpack.c.l.b16 %v1722
    %v6420 = vunpack.c.h.b16 %v1722
    %v6421 = vunpack.c.l.b16 %v1723
    %v6422 = vunpack.c.h.b16 %v1723
    %v6423 = vunpack.c.l.b16 %v1724
    %v6424 = vunpack.c.h.b16 %v1724
    %v6425 = vunpack.c.l.b16 %v1725
    %v6426 = vunpack.c.h.b16 %v1725
    %v6427 = vunpack.c.l.b16 %v1726
    %v6428 = vunpack.c.h.b16 %v1726
    %v6429 = vunpack.c.l.b16 %v1727
    %v6430 = vunpack.c.h.b16 %v1727
    %v6431 = vunpack.c.l.b16 %v1728
    %v6432 = vunpack.c.h.b16 %v1728
    %v6433 = vunpack.c.l.b16 %v1729
    %v6434 = vunpack.c.h.b16 %v1729
    %v6435 = vunpack.c.l.b16 %v1730
    %v6436 = vunpack.c.h.b16 %v1730
    %v6437 = vunpack.c.l.b16 %v1731
    %v6438 = vunpack.c.h.b16 %v1731
    %v6439 = vunpack.c.l.b16 %v1732
    %v6440 = vunpack.c.h.b16 %v1732
    %v6441 = vunpack.c.l.b16 %v1733
    %v6442 = vunpack.c.h.b16 %v1733
    %v6443 = vunpack.c.l.b16 %v1734
    %v6444 = vunpack.c.h.b16 %v1734
    %v6445 = vunpack.c.l.b16 %v1735
    %v6446 = vunpack.c.h.b16 %v1735
    %v6447 = vunpack.c.l.b16 %v1736
    %v6448 = vunpack.c.h.b16 %v1736
    %v6449 = vunpack.c.l.b16 %v1737
    %v6450 = vunpack.c.h.b16 %v1737
    %v6451 = vunpack.c.l.b16 %v1738
    %v6452 = vunpack.c.h.b16 %v1738
    %v6453 = vunpack.c.l.b16 %v1739
    %v6454 = vunpack.c.h.b16 %v1739
    %v6455 = vunpack.c.l.b16 %v1740
    %v6456 = vunpack.c.h.b16 %v1740
    %v6457 = vunpack.c.l.b16 %v1741
    %v6458 = vunpack.c.h.b16 %v1741
    %v6459 = vunpack.c.l.b16 %v1742
    %v6460 = vunpack.c.h.b16 %v1742
    %v6461 = vunpack.c.l.b16 %v1743
    %v6462 = vunpack.c.h.b16 %v1743
    %v6463 = vunpack.c.l.b16 %v1744
    %v6464 = vunpack.c.h.b16 %v1744
    %v6465 = vunpack.c.l.b16 %v1745
    %v6466 = vunpack.c.h.b16 %v1745
    %v6467 = vunpack.c.l.b16 %v1746
    %v6468 = vunpack.c.h.b16 %v1746
    %v6469 = vunpack.c.l.b16 %v1747
    %v6470 = vunpack.c.h.b16 %v1747
    %v6471 = vunpack.c.l.b16 %v1748
    %v6472 = vunpack.c.h.b16 %v1748
    %v6473 = vunpack.c.l.b16 %v1749
    %v6474 = vunpack.c.h.b16 %v1749
    %v6475 = vunpack.c.l.b16 %v1750
    %v6476 = vunpack.c.h.b16 %v1750
    %v6477 = vunpack.c.l.b16 %v1751
    %v6478 = vunpack.c.h.b16 %v1751
    %v6479 = vunpack.c.l.b16 %v1752
    %v6480 = vunpack.c.h.b16 %v1752
    %v6481 = vunpack.c.l.b16 %v1753
    %v6482 = vunpack.c.h.b16 %v1753
    %v6483 = vunpack.c.l.b16 %v1754
    %v6484 = vunpack.c.h.b16 %v1754
    %v6485 = vunpack.c.l.b16 %v1755
    %v6486 = vunpack.c.h.b16 %v1755
    %v6487 = vunpack.c.l.b16 %v1756
    %v6488 = vunpack.c.h.b16 %v1756
    %v6489 = vunpack.c.l.b16 %v1757
    %v6490 = vunpack.c.h.b16 %v1757
    %v6491 = vunpack.c.l.b16 %v1758
    %v6492 = vunpack.c.h.b16 %v1758
    %v6493 = vunpack.c.l.b16 %v1759
    %v6494 = vunpack.c.h.b16 %v1759
    %v6495 = vunpack.c.l.b16 %v1760
    %v6496 = vunpack.c.h.b16 %v1760
    %v6497 = vunpack.c.l.b16 %v1761
    %v6498 = vunpack.c.h.b16 %v1761
    %v6499 = vunpack.c.l.b16 %v1762
    %v6500 = vunpack.c.h.b16 %v1762
    %v6501 = vunpack.c.l.b16 %v1763
    %v6502 = vunpack.c.h.b16 %v1763
    %v6503 = vunpack.c.l.b16 %v1764
    %v6504 = vunpack.c.h.b16 %v1764
    %v6505 = vunpack.c.l.b16 %v1765
    %v6506 = vunpack.c.h.b16 %v1765
    %v6507 = vunpack.c.l.b16 %v1766
    %v6508 = vunpack.c.h.b16 %v1766
    %v6509 = vunpack.c.l.b16 %v1767
    %v6510 = vunpack.c.h.b16 %v1767
    %v6511 = vunpack.c.l.b16 %v1768
    %v6512 = vunpack.c.h.b16 %v1768
    %v6513 = vunpack.c.l.b16 %v1769
    %v6514 = vunpack.c.h.b16 %v1769
    %v6515 = vunpack.c.l.b16 %v1770
    %v6516 = vunpack.c.h.b16 %v1770
    %v6517 = vpack.c.b16 %v3389, %v3381
    %v6518 = vpack.c.b16 %v3390, %v3382
    %v6519 = vpack.c.b16 %v3391, %v3383
    %v6520 = vpack.c.b16 %v3392, %v3384
    %v6521 = vpack.c.b16 %v3393, %v3385
    %v6522 = vpack.c.b16 %v3394, %v3386
    %v6523 = vpack.c.b16 %v3395, %v3387
    %v6524 = vpack.c.b16 %v3396, %v3388
    %v6525 = vpack.c.b16 %v3405, %v3397
    %v6526 = vpack.c.b16 %v3406, %v3398
    %v6527 = vpack.c.b16 %v3407, %v3399
    %v6528 = vpack.c.b16 %v3408, %v3400
    %v6529 = vpack.c.b16 %v3409, %v3401
    %v6530 = vpack.c.b16 %v3410, %v3402
    %v6531 = vpack.c.b16 %v3411, %v3403
    %v6532 = vpack.c.b16 %v3412, %v3404
    %v6533 = vpack.c.b16 %v3421, %v3413
    %v6534 = vpack.c.b16 %v3422, %v3414
    %v6535 = vpack.c.b16 %v3423, %v3415
    %v6536 = vpack.c.b16 %v3424, %v3416
    %v6537 = vpack.c.b16 %v3425, %v3417
    %v6538 = vpack.c.b16 %v3426, %v3418
    %v6539 = vpack.c.b16 %v3427, %v3419
    %v6540 = vpack.c.b16 %v3428, %v3420
    %v6541 = vpack.c.b16 %v3437, %v3429
    %v6542 = vpack.c.b16 %v3438, %v3430
    %v6543 = vpack.c.b16 %v3439, %v3431
    %v6544 = vpack.c.b16 %v3440, %v3432
    %v6545 = vpack.c.b16 %v3441, %v3433
    %v6546 = vpack.c.b16 %v3442, %v3434
    %v6547 = vpack.c.b16 %v3443, %v3435
    %v6548 = vpack.c.b16 %v3444, %v3436
    %v6549 = vpack.c.b16 %v3453, %v3445
    %v6550 = vpack.c.b16 %v3454, %v3446
    %v6551 = vpack.c.b16 %v3455, %v3447
    %v6552 = vpack.c.b16 %v3456, %v3448
    %v6553 = vpack.c.b16 %v3457, %v3449
    %v6554 = vpack.c.b16 %v3458, %v3450
    %v6555 = vpack.c.b16 %v3459, %v3451
    %v6556 = vpack.c.b16 %v3460, %v3452
    %v6557 = vpack.c.b16 %v3469, %v3461
    %v6558 = vpack.c.b16 %v3470, %v3462
    %v6559 = vpack.c.b16 %v3471, %v3463
    %v6560 = vpack.c.b16 %v3472, %v3464
    %v6561 = vpack.c.b16 %v3473, %v3465
    %v6562 = vpack.c.b16 %v3474, %v3466
    %v6563 = vpack.c.b16 %v3475, %v3467
    %v6564 = vpack.c.b16 %v3476, %v3468
    %v6565 = vpack.c.b16 %v3485, %v3477
    %v6566 = vpack.c.b16 %v3486, %v3478
    %v6567 = vpack.c.b16 %v3487, %v3479
    %v6568 = vpack.c.b16 %v3488, %v3480
    %v6569 = vpack.c.b16 %v3489, %v3481
    %v6570 = vpack.c.b16 %v3490, %v3482
    %v6571 = vpack.c.b16 %v3491, %v3483
    %v6572 = vpack.c.b16 %v3492, %v3484
    %v6573 = vpack.c.b16 %v3501, %v3493
    %v6574 = vpack.c.b16 %v3502, %v3494
    %v6575 = vpack.c.b16 %v3503, %v3495
    %v6576 = vpack.c.b16 %v3504, %v3496
    %v6577 = vpack.c.b16 %v3505, %v3497
    %v6578 = vpack.c.b16 %v3506, %v3498
    %v6579 = vpack.c.b16 %v3507, %v3499
    %v6580 = vpack.c.b16 %v3508, %v3500
    %v6581 = vpack.c.b16 %v3517, %v3509
    %v6582 = vpack.c.b16 %v3518, %v3510
    %v6583 = vpack.c.b16 %v3519, %v3511
    %v6584 = vpack.c.b16 %v3520, %v3512
    %v6585 = vpack.c.b16 %v3521, %v3513
    %v6586 = vpack.c.b16 %v3522, %v3514
    %v6587 = vpack.c.b16 %v3523, %v3515
    %v6588 = vpack.c.b16 %v3524, %v3516
    %v6589 = vpack.c.b16 %v3533, %v3525
    %v6590 = vpack.c.b16 %v3534, %v3526
    %v6591 = vpack.c.b16 %v3535, %v3527
    %v6592 = vpack.c.b16 %v3536, %v3528
    %v6593 = vpack.c.b16 %v3537, %v3529
    %v6594 = vpack.c.b16 %v3538, %v3530
    %v6595 = vpack.c.b16 %v3539, %v3531
    %v6596 = vpack.c.b16 %v3540, %v3532
    %v6597 = vpack.c.b16 %v3549, %v3541
    %v6598 = vpack.c.b16 %v3550, %v3542
    %v6599 = vpack.c.b16 %v3551, %v3543
    %v6600 = vpack.c.b16 %v3552, %v3544
    %v6601 = vpack.c.b16 %v3553, %v3545
    %v6602 = vpack.c.b16 %v3554, %v3546
    %v6603 = vpack.c.b16 %v3555, %v3547
    %v6604 = vpack.c.b16 %v3556, %v3548
    %v6605 = vpack.c.b16 %v3565, %v3557
    %v6606 = vpack.c.b16 %v3566, %v3558
    %v6607 = vpack.c.b16 %v3567, %v3559
    %v6608 = vpack.c.b16 %v3568, %v3560
    %v6609 = vpack.c.b16 %v3569, %v3561
    %v6610 = vpack.c.b16 %v3570, %v3562
    %v6611 = vpack.c.b16 %v3571, %v3563
    %v6612 = vpack.c.b16 %v3572, %v3564
    %v6613 = vpack.c.b16 %v3581, %v3573
    %v6614 = vpack.c.b16 %v3582, %v3574
    %v6615 = vpack.c.b16 %v3583, %v3575
    %v6616 = vpack.c.b16 %v3584, %v3576
    %v6617 = vpack.c.b16 %v3585, %v3577
    %v6618 = vpack.c.b16 %v3586, %v3578
    %v6619 = vpack.c.b16 %v3587, %v3579
    %v6620 = vpack.c.b16 %v3588, %v3580
    %v6621 = vpack.c.b16 %v3597, %v3589
    %v6622 = vpack.c.b16 %v3598, %v3590
    %v6623 = vpack.c.b16 %v3599, %v3591
    %v6624 = vpack.c.b16 %v3600, %v3592
    %v6625 = vpack.c.b16 %v3601, %v3593
    %v6626 = vpack.c.b16 %v3602, %v3594
    %v6627 = vpack.c.b16 %v3603, %v3595
    %v6628 = vpack.c.b16 %v3604, %v3596
    %v6629 = vpack.c.b16 %v3613, %v3605
    %v6630 = vpack.c.b16 %v3614, %v3606
    %v6631 = vpack.c.b16 %v3615, %v3607
    %v6632 = vpack.c.b16 %v3616, %v3608
    %v6633 = vpack.c.b16 %v3617, %v3609
    %v6634 = vpack.c.b16 %v3618, %v3610
    %v6635 = vpack.c.b16 %v3619, %v3611
    %v6636 = vpack.c.b16 %v3620, %v3612
    %v6637 = vpack.c.b16 %v3629, %v3621
    %v6638 = vpack.c.b16 %v3630, %v3622
    %v6639 = vpack.c.b16 %v3631, %v3623
    %v6640 = vpack.c.b16 %v3632, %v3624
    %v6641 = vpack.c.b16 %v3633, %v3625
    %v6642 = vpack.c.b16 %v3634, %v3626
    %v6643 = vpack.c.b16 %v3635, %v3627
    %v6644 = vpack.c.b16 %v3636, %v3628
    %v6645 = vpack.c.b16 %v3645, %v3637
    %v6646 = vpack.c.b16 %v3646, %v3638
    %v6647 = vpack.c.b16 %v3647, %v3639
    %v6648 = vpack.c.b16 %v3648, %v3640
    %v6649 = vpack.c.b16 %v3649, %v3641
    %v6650 = vpack.c.b16 %v3650, %v3642
    %v6651 = vpack.c.b16 %v3651, %v3643
    %v6652 = vpack.c.b16 %v3652, %v3644
    %v6653 = vpack.c.b16 %v3661, %v3653
    %v6654 = vpack.c.b16 %v3662, %v3654
    %v6655 = vpack.c.b16 %v3663, %v3655
    %v6656 = vpack.c.b16 %v3664, %v3656
    %v6657 = vpack.c.b16 %v3665, %v3657
    %v6658 = vpack.c.b16 %v3666, %v3658
    %v6659 = vpack.c.b16 %v3667, %v3659
    %v6660 = vpack.c.b16 %v3668, %v3660
    %v6661 = vpack.c.b16 %v3677, %v3669
    %v6662 = vpack.c.b16 %v3678, %v3670
    %v6663 = vpack.c.b16 %v3679, %v3671
    %v6664 = vpack.c.b16 %v3680, %v3672
    %v6665 = vpack.c.b16 %v3681, %v3673
    %v6666 = vpack.c.b16 %v3682, %v3674
    %v6667 = vpack.c.b16 %v3683, %v3675
    %v6668 = vpack.c.b16 %v3684, %v3676
    %v6669 = vpack.c.b16 %v3693, %v3685
    %v6670 = vpack.c.b16 %v3694, %v3686
    %v6671 = vpack.c.b16 %v3695, %v3687
    %v6672 = vpack.c.b16 %v3696, %v3688
    %v6673 = vpack.c.b16 %v3697, %v3689
    %v6674 = vpack.c.b16 %v3698, %v3690
    %v6675 = vpack.c.b16 %v3699, %v3691
    %v6676 = vpack.c.b16 %v3700, %v3692
    %v6677 = vpack.c.b16 %v3709, %v3701
    %v6678 = vpack.c.b16 %v3710, %v3702
    %v6679 = vpack.c.b16 %v3711, %v3703
    %v6680 = vpack.c.b16 %v3712, %v3704
    %v6681 = vpack.c.b16 %v3713, %v3705
    %v6682 = vpack.c.b16 %v3714, %v3706
    %v6683 = vpack.c.b16 %v3715, %v3707
    %v6684 = vpack.c.b16 %v3716, %v3708
    %v6685 = vpack.c.b16 %v3725, %v3717
    %v6686 = vpack.c.b16 %v3726, %v3718
    %v6687 = vpack.c.b16 %v3727, %v3719
    %v6688 = vpack.c.b16 %v3728, %v3720
    %v6689 = vpack.c.b16 %v3729, %v3721
    %v6690 = vpack.c.b16 %v3730, %v3722
    %v6691 = vpack.c.b16 %v3731, %v3723
    %v6692 = vpack.c.b16 %v3732, %v3724
    %v6693 = vpack.c.b16 %v3741, %v3733
    %v6694 = vpack.c.b16 %v3742, %v3734
    %v6695 = vpack.c.b16 %v3743, %v3735
    %v6696 = vpack.c.b16 %v3744, %v3736
    %v6697 = vpack.c.b16 %v3745, %v3737
    %v6698 = vpack.c.b16 %v3746, %v3738
    %v6699 = vpack.c.b16 %v3747, %v3739
    %v6700 = vpack.c.b16 %v3748, %v3740
    %v6701 = vpack.c.b16 %v3757, %v3749
    %v6702 = vpack.c.b16 %v3758, %v3750
    %v6703 = vpack.c.b16 %v3759, %v3751
    %v6704 = vpack.c.b16 %v3760, %v3752
    %v6705 = vpack.c.b16 %v3761, %v3753
    %v6706 = vpack.c.b16 %v3762, %v3754
    %v6707 = vpack.c.b16 %v3763, %v3755
    %v6708 = vpack.c.b16 %v3764, %v3756
    %v6709 = vpack.c.b16 %v3773, %v3765
    %v6710 = vpack.c.b16 %v3774, %v3766
    %v6711 = vpack.c.b16 %v3775, %v3767
    %v6712 = vpack.c.b16 %v3776, %v3768
    %v6713 = vpack.c.b16 %v3777, %v3769
    %v6714 = vpack.c.b16 %v3778, %v3770
    %v6715 = vpack.c.b16 %v3779, %v3771
    %v6716 = vpack.c.b16 %v3780, %v3772
    %v6717 = vpack.c.b16 %v3789, %v3781
    %v6718 = vpack.c.b16 %v3790, %v3782
    %v6719 = vpack.c.b16 %v3791, %v3783
    %v6720 = vpack.c.b16 %v3792, %v3784
    %v6721 = vpack.c.b16 %v3793, %v3785
    %v6722 = vpack.c.b16 %v3794, %v3786
    %v6723 = vpack.c.b16 %v3795, %v3787
    %v6724 = vpack.c.b16 %v3796, %v3788
    %v6725 = vpack.c.b16 %v3805, %v3797
    %v6726 = vpack.c.b16 %v3806, %v3798
    %v6727 = vpack.c.b16 %v3807, %v3799
    %v6728 = vpack.c.b16 %v3808, %v3800
    %v6729 = vpack.c.b16 %v3809, %v3801
    %v6730 = vpack.c.b16 %v3810, %v3802
    %v6731 = vpack.c.b16 %v3811, %v3803
    %v6732 = vpack.c.b16 %v3812, %v3804
    %v6733 = vpack.c.b16 %v3821, %v3813
    %v6734 = vpack.c.b16 %v3822, %v3814
    %v6735 = vpack.c.b16 %v3823, %v3815
    %v6736 = vpack.c.b16 %v3824, %v3816
    %v6737 = vpack.c.b16 %v3825, %v3817
    %v6738 = vpack.c.b16 %v3826, %v3818
    %v6739 = vpack.c.b16 %v3827, %v3819
    %v6740 = vpack.c.b16 %v3828, %v3820
    %v6741 = vpack.c.b16 %v3837, %v3829
    %v6742 = vpack.c.b16 %v3838, %v3830
    %v6743 = vpack.c.b16 %v3839, %v3831
    %v6744 = vpack.c.b16 %v3840, %v3832
    %v6745 = vpack.c.b16 %v3841, %v3833
    %v6746 = vpack.c.b16 %v3842, %v3834
    %v6747 = vpack.c.b16 %v3843, %v3835
    %v6748 = vpack.c.b16 %v3844, %v3836
    %v6749 = vpack.c.b16 %v3853, %v3845
    %v6750 = vpack.c.b16 %v3854, %v3846
    %v6751 = vpack.c.b16 %v3855, %v3847
    %v6752 = vpack.c.b16 %v3856, %v3848
    %v6753 = vpack.c.b16 %v3857, %v3849
    %v6754 = vpack.c.b16 %v3858, %v3850
    %v6755 = vpack.c.b16 %v3859, %v3851
    %v6756 = vpack.c.b16 %v3860, %v3852
    %v6757 = vpack.c.b16 %v3869, %v3861
    %v6758 = vpack.c.b16 %v3870, %v3862
    %v6759 = vpack.c.b16 %v3871, %v3863
    %v6760 = vpack.c.b16 %v3872, %v3864
    %v6761 = vpack.c.b16 %v3873, %v3865
    %v6762 = vpack.c.b16 %v3874, %v3866
    %v6763 = vpack.c.b16 %v3875, %v3867
    %v6764 = vpack.c.b16 %v3876, %v3868
    %v6765 = vpack.c.b16 %v3885, %v3877
    %v6766 = vpack.c.b16 %v3886, %v3878
    %v6767 = vpack.c.b16 %v3887, %v3879
    %v6768 = vpack.c.b16 %v3888, %v3880
    %v6769 = vpack.c.b16 %v3889, %v3881
    %v6770 = vpack.c.b16 %v3890, %v3882
    %v6771 = vpack.c.b16 %v3891, %v3883
    %v6772 = vpack.c.b16 %v3892, %v3884
    %v6773 = vpack.c.b16 %v3901, %v3893
    %v6774 = vpack.c.b16 %v3902, %v3894
    %v6775 = vpack.c.b16 %v3903, %v3895
    %v6776 = vpack.c.b16 %v3904, %v3896
    %v6777 = vpack.c.b16 %v3905, %v3897
    %v6778 = vpack.c.b16 %v3906, %v3898
    %v6779 = vpack.c.b16 %v3907, %v3899
    %v6780 = vpack.c.b16 %v3908, %v3900
    %v6781 = vpack.c.b16 %v3917, %v3909
    %v6782 = vpack.c.b16 %v3918, %v3910
    %v6783 = vpack.c.b16 %v3919, %v3911
    %v6784 = vpack.c.b16 %v3920, %v3912
    %v6785 = vpack.c.b16 %v3921, %v3913
    %v6786 = vpack.c.b16 %v3922, %v3914
    %v6787 = vpack.c.b16 %v3923, %v3915
    %v6788 = vpack.c.b16 %v3924, %v3916
    %v6789 = vpack.c.b16 %v3933, %v3925
    %v6790 = vpack.c.b16 %v3934, %v3926
    %v6791 = vpack.c.b16 %v3935, %v3927
    %v6792 = vpack.c.b16 %v3936, %v3928
    %v6793 = vpack.c.b16 %v3937, %v3929
    %v6794 = vpack.c.b16 %v3938, %v3930
    %v6795 = vpack.c.b16 %v3939, %v3931
    %v6796 = vpack.c.b16 %v3940, %v3932
    %v6797 = vpack.c.b16 %v3949, %v3941
    %v6798 = vpack.c.b16 %v3950, %v3942
    %v6799 = vpack.c.b16 %v3951, %v3943
    %v6800 = vpack.c.b16 %v3952, %v3944
    %v6801 = vpack.c.b16 %v3953, %v3945
    %v6802 = vpack.c.b16 %v3954, %v3946
    %v6803 = vpack.c.b16 %v3955, %v3947
    %v6804 = vpack.c.b16 %v3956, %v3948
    %v6805 = vpack.c.b16 %v3965, %v3957
    %v6806 = vpack.c.b16 %v3966, %v3958
    %v6807 = vpack.c.b16 %v3967, %v3959
    %v6808 = vpack.c.b16 %v3968, %v3960
    %v6809 = vpack.c.b16 %v3969, %v3961
    %v6810 = vpack.c.b16 %v3970, %v3962
    %v6811 = vpack.c.b16 %v3971, %v3963
    %v6812 = vpack.c.b16 %v3972, %v3964
    %v6813 = vpack.c.b16 %v3981, %v3973
    %v6814 = vpack.c.b16 %v3982, %v3974
    %v6815 = vpack.c.b16 %v3983, %v3975
    %v6816 = vpack.c.b16 %v3984, %v3976
    %v6817 = vpack.c.b16 %v3985, %v3977
    %v6818 = vpack.c.b16 %v3986, %v3978
    %v6819 = vpack.c.b16 %v3987, %v3979
    %v6820 = vpack.c.b16 %v3988, %v3980
    %v6821 = vpack.c.b16 %v3997, %v3989
    %v6822 = vpack.c.b16 %v3998, %v3990
    %v6823 = vpack.c.b16 %v3999, %v3991
    %v6824 = vpack.c.b16 %v4000, %v3992
    %v6825 = vpack.c.b16 %v4001, %v3993
    %v6826 = vpack.c.b16 %v4002, %v3994
    %v6827 = vpack.c.b16 %v4003, %v3995
    %v6828 = vpack.c.b16 %v4004, %v3996
    %v6829 = vpack.c.b16 %v4013, %v4005
    %v6830 = vpack.c.b16 %v4014, %v4006
    %v6831 = vpack.c.b16 %v4015, %v4007
    %v6832 = vpack.c.b16 %v4016, %v4008
    %v6833 = vpack.c.b16 %v4017, %v4009
    %v6834 = vpack.c.b16 %v4018, %v4010
    %v6835 = vpack.c.b16 %v4019, %v4011
    %v6836 = vpack.c.b16 %v4020, %v4012
    %v6837 = vpack.c.b16 %v4029, %v4021
    %v6838 = vpack.c.b16 %v4030, %v4022
    %v6839 = vpack.c.b16 %v4031, %v4023
    %v6840 = vpack.c.b16 %v4032, %v4024
    %v6841 = vpack.c.b16 %v4033, %v4025
    %v6842 = vpack.c.b16 %v4034, %v4026
    %v6843 = vpack.c.b16 %v4035, %v4027
    %v6844 = vpack.c.b16 %v4036, %v4028
    %v6845 = vpack.c.b16 %v4045, %v4037
    %v6846 = vpack.c.b16 %v4046, %v4038
    %v6847 = vpack.c.b16 %v4047, %v4039
    %v6848 = vpack.c.b16 %v4048, %v4040
    %v6849 = vpack.c.b16 %v4049, %v4041
    %v6850 = vpack.c.b16 %v4050, %v4042
    %v6851 = vpack.c.b16 %v4051, %v4043
    %v6852 = vpack.c.b16 %v4052, %v4044
    %v6853 = vpack.c.b16 %v4061, %v4053
    %v6854 = vpack.c.b16 %v4062, %v4054
    %v6855 = vpack.c.b16 %v4063, %v4055
    %v6856 = vpack.c.b16 %v4064, %v4056
    %v6857 = vpack.c.b16 %v4065, %v4057
    %v6858 = vpack.c.b16 %v4066, %v4058
    %v6859 = vpack.c.b16 %v4067, %v4059
    %v6860 = vpack.c.b16 %v4068, %v4060
    %v6861 = vpack.c.b16 %v4077, %v4069
    %v6862 = vpack.c.b16 %v4078, %v4070
    %v6863 = vpack.c.b16 %v4079, %v4071
    %v6864 = vpack.c.b16 %v4080, %v4072
    %v6865 = vpack.c.b16 %v4081, %v4073
    %v6866 = vpack.c.b16 %v4082, %v4074
    %v6867 = vpack.c.b16 %v4083, %v4075
    %v6868 = vpack.c.b16 %v4084, %v4076
    %v6869 = vpack.c.b16 %v4093, %v4085
    %v6870 = vpack.c.b16 %v4094, %v4086
    %v6871 = vpack.c.b16 %v4095, %v4087
    %v6872 = vpack.c.b16 %v4096, %v4088
    %v6873 = vpack.c.b16 %v4097, %v4089
    %v6874 = vpack.c.b16 %v4098, %v4090
    %v6875 = vpack.c.b16 %v4099, %v4091
    %v6876 = vpack.c.b16 %v4100, %v4092
    %v6877 = vpack.c.b16 %v4109, %v4101
    %v6878 = vpack.c.b16 %v4110, %v4102
    %v6879 = vpack.c.b16 %v4111, %v4103
    %v6880 = vpack.c.b16 %v4112, %v4104
    %v6881 = vpack.c.b16 %v4113, %v4105
    %v6882 = vpack.c.b16 %v4114, %v4106
    %v6883 = vpack.c.b16 %v4115, %v4107
    %v6884 = vpack.c.b16 %v4116, %v4108
    %v6885 = vpack.c.b16 %v4125, %v4117
    %v6886 = vpack.c.b16 %v4126, %v4118
    %v6887 = vpack.c.b16 %v4127, %v4119
    %v6888 = vpack.c.b16 %v4128, %v4120
    %v6889 = vpack.c.b16 %v4129, %v4121
    %v6890 = vpack.c.b16 %v4130, %v4122
    %v6891 = vpack.c.b16 %v4131, %v4123
    %v6892 = vpack.c.b16 %v4132, %v4124
    %v6893 = vpack.c.b16 %v4141, %v4133
    %v6894 = vpack.c.b16 %v4142, %v4134
    %v6895 = vpack.c.b16 %v4143, %v4135
    %v6896 = vpack.c.b16 %v4144, %v4136
    %v6897 = vpack.c.b16 %v4145, %v4137
    %v6898 = vpack.c.b16 %v4146, %v4138
    %v6899 = vpack.c.b16 %v4147, %v4139
    %v6900 = vpack.c.b16 %v4148, %v4140
    %v6901 = vpack.c.b16 %v4157, %v4149
    %v6902 = vpack.c.b16 %v4158, %v4150
    %v6903 = vpack.c.b16 %v4159, %v4151
    %v6904 = vpack.c.b16 %v4160, %v4152
    %v6905 = vpack.c.b16 %v4161, %v4153
    %v6906 = vpack.c.b16 %v4162, %v4154
    %v6907 = vpack.c.b16 %v4163, %v4155
    %v6908 = vpack.c.b16 %v4164, %v4156
    %v6909 = vpack.c.b16 %v4173, %v4165
    %v6910 = vpack.c.b16 %v4174, %v4166
    %v6911 = vpack.c.b16 %v4175, %v4167
    %v6912 = vpack.c.b16 %v4176, %v4168
    %v6913 = vpack.c.b16 %v4177, %v4169
    %v6914 = vpack.c.b16 %v4178, %v4170
    %v6915 = vpack.c.b16 %v4179, %v4171
    %v6916 = vpack.c.b16 %v4180, %v4172
    %v6917 = vpack.c.b16 %v4189, %v4181
    %v6918 = vpack.c.b16 %v4190, %v4182
    %v6919 = vpack.c.b16 %v4191, %v4183
    %v6920 = vpack.c.b16 %v4192, %v4184
    %v6921 = vpack.c.b16 %v4193, %v4185
    %v6922 = vpack.c.b16 %v4194, %v4186
    %v6923 = vpack.c.b16 %v4195, %v4187
    %v6924 = vpack.c.b16 %v4196, %v4188
    %v6925 = vpack.c.b16 %v4205, %v4197
    %v6926 = vpack.c.b16 %v4206, %v4198
    %v6927 = vpack.c.b16 %v4207, %v4199
    %v6928 = vpack.c.b16 %v4208, %v4200
    %v6929 = vpack.c.b16 %v4209, %v4201
    %v6930 = vpack.c.b16 %v4210, %v4202
    %v6931 = vpack.c.b16 %v4211, %v4203
    %v6932 = vpack.c.b16 %v4212, %v4204
    %v6933 = vpack.c.b16 %v4221, %v4213
    %v6934 = vpack.c.b16 %v4222, %v4214
    %v6935 = vpack.c.b16 %v4223, %v4215
    %v6936 = vpack.c.b16 %v4224, %v4216
    %v6937 = vpack.c.b16 %v4225, %v4217
    %v6938 = vpack.c.b16 %v4226, %v4218
    %v6939 = vpack.c.b16 %v4227, %v4219
    %v6940 = vpack.c.b16 %v4228, %v4220
    %v6941 = vpack.c.b16 %v4237, %v4229
    %v6942 = vpack.c.b16 %v4238, %v4230
    %v6943 = vpack.c.b16 %v4239, %v4231
    %v6944 = vpack.c.b16 %v4240, %v4232
    %v6945 = vpack.c.b16 %v4241, %v4233
    %v6946 = vpack.c.b16 %v4242, %v4234
    %v6947 = vpack.c.b16 %v4243, %v4235
    %v6948 = vpack.c.b16 %v4244, %v4236
    %v6949 = vpack.c.b16 %v4253, %v4245
    %v6950 = vpack.c.b16 %v4254, %v4246
    %v6951 = vpack.c.b16 %v4255, %v4247
    %v6952 = vpack.c.b16 %v4256, %v4248
    %v6953 = vpack.c.b16 %v4257, %v4249
    %v6954 = vpack.c.b16 %v4258, %v4250
    %v6955 = vpack.c.b16 %v4259, %v4251
    %v6956 = vpack.c.b16 %v4260, %v4252
    %v6957 = vpack.c.b16 %v4269, %v4261
    %v6958 = vpack.c.b16 %v4270, %v4262
    %v6959 = vpack.c.b16 %v4271, %v4263
    %v6960 = vpack.c.b16 %v4272, %v4264
    %v6961 = vpack.c.b16 %v4273, %v4265
    %v6962 = vpack.c.b16 %v4274, %v4266
    %v6963 = vpack.c.b16 %v4275, %v4267
    %v6964 = vpack.c.b16 %v4276, %v4268
    %v6965 = vpack.c.b16 %v4285, %v4277
    %v6966 = vpack.c.b16 %v4286, %v4278
    %v6967 = vpack.c.b16 %v4287, %v4279
    %v6968 = vpack.c.b16 %v4288, %v4280
    %v6969 = vpack.c.b16 %v4289, %v4281
    %v6970 = vpack.c.b16 %v4290, %v4282
    %v6971 = vpack.c.b16 %v4291, %v4283
    %v6972 = vpack.c.b16 %v4292, %v4284
    %v6973 = vpack.c.b16 %v4301, %v4293
    %v6974 = vpack.c.b16 %v4302, %v4294
    %v6975 = vpack.c.b16 %v4303, %v4295
    %v6976 = vpack.c.b16 %v4304, %v4296
    %v6977 = vpack.c.b16 %v4305, %v4297
    %v6978 = vpack.c.b16 %v4306, %v4298
    %v6979 = vpack.c.b16 %v4307, %v4299
    %v6980 = vpack.c.b16 %v4308, %v4300
    %v6981 = vpack.c.b16 %v4317, %v4309
    %v6982 = vpack.c.b16 %v4318, %v4310
    %v6983 = vpack.c.b16 %v4319, %v4311
    %v6984 = vpack.c.b16 %v4320, %v4312
    %v6985 = vpack.c.b16 %v4321, %v4313
    %v6986 = vpack.c.b16 %v4322, %v4314
    %v6987 = vpack.c.b16 %v4323, %v4315
    %v6988 = vpack.c.b16 %v4324, %v4316
    %v6989 = vpack.c.b16 %v4333, %v4325
    %v6990 = vpack.c.b16 %v4334, %v4326
    %v6991 = vpack.c.b16 %v4335, %v4327
    %v6992 = vpack.c.b16 %v4336, %v4328
    %v6993 = vpack.c.b16 %v4337, %v4329
    %v6994 = vpack.c.b16 %v4338, %v4330
    %v6995 = vpack.c.b16 %v4339, %v4331
    %v6996 = vpack.c.b16 %v4340, %v4332
    %v6997 = vpack.c.b16 %v4349, %v4341
    %v6998 = vpack.c.b16 %v4350, %v4342
    %v6999 = vpack.c.b16 %v4351, %v4343
    %v7000 = vpack.c.b16 %v4352, %v4344
    %v7001 = vpack.c.b16 %v4353, %v4345
    %v7002 = vpack.c.b16 %v4354, %v4346
    %v7003 = vpack.c.b16 %v4355, %v4347
    %v7004 = vpack.c.b16 %v4356, %v4348
    %v7005 = vpack.c.b16 %v4365, %v4357
    %v7006 = vpack.c.b16 %v4366, %v4358
    %v7007 = vpack.c.b16 %v4367, %v4359
    %v7008 = vpack.c.b16 %v4368, %v4360
    %v7009 = vpack.c.b16 %v4369, %v4361
    %v7010 = vpack.c.b16 %v4370, %v4362
    %v7011 = vpack.c.b16 %v4371, %v4363
    %v7012 = vpack.c.b16 %v4372, %v4364
    %v7013 = vpack.c.b16 %v4381, %v4373
    %v7014 = vpack.c.b16 %v4382, %v4374
    %v7015 = vpack.c.b16 %v4383, %v4375
    %v7016 = vpack.c.b16 %v4384, %v4376
    %v7017 = vpack.c.b16 %v4385, %v4377
    %v7018 = vpack.c.b16 %v4386, %v4378
    %v7019 = vpack.c.b16 %v4387, %v4379
    %v7020 = vpack.c.b16 %v4388, %v4380
    %v7021 = vpack.c.b16 %v4397, %v4389
    %v7022 = vpack.c.b16 %v4398, %v4390
    %v7023 = vpack.c.b16 %v4399, %v4391
    %v7024 = vpack.c.b16 %v4400, %v4392
    %v7025 = vpack.c.b16 %v4401, %v4393
    %v7026 = vpack.c.b16 %v4402, %v4394
    %v7027 = vpack.c.b16 %v4403, %v4395
    %v7028 = vpack.c.b16 %v4404, %v4396
    %v7029 = vpack.c.b16 %v4413, %v4405
    %v7030 = vpack.c.b16 %v4414, %v4406
    %v7031 = vpack.c.b16 %v4415, %v4407
    %v7032 = vpack.c.b16 %v4416, %v4408
    %v7033 = vpack.c.b16 %v4417, %v4409
    %v7034 = vpack.c.b16 %v4418, %v4410
    %v7035 = vpack.c.b16 %v4419, %v4411
    %v7036 = vpack.c.b16 %v4420, %v4412
    %v7037 = vpack.c.b16 %v4429, %v4421
    %v7038 = vpack.c.b16 %v4430, %v4422
    %v7039 = vpack.c.b16 %v4431, %v4423
    %v7040 = vpack.c.b16 %v4432, %v4424
    %v7041 = vpack.c.b16 %v4433, %v4425
    %v7042 = vpack.c.b16 %v4434, %v4426
    %v7043 = vpack.c.b16 %v4435, %v4427
    %v7044 = vpack.c.b16 %v4436, %v4428
    %v7045 = vpack.c.b16 %v4445, %v4437
    %v7046 = vpack.c.b16 %v4446, %v4438
    %v7047 = vpack.c.b16 %v4447, %v4439
    %v7048 = vpack.c.b16 %v4448, %v4440
    %v7049 = vpack.c.b16 %v4449, %v4441
    %v7050 = vpack.c.b16 %v4450, %v4442
    %v7051 = vpack.c.b16 %v4451, %v4443
    %v7052 = vpack.c.b16 %v4452, %v4444
    %v7053 = vpack.c.b16 %v4461, %v4453
    %v7054 = vpack.c.b16 %v4462, %v4454
    %v7055 = vpack.c.b16 %v4463, %v4455
    %v7056 = vpack.c.b16 %v4464, %v4456
    %v7057 = vpack.c.b16 %v4465, %v4457
    %v7058 = vpack.c.b16 %v4466, %v4458
    %v7059 = vpack.c.b16 %v4467, %v4459
    %v7060 = vpack.c.b16 %v4468, %v4460
    %v7061 = vpack.c.b16 %v4477, %v4469
    %v7062 = vpack.c.b16 %v4478, %v4470
    %v7063 = vpack.c.b16 %v4479, %v4471
    %v7064 = vpack.c.b16 %v4480, %v4472
    %v7065 = vpack.c.b16 %v4481, %v4473
    %v7066 = vpack.c.b16 %v4482, %v4474
    %v7067 = vpack.c.b16 %v4483, %v4475
    %v7068 = vpack.c.b16 %v4484, %v4476
    %v7069 = vpack.c.b16 %v4493, %v4485
    %v7070 = vpack.c.b16 %v4494, %v4486
    %v7071 = vpack.c.b16 %v4495, %v4487
    %v7072 = vpack.c.b16 %v4496, %v4488
    %v7073 = vpack.c.b16 %v4497, %v4489
    %v7074 = vpack.c.b16 %v4498, %v4490
    %v7075 = vpack.c.b16 %v4499, %v4491
    %v7076 = vpack.c.b16 %v4500, %v4492
    %v7077 = vpack.c.b16 %v4509, %v4501
    %v7078 = vpack.c.b16 %v4510, %v4502
    %v7079 = vpack.c.b16 %v4511, %v4503
    %v7080 = vpack.c.b16 %v4512, %v4504
    %v7081 = vpack.c.b16 %v4513, %v4505
    %v7082 = vpack.c.b16 %v4514, %v4506
    %v7083 = vpack.c.b16 %v4515, %v4507
    %v7084 = vpack.c.b16 %v4516, %v4508
    %v7085 = vpack.c.b16 %v4525, %v4517
    %v7086 = vpack.c.b16 %v4526, %v4518
    %v7087 = vpack.c.b16 %v4527, %v4519
    %v7088 = vpack.c.b16 %v4528, %v4520
    %v7089 = vpack.c.b16 %v4529, %v4521
    %v7090 = vpack.c.b16 %v4530, %v4522
    %v7091 = vpack.c.b16 %v4531, %v4523
    %v7092 = vpack.c.b16 %v4532, %v4524
    %v7093 = vpack.c.b16 %v4541, %v4533
    %v7094 = vpack.c.b16 %v4542, %v4534
    %v7095 = vpack.c.b16 %v4543, %v4535
    %v7096 = vpack.c.b16 %v4544, %v4536
    %v7097 = vpack.c.b16 %v4545, %v4537
    %v7098 = vpack.c.b16 %v4546, %v4538
    %v7099 = vpack.c.b16 %v4547, %v4539
    %v7100 = vpack.c.b16 %v4548, %v4540
    %v7101 = vpack.c.b16 %v4557, %v4549
    %v7102 = vpack.c.b16 %v4558, %v4550
    %v7103 = vpack.c.b16 %v4559, %v4551
    %v7104 = vpack.c.b16 %v4560, %v4552
    %v7105 = vpack.c.b16 %v4561, %v4553
    %v7106 = vpack.c.b16 %v4562, %v4554
    %v7107 = vpack.c.b16 %v4563, %v4555
    %v7108 = vpack.c.b16 %v4564, %v4556
    %v7109 = vpack.c.b16 %v4573, %v4565
    %v7110 = vpack.c.b16 %v4574, %v4566
    %v7111 = vpack.c.b16 %v4575, %v4567
    %v7112 = vpack.c.b16 %v4576, %v4568
    %v7113 = vpack.c.b16 %v4577, %v4569
    %v7114 = vpack.c.b16 %v4578, %v4570
    %v7115 = vpack.c.b16 %v4579, %v4571
    %v7116 = vpack.c.b16 %v4580, %v4572
    %v7117 = vpack.c.b16 %v4589, %v4581
    %v7118 = vpack.c.b16 %v4590, %v4582
    %v7119 = vpack.c.b16 %v4591, %v4583
    %v7120 = vpack.c.b16 %v4592, %v4584
    %v7121 = vpack.c.b16 %v4593, %v4585
    %v7122 = vpack.c.b16 %v4594, %v4586
    %v7123 = vpack.c.b16 %v4595, %v4587
    %v7124 = vpack.c.b16 %v4596, %v4588
    %v7125 = vpack.c.b16 %v4605, %v4597
    %v7126 = vpack.c.b16 %v4606, %v4598
    %v7127 = vpack.c.b16 %v4607, %v4599
    %v7128 = vpack.c.b16 %v4608, %v4600
    %v7129 = vpack.c.b16 %v4609, %v4601
    %v7130 = vpack.c.b16 %v4610, %v4602
    %v7131 = vpack.c.b16 %v4611, %v4603
    %v7132 = vpack.c.b16 %v4612, %v4604
    %v7133 = vpack.c.b16 %v4621, %v4613
    %v7134 = vpack.c.b16 %v4622, %v4614
    %v7135 = vpack.c.b16 %v4623, %v4615
    %v7136 = vpack.c.b16 %v4624, %v4616
    %v7137 = vpack.c.b16 %v4625, %v4617
    %v7138 = vpack.c.b16 %v4626, %v4618
    %v7139 = vpack.c.b16 %v4627, %v4619
    %v7140 = vpack.c.b16 %v4628, %v4620
    %v7141 = vpack.c.b16 %v4637, %v4629
    %v7142 = vpack.c.b16 %v4638, %v4630
    %v7143 = vpack.c.b16 %v4639, %v4631
    %v7144 = vpack.c.b16 %v4640, %v4632
    %v7145 = vpack.c.b16 %v4641, %v4633
    %v7146 = vpack.c.b16 %v4642, %v4634
    %v7147 = vpack.c.b16 %v4643, %v4635
    %v7148 = vpack.c.b16 %v4644, %v4636
    %v7149 = vpack.c.b16 %v4653, %v4645
    %v7150 = vpack.c.b16 %v4654, %v4646
    %v7151 = vpack.c.b16 %v4655, %v4647
    %v7152 = vpack.c.b16 %v4656, %v4648
    %v7153 = vpack.c.b16 %v4657, %v4649
    %v7154 = vpack.c.b16 %v4658, %v4650
    %v7155 = vpack.c.b16 %v4659, %v4651
    %v7156 = vpack.c.b16 %v4660, %v4652
    %v7157 = vpack.c.b16 %v4669, %v4661
    %v7158 = vpack.c.b16 %v4670, %v4662
    %v7159 = vpack.c.b16 %v4671, %v4663
    %v7160 = vpack.c.b16 %v4672, %v4664
    %v7161 = vpack.c.b16 %v4673, %v4665
    %v7162 = vpack.c.b16 %v4674, %v4666
    %v7163 = vpack.c.b16 %v4675, %v4667
    %v7164 = vpack.c.b16 %v4676, %v4668
    %v7165 = vpack.c.b16 %v4685, %v4677
    %v7166 = vpack.c.b16 %v4686, %v4678
    %v7167 = vpack.c.b16 %v4687, %v4679
    %v7168 = vpack.c.b16 %v4688, %v4680
    %v7169 = vpack.c.b16 %v4689, %v4681
    %v7170 = vpack.c.b16 %v4690, %v4682
    %v7171 = vpack.c.b16 %v4691, %v4683
    %v7172 = vpack.c.b16 %v4692, %v4684
    %v7173 = vpack.c.b16 %v4701, %v4693
    %v7174 = vpack.c.b16 %v4702, %v4694
    %v7175 = vpack.c.b16 %v4703, %v4695
    %v7176 = vpack.c.b16 %v4704, %v4696
    %v7177 = vpack.c.b16 %v4705, %v4697
    %v7178 = vpack.c.b16 %v4706, %v4698
    %v7179 = vpack.c.b16 %v4707, %v4699
    %v7180 = vpack.c.b16 %v4708, %v4700
    %v7181 = vpack.c.b16 %v4717, %v4709
    %v7182 = vpack.c.b16 %v4718, %v4710
    %v7183 = vpack.c.b16 %v4719, %v4711
    %v7184 = vpack.c.b16 %v4720, %v4712
    %v7185 = vpack.c.b16 %v4721, %v4713
    %v7186 = vpack.c.b16 %v4722, %v4714
    %v7187 = vpack.c.b16 %v4723, %v4715
    %v7188 = vpack.c.b16 %v4724, %v4716
    %v7189 = vpack.c.b16 %v4733, %v4725
    %v7190 = vpack.c.b16 %v4734, %v4726
    %v7191 = vpack.c.b16 %v4735, %v4727
    %v7192 = vpack.c.b16 %v4736, %v4728
    %v7193 = vpack.c.b16 %v4737, %v4729
    %v7194 = vpack.c.b16 %v4738, %v4730
    %v7195 = vpack.c.b16 %v4739, %v4731
    %v7196 = vpack.c.b16 %v4740, %v4732
    %v7197 = vpack.c.b16 %v4749, %v4741
    %v7198 = vpack.c.b16 %v4750, %v4742
    %v7199 = vpack.c.b16 %v4751, %v4743
    %v7200 = vpack.c.b16 %v4752, %v4744
    %v7201 = vpack.c.b16 %v4753, %v4745
    %v7202 = vpack.c.b16 %v4754, %v4746
    %v7203 = vpack.c.b16 %v4755, %v4747
    %v7204 = vpack.c.b16 %v4756, %v4748
    %v7205 = vpack.c.b16 %v4765, %v4757
    %v7206 = vpack.c.b16 %v4766, %v4758
    %v7207 = vpack.c.b16 %v4767, %v4759
    %v7208 = vpack.c.b16 %v4768, %v4760
    %v7209 = vpack.c.b16 %v4769, %v4761
    %v7210 = vpack.c.b16 %v4770, %v4762
    %v7211 = vpack.c.b16 %v4771, %v4763
    %v7212 = vpack.c.b16 %v4772, %v4764
    %v7213 = vpack.c.b16 %v4781, %v4773
    %v7214 = vpack.c.b16 %v4782, %v4774
    %v7215 = vpack.c.b16 %v4783, %v4775
    %v7216 = vpack.c.b16 %v4784, %v4776
    %v7217 = vpack.c.b16 %v4785, %v4777
    %v7218 = vpack.c.b16 %v4786, %v4778
    %v7219 = vpack.c.b16 %v4787, %v4779
    %v7220 = vpack.c.b16 %v4788, %v4780
    %v7221 = vpack.c.b16 %v4797, %v4789
    %v7222 = vpack.c.b16 %v4798, %v4790
    %v7223 = vpack.c.b16 %v4799, %v4791
    %v7224 = vpack.c.b16 %v4800, %v4792
    %v7225 = vpack.c.b16 %v4801, %v4793
    %v7226 = vpack.c.b16 %v4802, %v4794
    %v7227 = vpack.c.b16 %v4803, %v4795
    %v7228 = vpack.c.b16 %v4804, %v4796
    %v7229 = vpack.c.b16 %v4813, %v4805
    %v7230 = vpack.c.b16 %v4814, %v4806
    %v7231 = vpack.c.b16 %v4815, %v4807
    %v7232 = vpack.c.b16 %v4816, %v4808
    %v7233 = vpack.c.b16 %v4817, %v4809
    %v7234 = vpack.c.b16 %v4818, %v4810
    %v7235 = vpack.c.b16 %v4819, %v4811
    %v7236 = vpack.c.b16 %v4820, %v4812
    %v7237 = vpack.c.b16 %v4829, %v4821
    %v7238 = vpack.c.b16 %v4830, %v4822
    %v7239 = vpack.c.b16 %v4831, %v4823
    %v7240 = vpack.c.b16 %v4832, %v4824
    %v7241 = vpack.c.b16 %v4833, %v4825
    %v7242 = vpack.c.b16 %v4834, %v4826
    %v7243 = vpack.c.b16 %v4835, %v4827
    %v7244 = vpack.c.b16 %v4836, %v4828
    %v7245 = vpack.c.b16 %v4845, %v4837
    %v7246 = vpack.c.b16 %v4846, %v4838
    %v7247 = vpack.c.b16 %v4847, %v4839
    %v7248 = vpack.c.b16 %v4848, %v4840
    %v7249 = vpack.c.b16 %v4849, %v4841
    %v7250 = vpack.c.b16 %v4850, %v4842
    %v7251 = vpack.c.b16 %v4851, %v4843
    %v7252 = vpack.c.b16 %v4852, %v4844
    %v7253 = vpack.c.b16 %v4861, %v4853
    %v7254 = vpack.c.b16 %v4862, %v4854
    %v7255 = vpack.c.b16 %v4863, %v4855
    %v7256 = vpack.c.b16 %v4864, %v4856
    %v7257 = vpack.c.b16 %v4865, %v4857
    %v7258 = vpack.c.b16 %v4866, %v4858
    %v7259 = vpack.c.b16 %v4867, %v4859
    %v7260 = vpack.c.b16 %v4868, %v4860
    %v7261 = vpack.c.b16 %v4877, %v4869
    %v7262 = vpack.c.b16 %v4878, %v4870
    %v7263 = vpack.c.b16 %v4879, %v4871
    %v7264 = vpack.c.b16 %v4880, %v4872
    %v7265 = vpack.c.b16 %v4881, %v4873
    %v7266 = vpack.c.b16 %v4882, %v4874
    %v7267 = vpack.c.b16 %v4883, %v4875
    %v7268 = vpack.c.b16 %v4884, %v4876
    %v7269 = vpack.c.b16 %v4893, %v4885
    %v7270 = vpack.c.b16 %v4894, %v4886
    %v7271 = vpack.c.b16 %v4895, %v4887
    %v7272 = vpack.c.b16 %v4896, %v4888
    %v7273 = vpack.c.b16 %v4897, %v4889
    %v7274 = vpack.c.b16 %v4898, %v4890
    %v7275 = vpack.c.b16 %v4899, %v4891
    %v7276 = vpack.c.b16 %v4900, %v4892
    %v7277 = vpack.c.b16 %v4909, %v4901
    %v7278 = vpack.c.b16 %v4910, %v4902
    %v7279 = vpack.c.b16 %v4911, %v4903
    %v7280 = vpack.c.b16 %v4912, %v4904
    %v7281 = vpack.c.b16 %v4913, %v4905
    %v7282 = vpack.c.b16 %v4914, %v4906
    %v7283 = vpack.c.b16 %v4915, %v4907
    %v7284 = vpack.c.b16 %v4916, %v4908
    %v7285 = vpack.c.b16 %v4925, %v4917
    %v7286 = vpack.c.b16 %v4926, %v4918
    %v7287 = vpack.c.b16 %v4927, %v4919
    %v7288 = vpack.c.b16 %v4928, %v4920
    %v7289 = vpack.c.b16 %v4929, %v4921
    %v7290 = vpack.c.b16 %v4930, %v4922
    %v7291 = vpack.c.b16 %v4931, %v4923
    %v7292 = vpack.c.b16 %v4932, %v4924
    %v7293 = vpack.c.b16 %v4941, %v4933
    %v7294 = vpack.c.b16 %v4942, %v4934
    %v7295 = vpack.c.b16 %v4943, %v4935
    %v7296 = vpack.c.b16 %v4944, %v4936
    %v7297 = vpack.c.b16 %v4945, %v4937
    %v7298 = vpack.c.b16 %v4946, %v4938
    %v7299 = vpack.c.b16 %v4947, %v4939
    %v7300 = vpack.c.b16 %v4948, %v4940
    %v7301 = vpack.c.b16 %v4957, %v4949
    %v7302 = vpack.c.b16 %v4958, %v4950
    %v7303 = vpack.c.b16 %v4959, %v4951
    %v7304 = vpack.c.b16 %v4960, %v4952
    %v7305 = vpack.c.b16 %v4961, %v4953
    %v7306 = vpack.c.b16 %v4962, %v4954
    %v7307 = vpack.c.b16 %v4963, %v4955
    %v7308 = vpack.c.b16 %v4964, %v4956
    %v7309 = vpack.c.b16 %v4973, %v4965
    %v7310 = vpack.c.b16 %v4974, %v4966
    %v7311 = vpack.c.b16 %v4975, %v4967
    %v7312 = vpack.c.b16 %v4976, %v4968
    %v7313 = vpack.c.b16 %v4977, %v4969
    %v7314 = vpack.c.b16 %v4978, %v4970
    %v7315 = vpack.c.b16 %v4979, %v4971
    %v7316 = vpack.c.b16 %v4980, %v4972
    %v7317 = vpack.c.b16 %v4989, %v4981
    %v7318 = vpack.c.b16 %v4990, %v4982
    %v7319 = vpack.c.b16 %v4991, %v4983
    %v7320 = vpack.c.b16 %v4992, %v4984
    %v7321 = vpack.c.b16 %v4993, %v4985
    %v7322 = vpack.c.b16 %v4994, %v4986
    %v7323 = vpack.c.b16 %v4995, %v4987
    %v7324 = vpack.c.b16 %v4996, %v4988
    %v7325 = vpack.c.b16 %v5005, %v4997
    %v7326 = vpack.c.b16 %v5006, %v4998
    %v7327 = vpack.c.b16 %v5007, %v4999
    %v7328 = vpack.c.b16 %v5008, %v5000
    %v7329 = vpack.c.b16 %v5009, %v5001
    %v7330 = vpack.c.b16 %v5010, %v5002
    %v7331 = vpack.c.b16 %v5011, %v5003
    %v7332 = vpack.c.b16 %v5012, %v5004
    %v7333 = vpack.c.b16 %v5021, %v5013
    %v7334 = vpack.c.b16 %v5022, %v5014
    %v7335 = vpack.c.b16 %v5023, %v5015
    %v7336 = vpack.c.b16 %v5024, %v5016
    %v7337 = vpack.c.b16 %v5025, %v5017
    %v7338 = vpack.c.b16 %v5026, %v5018
    %v7339 = vpack.c.b16 %v5027, %v5019
    %v7340 = vpack.c.b16 %v5028, %v5020
    %v7341 = vpack.c.b16 %v5037, %v5029
    %v7342 = vpack.c.b16 %v5038, %v5030
    %v7343 = vpack.c.b16 %v5039, %v5031
    %v7344 = vpack.c.b16 %v5040, %v5032
    %v7345 = vpack.c.b16 %v5041, %v5033
    %v7346 = vpack.c.b16 %v5042, %v5034
    %v7347 = vpack.c.b16 %v5043, %v5035
    %v7348 = vpack.c.b16 %v5044, %v5036
    %v7349 = vpack.c.b16 %v5053, %v5045
    %v7350 = vpack.c.b16 %v5054, %v5046
    %v7351 = vpack.c.b16 %v5055, %v5047
    %v7352 = vpack.c.b16 %v5056, %v5048
    %v7353 = vpack.c.b16 %v5057, %v5049
    %v7354 = vpack.c.b16 %v5058, %v5050
    %v7355 = vpack.c.b16 %v5059, %v5051
    %v7356 = vpack.c.b16 %v5060, %v5052
    %v7357 = vpack.c.b16 %v5069, %v5061
    %v7358 = vpack.c.b16 %v5070, %v5062
    %v7359 = vpack.c.b16 %v5071, %v5063
    %v7360 = vpack.c.b16 %v5072, %v5064
    %v7361 = vpack.c.b16 %v5073, %v5065
    %v7362 = vpack.c.b16 %v5074, %v5066
    %v7363 = vpack.c.b16 %v5075, %v5067
    %v7364 = vpack.c.b16 %v5076, %v5068
    %v7365 = vpack.c.b16 %v5085, %v5077
    %v7366 = vpack.c.b16 %v5086, %v5078
    %v7367 = vpack.c.b16 %v5087, %v5079
    %v7368 = vpack.c.b16 %v5088, %v5080
    %v7369 = vpack.c.b16 %v5089, %v5081
    %v7370 = vpack.c.b16 %v5090, %v5082
    %v7371 = vpack.c.b16 %v5091, %v5083
    %v7372 = vpack.c.b16 %v5092, %v5084
    %v7373 = vpack.c.b16 %v5101, %v5093
    %v7374 = vpack.c.b16 %v5102, %v5094
    %v7375 = vpack.c.b16 %v5103, %v5095
    %v7376 = vpack.c.b16 %v5104, %v5096
    %v7377 = vpack.c.b16 %v5105, %v5097
    %v7378 = vpack.c.b16 %v5106, %v5098
    %v7379 = vpack.c.b16 %v5107, %v5099
    %v7380 = vpack.c.b16 %v5108, %v5100
    %v7381 = vpack.c.b16 %v5117, %v5109
    %v7382 = vpack.c.b16 %v5118, %v5110
    %v7383 = vpack.c.b16 %v5119, %v5111
    %v7384 = vpack.c.b16 %v5120, %v5112
    %v7385 = vpack.c.b16 %v5121, %v5113
    %v7386 = vpack.c.b16 %v5122, %v5114
    %v7387 = vpack.c.b16 %v5123, %v5115
    %v7388 = vpack.c.b16 %v5124, %v5116
    %v7389 = vpack.c.b16 %v5133, %v5125
    %v7390 = vpack.c.b16 %v5134, %v5126
    %v7391 = vpack.c.b16 %v5135, %v5127
    %v7392 = vpack.c.b16 %v5136, %v5128
    %v7393 = vpack.c.b16 %v5137, %v5129
    %v7394 = vpack.c.b16 %v5138, %v5130
    %v7395 = vpack.c.b16 %v5139, %v5131
    %v7396 = vpack.c.b16 %v5140, %v5132
    %v7397 = vpack.c.b16 %v5149, %v5141
    %v7398 = vpack.c.b16 %v5150, %v5142
    %v7399 = vpack.c.b16 %v5151, %v5143
    %v7400 = vpack.c.b16 %v5152, %v5144
    %v7401 = vpack.c.b16 %v5153, %v5145
    %v7402 = vpack.c.b16 %v5154, %v5146
    %v7403 = vpack.c.b16 %v5155, %v5147
    %v7404 = vpack.c.b16 %v5156, %v5148
    %v7405 = vpack.c.b16 %v5165, %v5157
    %v7406 = vpack.c.b16 %v5166, %v5158
    %v7407 = vpack.c.b16 %v5167, %v5159
    %v7408 = vpack.c.b16 %v5168, %v5160
    %v7409 = vpack.c.b16 %v5169, %v5161
    %v7410 = vpack.c.b16 %v5170, %v5162
    %v7411 = vpack.c.b16 %v5171, %v5163
    %v7412 = vpack.c.b16 %v5172, %v5164
    %v7413 = vpack.c.b16 %v5181, %v5173
    %v7414 = vpack.c.b16 %v5182, %v5174
    %v7415 = vpack.c.b16 %v5183, %v5175
    %v7416 = vpack.c.b16 %v5184, %v5176
    %v7417 = vpack.c.b16 %v5185, %v5177
    %v7418 = vpack.c.b16 %v5186, %v5178
    %v7419 = vpack.c.b16 %v5187, %v5179
    %v7420 = vpack.c.b16 %v5188, %v5180
    %v7421 = vpack.c.b16 %v5197, %v5189
    %v7422 = vpack.c.b16 %v5198, %v5190
    %v7423 = vpack.c.b16 %v5199, %v5191
    %v7424 = vpack.c.b16 %v5200, %v5192
    %v7425 = vpack.c.b16 %v5201, %v5193
    %v7426 = vpack.c.b16 %v5202, %v5194
    %v7427 = vpack.c.b16 %v5203, %v5195
    %v7428 = vpack.c.b16 %v5204, %v5196
    %v7429 = vpack.c.b16 %v5213, %v5205
    %v7430 = vpack.c.b16 %v5214, %v5206
    %v7431 = vpack.c.b16 %v5215, %v5207
    %v7432 = vpack.c.b16 %v5216, %v5208
    %v7433 = vpack.c.b16 %v5217, %v5209
    %v7434 = vpack.c.b16 %v5218, %v5210
    %v7435 = vpack.c.b16 %v5219, %v5211
    %v7436 = vpack.c.b16 %v5220, %v5212
    %v7437 = vpack.c.b16 %v5229, %v5221
    %v7438 = vpack.c.b16 %v5230, %v5222
    %v7439 = vpack.c.b16 %v5231, %v5223
    %v7440 = vpack.c.b16 %v5232, %v5224
    %v7441 = vpack.c.b16 %v5233, %v5225
    %v7442 = vpack.c.b16 %v5234, %v5226
    %v7443 = vpack.c.b16 %v5235, %v5227
    %v7444 = vpack.c.b16 %v5236, %v5228
    %v7445 = vpack.c.b16 %v5245, %v5237
    %v7446 = vpack.c.b16 %v5246, %v5238
    %v7447 = vpack.c.b16 %v5247, %v5239
    %v7448 = vpack.c.b16 %v5248, %v5240
    %v7449 = vpack.c.b16 %v5249, %v5241
    %v7450 = vpack.c.b16 %v5250, %v5242
    %v7451 = vpack.c.b16 %v5251, %v5243
    %v7452 = vpack.c.b16 %v5252, %v5244
    %v7453 = vpack.c.b16 %v5261, %v5253
    %v7454 = vpack.c.b16 %v5262, %v5254
    %v7455 = vpack.c.b16 %v5263, %v5255
    %v7456 = vpack.c.b16 %v5264, %v5256
    %v7457 = vpack.c.b16 %v5265, %v5257
    %v7458 = vpack.c.b16 %v5266, %v5258
    %v7459 = vpack.c.b16 %v5267, %v5259
    %v7460 = vpack.c.b16 %v5268, %v5260
    %v7461 = vpack.c.b16 %v5277, %v5269
    %v7462 = vpack.c.b16 %v5278, %v5270
    %v7463 = vpack.c.b16 %v5279, %v5271
    %v7464 = vpack.c.b16 %v5280, %v5272
    %v7465 = vpack.c.b16 %v5281, %v5273
    %v7466 = vpack.c.b16 %v5282, %v5274
    %v7467 = vpack.c.b16 %v5283, %v5275
    %v7468 = vpack.c.b16 %v5284, %v5276
    %v7469 = vpack.c.b16 %v5293, %v5285
    %v7470 = vpack.c.b16 %v5294, %v5286
    %v7471 = vpack.c.b16 %v5295, %v5287
    %v7472 = vpack.c.b16 %v5296, %v5288
    %v7473 = vpack.c.b16 %v5297, %v5289
    %v7474 = vpack.c.b16 %v5298, %v5290
    %v7475 = vpack.c.b16 %v5299, %v5291
    %v7476 = vpack.c.b16 %v5300, %v5292
    %v7477 = vpack.c.b16 %v5309, %v5301
    %v7478 = vpack.c.b16 %v5310, %v5302
    %v7479 = vpack.c.b16 %v5311, %v5303
    %v7480 = vpack.c.b16 %v5312, %v5304
    %v7481 = vpack.c.b16 %v5313, %v5305
    %v7482 = vpack.c.b16 %v5314, %v5306
    %v7483 = vpack.c.b16 %v5315, %v5307
    %v7484 = vpack.c.b16 %v5316, %v5308
    %v7485 = vpack.c.b16 %v5325, %v5317
    %v7486 = vpack.c.b16 %v5326, %v5318
    %v7487 = vpack.c.b16 %v5327, %v5319
    %v7488 = vpack.c.b16 %v5328, %v5320
    %v7489 = vpack.c.b16 %v5329, %v5321
    %v7490 = vpack.c.b16 %v5330, %v5322
    %v7491 = vpack.c.b16 %v5331, %v5323
    %v7492 = vpack.c.b16 %v5332, %v5324
    %v7493 = vpack.c.b16 %v5341, %v5333
    %v7494 = vpack.c.b16 %v5342, %v5334
    %v7495 = vpack.c.b16 %v5343, %v5335
    %v7496 = vpack.c.b16 %v5344, %v5336
    %v7497 = vpack.c.b16 %v5345, %v5337
    %v7498 = vpack.c.b16 %v5346, %v5338
    %v7499 = vpack.c.b16 %v5347, %v5339
    %v7500 = vpack.c.b16 %v5348, %v5340
    %v7501 = vpack.c.b16 %v5357, %v5349
    %v7502 = vpack.c.b16 %v5358, %v5350
    %v7503 = vpack.c.b16 %v5359, %v5351
    %v7504 = vpack.c.b16 %v5360, %v5352
    %v7505 = vpack.c.b16 %v5361, %v5353
    %v7506 = vpack.c.b16 %v5362, %v5354
    %v7507 = vpack.c.b16 %v5363, %v5355
    %v7508 = vpack.c.b16 %v5364, %v5356
    %v7509 = vpack.c.b16 %v5373, %v5365
    %v7510 = vpack.c.b16 %v5374, %v5366
    %v7511 = vpack.c.b16 %v5375, %v5367
    %v7512 = vpack.c.b16 %v5376, %v5368
    %v7513 = vpack.c.b16 %v5377, %v5369
    %v7514 = vpack.c.b16 %v5378, %v5370
    %v7515 = vpack.c.b16 %v5379, %v5371
    %v7516 = vpack.c.b16 %v5380, %v5372
    %v7517 = vpack.c.b16 %v5389, %v5381
    %v7518 = vpack.c.b16 %v5390, %v5382
    %v7519 = vpack.c.b16 %v5391, %v5383
    %v7520 = vpack.c.b16 %v5392, %v5384
    %v7521 = vpack.c.b16 %v5393, %v5385
    %v7522 = vpack.c.b16 %v5394, %v5386
    %v7523 = vpack.c.b16 %v5395, %v5387
    %v7524 = vpack.c.b16 %v5396, %v5388
    %v7525 = vpack.c.b16 %v5405, %v5397
    %v7526 = vpack.c.b16 %v5406, %v5398
    %v7527 = vpack.c.b16 %v5407, %v5399
    %v7528 = vpack.c.b16 %v5408, %v5400
    %v7529 = vpack.c.b16 %v5409, %v5401
    %v7530 = vpack.c.b16 %v5410, %v5402
    %v7531 = vpack.c.b16 %v5411, %v5403
    %v7532 = vpack.c.b16 %v5412, %v5404
    %v7533 = vpack.c.b16 %v5421, %v5413
    %v7534 = vpack.c.b16 %v5422, %v5414
    %v7535 = vpack.c.b16 %v5423, %v5415
    %v7536 = vpack.c.b16 %v5424, %v5416
    %v7537 = vpack.c.b16 %v5425, %v5417
    %v7538 = vpack.c.b16 %v5426, %v5418
    %v7539 = vpack.c.b16 %v5427, %v5419
    %v7540 = vpack.c.b16 %v5428, %v5420
    %v7541 = vpack.c.b16 %v5437, %v5429
    %v7542 = vpack.c.b16 %v5438, %v5430
    %v7543 = vpack.c.b16 %v5439, %v5431
    %v7544 = vpack.c.b16 %v5440, %v5432
    %v7545 = vpack.c.b16 %v5441, %v5433
    %v7546 = vpack.c.b16 %v5442, %v5434
    %v7547 = vpack.c.b16 %v5443, %v5435
    %v7548 = vpack.c.b16 %v5444, %v5436
    %v7549 = vpack.c.b16 %v5453, %v5445
    %v7550 = vpack.c.b16 %v5454, %v5446
    %v7551 = vpack.c.b16 %v5455, %v5447
    %v7552 = vpack.c.b16 %v5456, %v5448
    %v7553 = vpack.c.b16 %v5457, %v5449
    %v7554 = vpack.c.b16 %v5458, %v5450
    %v7555 = vpack.c.b16 %v5459, %v5451
    %v7556 = vpack.c.b16 %v5460, %v5452
    %v7557 = vpack.c.b16 %v5469, %v5461
    %v7558 = vpack.c.b16 %v5470, %v5462
    %v7559 = vpack.c.b16 %v5471, %v5463
    %v7560 = vpack.c.b16 %v5472, %v5464
    %v7561 = vpack.c.b16 %v5473, %v5465
    %v7562 = vpack.c.b16 %v5474, %v5466
    %v7563 = vpack.c.b16 %v5475, %v5467
    %v7564 = vpack.c.b16 %v5476, %v5468
    %v7565 = vpack.c.b16 %v5485, %v5477
    %v7566 = vpack.c.b16 %v5486, %v5478
    %v7567 = vpack.c.b16 %v5487, %v5479
    %v7568 = vpack.c.b16 %v5488, %v5480
    %v7569 = vpack.c.b16 %v5489, %v5481
    %v7570 = vpack.c.b16 %v5490, %v5482
    %v7571 = vpack.c.b16 %v5491, %v5483
    %v7572 = vpack.c.b16 %v5492, %v5484
    %v7573 = vpack.c.b16 %v5501, %v5493
    %v7574 = vpack.c.b16 %v5502, %v5494
    %v7575 = vpack.c.b16 %v5503, %v5495
    %v7576 = vpack.c.b16 %v5504, %v5496
    %v7577 = vpack.c.b16 %v5505, %v5497
    %v7578 = vpack.c.b16 %v5506, %v5498
    %v7579 = vpack.c.b16 %v5507, %v5499
    %v7580 = vpack.c.b16 %v5508, %v5500
    %v7581 = vpack.c.b16 %v5517, %v5509
    %v7582 = vpack.c.b16 %v5518, %v5510
    %v7583 = vpack.c.b16 %v5519, %v5511
    %v7584 = vpack.c.b16 %v5520, %v5512
    %v7585 = vpack.c.b16 %v5521, %v5513
    %v7586 = vpack.c.b16 %v5522, %v5514
    %v7587 = vpack.c.b16 %v5523, %v5515
    %v7588 = vpack.c.b16 %v5524, %v5516
    %v7589 = vpack.c.b16 %v5533, %v5525
    %v7590 = vpack.c.b16 %v5534, %v5526
    %v7591 = vpack.c.b16 %v5535, %v5527
    %v7592 = vpack.c.b16 %v5536, %v5528
    %v7593 = vpack.c.b16 %v5537, %v5529
    %v7594 = vpack.c.b16 %v5538, %v5530
    %v7595 = vpack.c.b16 %v5539, %v5531
    %v7596 = vpack.c.b16 %v5540, %v5532
    %v7597 = vpack.c.b16 %v5549, %v5541
    %v7598 = vpack.c.b16 %v5550, %v5542
    %v7599 = vpack.c.b16 %v5551, %v5543
    %v7600 = vpack.c.b16 %v5552, %v5544
    %v7601 = vpack.c.b16 %v5553, %v5545
    %v7602 = vpack.c.b16 %v5554, %v5546
    %v7603 = vpack.c.b16 %v5555, %v5547
    %v7604 = vpack.c.b16 %v5556, %v5548
    %v7605 = vpack.c.b16 %v5565, %v5557
    %v7606 = vpack.c.b16 %v5566, %v5558
    %v7607 = vpack.c.b16 %v5567, %v5559
    %v7608 = vpack.c.b16 %v5568, %v5560
    %v7609 = vpack.c.b16 %v5569, %v5561
    %v7610 = vpack.c.b16 %v5570, %v5562
    %v7611 = vpack.c.b16 %v5571, %v5563
    %v7612 = vpack.c.b16 %v5572, %v5564
    %v7613 = vpack.c.b16 %v5581, %v5573
    %v7614 = vpack.c.b16 %v5582, %v5574
    %v7615 = vpack.c.b16 %v5583, %v5575
    %v7616 = vpack.c.b16 %v5584, %v5576
    %v7617 = vpack.c.b16 %v5585, %v5577
    %v7618 = vpack.c.b16 %v5586, %v5578
    %v7619 = vpack.c.b16 %v5587, %v5579
    %v7620 = vpack.c.b16 %v5588, %v5580
    %v7621 = vpack.c.b16 %v5597, %v5589
    %v7622 = vpack.c.b16 %v5598, %v5590
    %v7623 = vpack.c.b16 %v5599, %v5591
    %v7624 = vpack.c.b16 %v5600, %v5592
    %v7625 = vpack.c.b16 %v5601, %v5593
    %v7626 = vpack.c.b16 %v5602, %v5594
    %v7627 = vpack.c.b16 %v5603, %v5595
    %v7628 = vpack.c.b16 %v5604, %v5596
    %v7629 = vpack.c.b16 %v5613, %v5605
    %v7630 = vpack.c.b16 %v5614, %v5606
    %v7631 = vpack.c.b16 %v5615, %v5607
    %v7632 = vpack.c.b16 %v5616, %v5608
    %v7633 = vpack.c.b16 %v5617, %v5609
    %v7634 = vpack.c.b16 %v5618, %v5610
    %v7635 = vpack.c.b16 %v5619, %v5611
    %v7636 = vpack.c.b16 %v5620, %v5612
    %v7637 = vpack.c.b16 %v5629, %v5621
    %v7638 = vpack.c.b16 %v5630, %v5622
    %v7639 = vpack.c.b16 %v5631, %v5623
    %v7640 = vpack.c.b16 %v5632, %v5624
    %v7641 = vpack.c.b16 %v5633, %v5625
    %v7642 = vpack.c.b16 %v5634, %v5626
    %v7643 = vpack.c.b16 %v5635, %v5627
    %v7644 = vpack.c.b16 %v5636, %v5628
    %v7645 = vpack.c.b16 %v5645, %v5637
    %v7646 = vpack.c.b16 %v5646, %v5638
    %v7647 = vpack.c.b16 %v5647, %v5639
    %v7648 = vpack.c.b16 %v5648, %v5640
    %v7649 = vpack.c.b16 %v5649, %v5641
    %v7650 = vpack.c.b16 %v5650, %v5642
    %v7651 = vpack.c.b16 %v5651, %v5643
    %v7652 = vpack.c.b16 %v5652, %v5644
    %v7653 = vpack.c.b16 %v5661, %v5653
    %v7654 = vpack.c.b16 %v5662, %v5654
    %v7655 = vpack.c.b16 %v5663, %v5655
    %v7656 = vpack.c.b16 %v5664, %v5656
    %v7657 = vpack.c.b16 %v5665, %v5657
    %v7658 = vpack.c.b16 %v5666, %v5658
    %v7659 = vpack.c.b16 %v5667, %v5659
    %v7660 = vpack.c.b16 %v5668, %v5660
    %v7661 = vpack.c.b16 %v5677, %v5669
    %v7662 = vpack.c.b16 %v5678, %v5670
    %v7663 = vpack.c.b16 %v5679, %v5671
    %v7664 = vpack.c.b16 %v5680, %v5672
    %v7665 = vpack.c.b16 %v5681, %v5673
    %v7666 = vpack.c.b16 %v5682, %v5674
    %v7667 = vpack.c.b16 %v5683, %v5675
    %v7668 = vpack.c.b16 %v5684, %v5676
    %v7669 = vpack.c.b16 %v5693, %v5685
    %v7670 = vpack.c.b16 %v5694, %v5686
    %v7671 = vpack.c.b16 %v5695, %v5687
    %v7672 = vpack.c.b16 %v5696, %v5688
    %v7673 = vpack.c.b16 %v5697, %v5689
    %v7674 = vpack.c.b16 %v5698, %v5690
    %v7675 = vpack.c.b16 %v5699, %v5691
    %v7676 = vpack.c.b16 %v5700, %v5692
    %v7677 = vpack.c.b16 %v5709, %v5701
    %v7678 = vpack.c.b16 %v5710, %v5702
    %v7679 = vpack.c.b16 %v5711, %v5703
    %v7680 = vpack.c.b16 %v5712, %v5704
    %v7681 = vpack.c.b16 %v5713, %v5705
    %v7682 = vpack.c.b16 %v5714, %v5706
    %v7683 = vpack.c.b16 %v5715, %v5707
    %v7684 = vpack.c.b16 %v5716, %v5708
    %v7685 = vpack.c.b16 %v5725, %v5717
    %v7686 = vpack.c.b16 %v5726, %v5718
    %v7687 = vpack.c.b16 %v5727, %v5719
    %v7688 = vpack.c.b16 %v5728, %v5720
    %v7689 = vpack.c.b16 %v5729, %v5721
    %v7690 = vpack.c.b16 %v5730, %v5722
    %v7691 = vpack.c.b16 %v5731, %v5723
    %v7692 = vpack.c.b16 %v5732, %v5724
    %v7693 = vpack.c.b16 %v5741, %v5733
    %v7694 = vpack.c.b16 %v5742, %v5734
    %v7695 = vpack.c.b16 %v5743, %v5735
    %v7696 = vpack.c.b16 %v5744, %v5736
    %v7697 = vpack.c.b16 %v5745, %v5737
    %v7698 = vpack.c.b16 %v5746, %v5738
    %v7699 = vpack.c.b16 %v5747, %v5739
    %v7700 = vpack.c.b16 %v5748, %v5740
    %v7701 = vpack.c.b16 %v5757, %v5749
    %v7702 = vpack.c.b16 %v5758, %v5750
    %v7703 = vpack.c.b16 %v5759, %v5751
    %v7704 = vpack.c.b16 %v5760, %v5752
    %v7705 = vpack.c.b16 %v5761, %v5753
    %v7706 = vpack.c.b16 %v5762, %v5754
    %v7707 = vpack.c.b16 %v5763, %v5755
    %v7708 = vpack.c.b16 %v5764, %v5756
    %v7709 = vpack.c.b16 %v5773, %v5765
    %v7710 = vpack.c.b16 %v5774, %v5766
    %v7711 = vpack.c.b16 %v5775, %v5767
    %v7712 = vpack.c.b16 %v5776, %v5768
    %v7713 = vpack.c.b16 %v5777, %v5769
    %v7714 = vpack.c.b16 %v5778, %v5770
    %v7715 = vpack.c.b16 %v5779, %v5771
    %v7716 = vpack.c.b16 %v5780, %v5772
    %v7717 = vpack.c.b16 %v5789, %v5781
    %v7718 = vpack.c.b16 %v5790, %v5782
    %v7719 = vpack.c.b16 %v5791, %v5783
    %v7720 = vpack.c.b16 %v5792, %v5784
    %v7721 = vpack.c.b16 %v5793, %v5785
    %v7722 = vpack.c.b16 %v5794, %v5786
    %v7723 = vpack.c.b16 %v5795, %v5787
    %v7724 = vpack.c.b16 %v5796, %v5788
    %v7725 = vpack.c.b16 %v5805, %v5797
    %v7726 = vpack.c.b16 %v5806, %v5798
    %v7727 = vpack.c.b16 %v5807, %v5799
    %v7728 = vpack.c.b16 %v5808, %v5800
    %v7729 = vpack.c.b16 %v5809, %v5801
    %v7730 = vpack.c.b16 %v5810, %v5802
    %v7731 = vpack.c.b16 %v5811, %v5803
    %v7732 = vpack.c.b16 %v5812, %v5804
    %v7733 = vpack.c.b16 %v5821, %v5813
    %v7734 = vpack.c.b16 %v5822, %v5814
    %v7735 = vpack.c.b16 %v5823, %v5815
    %v7736 = vpack.c.b16 %v5824, %v5816
    %v7737 = vpack.c.b16 %v5825, %v5817
    %v7738 = vpack.c.b16 %v5826, %v5818
    %v7739 = vpack.c.b16 %v5827, %v5819
    %v7740 = vpack.c.b16 %v5828, %v5820
    %v7741 = vpack.c.b16 %v5837, %v5829
    %v7742 = vpack.c.b16 %v5838, %v5830
    %v7743 = vpack.c.b16 %v5839, %v5831
    %v7744 = vpack.c.b16 %v5840, %v5832
    %v7745 = vpack.c.b16 %v5841, %v5833
    %v7746 = vpack.c.b16 %v5842, %v5834
    %v7747 = vpack.c.b16 %v5843, %v5835
    %v7748 = vpack.c.b16 %v5844, %v5836
    %v7749 = vpack.c.b16 %v5853, %v5845
    %v7750 = vpack.c.b16 %v5854, %v5846
    %v7751 = vpack.c.b16 %v5855, %v5847
    %v7752 = vpack.c.b16 %v5856, %v5848
    %v7753 = vpack.c.b16 %v5857, %v5849
    %v7754 = vpack.c.b16 %v5858, %v5850
    %v7755 = vpack.c.b16 %v5859, %v5851
    %v7756 = vpack.c.b16 %v5860, %v5852
    %v7757 = vpack.c.b16 %v5869, %v5861
    %v7758 = vpack.c.b16 %v5870, %v5862
    %v7759 = vpack.c.b16 %v5871, %v5863
    %v7760 = vpack.c.b16 %v5872, %v5864
    %v7761 = vpack.c.b16 %v5873, %v5865
    %v7762 = vpack.c.b16 %v5874, %v5866
    %v7763 = vpack.c.b16 %v5875, %v5867
    %v7764 = vpack.c.b16 %v5876, %v5868
    %v7765 = vpack.c.b16 %v5885, %v5877
    %v7766 = vpack.c.b16 %v5886, %v5878
    %v7767 = vpack.c.b16 %v5887, %v5879
    %v7768 = vpack.c.b16 %v5888, %v5880
    %v7769 = vpack.c.b16 %v5889, %v5881
    %v7770 = vpack.c.b16 %v5890, %v5882
    %v7771 = vpack.c.b16 %v5891, %v5883
    %v7772 = vpack.c.b16 %v5892, %v5884
    %v7773 = vpack.c.b16 %v5901, %v5893
    %v7774 = vpack.c.b16 %v5902, %v5894
    %v7775 = vpack.c.b16 %v5903, %v5895
    %v7776 = vpack.c.b16 %v5904, %v5896
    %v7777 = vpack.c.b16 %v5905, %v5897
    %v7778 = vpack.c.b16 %v5906, %v5898
    %v7779 = vpack.c.b16 %v5907, %v5899
    %v7780 = vpack.c.b16 %v5908, %v5900
    %v7781 = vpack.c.b16 %v5917, %v5909
    %v7782 = vpack.c.b16 %v5918, %v5910
    %v7783 = vpack.c.b16 %v5919, %v5911
    %v7784 = vpack.c.b16 %v5920, %v5912
    %v7785 = vpack.c.b16 %v5921, %v5913
    %v7786 = vpack.c.b16 %v5922, %v5914
    %v7787 = vpack.c.b16 %v5923, %v5915
    %v7788 = vpack.c.b16 %v5924, %v5916
    %v7789 = vpack.c.b16 %v5933, %v5925
    %v7790 = vpack.c.b16 %v5934, %v5926
    %v7791 = vpack.c.b16 %v5935, %v5927
    %v7792 = vpack.c.b16 %v5936, %v5928
    %v7793 = vpack.c.b16 %v5937, %v5929
    %v7794 = vpack.c.b16 %v5938, %v5930
    %v7795 = vpack.c.b16 %v5939, %v5931
    %v7796 = vpack.c.b16 %v5940, %v5932
    %v7797 = vpack.c.b16 %v5949, %v5941
    %v7798 = vpack.c.b16 %v5950, %v5942
    %v7799 = vpack.c.b16 %v5951, %v5943
    %v7800 = vpack.c.b16 %v5952, %v5944
    %v7801 = vpack.c.b16 %v5953, %v5945
    %v7802 = vpack.c.b16 %v5954, %v5946
    %v7803 = vpack.c.b16 %v5955, %v5947
    %v7804 = vpack.c.b16 %v5956, %v5948
    %v7805 = vpack.c.b16 %v5965, %v5957
    %v7806 = vpack.c.b16 %v5966, %v5958
    %v7807 = vpack.c.b16 %v5967, %v5959
    %v7808 = vpack.c.b16 %v5968, %v5960
    %v7809 = vpack.c.b16 %v5969, %v5961
    %v7810 = vpack.c.b16 %v5970, %v5962
    %v7811 = vpack.c.b16 %v5971, %v5963
    %v7812 = vpack.c.b16 %v5972, %v5964
    %v7813 = vpack.c.b16 %v5981, %v5973
    %v7814 = vpack.c.b16 %v5982, %v5974
    %v7815 = vpack.c.b16 %v5983, %v5975
    %v7816 = vpack.c.b16 %v5984, %v5976
    %v7817 = vpack.c.b16 %v5985, %v5977
    %v7818 = vpack.c.b16 %v5986, %v5978
    %v7819 = vpack.c.b16 %v5987, %v5979
    %v7820 = vpack.c.b16 %v5988, %v5980
    %v7821 = vpack.c.b16 %v5997, %v5989
    %v7822 = vpack.c.b16 %v5998, %v5990
    %v7823 = vpack.c.b16 %v5999, %v5991
    %v7824 = vpack.c.b16 %v6000, %v5992
    %v7825 = vpack.c.b16 %v6001, %v5993
    %v7826 = vpack.c.b16 %v6002, %v5994
    %v7827 = vpack.c.b16 %v6003, %v5995
    %v7828 = vpack.c.b16 %v6004, %v5996
    %v7829 = vpack.c.b16 %v6013, %v6005
    %v7830 = vpack.c.b16 %v6014, %v6006
    %v7831 = vpack.c.b16 %v6015, %v6007
    %v7832 = vpack.c.b16 %v6016, %v6008
    %v7833 = vpack.c.b16 %v6017, %v6009
    %v7834 = vpack.c.b16 %v6018, %v6010
    %v7835 = vpack.c.b16 %v6019, %v6011
    %v7836 = vpack.c.b16 %v6020, %v6012
    %v7837 = vpack.c.b16 %v6029, %v6021
    %v7838 = vpack.c.b16 %v6030, %v6022
    %v7839 = vpack.c.b16 %v6031, %v6023
    %v7840 = vpack.c.b16 %v6032, %v6024
    %v7841 = vpack.c.b16 %v6033, %v6025
    %v7842 = vpack.c.b16 %v6034, %v6026
    %v7843 = vpack.c.b16 %v6035, %v6027
    %v7844 = vpack.c.b16 %v6036, %v6028
    %v7845 = vpack.c.b16 %v6045, %v6037
    %v7846 = vpack.c.b16 %v6046, %v6038
    %v7847 = vpack.c.b16 %v6047, %v6039
    %v7848 = vpack.c.b16 %v6048, %v6040
    %v7849 = vpack.c.b16 %v6049, %v6041
    %v7850 = vpack.c.b16 %v6050, %v6042
    %v7851 = vpack.c.b16 %v6051, %v6043
    %v7852 = vpack.c.b16 %v6052, %v6044
    %v7853 = vpack.c.b16 %v6061, %v6053
    %v7854 = vpack.c.b16 %v6062, %v6054
    %v7855 = vpack.c.b16 %v6063, %v6055
    %v7856 = vpack.c.b16 %v6064, %v6056
    %v7857 = vpack.c.b16 %v6065, %v6057
    %v7858 = vpack.c.b16 %v6066, %v6058
    %v7859 = vpack.c.b16 %v6067, %v6059
    %v7860 = vpack.c.b16 %v6068, %v6060
    %v7861 = vpack.c.b16 %v6077, %v6069
    %v7862 = vpack.c.b16 %v6078, %v6070
    %v7863 = vpack.c.b16 %v6079, %v6071
    %v7864 = vpack.c.b16 %v6080, %v6072
    %v7865 = vpack.c.b16 %v6081, %v6073
    %v7866 = vpack.c.b16 %v6082, %v6074
    %v7867 = vpack.c.b16 %v6083, %v6075
    %v7868 = vpack.c.b16 %v6084, %v6076
    %v7869 = vpack.c.b16 %v6093, %v6085
    %v7870 = vpack.c.b16 %v6094, %v6086
    %v7871 = vpack.c.b16 %v6095, %v6087
    %v7872 = vpack.c.b16 %v6096, %v6088
    %v7873 = vpack.c.b16 %v6097, %v6089
    %v7874 = vpack.c.b16 %v6098, %v6090
    %v7875 = vpack.c.b16 %v6099, %v6091
    %v7876 = vpack.c.b16 %v6100, %v6092
    %v7877 = vpack.c.b16 %v6109, %v6101
    %v7878 = vpack.c.b16 %v6110, %v6102
    %v7879 = vpack.c.b16 %v6111, %v6103
    %v7880 = vpack.c.b16 %v6112, %v6104
    %v7881 = vpack.c.b16 %v6113, %v6105
    %v7882 = vpack.c.b16 %v6114, %v6106
    %v7883 = vpack.c.b16 %v6115, %v6107
    %v7884 = vpack.c.b16 %v6116, %v6108
    %v7885 = vpack.c.b16 %v6125, %v6117
    %v7886 = vpack.c.b16 %v6126, %v6118
    %v7887 = vpack.c.b16 %v6127, %v6119
    %v7888 = vpack.c.b16 %v6128, %v6120
    %v7889 = vpack.c.b16 %v6129, %v6121
    %v7890 = vpack.c.b16 %v6130, %v6122
    %v7891 = vpack.c.b16 %v6131, %v6123
    %v7892 = vpack.c.b16 %v6132, %v6124
    %v7893 = vpack.c.b16 %v6141, %v6133
    %v7894 = vpack.c.b16 %v6142, %v6134
    %v7895 = vpack.c.b16 %v6143, %v6135
    %v7896 = vpack.c.b16 %v6144, %v6136
    %v7897 = vpack.c.b16 %v6145, %v6137
    %v7898 = vpack.c.b16 %v6146, %v6138
    %v7899 = vpack.c.b16 %v6147, %v6139
    %v7900 = vpack.c.b16 %v6148, %v6140
    %v7901 = vpack.c.b16 %v6157, %v6149
    %v7902 = vpack.c.b16 %v6158, %v6150
    %v7903 = vpack.c.b16 %v6159, %v6151
    %v7904 = vpack.c.b16 %v6160, %v6152
    %v7905 = vpack.c.b16 %v6161, %v6153
    %v7906 = vpack.c.b16 %v6162, %v6154
    %v7907 = vpack.c.b16 %v6163, %v6155
    %v7908 = vpack.c.b16 %v6164, %v6156
    %v7909 = vpack.c.b16 %v6173, %v6165
    %v7910 = vpack.c.b16 %v6174, %v6166
    %v7911 = vpack.c.b16 %v6175, %v6167
    %v7912 = vpack.c.b16 %v6176, %v6168
    %v7913 = vpack.c.b16 %v6177, %v6169
    %v7914 = vpack.c.b16 %v6178, %v6170
    %v7915 = vpack.c.b16 %v6179, %v6171
    %v7916 = vpack.c.b16 %v6180, %v6172
    %v7917 = vpack.c.b16 %v6189, %v6181
    %v7918 = vpack.c.b16 %v6190, %v6182
    %v7919 = vpack.c.b16 %v6191, %v6183
    %v7920 = vpack.c.b16 %v6192, %v6184
    %v7921 = vpack.c.b16 %v6193, %v6185
    %v7922 = vpack.c.b16 %v6194, %v6186
    %v7923 = vpack.c.b16 %v6195, %v6187
    %v7924 = vpack.c.b16 %v6196, %v6188
    %v7925 = vpack.c.b16 %v6205, %v6197
    %v7926 = vpack.c.b16 %v6206, %v6198
    %v7927 = vpack.c.b16 %v6207, %v6199
    %v7928 = vpack.c.b16 %v6208, %v6200
    %v7929 = vpack.c.b16 %v6209, %v6201
    %v7930 = vpack.c.b16 %v6210, %v6202
    %v7931 = vpack.c.b16 %v6211, %v6203
    %v7932 = vpack.c.b16 %v6212, %v6204
    %v7933 = vpack.c.b16 %v6221, %v6213
    %v7934 = vpack.c.b16 %v6222, %v6214
    %v7935 = vpack.c.b16 %v6223, %v6215
    %v7936 = vpack.c.b16 %v6224, %v6216
    %v7937 = vpack.c.b16 %v6225, %v6217
    %v7938 = vpack.c.b16 %v6226, %v6218
    %v7939 = vpack.c.b16 %v6227, %v6219
    %v7940 = vpack.c.b16 %v6228, %v6220
    %v7941 = vpack.c.b16 %v6237, %v6229
    %v7942 = vpack.c.b16 %v6238, %v6230
    %v7943 = vpack.c.b16 %v6239, %v6231
    %v7944 = vpack.c.b16 %v6240, %v6232
    %v7945 = vpack.c.b16 %v6241, %v6233
    %v7946 = vpack.c.b16 %v6242, %v6234
    %v7947 = vpack.c.b16 %v6243, %v6235
    %v7948 = vpack.c.b16 %v6244, %v6236
    %v7949 = vpack.c.b16 %v6253, %v6245
    %v7950 = vpack.c.b16 %v6254, %v6246
    %v7951 = vpack.c.b16 %v6255, %v6247
    %v7952 = vpack.c.b16 %v6256, %v6248
    %v7953 = vpack.c.b16 %v6257, %v6249
    %v7954 = vpack.c.b16 %v6258, %v6250
    %v7955 = vpack.c.b16 %v6259, %v6251
    %v7956 = vpack.c.b16 %v6260, %v6252
    %v7957 = vpack.c.b16 %v6269, %v6261
    %v7958 = vpack.c.b16 %v6270, %v6262
    %v7959 = vpack.c.b16 %v6271, %v6263
    %v7960 = vpack.c.b16 %v6272, %v6264
    %v7961 = vpack.c.b16 %v6273, %v6265
    %v7962 = vpack.c.b16 %v6274, %v6266
    %v7963 = vpack.c.b16 %v6275, %v6267
    %v7964 = vpack.c.b16 %v6276, %v6268
    %v7965 = vpack.c.b16 %v6285, %v6277
    %v7966 = vpack.c.b16 %v6286, %v6278
    %v7967 = vpack.c.b16 %v6287, %v6279
    %v7968 = vpack.c.b16 %v6288, %v6280
    %v7969 = vpack.c.b16 %v6289, %v6281
    %v7970 = vpack.c.b16 %v6290, %v6282
    %v7971 = vpack.c.b16 %v6291, %v6283
    %v7972 = vpack.c.b16 %v6292, %v6284
    %v7973 = vpack.c.b16 %v6301, %v6293
    %v7974 = vpack.c.b16 %v6302, %v6294
    %v7975 = vpack.c.b16 %v6303, %v6295
    %v7976 = vpack.c.b16 %v6304, %v6296
    %v7977 = vpack.c.b16 %v6305, %v6297
    %v7978 = vpack.c.b16 %v6306, %v6298
    %v7979 = vpack.c.b16 %v6307, %v6299
    %v7980 = vpack.c.b16 %v6308, %v6300
    %v7981 = vpack.c.b16 %v6317, %v6309
    %v7982 = vpack.c.b16 %v6318, %v6310
    %v7983 = vpack.c.b16 %v6319, %v6311
    %v7984 = vpack.c.b16 %v6320, %v6312
    %v7985 = vpack.c.b16 %v6321, %v6313
    %v7986 = vpack.c.b16 %v6322, %v6314
    %v7987 = vpack.c.b16 %v6323, %v6315
    %v7988 = vpack.c.b16 %v6324, %v6316
    %v7989 = vpack.c.b16 %v6333, %v6325
    %v7990 = vpack.c.b16 %v6334, %v6326
    %v7991 = vpack.c.b16 %v6335, %v6327
    %v7992 = vpack.c.b16 %v6336, %v6328
    %v7993 = vpack.c.b16 %v6337, %v6329
    %v7994 = vpack.c.b16 %v6338, %v6330
    %v7995 = vpack.c.b16 %v6339, %v6331
    %v7996 = vpack.c.b16 %v6340, %v6332
    %v7997 = vpack.c.b16 %v6349, %v6341
    %v7998 = vpack.c.b16 %v6350, %v6342
    %v7999 = vpack.c.b16 %v6351, %v6343
    %v8000 = vpack.c.b16 %v6352, %v6344
    %v8001 = vpack.c.b16 %v6353, %v6345
    %v8002 = vpack.c.b16 %v6354, %v6346
    %v8003 = vpack.c.b16 %v6355, %v6347
    %v8004 = vpack.c.b16 %v6356, %v6348
    %v8005 = vpack.c.b16 %v6365, %v6357
    %v8006 = vpack.c.b16 %v6366, %v6358
    %v8007 = vpack.c.b16 %v6367, %v6359
    %v8008 = vpack.c.b16 %v6368, %v6360
    %v8009 = vpack.c.b16 %v6369, %v6361
    %v8010 = vpack.c.b16 %v6370, %v6362
    %v8011 = vpack.c.b16 %v6371, %v6363
    %v8012 = vpack.c.b16 %v6372, %v6364
    %v8013 = vpack.c.b16 %v6381, %v6373
    %v8014 = vpack.c.b16 %v6382, %v6374
    %v8015 = vpack.c.b16 %v6383, %v6375
    %v8016 = vpack.c.b16 %v6384, %v6376
    %v8017 = vpack.c.b16 %v6385, %v6377
    %v8018 = vpack.c.b16 %v6386, %v6378
    %v8019 = vpack.c.b16 %v6387, %v6379
    %v8020 = vpack.c.b16 %v6388, %v6380
    %v8021 = vpack.c.b16 %v6397, %v6389
    %v8022 = vpack.c.b16 %v6398, %v6390
    %v8023 = vpack.c.b16 %v6399, %v6391
    %v8024 = vpack.c.b16 %v6400, %v6392
    %v8025 = vpack.c.b16 %v6401, %v6393
    %v8026 = vpack.c.b16 %v6402, %v6394
    %v8027 = vpack.c.b16 %v6403, %v6395
    %v8028 = vpack.c.b16 %v6404, %v6396
    %v8029 = vpack.c.b16 %v6413, %v6405
    %v8030 = vpack.c.b16 %v6414, %v6406
    %v8031 = vpack.c.b16 %v6415, %v6407
    %v8032 = vpack.c.b16 %v6416, %v6408
    %v8033 = vpack.c.b16 %v6417, %v6409
    %v8034 = vpack.c.b16 %v6418, %v6410
    %v8035 = vpack.c.b16 %v6419, %v6411
    %v8036 = vpack.c.b16 %v6420, %v6412
    %v8037 = vpack.c.b16 %v6429, %v6421
    %v8038 = vpack.c.b16 %v6430, %v6422
    %v8039 = vpack.c.b16 %v6431, %v6423
    %v8040 = vpack.c.b16 %v6432, %v6424
    %v8041 = vpack.c.b16 %v6433, %v6425
    %v8042 = vpack.c.b16 %v6434, %v6426
    %v8043 = vpack.c.b16 %v6435, %v6427
    %v8044 = vpack.c.b16 %v6436, %v6428
    %v8045 = vpack.c.b16 %v6445, %v6437
    %v8046 = vpack.c.b16 %v6446, %v6438
    %v8047 = vpack.c.b16 %v6447, %v6439
    %v8048 = vpack.c.b16 %v6448, %v6440
    %v8049 = vpack.c.b16 %v6449, %v6441
    %v8050 = vpack.c.b16 %v6450, %v6442
    %v8051 = vpack.c.b16 %v6451, %v6443
    %v8052 = vpack.c.b16 %v6452, %v6444
    %v8053 = vpack.c.b16 %v6461, %v6453
    %v8054 = vpack.c.b16 %v6462, %v6454
    %v8055 = vpack.c.b16 %v6463, %v6455
    %v8056 = vpack.c.b16 %v6464, %v6456
    %v8057 = vpack.c.b16 %v6465, %v6457
    %v8058 = vpack.c.b16 %v6466, %v6458
    %v8059 = vpack.c.b16 %v6467, %v6459
    %v8060 = vpack.c.b16 %v6468, %v6460
    %v8061 = vpack.c.b16 %v6477, %v6469
    %v8062 = vpack.c.b16 %v6478, %v6470
    %v8063 = vpack.c.b16 %v6479, %v6471
    %v8064 = vpack.c.b16 %v6480, %v6472
    %v8065 = vpack.c.b16 %v6481, %v6473
    %v8066 = vpack.c.b16 %v6482, %v6474
    %v8067 = vpack.c.b16 %v6483, %v6475
    %v8068 = vpack.c.b16 %v6484, %v6476
    %v8069 = vpack.c.b16 %v6493, %v6485
    %v8070 = vpack.c.b16 %v6494, %v6486
    %v8071 = vpack.c.b16 %v6495, %v6487
    %v8072 = vpack.c.b16 %v6496, %v6488
    %v8073 = vpack.c.b16 %v6497, %v6489
    %v8074 = vpack.c.b16 %v6498, %v6490
    %v8075 = vpack.c.b16 %v6499, %v6491
    %v8076 = vpack.c.b16 %v6500, %v6492
    %v8077 = vpack.c.b16 %v6509, %v6501
    %v8078 = vpack.c.b16 %v6510, %v6502
    %v8079 = vpack.c.b16 %v6511, %v6503
    %v8080 = vpack.c.b16 %v6512, %v6504
    %v8081 = vpack.c.b16 %v6513, %v6505
    %v8082 = vpack.c.b16 %v6514, %v6506
    %v8083 = vpack.c.b16 %v6515, %v6507
    %v8084 = vpack.c.b16 %v6516, %v6508
    %vm9653 = vcmask 523264
    %v9655 = vsel %vm9653, %v202, 0
    %9657 = vmatprep.subr.bf16.mxu0 %v6574
    %9658 = vmatpush1.bf16.msra.mxu0 %v6573
    %9659 = vmatprep.subr.bf16.mxu0 %v6566
    %9660 = vmatpush1.bf16.msra.mxu0 %v6565
    %9661 = vmatprep.subr.bf16.mxu0 %v6558
    %9662 = vmatpush1.bf16.msra.mxu0 %v6557
    %9663 = vmatprep.subr.bf16.mxu0 %v6550
    %9664 = vmatpush1.bf16.msra.mxu0 %v6549
    %9665 = vmatprep.subr.bf16.mxu0 %v6542
    %9666 = vmatpush1.bf16.msra.mxu0 %v6541
    %9667 = vmatprep.subr.bf16.mxu0 %v6534
    %9668 = vmatpush1.bf16.msra.mxu0 %v6533
    %9669 = vmatprep.subr.bf16.mxu0 %v6526
    %9670 = vmatpush1.bf16.msra.mxu0 %v6525
    %9671 = vmatprep.subr.bf16.mxu0 %v6518
    %9672 = vmatpush1.bf16.msra.mxu0 %v6517
    %9673 = vmatprep.subr.bf16.mxu0 %v6638
    %9674 = vmatpush2.bf16.msra.mxu0 %v6637
    %9675 = vmatprep.subr.bf16.mxu0 %v6630
    %9676 = vmatpush2.bf16.msra.mxu0 %v6629
    %9677 = vmatprep.subr.bf16.mxu0 %v6622
    %9678 = vmatpush2.bf16.msra.mxu0 %v6621
    %9679 = vmatprep.subr.bf16.mxu0 %v6614
    %9680 = vmatpush2.bf16.msra.mxu0 %v6613
    %9681 = vmatprep.subr.bf16.mxu0 %v6606
    %9682 = vmatpush2.bf16.msra.mxu0 %v6605
    %9683 = vmatprep.subr.bf16.mxu0 %v6598
    %9684 = vmatpush2.bf16.msra.mxu0 %v6597
    %9685 = vmatprep.subr.bf16.mxu0 %v6590
    %9686 = vmatpush2.bf16.msra.mxu0 %v6589
    %9687 = vmatprep.subr.bf16.mxu0 %v6582
    %9688 = vmatpush2.bf16.msra.mxu0 %v6581
    %9689 = vmatprep.mubr.bf16.mxu0 %v179
    %9690 = vmatmul.mubr.bf16.gmra.mxu0 %v178
    %v9691 = vpop.f32.mrf.mxu0
    %v9692 = vadd.f32 %v1776, %v9691
    %v9693 = vpop.f32.mrf.mxu0
    %v9694 = vadd.f32 %v1780, %v9693
    %v9695 = vpop.f32.mrf.mxu0
    %v9696 = vpop.f32.mrf.mxu0
    %9697 = vdwg.mxu0
    %9698 = vmatprep.subr.bf16.mxu0 %v6702
    %9699 = vmatpush1.bf16.msra.mxu0 %v6701
    %9700 = vmatprep.subr.bf16.mxu0 %v6694
    %9701 = vmatpush1.bf16.msra.mxu0 %v6693
    %9702 = vmatprep.subr.bf16.mxu0 %v6686
    %9703 = vmatpush1.bf16.msra.mxu0 %v6685
    %9704 = vmatprep.subr.bf16.mxu0 %v6678
    %9705 = vmatpush1.bf16.msra.mxu0 %v6677
    %9706 = vmatprep.subr.bf16.mxu0 %v6670
    %9707 = vmatpush1.bf16.msra.mxu0 %v6669
    %9708 = vmatprep.subr.bf16.mxu0 %v6662
    %9709 = vmatpush1.bf16.msra.mxu0 %v6661
    %9710 = vmatprep.subr.bf16.mxu0 %v6654
    %9711 = vmatpush1.bf16.msra.mxu0 %v6653
    %9712 = vmatprep.subr.bf16.mxu0 %v6646
    %9713 = vmatpush1.bf16.msra.mxu0 %v6645
    %9714 = vmatprep.subr.bf16.mxu0 %v6766
    %9715 = vmatpush2.bf16.msra.mxu0 %v6765
    %9716 = vmatprep.subr.bf16.mxu0 %v6758
    %9717 = vmatpush2.bf16.msra.mxu0 %v6757
    %9718 = vmatprep.subr.bf16.mxu0 %v6750
    %9719 = vmatpush2.bf16.msra.mxu0 %v6749
    %9720 = vmatprep.subr.bf16.mxu0 %v6742
    %9721 = vmatpush2.bf16.msra.mxu0 %v6741
    %9722 = vmatprep.subr.bf16.mxu0 %v6734
    %9723 = vmatpush2.bf16.msra.mxu0 %v6733
    %9724 = vmatprep.subr.bf16.mxu0 %v6726
    %9725 = vmatpush2.bf16.msra.mxu0 %v6725
    %9726 = vmatprep.subr.bf16.mxu0 %v6718
    %9727 = vmatpush2.bf16.msra.mxu0 %v6717
    %9728 = vmatprep.subr.bf16.mxu0 %v6710
    %9729 = vmatpush2.bf16.msra.mxu0 %v6709
    %9730 = vmatprep.mubr.bf16.mxu0 %v181
    %9731 = vmatmul.mubr.bf16.gmra.mxu0 %v180
    %v9732 = vpop.f32.mrf.mxu0
    %v9733 = vadd.f32 %v9692, %v9732
    %v9734 = vpop.f32.mrf.mxu0
    %v9735 = vadd.f32 %v9694, %v9734
    %v9736 = vpop.f32.mrf.mxu0
    %v9737 = vpop.f32.mrf.mxu0
    %9738 = vdwg.mxu0
    %9739 = vmatprep.subr.bf16.mxu0 %v6830
    %9740 = vmatpush1.bf16.msra.mxu0 %v6829
    %9741 = vmatprep.subr.bf16.mxu0 %v6822
    %9742 = vmatpush1.bf16.msra.mxu0 %v6821
    %9743 = vmatprep.subr.bf16.mxu0 %v6814
    %9744 = vmatpush1.bf16.msra.mxu0 %v6813
    %9745 = vmatprep.subr.bf16.mxu0 %v6806
    %9746 = vmatpush1.bf16.msra.mxu0 %v6805
    %9747 = vmatprep.subr.bf16.mxu0 %v6798
    %9748 = vmatpush1.bf16.msra.mxu0 %v6797
    %9749 = vmatprep.subr.bf16.mxu0 %v6790
    %9750 = vmatpush1.bf16.msra.mxu0 %v6789
    %9751 = vmatprep.subr.bf16.mxu0 %v6782
    %9752 = vmatpush1.bf16.msra.mxu0 %v6781
    %9753 = vmatprep.subr.bf16.mxu0 %v6774
    %9754 = vmatpush1.bf16.msra.mxu0 %v6773
    %9755 = vmatprep.subr.bf16.mxu0 %v6894
    %9756 = vmatpush2.bf16.msra.mxu0 %v6893
    %9757 = vmatprep.subr.bf16.mxu0 %v6886
    %9758 = vmatpush2.bf16.msra.mxu0 %v6885
    %9759 = vmatprep.subr.bf16.mxu0 %v6878
    %9760 = vmatpush2.bf16.msra.mxu0 %v6877
    %9761 = vmatprep.subr.bf16.mxu0 %v6870
    %9762 = vmatpush2.bf16.msra.mxu0 %v6869
    %9763 = vmatprep.subr.bf16.mxu0 %v6862
    %9764 = vmatpush2.bf16.msra.mxu0 %v6861
    %9765 = vmatprep.subr.bf16.mxu0 %v6854
    %9766 = vmatpush2.bf16.msra.mxu0 %v6853
    %9767 = vmatprep.subr.bf16.mxu0 %v6846
    %9768 = vmatpush2.bf16.msra.mxu0 %v6845
    %9769 = vmatprep.subr.bf16.mxu0 %v6838
    %9770 = vmatpush2.bf16.msra.mxu0 %v6837
    %9771 = vmatprep.mubr.bf16.mxu0 %v183
    %9772 = vmatmul.mubr.bf16.gmra.mxu0 %v182
    %v9773 = vpop.f32.mrf.mxu0
    %v9774 = vadd.f32 %v9733, %v9773
    %v9775 = vpop.f32.mrf.mxu0
    %v9776 = vadd.f32 %v9735, %v9775
    %v9777 = vpop.f32.mrf.mxu0
    %v9778 = vpop.f32.mrf.mxu0
    %9779 = vdwg.mxu0
    %9780 = vmatprep.subr.bf16.mxu0 %v6958
    %9781 = vmatpush1.bf16.msra.mxu0 %v6957
    %9782 = vmatprep.subr.bf16.mxu0 %v6950
    %9783 = vmatpush1.bf16.msra.mxu0 %v6949
    %9784 = vmatprep.subr.bf16.mxu0 %v6942
    %9785 = vmatpush1.bf16.msra.mxu0 %v6941
    %9786 = vmatprep.subr.bf16.mxu0 %v6934
    %9787 = vmatpush1.bf16.msra.mxu0 %v6933
    %9788 = vmatprep.subr.bf16.mxu0 %v6926
    %9789 = vmatpush1.bf16.msra.mxu0 %v6925
    %9790 = vmatprep.subr.bf16.mxu0 %v6918
    %9791 = vmatpush1.bf16.msra.mxu0 %v6917
    %9792 = vmatprep.subr.bf16.mxu0 %v6910
    %9793 = vmatpush1.bf16.msra.mxu0 %v6909
    %9794 = vmatprep.subr.bf16.mxu0 %v6902
    %9795 = vmatpush1.bf16.msra.mxu0 %v6901
    %9796 = vmatprep.subr.bf16.mxu0 %v7022
    %9797 = vmatpush2.bf16.msra.mxu0 %v7021
    %9798 = vmatprep.subr.bf16.mxu0 %v7014
    %9799 = vmatpush2.bf16.msra.mxu0 %v7013
    %9800 = vmatprep.subr.bf16.mxu0 %v7006
    %9801 = vmatpush2.bf16.msra.mxu0 %v7005
    %9802 = vmatprep.subr.bf16.mxu0 %v6998
    %9803 = vmatpush2.bf16.msra.mxu0 %v6997
    %9804 = vmatprep.subr.bf16.mxu0 %v6990
    %9805 = vmatpush2.bf16.msra.mxu0 %v6989
    %9806 = vmatprep.subr.bf16.mxu0 %v6982
    %9807 = vmatpush2.bf16.msra.mxu0 %v6981
    %9808 = vmatprep.subr.bf16.mxu0 %v6974
    %9809 = vmatpush2.bf16.msra.mxu0 %v6973
    %9810 = vmatprep.subr.bf16.mxu0 %v6966
    %9811 = vmatpush2.bf16.msra.mxu0 %v6965
    %9812 = vmatprep.mubr.bf16.mxu0 %v185
    %9813 = vmatmul.mubr.bf16.gmra.mxu0 %v184
    %v9814 = vpop.f32.mrf.mxu0
    %v9815 = vadd.f32 %v9774, %v9814
    %v9816 = vpop.f32.mrf.mxu0
    %v9817 = vadd.f32 %v9776, %v9816
    %v9818 = vpop.f32.mrf.mxu0
    %v9819 = vpop.f32.mrf.mxu0
    %9820 = vdwg.mxu0
    %9821 = vmatprep.subr.bf16.mxu0 %v7086
    %9822 = vmatpush1.bf16.msra.mxu0 %v7085
    %9823 = vmatprep.subr.bf16.mxu0 %v7078
    %9824 = vmatpush1.bf16.msra.mxu0 %v7077
    %9825 = vmatprep.subr.bf16.mxu0 %v7070
    %9826 = vmatpush1.bf16.msra.mxu0 %v7069
    %9827 = vmatprep.subr.bf16.mxu0 %v7062
    %9828 = vmatpush1.bf16.msra.mxu0 %v7061
    %9829 = vmatprep.subr.bf16.mxu0 %v7054
    %9830 = vmatpush1.bf16.msra.mxu0 %v7053
    %9831 = vmatprep.subr.bf16.mxu0 %v7046
    %9832 = vmatpush1.bf16.msra.mxu0 %v7045
    %9833 = vmatprep.subr.bf16.mxu0 %v7038
    %9834 = vmatpush1.bf16.msra.mxu0 %v7037
    %9835 = vmatprep.subr.bf16.mxu0 %v7030
    %9836 = vmatpush1.bf16.msra.mxu0 %v7029
    %9837 = vmatprep.subr.bf16.mxu0 %v7150
    %9838 = vmatpush2.bf16.msra.mxu0 %v7149
    %9839 = vmatprep.subr.bf16.mxu0 %v7142
    %9840 = vmatpush2.bf16.msra.mxu0 %v7141
    %9841 = vmatprep.subr.bf16.mxu0 %v7134
    %9842 = vmatpush2.bf16.msra.mxu0 %v7133
    %9843 = vmatprep.subr.bf16.mxu0 %v7126
    %9844 = vmatpush2.bf16.msra.mxu0 %v7125
    %9845 = vmatprep.subr.bf16.mxu0 %v7118
    %9846 = vmatpush2.bf16.msra.mxu0 %v7117
    %9847 = vmatprep.subr.bf16.mxu0 %v7110
    %9848 = vmatpush2.bf16.msra.mxu0 %v7109
    %9849 = vmatprep.subr.bf16.mxu0 %v7102
    %9850 = vmatpush2.bf16.msra.mxu0 %v7101
    %9851 = vmatprep.subr.bf16.mxu0 %v7094
    %9852 = vmatpush2.bf16.msra.mxu0 %v7093
    %9853 = vmatprep.mubr.bf16.mxu0 %v187
    %9854 = vmatmul.mubr.bf16.gmra.mxu0 %v186
    %v9855 = vpop.f32.mrf.mxu0
    %v9856 = vadd.f32 %v9815, %v9855
    %v9857 = vpop.f32.mrf.mxu0
    %v9858 = vadd.f32 %v9817, %v9857
    %v9859 = vpop.f32.mrf.mxu0
    %v9860 = vpop.f32.mrf.mxu0
    %9861 = vdwg.mxu0
    %9862 = vmatprep.subr.bf16.mxu0 %v7214
    %9863 = vmatpush1.bf16.msra.mxu0 %v7213
    %9864 = vmatprep.subr.bf16.mxu0 %v7206
    %9865 = vmatpush1.bf16.msra.mxu0 %v7205
    %9866 = vmatprep.subr.bf16.mxu0 %v7198
    %9867 = vmatpush1.bf16.msra.mxu0 %v7197
    %9868 = vmatprep.subr.bf16.mxu0 %v7190
    %9869 = vmatpush1.bf16.msra.mxu0 %v7189
    %9870 = vmatprep.subr.bf16.mxu0 %v7182
    %9871 = vmatpush1.bf16.msra.mxu0 %v7181
    %9872 = vmatprep.subr.bf16.mxu0 %v7174
    %9873 = vmatpush1.bf16.msra.mxu0 %v7173
    %9874 = vmatprep.subr.bf16.mxu0 %v7166
    %9875 = vmatpush1.bf16.msra.mxu0 %v7165
    %9876 = vmatprep.subr.bf16.mxu0 %v7158
    %9877 = vmatpush1.bf16.msra.mxu0 %v7157
    %9878 = vmatprep.subr.bf16.mxu0 %v7278
    %9879 = vmatpush2.bf16.msra.mxu0 %v7277
    %9880 = vmatprep.subr.bf16.mxu0 %v7270
    %9881 = vmatpush2.bf16.msra.mxu0 %v7269
    %9882 = vmatprep.subr.bf16.mxu0 %v7262
    %9883 = vmatpush2.bf16.msra.mxu0 %v7261
    %9884 = vmatprep.subr.bf16.mxu0 %v7254
    %9885 = vmatpush2.bf16.msra.mxu0 %v7253
    %9886 = vmatprep.subr.bf16.mxu0 %v7246
    %9887 = vmatpush2.bf16.msra.mxu0 %v7245
    %9888 = vmatprep.subr.bf16.mxu0 %v7238
    %9889 = vmatpush2.bf16.msra.mxu0 %v7237
    %9890 = vmatprep.subr.bf16.mxu0 %v7230
    %9891 = vmatpush2.bf16.msra.mxu0 %v7229
    %9892 = vmatprep.subr.bf16.mxu0 %v7222
    %9893 = vmatpush2.bf16.msra.mxu0 %v7221
    %9894 = vmatprep.mubr.bf16.mxu0 %v189
    %9895 = vmatmul.mubr.bf16.gmra.mxu0 %v188
    %v9896 = vpop.f32.mrf.mxu0
    %v9897 = vadd.f32 %v9856, %v9896
    %v9898 = vpop.f32.mrf.mxu0
    %v9899 = vadd.f32 %v9858, %v9898
    %v9900 = vpop.f32.mrf.mxu0
    %v9901 = vpop.f32.mrf.mxu0
    %9902 = vdwg.mxu0
    %9903 = vmatprep.subr.bf16.mxu0 %v7342
    %9904 = vmatpush1.bf16.msra.mxu0 %v7341
    %9905 = vmatprep.subr.bf16.mxu0 %v7334
    %9906 = vmatpush1.bf16.msra.mxu0 %v7333
    %9907 = vmatprep.subr.bf16.mxu0 %v7326
    %9908 = vmatpush1.bf16.msra.mxu0 %v7325
    %9909 = vmatprep.subr.bf16.mxu0 %v7318
    %9910 = vmatpush1.bf16.msra.mxu0 %v7317
    %9911 = vmatprep.subr.bf16.mxu0 %v7310
    %9912 = vmatpush1.bf16.msra.mxu0 %v7309
    %9913 = vmatprep.subr.bf16.mxu0 %v7302
    %9914 = vmatpush1.bf16.msra.mxu0 %v7301
    %9915 = vmatprep.subr.bf16.mxu0 %v7294
    %9916 = vmatpush1.bf16.msra.mxu0 %v7293
    %9917 = vmatprep.subr.bf16.mxu0 %v7286
    %9918 = vmatpush1.bf16.msra.mxu0 %v7285
    %9919 = vmatprep.subr.bf16.mxu0 %v7406
    %9920 = vmatpush2.bf16.msra.mxu0 %v7405
    %9921 = vmatprep.subr.bf16.mxu0 %v7398
    %9922 = vmatpush2.bf16.msra.mxu0 %v7397
    %9923 = vmatprep.subr.bf16.mxu0 %v7390
    %9924 = vmatpush2.bf16.msra.mxu0 %v7389
    %9925 = vmatprep.subr.bf16.mxu0 %v7382
    %9926 = vmatpush2.bf16.msra.mxu0 %v7381
    %9927 = vmatprep.subr.bf16.mxu0 %v7374
    %9928 = vmatpush2.bf16.msra.mxu0 %v7373
    %9929 = vmatprep.subr.bf16.mxu0 %v7366
    %9930 = vmatpush2.bf16.msra.mxu0 %v7365
    %9931 = vmatprep.subr.bf16.mxu0 %v7358
    %9932 = vmatpush2.bf16.msra.mxu0 %v7357
    %9933 = vmatprep.subr.bf16.mxu0 %v7350
    %9934 = vmatpush2.bf16.msra.mxu0 %v7349
    %9935 = vmatprep.mubr.bf16.mxu0 %v191
    %9936 = vmatmul.mubr.bf16.gmra.mxu0 %v190
    %v9937 = vpop.f32.mrf.mxu0
    %v9938 = vadd.f32 %v9897, %v9937
    %v9939 = vpop.f32.mrf.mxu0
    %v9940 = vadd.f32 %v9899, %v9939
    %v9941 = vpop.f32.mrf.mxu0
    %v9942 = vpop.f32.mrf.mxu0
    %9943 = vdwg.mxu0
    %9944 = vmatprep.subr.bf16.mxu0 %v7470
    %9945 = vmatpush1.bf16.msra.mxu0 %v7469
    %9946 = vmatprep.subr.bf16.mxu0 %v7462
    %9947 = vmatpush1.bf16.msra.mxu0 %v7461
    %9948 = vmatprep.subr.bf16.mxu0 %v7454
    %9949 = vmatpush1.bf16.msra.mxu0 %v7453
    %9950 = vmatprep.subr.bf16.mxu0 %v7446
    %9951 = vmatpush1.bf16.msra.mxu0 %v7445
    %9952 = vmatprep.subr.bf16.mxu0 %v7438
    %9953 = vmatpush1.bf16.msra.mxu0 %v7437
    %9954 = vmatprep.subr.bf16.mxu0 %v7430
    %9955 = vmatpush1.bf16.msra.mxu0 %v7429
    %9956 = vmatprep.subr.bf16.mxu0 %v7422
    %9957 = vmatpush1.bf16.msra.mxu0 %v7421
    %9958 = vmatprep.subr.bf16.mxu0 %v7414
    %9959 = vmatpush1.bf16.msra.mxu0 %v7413
    %9960 = vmatprep.subr.bf16.mxu0 %v7534
    %9961 = vmatpush2.bf16.msra.mxu0 %v7533
    %9962 = vmatprep.subr.bf16.mxu0 %v7526
    %9963 = vmatpush2.bf16.msra.mxu0 %v7525
    %9964 = vmatprep.subr.bf16.mxu0 %v7518
    %9965 = vmatpush2.bf16.msra.mxu0 %v7517
    %9966 = vmatprep.subr.bf16.mxu0 %v7510
    %9967 = vmatpush2.bf16.msra.mxu0 %v7509
    %9968 = vmatprep.subr.bf16.mxu0 %v7502
    %9969 = vmatpush2.bf16.msra.mxu0 %v7501
    %9970 = vmatprep.subr.bf16.mxu0 %v7494
    %9971 = vmatpush2.bf16.msra.mxu0 %v7493
    %9972 = vmatprep.subr.bf16.mxu0 %v7486
    %9973 = vmatpush2.bf16.msra.mxu0 %v7485
    %9974 = vmatprep.subr.bf16.mxu0 %v7478
    %9975 = vmatpush2.bf16.msra.mxu0 %v7477
    %9976 = vmatprep.mubr.bf16.mxu0 %v193
    %9977 = vmatmul.mubr.bf16.gmra.mxu0 %v192
    %v9978 = vpop.f32.mrf.mxu0
    %v9979 = vadd.f32 %v9938, %v9978
    %v9980 = vpop.f32.mrf.mxu0
    %v9981 = vadd.f32 %v9940, %v9980
    %v9982 = vpop.f32.mrf.mxu0
    %v9983 = vpop.f32.mrf.mxu0
    %9984 = vdwg.mxu0
    %9985 = vmatprep.subr.bf16.mxu0 %v7598
    %9986 = vmatpush1.bf16.msra.mxu0 %v7597
    %9987 = vmatprep.subr.bf16.mxu0 %v7590
    %9988 = vmatpush1.bf16.msra.mxu0 %v7589
    %9989 = vmatprep.subr.bf16.mxu0 %v7582
    %9990 = vmatpush1.bf16.msra.mxu0 %v7581
    %9991 = vmatprep.subr.bf16.mxu0 %v7574
    %9992 = vmatpush1.bf16.msra.mxu0 %v7573
    %9993 = vmatprep.subr.bf16.mxu0 %v7566
    %9994 = vmatpush1.bf16.msra.mxu0 %v7565
    %9995 = vmatprep.subr.bf16.mxu0 %v7558
    %9996 = vmatpush1.bf16.msra.mxu0 %v7557
    %9997 = vmatprep.subr.bf16.mxu0 %v7550
    %9998 = vmatpush1.bf16.msra.mxu0 %v7549
    %9999 = vmatprep.subr.bf16.mxu0 %v7542
    %10000 = vmatpush1.bf16.msra.mxu0 %v7541
    %10001 = vmatprep.subr.bf16.mxu0 %v7662
    %10002 = vmatpush2.bf16.msra.mxu0 %v7661
    %10003 = vmatprep.subr.bf16.mxu0 %v7654
    %10004 = vmatpush2.bf16.msra.mxu0 %v7653
    %10005 = vmatprep.subr.bf16.mxu0 %v7646
    %10006 = vmatpush2.bf16.msra.mxu0 %v7645
    %10007 = vmatprep.subr.bf16.mxu0 %v7638
    %10008 = vmatpush2.bf16.msra.mxu0 %v7637
    %10009 = vmatprep.subr.bf16.mxu0 %v7630
    %10010 = vmatpush2.bf16.msra.mxu0 %v7629
    %10011 = vmatprep.subr.bf16.mxu0 %v7622
    %10012 = vmatpush2.bf16.msra.mxu0 %v7621
    %10013 = vmatprep.subr.bf16.mxu0 %v7614
    %10014 = vmatpush2.bf16.msra.mxu0 %v7613
    %10015 = vmatprep.subr.bf16.mxu0 %v7606
    %10016 = vmatpush2.bf16.msra.mxu0 %v7605
    %10017 = vmatprep.mubr.bf16.mxu0 %v195
    %10018 = vmatmul.mubr.bf16.gmra.mxu0 %v194
    %v10019 = vpop.f32.mrf.mxu0
    %v10020 = vadd.f32 %v9979, %v10019
    %v10021 = vpop.f32.mrf.mxu0
    %v10022 = vadd.f32 %v9981, %v10021
    %v10023 = vpop.f32.mrf.mxu0
    %v10024 = vpop.f32.mrf.mxu0
    %10025 = vdwg.mxu0
    %10026 = vmatprep.subr.bf16.mxu0 %v7726
    %10027 = vmatpush1.bf16.msra.mxu0 %v7725
    %10028 = vmatprep.subr.bf16.mxu0 %v7718
    %10029 = vmatpush1.bf16.msra.mxu0 %v7717
    %10030 = vmatprep.subr.bf16.mxu0 %v7710
    %10031 = vmatpush1.bf16.msra.mxu0 %v7709
    %10032 = vmatprep.subr.bf16.mxu0 %v7702
    %10033 = vmatpush1.bf16.msra.mxu0 %v7701
    %10034 = vmatprep.subr.bf16.mxu0 %v7694
    %10035 = vmatpush1.bf16.msra.mxu0 %v7693
    %10036 = vmatprep.subr.bf16.mxu0 %v7686
    %10037 = vmatpush1.bf16.msra.mxu0 %v7685
    %10038 = vmatprep.subr.bf16.mxu0 %v7678
    %10039 = vmatpush1.bf16.msra.mxu0 %v7677
    %10040 = vmatprep.subr.bf16.mxu0 %v7670
    %10041 = vmatpush1.bf16.msra.mxu0 %v7669
    %10042 = vmatprep.subr.bf16.mxu0 %v7790
    %10043 = vmatpush2.bf16.msra.mxu0 %v7789
    %10044 = vmatprep.subr.bf16.mxu0 %v7782
    %10045 = vmatpush2.bf16.msra.mxu0 %v7781
    %10046 = vmatprep.subr.bf16.mxu0 %v7774
    %10047 = vmatpush2.bf16.msra.mxu0 %v7773
    %10048 = vmatprep.subr.bf16.mxu0 %v7766
    %10049 = vmatpush2.bf16.msra.mxu0 %v7765
    %10050 = vmatprep.subr.bf16.mxu0 %v7758
    %10051 = vmatpush2.bf16.msra.mxu0 %v7757
    %10052 = vmatprep.subr.bf16.mxu0 %v7750
    %10053 = vmatpush2.bf16.msra.mxu0 %v7749
    %10054 = vmatprep.subr.bf16.mxu0 %v7742
    %10055 = vmatpush2.bf16.msra.mxu0 %v7741
    %10056 = vmatprep.subr.bf16.mxu0 %v7734
    %10057 = vmatpush2.bf16.msra.mxu0 %v7733
    %10058 = vmatprep.mubr.bf16.mxu0 %v197
    %10059 = vmatmul.mubr.bf16.gmra.mxu0 %v196
    %v10060 = vpop.f32.mrf.mxu0
    %v10061 = vadd.f32 %v10020, %v10060
    %v10062 = vpop.f32.mrf.mxu0
    %v10063 = vadd.f32 %v10022, %v10062
    %v10064 = vpop.f32.mrf.mxu0
    %v10065 = vpop.f32.mrf.mxu0
    %10066 = vdwg.mxu0
    %10067 = vmatprep.subr.bf16.mxu0 %v7854
    %10068 = vmatpush1.bf16.msra.mxu0 %v7853
    %10069 = vmatprep.subr.bf16.mxu0 %v7846
    %10070 = vmatpush1.bf16.msra.mxu0 %v7845
    %10071 = vmatprep.subr.bf16.mxu0 %v7838
    %10072 = vmatpush1.bf16.msra.mxu0 %v7837
    %10073 = vmatprep.subr.bf16.mxu0 %v7830
    %10074 = vmatpush1.bf16.msra.mxu0 %v7829
    %10075 = vmatprep.subr.bf16.mxu0 %v7822
    %10076 = vmatpush1.bf16.msra.mxu0 %v7821
    %10077 = vmatprep.subr.bf16.mxu0 %v7814
    %10078 = vmatpush1.bf16.msra.mxu0 %v7813
    %10079 = vmatprep.subr.bf16.mxu0 %v7806
    %10080 = vmatpush1.bf16.msra.mxu0 %v7805
    %10081 = vmatprep.subr.bf16.mxu0 %v7798
    %10082 = vmatpush1.bf16.msra.mxu0 %v7797
    %10083 = vmatprep.subr.bf16.mxu0 %v7918
    %10084 = vmatpush2.bf16.msra.mxu0 %v7917
    %10085 = vmatprep.subr.bf16.mxu0 %v7910
    %10086 = vmatpush2.bf16.msra.mxu0 %v7909
    %10087 = vmatprep.subr.bf16.mxu0 %v7902
    %10088 = vmatpush2.bf16.msra.mxu0 %v7901
    %10089 = vmatprep.subr.bf16.mxu0 %v7894
    %10090 = vmatpush2.bf16.msra.mxu0 %v7893
    %10091 = vmatprep.subr.bf16.mxu0 %v7886
    %10092 = vmatpush2.bf16.msra.mxu0 %v7885
    %10093 = vmatprep.subr.bf16.mxu0 %v7878
    %10094 = vmatpush2.bf16.msra.mxu0 %v7877
    %10095 = vmatprep.subr.bf16.mxu0 %v7870
    %10096 = vmatpush2.bf16.msra.mxu0 %v7869
    %10097 = vmatprep.subr.bf16.mxu0 %v7862
    %10098 = vmatpush2.bf16.msra.mxu0 %v7861
    %10099 = vmatprep.mubr.bf16.mxu0 %v199
    %10100 = vmatmul.mubr.bf16.gmra.mxu0 %v198
    %v10101 = vpop.f32.mrf.mxu0
    %v10102 = vadd.f32 %v10061, %v10101
    %v10103 = vpop.f32.mrf.mxu0
    %v10104 = vadd.f32 %v10063, %v10103
    %v10105 = vpop.f32.mrf.mxu0
    %v10106 = vpop.f32.mrf.mxu0
    %10107 = vdwg.mxu0
    %10108 = vmatprep.subr.bf16.mxu0 %v7982
    %10109 = vmatpush1.bf16.msra.mxu0 %v7981
    %10110 = vmatprep.subr.bf16.mxu0 %v7974
    %10111 = vmatpush1.bf16.msra.mxu0 %v7973
    %10112 = vmatprep.subr.bf16.mxu0 %v7966
    %10113 = vmatpush1.bf16.msra.mxu0 %v7965
    %10114 = vmatprep.subr.bf16.mxu0 %v7958
    %10115 = vmatpush1.bf16.msra.mxu0 %v7957
    %10116 = vmatprep.subr.bf16.mxu0 %v7950
    %10117 = vmatpush1.bf16.msra.mxu0 %v7949
    %10118 = vmatprep.subr.bf16.mxu0 %v7942
    %10119 = vmatpush1.bf16.msra.mxu0 %v7941
    %10120 = vmatprep.subr.bf16.mxu0 %v7934
    %10121 = vmatpush1.bf16.msra.mxu0 %v7933
    %10122 = vmatprep.subr.bf16.mxu0 %v7926
    %10123 = vmatpush1.bf16.msra.mxu0 %v7925
    %10124 = vmatprep.subr.bf16.mxu0 %v8046
    %10125 = vmatpush2.bf16.msra.mxu0 %v8045
    %10126 = vmatprep.subr.bf16.mxu0 %v8038
    %10127 = vmatpush2.bf16.msra.mxu0 %v8037
    %10128 = vmatprep.subr.bf16.mxu0 %v8030
    %10129 = vmatpush2.bf16.msra.mxu0 %v8029
    %10130 = vmatprep.subr.bf16.mxu0 %v8022
    %10131 = vmatpush2.bf16.msra.mxu0 %v8021
    %10132 = vmatprep.subr.bf16.mxu0 %v8014
    %10133 = vmatpush2.bf16.msra.mxu0 %v8013
    %10134 = vmatprep.subr.bf16.mxu0 %v8006
    %10135 = vmatpush2.bf16.msra.mxu0 %v8005
    %10136 = vmatprep.subr.bf16.mxu0 %v7998
    %10137 = vmatpush2.bf16.msra.mxu0 %v7997
    %10138 = vmatprep.subr.bf16.mxu0 %v7990
    %10139 = vmatpush2.bf16.msra.mxu0 %v7989
    %10140 = vmatprep.mubr.bf16.mxu0 %v201
    %10141 = vmatmul.mubr.bf16.gmra.mxu0 %v200
    %v10142 = vpop.f32.mrf.mxu0
    %v10143 = vadd.f32 %v10102, %v10142
    %v10144 = vpop.f32.mrf.mxu0
    %v10145 = vadd.f32 %v10104, %v10144
    %v10146 = vpop.f32.mrf.mxu0
    %v10147 = vpop.f32.mrf.mxu0
    %10148 = vdwg.mxu0
    %10149 = vmatprep.subr.bf16.mxu0 0
    %10150 = vmatpush1.bf16.msra.mxu0 0
    %10151 = vmatprep.subr.bf16.mxu0 0
    %10152 = vmatpush1.bf16.msra.mxu0 0
    %10153 = vmatprep.subr.bf16.mxu0 0
    %10154 = vmatpush1.bf16.msra.mxu0 0
    %10155 = vmatprep.subr.bf16.mxu0 0
    %10156 = vmatpush1.bf16.msra.mxu0 0
    %10157 = vmatprep.subr.bf16.mxu0 %v8078
    %10158 = vmatpush1.bf16.msra.mxu0 %v8077
    %10159 = vmatprep.subr.bf16.mxu0 %v8070
    %10160 = vmatpush1.bf16.msra.mxu0 %v8069
    %10161 = vmatprep.subr.bf16.mxu0 %v8062
    %10162 = vmatpush1.bf16.msra.mxu0 %v8061
    %10163 = vmatprep.subr.bf16.mxu0 %v8054
    %10164 = vmatpush1.bf16.msra.mxu0 %v8053
    %10165 = vmatprep.subr.bf16.mxu0 0
    %10166 = vmatpush2.bf16.msra.mxu0 0
    %10167 = vmatprep.subr.bf16.mxu0 0
    %10168 = vmatpush2.bf16.msra.mxu0 0
    %10169 = vmatprep.subr.bf16.mxu0 0
    %10170 = vmatpush2.bf16.msra.mxu0 0
    %10171 = vmatprep.subr.bf16.mxu0 0
    %10172 = vmatpush2.bf16.msra.mxu0 0
    %10173 = vmatprep.subr.bf16.mxu0 0
    %10174 = vmatpush2.bf16.msra.mxu0 0
    %10175 = vmatprep.subr.bf16.mxu0 0
    %10176 = vmatpush2.bf16.msra.mxu0 0
    %10177 = vmatprep.subr.bf16.mxu0 0
    %10178 = vmatpush2.bf16.msra.mxu0 0
    %10179 = vmatprep.subr.bf16.mxu0 0
    %10180 = vmatpush2.bf16.msra.mxu0 0
    %10181 = vmatprep.mubr.bf16.mxu0 0
    %10182 = vmatmul.mubr.bf16.gmra.mxu0 %v9655
    %v10183 = vpop.f32.mrf.mxu0
    %v10184 = vadd.f32 %v10143, %v10183
    %v10185 = vpop.f32.mrf.mxu0
    %v10186 = vadd.f32 %v10145, %v10185
    %v10187 = vpop.f32.mrf.mxu0
    %v10188 = vpop.f32.mrf.mxu0
    %10189 = vdwg.mxu0
    %10190 = vmatprep.subr.bf16.mxu0 %v6576
    %10191 = vmatpush1.bf16.msra.mxu0 %v6575
    %10192 = vmatprep.subr.bf16.mxu0 %v6568
    %10193 = vmatpush1.bf16.msra.mxu0 %v6567
    %10194 = vmatprep.subr.bf16.mxu0 %v6560
    %10195 = vmatpush1.bf16.msra.mxu0 %v6559
    %10196 = vmatprep.subr.bf16.mxu0 %v6552
    %10197 = vmatpush1.bf16.msra.mxu0 %v6551
    %10198 = vmatprep.subr.bf16.mxu0 %v6544
    %10199 = vmatpush1.bf16.msra.mxu0 %v6543
    %10200 = vmatprep.subr.bf16.mxu0 %v6536
    %10201 = vmatpush1.bf16.msra.mxu0 %v6535
    %10202 = vmatprep.subr.bf16.mxu0 %v6528
    %10203 = vmatpush1.bf16.msra.mxu0 %v6527
    %10204 = vmatprep.subr.bf16.mxu0 %v6520
    %10205 = vmatpush1.bf16.msra.mxu0 %v6519
    %10206 = vmatprep.subr.bf16.mxu0 %v6640
    %10207 = vmatpush2.bf16.msra.mxu0 %v6639
    %10208 = vmatprep.subr.bf16.mxu0 %v6632
    %10209 = vmatpush2.bf16.msra.mxu0 %v6631
    %10210 = vmatprep.subr.bf16.mxu0 %v6624
    %10211 = vmatpush2.bf16.msra.mxu0 %v6623
    %10212 = vmatprep.subr.bf16.mxu0 %v6616
    %10213 = vmatpush2.bf16.msra.mxu0 %v6615
    %10214 = vmatprep.subr.bf16.mxu0 %v6608
    %10215 = vmatpush2.bf16.msra.mxu0 %v6607
    %10216 = vmatprep.subr.bf16.mxu0 %v6600
    %10217 = vmatpush2.bf16.msra.mxu0 %v6599
    %10218 = vmatprep.subr.bf16.mxu0 %v6592
    %10219 = vmatpush2.bf16.msra.mxu0 %v6591
    %10220 = vmatprep.subr.bf16.mxu0 %v6584
    %10221 = vmatpush2.bf16.msra.mxu0 %v6583
    %10222 = vmatprep.mubr.bf16.mxu0 %v179
    %10223 = vmatmul.mubr.bf16.gmra.mxu0 %v178
    %v10224 = vpop.f32.mrf.mxu0
    %v10225 = vadd.f32 %v1784, %v10224
    %v10226 = vpop.f32.mrf.mxu0
    %v10227 = vadd.f32 %v1788, %v10226
    %v10228 = vpop.f32.mrf.mxu0
    %v10229 = vpop.f32.mrf.mxu0
    %10230 = vdwg.mxu0
    %10231 = vmatprep.subr.bf16.mxu0 %v6704
    %10232 = vmatpush1.bf16.msra.mxu0 %v6703
    %10233 = vmatprep.subr.bf16.mxu0 %v6696
    %10234 = vmatpush1.bf16.msra.mxu0 %v6695
    %10235 = vmatprep.subr.bf16.mxu0 %v6688
    %10236 = vmatpush1.bf16.msra.mxu0 %v6687
    %10237 = vmatprep.subr.bf16.mxu0 %v6680
    %10238 = vmatpush1.bf16.msra.mxu0 %v6679
    %10239 = vmatprep.subr.bf16.mxu0 %v6672
    %10240 = vmatpush1.bf16.msra.mxu0 %v6671
    %10241 = vmatprep.subr.bf16.mxu0 %v6664
    %10242 = vmatpush1.bf16.msra.mxu0 %v6663
    %10243 = vmatprep.subr.bf16.mxu0 %v6656
    %10244 = vmatpush1.bf16.msra.mxu0 %v6655
    %10245 = vmatprep.subr.bf16.mxu0 %v6648
    %10246 = vmatpush1.bf16.msra.mxu0 %v6647
    %10247 = vmatprep.subr.bf16.mxu0 %v6768
    %10248 = vmatpush2.bf16.msra.mxu0 %v6767
    %10249 = vmatprep.subr.bf16.mxu0 %v6760
    %10250 = vmatpush2.bf16.msra.mxu0 %v6759
    %10251 = vmatprep.subr.bf16.mxu0 %v6752
    %10252 = vmatpush2.bf16.msra.mxu0 %v6751
    %10253 = vmatprep.subr.bf16.mxu0 %v6744
    %10254 = vmatpush2.bf16.msra.mxu0 %v6743
    %10255 = vmatprep.subr.bf16.mxu0 %v6736
    %10256 = vmatpush2.bf16.msra.mxu0 %v6735
    %10257 = vmatprep.subr.bf16.mxu0 %v6728
    %10258 = vmatpush2.bf16.msra.mxu0 %v6727
    %10259 = vmatprep.subr.bf16.mxu0 %v6720
    %10260 = vmatpush2.bf16.msra.mxu0 %v6719
    %10261 = vmatprep.subr.bf16.mxu0 %v6712
    %10262 = vmatpush2.bf16.msra.mxu0 %v6711
    %10263 = vmatprep.mubr.bf16.mxu0 %v181
    %10264 = vmatmul.mubr.bf16.gmra.mxu0 %v180
    %v10265 = vpop.f32.mrf.mxu0
    %v10266 = vadd.f32 %v10225, %v10265
    %v10267 = vpop.f32.mrf.mxu0
    %v10268 = vadd.f32 %v10227, %v10267
    %v10269 = vpop.f32.mrf.mxu0
    %v10270 = vpop.f32.mrf.mxu0
    %10271 = vdwg.mxu0
    %10272 = vmatprep.subr.bf16.mxu0 %v6832
    %10273 = vmatpush1.bf16.msra.mxu0 %v6831
    %10274 = vmatprep.subr.bf16.mxu0 %v6824
    %10275 = vmatpush1.bf16.msra.mxu0 %v6823
    %10276 = vmatprep.subr.bf16.mxu0 %v6816
    %10277 = vmatpush1.bf16.msra.mxu0 %v6815
    %10278 = vmatprep.subr.bf16.mxu0 %v6808
    %10279 = vmatpush1.bf16.msra.mxu0 %v6807
    %10280 = vmatprep.subr.bf16.mxu0 %v6800
    %10281 = vmatpush1.bf16.msra.mxu0 %v6799
    %10282 = vmatprep.subr.bf16.mxu0 %v6792
    %10283 = vmatpush1.bf16.msra.mxu0 %v6791
    %10284 = vmatprep.subr.bf16.mxu0 %v6784
    %10285 = vmatpush1.bf16.msra.mxu0 %v6783
    %10286 = vmatprep.subr.bf16.mxu0 %v6776
    %10287 = vmatpush1.bf16.msra.mxu0 %v6775
    %10288 = vmatprep.subr.bf16.mxu0 %v6896
    %10289 = vmatpush2.bf16.msra.mxu0 %v6895
    %10290 = vmatprep.subr.bf16.mxu0 %v6888
    %10291 = vmatpush2.bf16.msra.mxu0 %v6887
    %10292 = vmatprep.subr.bf16.mxu0 %v6880
    %10293 = vmatpush2.bf16.msra.mxu0 %v6879
    %10294 = vmatprep.subr.bf16.mxu0 %v6872
    %10295 = vmatpush2.bf16.msra.mxu0 %v6871
    %10296 = vmatprep.subr.bf16.mxu0 %v6864
    %10297 = vmatpush2.bf16.msra.mxu0 %v6863
    %10298 = vmatprep.subr.bf16.mxu0 %v6856
    %10299 = vmatpush2.bf16.msra.mxu0 %v6855
    %10300 = vmatprep.subr.bf16.mxu0 %v6848
    %10301 = vmatpush2.bf16.msra.mxu0 %v6847
    %10302 = vmatprep.subr.bf16.mxu0 %v6840
    %10303 = vmatpush2.bf16.msra.mxu0 %v6839
    %10304 = vmatprep.mubr.bf16.mxu0 %v183
    %10305 = vmatmul.mubr.bf16.gmra.mxu0 %v182
    %v10306 = vpop.f32.mrf.mxu0
    %v10307 = vadd.f32 %v10266, %v10306
    %v10308 = vpop.f32.mrf.mxu0
    %v10309 = vadd.f32 %v10268, %v10308
    %v10310 = vpop.f32.mrf.mxu0
    %v10311 = vpop.f32.mrf.mxu0
    %10312 = vdwg.mxu0
    %10313 = vmatprep.subr.bf16.mxu0 %v6960
    %10314 = vmatpush1.bf16.msra.mxu0 %v6959
    %10315 = vmatprep.subr.bf16.mxu0 %v6952
    %10316 = vmatpush1.bf16.msra.mxu0 %v6951
    %10317 = vmatprep.subr.bf16.mxu0 %v6944
    %10318 = vmatpush1.bf16.msra.mxu0 %v6943
    %10319 = vmatprep.subr.bf16.mxu0 %v6936
    %10320 = vmatpush1.bf16.msra.mxu0 %v6935
    %10321 = vmatprep.subr.bf16.mxu0 %v6928
    %10322 = vmatpush1.bf16.msra.mxu0 %v6927
    %10323 = vmatprep.subr.bf16.mxu0 %v6920
    %10324 = vmatpush1.bf16.msra.mxu0 %v6919
    %10325 = vmatprep.subr.bf16.mxu0 %v6912
    %10326 = vmatpush1.bf16.msra.mxu0 %v6911
    %10327 = vmatprep.subr.bf16.mxu0 %v6904
    %10328 = vmatpush1.bf16.msra.mxu0 %v6903
    %10329 = vmatprep.subr.bf16.mxu0 %v7024
    %10330 = vmatpush2.bf16.msra.mxu0 %v7023
    %10331 = vmatprep.subr.bf16.mxu0 %v7016
    %10332 = vmatpush2.bf16.msra.mxu0 %v7015
    %10333 = vmatprep.subr.bf16.mxu0 %v7008
    %10334 = vmatpush2.bf16.msra.mxu0 %v7007
    %10335 = vmatprep.subr.bf16.mxu0 %v7000
    %10336 = vmatpush2.bf16.msra.mxu0 %v6999
    %10337 = vmatprep.subr.bf16.mxu0 %v6992
    %10338 = vmatpush2.bf16.msra.mxu0 %v6991
    %10339 = vmatprep.subr.bf16.mxu0 %v6984
    %10340 = vmatpush2.bf16.msra.mxu0 %v6983
    %10341 = vmatprep.subr.bf16.mxu0 %v6976
    %10342 = vmatpush2.bf16.msra.mxu0 %v6975
    %10343 = vmatprep.subr.bf16.mxu0 %v6968
    %10344 = vmatpush2.bf16.msra.mxu0 %v6967
    %10345 = vmatprep.mubr.bf16.mxu0 %v185
    %10346 = vmatmul.mubr.bf16.gmra.mxu0 %v184
    %v10347 = vpop.f32.mrf.mxu0
    %v10348 = vadd.f32 %v10307, %v10347
    %v10349 = vpop.f32.mrf.mxu0
    %v10350 = vadd.f32 %v10309, %v10349
    %v10351 = vpop.f32.mrf.mxu0
    %v10352 = vpop.f32.mrf.mxu0
    %10353 = vdwg.mxu0
    %10354 = vmatprep.subr.bf16.mxu0 %v7088
    %10355 = vmatpush1.bf16.msra.mxu0 %v7087
    %10356 = vmatprep.subr.bf16.mxu0 %v7080
    %10357 = vmatpush1.bf16.msra.mxu0 %v7079
    %10358 = vmatprep.subr.bf16.mxu0 %v7072
    %10359 = vmatpush1.bf16.msra.mxu0 %v7071
    %10360 = vmatprep.subr.bf16.mxu0 %v7064
    %10361 = vmatpush1.bf16.msra.mxu0 %v7063
    %10362 = vmatprep.subr.bf16.mxu0 %v7056
    %10363 = vmatpush1.bf16.msra.mxu0 %v7055
    %10364 = vmatprep.subr.bf16.mxu0 %v7048
    %10365 = vmatpush1.bf16.msra.mxu0 %v7047
    %10366 = vmatprep.subr.bf16.mxu0 %v7040
    %10367 = vmatpush1.bf16.msra.mxu0 %v7039
    %10368 = vmatprep.subr.bf16.mxu0 %v7032
    %10369 = vmatpush1.bf16.msra.mxu0 %v7031
    %10370 = vmatprep.subr.bf16.mxu0 %v7152
    %10371 = vmatpush2.bf16.msra.mxu0 %v7151
    %10372 = vmatprep.subr.bf16.mxu0 %v7144
    %10373 = vmatpush2.bf16.msra.mxu0 %v7143
    %10374 = vmatprep.subr.bf16.mxu0 %v7136
    %10375 = vmatpush2.bf16.msra.mxu0 %v7135
    %10376 = vmatprep.subr.bf16.mxu0 %v7128
    %10377 = vmatpush2.bf16.msra.mxu0 %v7127
    %10378 = vmatprep.subr.bf16.mxu0 %v7120
    %10379 = vmatpush2.bf16.msra.mxu0 %v7119
    %10380 = vmatprep.subr.bf16.mxu0 %v7112
    %10381 = vmatpush2.bf16.msra.mxu0 %v7111
    %10382 = vmatprep.subr.bf16.mxu0 %v7104
    %10383 = vmatpush2.bf16.msra.mxu0 %v7103
    %10384 = vmatprep.subr.bf16.mxu0 %v7096
    %10385 = vmatpush2.bf16.msra.mxu0 %v7095
    %10386 = vmatprep.mubr.bf16.mxu0 %v187
    %10387 = vmatmul.mubr.bf16.gmra.mxu0 %v186
    %v10388 = vpop.f32.mrf.mxu0
    %v10389 = vadd.f32 %v10348, %v10388
    %v10390 = vpop.f32.mrf.mxu0
    %v10391 = vadd.f32 %v10350, %v10390
    %v10392 = vpop.f32.mrf.mxu0
    %v10393 = vpop.f32.mrf.mxu0
    %10394 = vdwg.mxu0
    %10395 = vmatprep.subr.bf16.mxu0 %v7216
    %10396 = vmatpush1.bf16.msra.mxu0 %v7215
    %10397 = vmatprep.subr.bf16.mxu0 %v7208
    %10398 = vmatpush1.bf16.msra.mxu0 %v7207
    %10399 = vmatprep.subr.bf16.mxu0 %v7200
    %10400 = vmatpush1.bf16.msra.mxu0 %v7199
    %10401 = vmatprep.subr.bf16.mxu0 %v7192
    %10402 = vmatpush1.bf16.msra.mxu0 %v7191
    %10403 = vmatprep.subr.bf16.mxu0 %v7184
    %10404 = vmatpush1.bf16.msra.mxu0 %v7183
    %10405 = vmatprep.subr.bf16.mxu0 %v7176
    %10406 = vmatpush1.bf16.msra.mxu0 %v7175
    %10407 = vmatprep.subr.bf16.mxu0 %v7168
    %10408 = vmatpush1.bf16.msra.mxu0 %v7167
    %10409 = vmatprep.subr.bf16.mxu0 %v7160
    %10410 = vmatpush1.bf16.msra.mxu0 %v7159
    %10411 = vmatprep.subr.bf16.mxu0 %v7280
    %10412 = vmatpush2.bf16.msra.mxu0 %v7279
    %10413 = vmatprep.subr.bf16.mxu0 %v7272
    %10414 = vmatpush2.bf16.msra.mxu0 %v7271
    %10415 = vmatprep.subr.bf16.mxu0 %v7264
    %10416 = vmatpush2.bf16.msra.mxu0 %v7263
    %10417 = vmatprep.subr.bf16.mxu0 %v7256
    %10418 = vmatpush2.bf16.msra.mxu0 %v7255
    %10419 = vmatprep.subr.bf16.mxu0 %v7248
    %10420 = vmatpush2.bf16.msra.mxu0 %v7247
    %10421 = vmatprep.subr.bf16.mxu0 %v7240
    %10422 = vmatpush2.bf16.msra.mxu0 %v7239
    %10423 = vmatprep.subr.bf16.mxu0 %v7232
    %10424 = vmatpush2.bf16.msra.mxu0 %v7231
    %10425 = vmatprep.subr.bf16.mxu0 %v7224
    %10426 = vmatpush2.bf16.msra.mxu0 %v7223
    %10427 = vmatprep.mubr.bf16.mxu0 %v189
    %10428 = vmatmul.mubr.bf16.gmra.mxu0 %v188
    %v10429 = vpop.f32.mrf.mxu0
    %v10430 = vadd.f32 %v10389, %v10429
    %v10431 = vpop.f32.mrf.mxu0
    %v10432 = vadd.f32 %v10391, %v10431
    %v10433 = vpop.f32.mrf.mxu0
    %v10434 = vpop.f32.mrf.mxu0
    %10435 = vdwg.mxu0
    %10436 = vmatprep.subr.bf16.mxu0 %v7344
    %10437 = vmatpush1.bf16.msra.mxu0 %v7343
    %10438 = vmatprep.subr.bf16.mxu0 %v7336
    %10439 = vmatpush1.bf16.msra.mxu0 %v7335
    %10440 = vmatprep.subr.bf16.mxu0 %v7328
    %10441 = vmatpush1.bf16.msra.mxu0 %v7327
    %10442 = vmatprep.subr.bf16.mxu0 %v7320
    %10443 = vmatpush1.bf16.msra.mxu0 %v7319
    %10444 = vmatprep.subr.bf16.mxu0 %v7312
    %10445 = vmatpush1.bf16.msra.mxu0 %v7311
    %10446 = vmatprep.subr.bf16.mxu0 %v7304
    %10447 = vmatpush1.bf16.msra.mxu0 %v7303
    %10448 = vmatprep.subr.bf16.mxu0 %v7296
    %10449 = vmatpush1.bf16.msra.mxu0 %v7295
    %10450 = vmatprep.subr.bf16.mxu0 %v7288
    %10451 = vmatpush1.bf16.msra.mxu0 %v7287
    %10452 = vmatprep.subr.bf16.mxu0 %v7408
    %10453 = vmatpush2.bf16.msra.mxu0 %v7407
    %10454 = vmatprep.subr.bf16.mxu0 %v7400
    %10455 = vmatpush2.bf16.msra.mxu0 %v7399
    %10456 = vmatprep.subr.bf16.mxu0 %v7392
    %10457 = vmatpush2.bf16.msra.mxu0 %v7391
    %10458 = vmatprep.subr.bf16.mxu0 %v7384
    %10459 = vmatpush2.bf16.msra.mxu0 %v7383
    %10460 = vmatprep.subr.bf16.mxu0 %v7376
    %10461 = vmatpush2.bf16.msra.mxu0 %v7375
    %10462 = vmatprep.subr.bf16.mxu0 %v7368
    %10463 = vmatpush2.bf16.msra.mxu0 %v7367
    %10464 = vmatprep.subr.bf16.mxu0 %v7360
    %10465 = vmatpush2.bf16.msra.mxu0 %v7359
    %10466 = vmatprep.subr.bf16.mxu0 %v7352
    %10467 = vmatpush2.bf16.msra.mxu0 %v7351
    %10468 = vmatprep.mubr.bf16.mxu0 %v191
    %10469 = vmatmul.mubr.bf16.gmra.mxu0 %v190
    %v10470 = vpop.f32.mrf.mxu0
    %v10471 = vadd.f32 %v10430, %v10470
    %v10472 = vpop.f32.mrf.mxu0
    %v10473 = vadd.f32 %v10432, %v10472
    %v10474 = vpop.f32.mrf.mxu0
    %v10475 = vpop.f32.mrf.mxu0
    %10476 = vdwg.mxu0
    %10477 = vmatprep.subr.bf16.mxu0 %v7472
    %10478 = vmatpush1.bf16.msra.mxu0 %v7471
    %10479 = vmatprep.subr.bf16.mxu0 %v7464
    %10480 = vmatpush1.bf16.msra.mxu0 %v7463
    %10481 = vmatprep.subr.bf16.mxu0 %v7456
    %10482 = vmatpush1.bf16.msra.mxu0 %v7455
    %10483 = vmatprep.subr.bf16.mxu0 %v7448
    %10484 = vmatpush1.bf16.msra.mxu0 %v7447
    %10485 = vmatprep.subr.bf16.mxu0 %v7440
    %10486 = vmatpush1.bf16.msra.mxu0 %v7439
    %10487 = vmatprep.subr.bf16.mxu0 %v7432
    %10488 = vmatpush1.bf16.msra.mxu0 %v7431
    %10489 = vmatprep.subr.bf16.mxu0 %v7424
    %10490 = vmatpush1.bf16.msra.mxu0 %v7423
    %10491 = vmatprep.subr.bf16.mxu0 %v7416
    %10492 = vmatpush1.bf16.msra.mxu0 %v7415
    %10493 = vmatprep.subr.bf16.mxu0 %v7536
    %10494 = vmatpush2.bf16.msra.mxu0 %v7535
    %10495 = vmatprep.subr.bf16.mxu0 %v7528
    %10496 = vmatpush2.bf16.msra.mxu0 %v7527
    %10497 = vmatprep.subr.bf16.mxu0 %v7520
    %10498 = vmatpush2.bf16.msra.mxu0 %v7519
    %10499 = vmatprep.subr.bf16.mxu0 %v7512
    %10500 = vmatpush2.bf16.msra.mxu0 %v7511
    %10501 = vmatprep.subr.bf16.mxu0 %v7504
    %10502 = vmatpush2.bf16.msra.mxu0 %v7503
    %10503 = vmatprep.subr.bf16.mxu0 %v7496
    %10504 = vmatpush2.bf16.msra.mxu0 %v7495
    %10505 = vmatprep.subr.bf16.mxu0 %v7488
    %10506 = vmatpush2.bf16.msra.mxu0 %v7487
    %10507 = vmatprep.subr.bf16.mxu0 %v7480
    %10508 = vmatpush2.bf16.msra.mxu0 %v7479
    %10509 = vmatprep.mubr.bf16.mxu0 %v193
    %10510 = vmatmul.mubr.bf16.gmra.mxu0 %v192
    %v10511 = vpop.f32.mrf.mxu0
    %v10512 = vadd.f32 %v10471, %v10511
    %v10513 = vpop.f32.mrf.mxu0
    %v10514 = vadd.f32 %v10473, %v10513
    %v10515 = vpop.f32.mrf.mxu0
    %v10516 = vpop.f32.mrf.mxu0
    %10517 = vdwg.mxu0
    %10518 = vmatprep.subr.bf16.mxu0 %v7600
    %10519 = vmatpush1.bf16.msra.mxu0 %v7599
    %10520 = vmatprep.subr.bf16.mxu0 %v7592
    %10521 = vmatpush1.bf16.msra.mxu0 %v7591
    %10522 = vmatprep.subr.bf16.mxu0 %v7584
    %10523 = vmatpush1.bf16.msra.mxu0 %v7583
    %10524 = vmatprep.subr.bf16.mxu0 %v7576
    %10525 = vmatpush1.bf16.msra.mxu0 %v7575
    %10526 = vmatprep.subr.bf16.mxu0 %v7568
    %10527 = vmatpush1.bf16.msra.mxu0 %v7567
    %10528 = vmatprep.subr.bf16.mxu0 %v7560
    %10529 = vmatpush1.bf16.msra.mxu0 %v7559
    %10530 = vmatprep.subr.bf16.mxu0 %v7552
    %10531 = vmatpush1.bf16.msra.mxu0 %v7551
    %10532 = vmatprep.subr.bf16.mxu0 %v7544
    %10533 = vmatpush1.bf16.msra.mxu0 %v7543
    %10534 = vmatprep.subr.bf16.mxu0 %v7664
    %10535 = vmatpush2.bf16.msra.mxu0 %v7663
    %10536 = vmatprep.subr.bf16.mxu0 %v7656
    %10537 = vmatpush2.bf16.msra.mxu0 %v7655
    %10538 = vmatprep.subr.bf16.mxu0 %v7648
    %10539 = vmatpush2.bf16.msra.mxu0 %v7647
    %10540 = vmatprep.subr.bf16.mxu0 %v7640
    %10541 = vmatpush2.bf16.msra.mxu0 %v7639
    %10542 = vmatprep.subr.bf16.mxu0 %v7632
    %10543 = vmatpush2.bf16.msra.mxu0 %v7631
    %10544 = vmatprep.subr.bf16.mxu0 %v7624
    %10545 = vmatpush2.bf16.msra.mxu0 %v7623
    %10546 = vmatprep.subr.bf16.mxu0 %v7616
    %10547 = vmatpush2.bf16.msra.mxu0 %v7615
    %10548 = vmatprep.subr.bf16.mxu0 %v7608
    %10549 = vmatpush2.bf16.msra.mxu0 %v7607
    %10550 = vmatprep.mubr.bf16.mxu0 %v195
    %10551 = vmatmul.mubr.bf16.gmra.mxu0 %v194
    %v10552 = vpop.f32.mrf.mxu0
    %v10553 = vadd.f32 %v10512, %v10552
    %v10554 = vpop.f32.mrf.mxu0
    %v10555 = vadd.f32 %v10514, %v10554
    %v10556 = vpop.f32.mrf.mxu0
    %v10557 = vpop.f32.mrf.mxu0
    %10558 = vdwg.mxu0
    %10559 = vmatprep.subr.bf16.mxu0 %v7728
    %10560 = vmatpush1.bf16.msra.mxu0 %v7727
    %10561 = vmatprep.subr.bf16.mxu0 %v7720
    %10562 = vmatpush1.bf16.msra.mxu0 %v7719
    %10563 = vmatprep.subr.bf16.mxu0 %v7712
    %10564 = vmatpush1.bf16.msra.mxu0 %v7711
    %10565 = vmatprep.subr.bf16.mxu0 %v7704
    %10566 = vmatpush1.bf16.msra.mxu0 %v7703
    %10567 = vmatprep.subr.bf16.mxu0 %v7696
    %10568 = vmatpush1.bf16.msra.mxu0 %v7695
    %10569 = vmatprep.subr.bf16.mxu0 %v7688
    %10570 = vmatpush1.bf16.msra.mxu0 %v7687
    %10571 = vmatprep.subr.bf16.mxu0 %v7680
    %10572 = vmatpush1.bf16.msra.mxu0 %v7679
    %10573 = vmatprep.subr.bf16.mxu0 %v7672
    %10574 = vmatpush1.bf16.msra.mxu0 %v7671
    %10575 = vmatprep.subr.bf16.mxu0 %v7792
    %10576 = vmatpush2.bf16.msra.mxu0 %v7791
    %10577 = vmatprep.subr.bf16.mxu0 %v7784
    %10578 = vmatpush2.bf16.msra.mxu0 %v7783
    %10579 = vmatprep.subr.bf16.mxu0 %v7776
    %10580 = vmatpush2.bf16.msra.mxu0 %v7775
    %10581 = vmatprep.subr.bf16.mxu0 %v7768
    %10582 = vmatpush2.bf16.msra.mxu0 %v7767
    %10583 = vmatprep.subr.bf16.mxu0 %v7760
    %10584 = vmatpush2.bf16.msra.mxu0 %v7759
    %10585 = vmatprep.subr.bf16.mxu0 %v7752
    %10586 = vmatpush2.bf16.msra.mxu0 %v7751
    %10587 = vmatprep.subr.bf16.mxu0 %v7744
    %10588 = vmatpush2.bf16.msra.mxu0 %v7743
    %10589 = vmatprep.subr.bf16.mxu0 %v7736
    %10590 = vmatpush2.bf16.msra.mxu0 %v7735
    %10591 = vmatprep.mubr.bf16.mxu0 %v197
    %10592 = vmatmul.mubr.bf16.gmra.mxu0 %v196
    %v10593 = vpop.f32.mrf.mxu0
    %v10594 = vadd.f32 %v10553, %v10593
    %v10595 = vpop.f32.mrf.mxu0
    %v10596 = vadd.f32 %v10555, %v10595
    %v10597 = vpop.f32.mrf.mxu0
    %v10598 = vpop.f32.mrf.mxu0
    %10599 = vdwg.mxu0
    %10600 = vmatprep.subr.bf16.mxu0 %v7856
    %10601 = vmatpush1.bf16.msra.mxu0 %v7855
    %10602 = vmatprep.subr.bf16.mxu0 %v7848
    %10603 = vmatpush1.bf16.msra.mxu0 %v7847
    %10604 = vmatprep.subr.bf16.mxu0 %v7840
    %10605 = vmatpush1.bf16.msra.mxu0 %v7839
    %10606 = vmatprep.subr.bf16.mxu0 %v7832
    %10607 = vmatpush1.bf16.msra.mxu0 %v7831
    %10608 = vmatprep.subr.bf16.mxu0 %v7824
    %10609 = vmatpush1.bf16.msra.mxu0 %v7823
    %10610 = vmatprep.subr.bf16.mxu0 %v7816
    %10611 = vmatpush1.bf16.msra.mxu0 %v7815
    %10612 = vmatprep.subr.bf16.mxu0 %v7808
    %10613 = vmatpush1.bf16.msra.mxu0 %v7807
    %10614 = vmatprep.subr.bf16.mxu0 %v7800
    %10615 = vmatpush1.bf16.msra.mxu0 %v7799
    %10616 = vmatprep.subr.bf16.mxu0 %v7920
    %10617 = vmatpush2.bf16.msra.mxu0 %v7919
    %10618 = vmatprep.subr.bf16.mxu0 %v7912
    %10619 = vmatpush2.bf16.msra.mxu0 %v7911
    %10620 = vmatprep.subr.bf16.mxu0 %v7904
    %10621 = vmatpush2.bf16.msra.mxu0 %v7903
    %10622 = vmatprep.subr.bf16.mxu0 %v7896
    %10623 = vmatpush2.bf16.msra.mxu0 %v7895
    %10624 = vmatprep.subr.bf16.mxu0 %v7888
    %10625 = vmatpush2.bf16.msra.mxu0 %v7887
    %10626 = vmatprep.subr.bf16.mxu0 %v7880
    %10627 = vmatpush2.bf16.msra.mxu0 %v7879
    %10628 = vmatprep.subr.bf16.mxu0 %v7872
    %10629 = vmatpush2.bf16.msra.mxu0 %v7871
    %10630 = vmatprep.subr.bf16.mxu0 %v7864
    %10631 = vmatpush2.bf16.msra.mxu0 %v7863
    %10632 = vmatprep.mubr.bf16.mxu0 %v199
    %10633 = vmatmul.mubr.bf16.gmra.mxu0 %v198
    %v10634 = vpop.f32.mrf.mxu0
    %v10635 = vadd.f32 %v10594, %v10634
    %v10636 = vpop.f32.mrf.mxu0
    %v10637 = vadd.f32 %v10596, %v10636
    %v10638 = vpop.f32.mrf.mxu0
    %v10639 = vpop.f32.mrf.mxu0
    %10640 = vdwg.mxu0
    %10641 = vmatprep.subr.bf16.mxu0 %v7984
    %10642 = vmatpush1.bf16.msra.mxu0 %v7983
    %10643 = vmatprep.subr.bf16.mxu0 %v7976
    %10644 = vmatpush1.bf16.msra.mxu0 %v7975
    %10645 = vmatprep.subr.bf16.mxu0 %v7968
    %10646 = vmatpush1.bf16.msra.mxu0 %v7967
    %10647 = vmatprep.subr.bf16.mxu0 %v7960
    %10648 = vmatpush1.bf16.msra.mxu0 %v7959
    %10649 = vmatprep.subr.bf16.mxu0 %v7952
    %10650 = vmatpush1.bf16.msra.mxu0 %v7951
    %10651 = vmatprep.subr.bf16.mxu0 %v7944
    %10652 = vmatpush1.bf16.msra.mxu0 %v7943
    %10653 = vmatprep.subr.bf16.mxu0 %v7936
    %10654 = vmatpush1.bf16.msra.mxu0 %v7935
    %10655 = vmatprep.subr.bf16.mxu0 %v7928
    %10656 = vmatpush1.bf16.msra.mxu0 %v7927
    %10657 = vmatprep.subr.bf16.mxu0 %v8048
    %10658 = vmatpush2.bf16.msra.mxu0 %v8047
    %10659 = vmatprep.subr.bf16.mxu0 %v8040
    %10660 = vmatpush2.bf16.msra.mxu0 %v8039
    %10661 = vmatprep.subr.bf16.mxu0 %v8032
    %10662 = vmatpush2.bf16.msra.mxu0 %v8031
    %10663 = vmatprep.subr.bf16.mxu0 %v8024
    %10664 = vmatpush2.bf16.msra.mxu0 %v8023
    %10665 = vmatprep.subr.bf16.mxu0 %v8016
    %10666 = vmatpush2.bf16.msra.mxu0 %v8015
    %10667 = vmatprep.subr.bf16.mxu0 %v8008
    %10668 = vmatpush2.bf16.msra.mxu0 %v8007
    %10669 = vmatprep.subr.bf16.mxu0 %v8000
    %10670 = vmatpush2.bf16.msra.mxu0 %v7999
    %10671 = vmatprep.subr.bf16.mxu0 %v7992
    %10672 = vmatpush2.bf16.msra.mxu0 %v7991
    %10673 = vmatprep.mubr.bf16.mxu0 %v201
    %10674 = vmatmul.mubr.bf16.gmra.mxu0 %v200
    %v10675 = vpop.f32.mrf.mxu0
    %v10676 = vadd.f32 %v10635, %v10675
    %v10677 = vpop.f32.mrf.mxu0
    %v10678 = vadd.f32 %v10637, %v10677
    %v10679 = vpop.f32.mrf.mxu0
    %v10680 = vpop.f32.mrf.mxu0
    %10681 = vdwg.mxu0
    %10682 = vmatprep.subr.bf16.mxu0 0
    %10683 = vmatpush1.bf16.msra.mxu0 0
    %10684 = vmatprep.subr.bf16.mxu0 0
    %10685 = vmatpush1.bf16.msra.mxu0 0
    %10686 = vmatprep.subr.bf16.mxu0 0
    %10687 = vmatpush1.bf16.msra.mxu0 0
    %10688 = vmatprep.subr.bf16.mxu0 0
    %10689 = vmatpush1.bf16.msra.mxu0 0
    %10690 = vmatprep.subr.bf16.mxu0 %v8080
    %10691 = vmatpush1.bf16.msra.mxu0 %v8079
    %10692 = vmatprep.subr.bf16.mxu0 %v8072
    %10693 = vmatpush1.bf16.msra.mxu0 %v8071
    %10694 = vmatprep.subr.bf16.mxu0 %v8064
    %10695 = vmatpush1.bf16.msra.mxu0 %v8063
    %10696 = vmatprep.subr.bf16.mxu0 %v8056
    %10697 = vmatpush1.bf16.msra.mxu0 %v8055
    %10698 = vmatprep.subr.bf16.mxu0 0
    %10699 = vmatpush2.bf16.msra.mxu0 0
    %10700 = vmatprep.subr.bf16.mxu0 0
    %10701 = vmatpush2.bf16.msra.mxu0 0
    %10702 = vmatprep.subr.bf16.mxu0 0
    %10703 = vmatpush2.bf16.msra.mxu0 0
    %10704 = vmatprep.subr.bf16.mxu0 0
    %10705 = vmatpush2.bf16.msra.mxu0 0
    %10706 = vmatprep.subr.bf16.mxu0 0
    %10707 = vmatpush2.bf16.msra.mxu0 0
    %10708 = vmatprep.subr.bf16.mxu0 0
    %10709 = vmatpush2.bf16.msra.mxu0 0
    %10710 = vmatprep.subr.bf16.mxu0 0
    %10711 = vmatpush2.bf16.msra.mxu0 0
    %10712 = vmatprep.subr.bf16.mxu0 0
    %10713 = vmatpush2.bf16.msra.mxu0 0
    %10714 = vmatprep.mubr.bf16.mxu0 0
    %10715 = vmatmul.mubr.bf16.gmra.mxu0 %v9655
    %v10716 = vpop.f32.mrf.mxu0
    %v10717 = vadd.f32 %v10676, %v10716
    %v10718 = vpop.f32.mrf.mxu0
    %v10719 = vadd.f32 %v10678, %v10718
    %v10720 = vpop.f32.mrf.mxu0
    %v10721 = vpop.f32.mrf.mxu0
    %10722 = vdwg.mxu0
    %10723 = vmatprep.subr.bf16.mxu0 %v6578
    %10724 = vmatpush1.bf16.msra.mxu0 %v6577
    %10725 = vmatprep.subr.bf16.mxu0 %v6570
    %10726 = vmatpush1.bf16.msra.mxu0 %v6569
    %10727 = vmatprep.subr.bf16.mxu0 %v6562
    %10728 = vmatpush1.bf16.msra.mxu0 %v6561
    %10729 = vmatprep.subr.bf16.mxu0 %v6554
    %10730 = vmatpush1.bf16.msra.mxu0 %v6553
    %10731 = vmatprep.subr.bf16.mxu0 %v6546
    %10732 = vmatpush1.bf16.msra.mxu0 %v6545
    %10733 = vmatprep.subr.bf16.mxu0 %v6538
    %10734 = vmatpush1.bf16.msra.mxu0 %v6537
    %10735 = vmatprep.subr.bf16.mxu0 %v6530
    %10736 = vmatpush1.bf16.msra.mxu0 %v6529
    %10737 = vmatprep.subr.bf16.mxu0 %v6522
    %10738 = vmatpush1.bf16.msra.mxu0 %v6521
    %10739 = vmatprep.subr.bf16.mxu0 %v6642
    %10740 = vmatpush2.bf16.msra.mxu0 %v6641
    %10741 = vmatprep.subr.bf16.mxu0 %v6634
    %10742 = vmatpush2.bf16.msra.mxu0 %v6633
    %10743 = vmatprep.subr.bf16.mxu0 %v6626
    %10744 = vmatpush2.bf16.msra.mxu0 %v6625
    %10745 = vmatprep.subr.bf16.mxu0 %v6618
    %10746 = vmatpush2.bf16.msra.mxu0 %v6617
    %10747 = vmatprep.subr.bf16.mxu0 %v6610
    %10748 = vmatpush2.bf16.msra.mxu0 %v6609
    %10749 = vmatprep.subr.bf16.mxu0 %v6602
    %10750 = vmatpush2.bf16.msra.mxu0 %v6601
    %10751 = vmatprep.subr.bf16.mxu0 %v6594
    %10752 = vmatpush2.bf16.msra.mxu0 %v6593
    %10753 = vmatprep.subr.bf16.mxu0 %v6586
    %10754 = vmatpush2.bf16.msra.mxu0 %v6585
    %10755 = vmatprep.mubr.bf16.mxu0 %v179
    %10756 = vmatmul.mubr.bf16.gmra.mxu0 %v178
    %v10757 = vpop.f32.mrf.mxu0
    %v10758 = vadd.f32 %v1792, %v10757
    %v10759 = vpop.f32.mrf.mxu0
    %v10760 = vadd.f32 %v1796, %v10759
    %v10761 = vpop.f32.mrf.mxu0
    %v10762 = vpop.f32.mrf.mxu0
    %10763 = vdwg.mxu0
    %10764 = vmatprep.subr.bf16.mxu0 %v6706
    %10765 = vmatpush1.bf16.msra.mxu0 %v6705
    %10766 = vmatprep.subr.bf16.mxu0 %v6698
    %10767 = vmatpush1.bf16.msra.mxu0 %v6697
    %10768 = vmatprep.subr.bf16.mxu0 %v6690
    %10769 = vmatpush1.bf16.msra.mxu0 %v6689
    %10770 = vmatprep.subr.bf16.mxu0 %v6682
    %10771 = vmatpush1.bf16.msra.mxu0 %v6681
    %10772 = vmatprep.subr.bf16.mxu0 %v6674
    %10773 = vmatpush1.bf16.msra.mxu0 %v6673
    %10774 = vmatprep.subr.bf16.mxu0 %v6666
    %10775 = vmatpush1.bf16.msra.mxu0 %v6665
    %10776 = vmatprep.subr.bf16.mxu0 %v6658
    %10777 = vmatpush1.bf16.msra.mxu0 %v6657
    %10778 = vmatprep.subr.bf16.mxu0 %v6650
    %10779 = vmatpush1.bf16.msra.mxu0 %v6649
    %10780 = vmatprep.subr.bf16.mxu0 %v6770
    %10781 = vmatpush2.bf16.msra.mxu0 %v6769
    %10782 = vmatprep.subr.bf16.mxu0 %v6762
    %10783 = vmatpush2.bf16.msra.mxu0 %v6761
    %10784 = vmatprep.subr.bf16.mxu0 %v6754
    %10785 = vmatpush2.bf16.msra.mxu0 %v6753
    %10786 = vmatprep.subr.bf16.mxu0 %v6746
    %10787 = vmatpush2.bf16.msra.mxu0 %v6745
    %10788 = vmatprep.subr.bf16.mxu0 %v6738
    %10789 = vmatpush2.bf16.msra.mxu0 %v6737
    %10790 = vmatprep.subr.bf16.mxu0 %v6730
    %10791 = vmatpush2.bf16.msra.mxu0 %v6729
    %10792 = vmatprep.subr.bf16.mxu0 %v6722
    %10793 = vmatpush2.bf16.msra.mxu0 %v6721
    %10794 = vmatprep.subr.bf16.mxu0 %v6714
    %10795 = vmatpush2.bf16.msra.mxu0 %v6713
    %10796 = vmatprep.mubr.bf16.mxu0 %v181
    %10797 = vmatmul.mubr.bf16.gmra.mxu0 %v180
    %v10798 = vpop.f32.mrf.mxu0
    %v10799 = vadd.f32 %v10758, %v10798
    %v10800 = vpop.f32.mrf.mxu0
    %v10801 = vadd.f32 %v10760, %v10800
    %v10802 = vpop.f32.mrf.mxu0
    %v10803 = vpop.f32.mrf.mxu0
    %10804 = vdwg.mxu0
    %10805 = vmatprep.subr.bf16.mxu0 %v6834
    %10806 = vmatpush1.bf16.msra.mxu0 %v6833
    %10807 = vmatprep.subr.bf16.mxu0 %v6826
    %10808 = vmatpush1.bf16.msra.mxu0 %v6825
    %10809 = vmatprep.subr.bf16.mxu0 %v6818
    %10810 = vmatpush1.bf16.msra.mxu0 %v6817
    %10811 = vmatprep.subr.bf16.mxu0 %v6810
    %10812 = vmatpush1.bf16.msra.mxu0 %v6809
    %10813 = vmatprep.subr.bf16.mxu0 %v6802
    %10814 = vmatpush1.bf16.msra.mxu0 %v6801
    %10815 = vmatprep.subr.bf16.mxu0 %v6794
    %10816 = vmatpush1.bf16.msra.mxu0 %v6793
    %10817 = vmatprep.subr.bf16.mxu0 %v6786
    %10818 = vmatpush1.bf16.msra.mxu0 %v6785
    %10819 = vmatprep.subr.bf16.mxu0 %v6778
    %10820 = vmatpush1.bf16.msra.mxu0 %v6777
    %10821 = vmatprep.subr.bf16.mxu0 %v6898
    %10822 = vmatpush2.bf16.msra.mxu0 %v6897
    %10823 = vmatprep.subr.bf16.mxu0 %v6890
    %10824 = vmatpush2.bf16.msra.mxu0 %v6889
    %10825 = vmatprep.subr.bf16.mxu0 %v6882
    %10826 = vmatpush2.bf16.msra.mxu0 %v6881
    %10827 = vmatprep.subr.bf16.mxu0 %v6874
    %10828 = vmatpush2.bf16.msra.mxu0 %v6873
    %10829 = vmatprep.subr.bf16.mxu0 %v6866
    %10830 = vmatpush2.bf16.msra.mxu0 %v6865
    %10831 = vmatprep.subr.bf16.mxu0 %v6858
    %10832 = vmatpush2.bf16.msra.mxu0 %v6857
    %10833 = vmatprep.subr.bf16.mxu0 %v6850
    %10834 = vmatpush2.bf16.msra.mxu0 %v6849
    %10835 = vmatprep.subr.bf16.mxu0 %v6842
    %10836 = vmatpush2.bf16.msra.mxu0 %v6841
    %10837 = vmatprep.mubr.bf16.mxu0 %v183
    %10838 = vmatmul.mubr.bf16.gmra.mxu0 %v182
    %v10839 = vpop.f32.mrf.mxu0
    %v10840 = vadd.f32 %v10799, %v10839
    %v10841 = vpop.f32.mrf.mxu0
    %v10842 = vadd.f32 %v10801, %v10841
    %v10843 = vpop.f32.mrf.mxu0
    %v10844 = vpop.f32.mrf.mxu0
    %10845 = vdwg.mxu0
    %10846 = vmatprep.subr.bf16.mxu0 %v6962
    %10847 = vmatpush1.bf16.msra.mxu0 %v6961
    %10848 = vmatprep.subr.bf16.mxu0 %v6954
    %10849 = vmatpush1.bf16.msra.mxu0 %v6953
    %10850 = vmatprep.subr.bf16.mxu0 %v6946
    %10851 = vmatpush1.bf16.msra.mxu0 %v6945
    %10852 = vmatprep.subr.bf16.mxu0 %v6938
    %10853 = vmatpush1.bf16.msra.mxu0 %v6937
    %10854 = vmatprep.subr.bf16.mxu0 %v6930
    %10855 = vmatpush1.bf16.msra.mxu0 %v6929
    %10856 = vmatprep.subr.bf16.mxu0 %v6922
    %10857 = vmatpush1.bf16.msra.mxu0 %v6921
    %10858 = vmatprep.subr.bf16.mxu0 %v6914
    %10859 = vmatpush1.bf16.msra.mxu0 %v6913
    %10860 = vmatprep.subr.bf16.mxu0 %v6906
    %10861 = vmatpush1.bf16.msra.mxu0 %v6905
    %10862 = vmatprep.subr.bf16.mxu0 %v7026
    %10863 = vmatpush2.bf16.msra.mxu0 %v7025
    %10864 = vmatprep.subr.bf16.mxu0 %v7018
    %10865 = vmatpush2.bf16.msra.mxu0 %v7017
    %10866 = vmatprep.subr.bf16.mxu0 %v7010
    %10867 = vmatpush2.bf16.msra.mxu0 %v7009
    %10868 = vmatprep.subr.bf16.mxu0 %v7002
    %10869 = vmatpush2.bf16.msra.mxu0 %v7001
    %10870 = vmatprep.subr.bf16.mxu0 %v6994
    %10871 = vmatpush2.bf16.msra.mxu0 %v6993
    %10872 = vmatprep.subr.bf16.mxu0 %v6986
    %10873 = vmatpush2.bf16.msra.mxu0 %v6985
    %10874 = vmatprep.subr.bf16.mxu0 %v6978
    %10875 = vmatpush2.bf16.msra.mxu0 %v6977
    %10876 = vmatprep.subr.bf16.mxu0 %v6970
    %10877 = vmatpush2.bf16.msra.mxu0 %v6969
    %10878 = vmatprep.mubr.bf16.mxu0 %v185
    %10879 = vmatmul.mubr.bf16.gmra.mxu0 %v184
    %v10880 = vpop.f32.mrf.mxu0
    %v10881 = vadd.f32 %v10840, %v10880
    %v10882 = vpop.f32.mrf.mxu0
    %v10883 = vadd.f32 %v10842, %v10882
    %v10884 = vpop.f32.mrf.mxu0
    %v10885 = vpop.f32.mrf.mxu0
    %10886 = vdwg.mxu0
    %10887 = vmatprep.subr.bf16.mxu0 %v7090
    %10888 = vmatpush1.bf16.msra.mxu0 %v7089
    %10889 = vmatprep.subr.bf16.mxu0 %v7082
    %10890 = vmatpush1.bf16.msra.mxu0 %v7081
    %10891 = vmatprep.subr.bf16.mxu0 %v7074
    %10892 = vmatpush1.bf16.msra.mxu0 %v7073
    %10893 = vmatprep.subr.bf16.mxu0 %v7066
    %10894 = vmatpush1.bf16.msra.mxu0 %v7065
    %10895 = vmatprep.subr.bf16.mxu0 %v7058
    %10896 = vmatpush1.bf16.msra.mxu0 %v7057
    %10897 = vmatprep.subr.bf16.mxu0 %v7050
    %10898 = vmatpush1.bf16.msra.mxu0 %v7049
    %10899 = vmatprep.subr.bf16.mxu0 %v7042
    %10900 = vmatpush1.bf16.msra.mxu0 %v7041
    %10901 = vmatprep.subr.bf16.mxu0 %v7034
    %10902 = vmatpush1.bf16.msra.mxu0 %v7033
    %10903 = vmatprep.subr.bf16.mxu0 %v7154
    %10904 = vmatpush2.bf16.msra.mxu0 %v7153
    %10905 = vmatprep.subr.bf16.mxu0 %v7146
    %10906 = vmatpush2.bf16.msra.mxu0 %v7145
    %10907 = vmatprep.subr.bf16.mxu0 %v7138
    %10908 = vmatpush2.bf16.msra.mxu0 %v7137
    %10909 = vmatprep.subr.bf16.mxu0 %v7130
    %10910 = vmatpush2.bf16.msra.mxu0 %v7129
    %10911 = vmatprep.subr.bf16.mxu0 %v7122
    %10912 = vmatpush2.bf16.msra.mxu0 %v7121
    %10913 = vmatprep.subr.bf16.mxu0 %v7114
    %10914 = vmatpush2.bf16.msra.mxu0 %v7113
    %10915 = vmatprep.subr.bf16.mxu0 %v7106
    %10916 = vmatpush2.bf16.msra.mxu0 %v7105
    %10917 = vmatprep.subr.bf16.mxu0 %v7098
    %10918 = vmatpush2.bf16.msra.mxu0 %v7097
    %10919 = vmatprep.mubr.bf16.mxu0 %v187
    %10920 = vmatmul.mubr.bf16.gmra.mxu0 %v186
    %v10921 = vpop.f32.mrf.mxu0
    %v10922 = vadd.f32 %v10881, %v10921
    %v10923 = vpop.f32.mrf.mxu0
    %v10924 = vadd.f32 %v10883, %v10923
    %v10925 = vpop.f32.mrf.mxu0
    %v10926 = vpop.f32.mrf.mxu0
    %10927 = vdwg.mxu0
    %10928 = vmatprep.subr.bf16.mxu0 %v7218
    %10929 = vmatpush1.bf16.msra.mxu0 %v7217
    %10930 = vmatprep.subr.bf16.mxu0 %v7210
    %10931 = vmatpush1.bf16.msra.mxu0 %v7209
    %10932 = vmatprep.subr.bf16.mxu0 %v7202
    %10933 = vmatpush1.bf16.msra.mxu0 %v7201
    %10934 = vmatprep.subr.bf16.mxu0 %v7194
    %10935 = vmatpush1.bf16.msra.mxu0 %v7193
    %10936 = vmatprep.subr.bf16.mxu0 %v7186
    %10937 = vmatpush1.bf16.msra.mxu0 %v7185
    %10938 = vmatprep.subr.bf16.mxu0 %v7178
    %10939 = vmatpush1.bf16.msra.mxu0 %v7177
    %10940 = vmatprep.subr.bf16.mxu0 %v7170
    %10941 = vmatpush1.bf16.msra.mxu0 %v7169
    %10942 = vmatprep.subr.bf16.mxu0 %v7162
    %10943 = vmatpush1.bf16.msra.mxu0 %v7161
    %10944 = vmatprep.subr.bf16.mxu0 %v7282
    %10945 = vmatpush2.bf16.msra.mxu0 %v7281
    %10946 = vmatprep.subr.bf16.mxu0 %v7274
    %10947 = vmatpush2.bf16.msra.mxu0 %v7273
    %10948 = vmatprep.subr.bf16.mxu0 %v7266
    %10949 = vmatpush2.bf16.msra.mxu0 %v7265
    %10950 = vmatprep.subr.bf16.mxu0 %v7258
    %10951 = vmatpush2.bf16.msra.mxu0 %v7257
    %10952 = vmatprep.subr.bf16.mxu0 %v7250
    %10953 = vmatpush2.bf16.msra.mxu0 %v7249
    %10954 = vmatprep.subr.bf16.mxu0 %v7242
    %10955 = vmatpush2.bf16.msra.mxu0 %v7241
    %10956 = vmatprep.subr.bf16.mxu0 %v7234
    %10957 = vmatpush2.bf16.msra.mxu0 %v7233
    %10958 = vmatprep.subr.bf16.mxu0 %v7226
    %10959 = vmatpush2.bf16.msra.mxu0 %v7225
    %10960 = vmatprep.mubr.bf16.mxu0 %v189
    %10961 = vmatmul.mubr.bf16.gmra.mxu0 %v188
    %v10962 = vpop.f32.mrf.mxu0
    %v10963 = vadd.f32 %v10922, %v10962
    %v10964 = vpop.f32.mrf.mxu0
    %v10965 = vadd.f32 %v10924, %v10964
    %v10966 = vpop.f32.mrf.mxu0
    %v10967 = vpop.f32.mrf.mxu0
    %10968 = vdwg.mxu0
    %10969 = vmatprep.subr.bf16.mxu0 %v7346
    %10970 = vmatpush1.bf16.msra.mxu0 %v7345
    %10971 = vmatprep.subr.bf16.mxu0 %v7338
    %10972 = vmatpush1.bf16.msra.mxu0 %v7337
    %10973 = vmatprep.subr.bf16.mxu0 %v7330
    %10974 = vmatpush1.bf16.msra.mxu0 %v7329
    %10975 = vmatprep.subr.bf16.mxu0 %v7322
    %10976 = vmatpush1.bf16.msra.mxu0 %v7321
    %10977 = vmatprep.subr.bf16.mxu0 %v7314
    %10978 = vmatpush1.bf16.msra.mxu0 %v7313
    %10979 = vmatprep.subr.bf16.mxu0 %v7306
    %10980 = vmatpush1.bf16.msra.mxu0 %v7305
    %10981 = vmatprep.subr.bf16.mxu0 %v7298
    %10982 = vmatpush1.bf16.msra.mxu0 %v7297
    %10983 = vmatprep.subr.bf16.mxu0 %v7290
    %10984 = vmatpush1.bf16.msra.mxu0 %v7289
    %10985 = vmatprep.subr.bf16.mxu0 %v7410
    %10986 = vmatpush2.bf16.msra.mxu0 %v7409
    %10987 = vmatprep.subr.bf16.mxu0 %v7402
    %10988 = vmatpush2.bf16.msra.mxu0 %v7401
    %10989 = vmatprep.subr.bf16.mxu0 %v7394
    %10990 = vmatpush2.bf16.msra.mxu0 %v7393
    %10991 = vmatprep.subr.bf16.mxu0 %v7386
    %10992 = vmatpush2.bf16.msra.mxu0 %v7385
    %10993 = vmatprep.subr.bf16.mxu0 %v7378
    %10994 = vmatpush2.bf16.msra.mxu0 %v7377
    %10995 = vmatprep.subr.bf16.mxu0 %v7370
    %10996 = vmatpush2.bf16.msra.mxu0 %v7369
    %10997 = vmatprep.subr.bf16.mxu0 %v7362
    %10998 = vmatpush2.bf16.msra.mxu0 %v7361
    %10999 = vmatprep.subr.bf16.mxu0 %v7354
    %11000 = vmatpush2.bf16.msra.mxu0 %v7353
    %11001 = vmatprep.mubr.bf16.mxu0 %v191
    %11002 = vmatmul.mubr.bf16.gmra.mxu0 %v190
    %v11003 = vpop.f32.mrf.mxu0
    %v11004 = vadd.f32 %v10963, %v11003
    %v11005 = vpop.f32.mrf.mxu0
    %v11006 = vadd.f32 %v10965, %v11005
    %v11007 = vpop.f32.mrf.mxu0
    %v11008 = vpop.f32.mrf.mxu0
    %11009 = vdwg.mxu0
    %11010 = vmatprep.subr.bf16.mxu0 %v7474
    %11011 = vmatpush1.bf16.msra.mxu0 %v7473
    %11012 = vmatprep.subr.bf16.mxu0 %v7466
    %11013 = vmatpush1.bf16.msra.mxu0 %v7465
    %11014 = vmatprep.subr.bf16.mxu0 %v7458
    %11015 = vmatpush1.bf16.msra.mxu0 %v7457
    %11016 = vmatprep.subr.bf16.mxu0 %v7450
    %11017 = vmatpush1.bf16.msra.mxu0 %v7449
    %11018 = vmatprep.subr.bf16.mxu0 %v7442
    %11019 = vmatpush1.bf16.msra.mxu0 %v7441
    %11020 = vmatprep.subr.bf16.mxu0 %v7434
    %11021 = vmatpush1.bf16.msra.mxu0 %v7433
    %11022 = vmatprep.subr.bf16.mxu0 %v7426
    %11023 = vmatpush1.bf16.msra.mxu0 %v7425
    %11024 = vmatprep.subr.bf16.mxu0 %v7418
    %11025 = vmatpush1.bf16.msra.mxu0 %v7417
    %11026 = vmatprep.subr.bf16.mxu0 %v7538
    %11027 = vmatpush2.bf16.msra.mxu0 %v7537
    %11028 = vmatprep.subr.bf16.mxu0 %v7530
    %11029 = vmatpush2.bf16.msra.mxu0 %v7529
    %11030 = vmatprep.subr.bf16.mxu0 %v7522
    %11031 = vmatpush2.bf16.msra.mxu0 %v7521
    %11032 = vmatprep.subr.bf16.mxu0 %v7514
    %11033 = vmatpush2.bf16.msra.mxu0 %v7513
    %11034 = vmatprep.subr.bf16.mxu0 %v7506
    %11035 = vmatpush2.bf16.msra.mxu0 %v7505
    %11036 = vmatprep.subr.bf16.mxu0 %v7498
    %11037 = vmatpush2.bf16.msra.mxu0 %v7497
    %11038 = vmatprep.subr.bf16.mxu0 %v7490
    %11039 = vmatpush2.bf16.msra.mxu0 %v7489
    %11040 = vmatprep.subr.bf16.mxu0 %v7482
    %11041 = vmatpush2.bf16.msra.mxu0 %v7481
    %11042 = vmatprep.mubr.bf16.mxu0 %v193
    %11043 = vmatmul.mubr.bf16.gmra.mxu0 %v192
    %v11044 = vpop.f32.mrf.mxu0
    %v11045 = vadd.f32 %v11004, %v11044
    %v11046 = vpop.f32.mrf.mxu0
    %v11047 = vadd.f32 %v11006, %v11046
    %v11048 = vpop.f32.mrf.mxu0
    %v11049 = vpop.f32.mrf.mxu0
    %11050 = vdwg.mxu0
    %11051 = vmatprep.subr.bf16.mxu0 %v7602
    %11052 = vmatpush1.bf16.msra.mxu0 %v7601
    %11053 = vmatprep.subr.bf16.mxu0 %v7594
    %11054 = vmatpush1.bf16.msra.mxu0 %v7593
    %11055 = vmatprep.subr.bf16.mxu0 %v7586
    %11056 = vmatpush1.bf16.msra.mxu0 %v7585
    %11057 = vmatprep.subr.bf16.mxu0 %v7578
    %11058 = vmatpush1.bf16.msra.mxu0 %v7577
    %11059 = vmatprep.subr.bf16.mxu0 %v7570
    %11060 = vmatpush1.bf16.msra.mxu0 %v7569
    %11061 = vmatprep.subr.bf16.mxu0 %v7562
    %11062 = vmatpush1.bf16.msra.mxu0 %v7561
    %11063 = vmatprep.subr.bf16.mxu0 %v7554
    %11064 = vmatpush1.bf16.msra.mxu0 %v7553
    %11065 = vmatprep.subr.bf16.mxu0 %v7546
    %11066 = vmatpush1.bf16.msra.mxu0 %v7545
    %11067 = vmatprep.subr.bf16.mxu0 %v7666
    %11068 = vmatpush2.bf16.msra.mxu0 %v7665
    %11069 = vmatprep.subr.bf16.mxu0 %v7658
    %11070 = vmatpush2.bf16.msra.mxu0 %v7657
    %11071 = vmatprep.subr.bf16.mxu0 %v7650
    %11072 = vmatpush2.bf16.msra.mxu0 %v7649
    %11073 = vmatprep.subr.bf16.mxu0 %v7642
    %11074 = vmatpush2.bf16.msra.mxu0 %v7641
    %11075 = vmatprep.subr.bf16.mxu0 %v7634
    %11076 = vmatpush2.bf16.msra.mxu0 %v7633
    %11077 = vmatprep.subr.bf16.mxu0 %v7626
    %11078 = vmatpush2.bf16.msra.mxu0 %v7625
    %11079 = vmatprep.subr.bf16.mxu0 %v7618
    %11080 = vmatpush2.bf16.msra.mxu0 %v7617
    %11081 = vmatprep.subr.bf16.mxu0 %v7610
    %11082 = vmatpush2.bf16.msra.mxu0 %v7609
    %11083 = vmatprep.mubr.bf16.mxu0 %v195
    %11084 = vmatmul.mubr.bf16.gmra.mxu0 %v194
    %v11085 = vpop.f32.mrf.mxu0
    %v11086 = vadd.f32 %v11045, %v11085
    %v11087 = vpop.f32.mrf.mxu0
    %v11088 = vadd.f32 %v11047, %v11087
    %v11089 = vpop.f32.mrf.mxu0
    %v11090 = vpop.f32.mrf.mxu0
    %11091 = vdwg.mxu0
    %11092 = vmatprep.subr.bf16.mxu0 %v7730
    %11093 = vmatpush1.bf16.msra.mxu0 %v7729
    %11094 = vmatprep.subr.bf16.mxu0 %v7722
    %11095 = vmatpush1.bf16.msra.mxu0 %v7721
    %11096 = vmatprep.subr.bf16.mxu0 %v7714
    %11097 = vmatpush1.bf16.msra.mxu0 %v7713
    %11098 = vmatprep.subr.bf16.mxu0 %v7706
    %11099 = vmatpush1.bf16.msra.mxu0 %v7705
    %11100 = vmatprep.subr.bf16.mxu0 %v7698
    %11101 = vmatpush1.bf16.msra.mxu0 %v7697
    %11102 = vmatprep.subr.bf16.mxu0 %v7690
    %11103 = vmatpush1.bf16.msra.mxu0 %v7689
    %11104 = vmatprep.subr.bf16.mxu0 %v7682
    %11105 = vmatpush1.bf16.msra.mxu0 %v7681
    %11106 = vmatprep.subr.bf16.mxu0 %v7674
    %11107 = vmatpush1.bf16.msra.mxu0 %v7673
    %11108 = vmatprep.subr.bf16.mxu0 %v7794
    %11109 = vmatpush2.bf16.msra.mxu0 %v7793
    %11110 = vmatprep.subr.bf16.mxu0 %v7786
    %11111 = vmatpush2.bf16.msra.mxu0 %v7785
    %11112 = vmatprep.subr.bf16.mxu0 %v7778
    %11113 = vmatpush2.bf16.msra.mxu0 %v7777
    %11114 = vmatprep.subr.bf16.mxu0 %v7770
    %11115 = vmatpush2.bf16.msra.mxu0 %v7769
    %11116 = vmatprep.subr.bf16.mxu0 %v7762
    %11117 = vmatpush2.bf16.msra.mxu0 %v7761
    %11118 = vmatprep.subr.bf16.mxu0 %v7754
    %11119 = vmatpush2.bf16.msra.mxu0 %v7753
    %11120 = vmatprep.subr.bf16.mxu0 %v7746
    %11121 = vmatpush2.bf16.msra.mxu0 %v7745
    %11122 = vmatprep.subr.bf16.mxu0 %v7738
    %11123 = vmatpush2.bf16.msra.mxu0 %v7737
    %11124 = vmatprep.mubr.bf16.mxu0 %v197
    %11125 = vmatmul.mubr.bf16.gmra.mxu0 %v196
    %v11126 = vpop.f32.mrf.mxu0
    %v11127 = vadd.f32 %v11086, %v11126
    %v11128 = vpop.f32.mrf.mxu0
    %v11129 = vadd.f32 %v11088, %v11128
    %v11130 = vpop.f32.mrf.mxu0
    %v11131 = vpop.f32.mrf.mxu0
    %11132 = vdwg.mxu0
    %11133 = vmatprep.subr.bf16.mxu0 %v7858
    %11134 = vmatpush1.bf16.msra.mxu0 %v7857
    %11135 = vmatprep.subr.bf16.mxu0 %v7850
    %11136 = vmatpush1.bf16.msra.mxu0 %v7849
    %11137 = vmatprep.subr.bf16.mxu0 %v7842
    %11138 = vmatpush1.bf16.msra.mxu0 %v7841
    %11139 = vmatprep.subr.bf16.mxu0 %v7834
    %11140 = vmatpush1.bf16.msra.mxu0 %v7833
    %11141 = vmatprep.subr.bf16.mxu0 %v7826
    %11142 = vmatpush1.bf16.msra.mxu0 %v7825
    %11143 = vmatprep.subr.bf16.mxu0 %v7818
    %11144 = vmatpush1.bf16.msra.mxu0 %v7817
    %11145 = vmatprep.subr.bf16.mxu0 %v7810
    %11146 = vmatpush1.bf16.msra.mxu0 %v7809
    %11147 = vmatprep.subr.bf16.mxu0 %v7802
    %11148 = vmatpush1.bf16.msra.mxu0 %v7801
    %11149 = vmatprep.subr.bf16.mxu0 %v7922
    %11150 = vmatpush2.bf16.msra.mxu0 %v7921
    %11151 = vmatprep.subr.bf16.mxu0 %v7914
    %11152 = vmatpush2.bf16.msra.mxu0 %v7913
    %11153 = vmatprep.subr.bf16.mxu0 %v7906
    %11154 = vmatpush2.bf16.msra.mxu0 %v7905
    %11155 = vmatprep.subr.bf16.mxu0 %v7898
    %11156 = vmatpush2.bf16.msra.mxu0 %v7897
    %11157 = vmatprep.subr.bf16.mxu0 %v7890
    %11158 = vmatpush2.bf16.msra.mxu0 %v7889
    %11159 = vmatprep.subr.bf16.mxu0 %v7882
    %11160 = vmatpush2.bf16.msra.mxu0 %v7881
    %11161 = vmatprep.subr.bf16.mxu0 %v7874
    %11162 = vmatpush2.bf16.msra.mxu0 %v7873
    %11163 = vmatprep.subr.bf16.mxu0 %v7866
    %11164 = vmatpush2.bf16.msra.mxu0 %v7865
    %11165 = vmatprep.mubr.bf16.mxu0 %v199
    %11166 = vmatmul.mubr.bf16.gmra.mxu0 %v198
    %v11167 = vpop.f32.mrf.mxu0
    %v11168 = vadd.f32 %v11127, %v11167
    %v11169 = vpop.f32.mrf.mxu0
    %v11170 = vadd.f32 %v11129, %v11169
    %v11171 = vpop.f32.mrf.mxu0
    %v11172 = vpop.f32.mrf.mxu0
    %11173 = vdwg.mxu0
    %11174 = vmatprep.subr.bf16.mxu0 %v7986
    %11175 = vmatpush1.bf16.msra.mxu0 %v7985
    %11176 = vmatprep.subr.bf16.mxu0 %v7978
    %11177 = vmatpush1.bf16.msra.mxu0 %v7977
    %11178 = vmatprep.subr.bf16.mxu0 %v7970
    %11179 = vmatpush1.bf16.msra.mxu0 %v7969
    %11180 = vmatprep.subr.bf16.mxu0 %v7962
    %11181 = vmatpush1.bf16.msra.mxu0 %v7961
    %11182 = vmatprep.subr.bf16.mxu0 %v7954
    %11183 = vmatpush1.bf16.msra.mxu0 %v7953
    %11184 = vmatprep.subr.bf16.mxu0 %v7946
    %11185 = vmatpush1.bf16.msra.mxu0 %v7945
    %11186 = vmatprep.subr.bf16.mxu0 %v7938
    %11187 = vmatpush1.bf16.msra.mxu0 %v7937
    %11188 = vmatprep.subr.bf16.mxu0 %v7930
    %11189 = vmatpush1.bf16.msra.mxu0 %v7929
    %11190 = vmatprep.subr.bf16.mxu0 %v8050
    %11191 = vmatpush2.bf16.msra.mxu0 %v8049
    %11192 = vmatprep.subr.bf16.mxu0 %v8042
    %11193 = vmatpush2.bf16.msra.mxu0 %v8041
    %11194 = vmatprep.subr.bf16.mxu0 %v8034
    %11195 = vmatpush2.bf16.msra.mxu0 %v8033
    %11196 = vmatprep.subr.bf16.mxu0 %v8026
    %11197 = vmatpush2.bf16.msra.mxu0 %v8025
    %11198 = vmatprep.subr.bf16.mxu0 %v8018
    %11199 = vmatpush2.bf16.msra.mxu0 %v8017
    %11200 = vmatprep.subr.bf16.mxu0 %v8010
    %11201 = vmatpush2.bf16.msra.mxu0 %v8009
    %11202 = vmatprep.subr.bf16.mxu0 %v8002
    %11203 = vmatpush2.bf16.msra.mxu0 %v8001
    %11204 = vmatprep.subr.bf16.mxu0 %v7994
    %11205 = vmatpush2.bf16.msra.mxu0 %v7993
    %11206 = vmatprep.mubr.bf16.mxu0 %v201
    %11207 = vmatmul.mubr.bf16.gmra.mxu0 %v200
    %v11208 = vpop.f32.mrf.mxu0
    %v11209 = vadd.f32 %v11168, %v11208
    %v11210 = vpop.f32.mrf.mxu0
    %v11211 = vadd.f32 %v11170, %v11210
    %v11212 = vpop.f32.mrf.mxu0
    %v11213 = vpop.f32.mrf.mxu0
    %11214 = vdwg.mxu0
    %11215 = vmatprep.subr.bf16.mxu0 0
    %11216 = vmatpush1.bf16.msra.mxu0 0
    %11217 = vmatprep.subr.bf16.mxu0 0
    %11218 = vmatpush1.bf16.msra.mxu0 0
    %11219 = vmatprep.subr.bf16.mxu0 0
    %11220 = vmatpush1.bf16.msra.mxu0 0
    %11221 = vmatprep.subr.bf16.mxu0 0
    %11222 = vmatpush1.bf16.msra.mxu0 0
    %11223 = vmatprep.subr.bf16.mxu0 %v8082
    %11224 = vmatpush1.bf16.msra.mxu0 %v8081
    %11225 = vmatprep.subr.bf16.mxu0 %v8074
    %11226 = vmatpush1.bf16.msra.mxu0 %v8073
    %11227 = vmatprep.subr.bf16.mxu0 %v8066
    %11228 = vmatpush1.bf16.msra.mxu0 %v8065
    %11229 = vmatprep.subr.bf16.mxu0 %v8058
    %11230 = vmatpush1.bf16.msra.mxu0 %v8057
    %11231 = vmatprep.subr.bf16.mxu0 0
    %11232 = vmatpush2.bf16.msra.mxu0 0
    %11233 = vmatprep.subr.bf16.mxu0 0
    %11234 = vmatpush2.bf16.msra.mxu0 0
    %11235 = vmatprep.subr.bf16.mxu0 0
    %11236 = vmatpush2.bf16.msra.mxu0 0
    %11237 = vmatprep.subr.bf16.mxu0 0
    %11238 = vmatpush2.bf16.msra.mxu0 0
    %11239 = vmatprep.subr.bf16.mxu0 0
    %11240 = vmatpush2.bf16.msra.mxu0 0
    %11241 = vmatprep.subr.bf16.mxu0 0
    %11242 = vmatpush2.bf16.msra.mxu0 0
    %11243 = vmatprep.subr.bf16.mxu0 0
    %11244 = vmatpush2.bf16.msra.mxu0 0
    %11245 = vmatprep.subr.bf16.mxu0 0
    %11246 = vmatpush2.bf16.msra.mxu0 0
    %11247 = vmatprep.mubr.bf16.mxu0 0
    %11248 = vmatmul.mubr.bf16.gmra.mxu0 %v9655
    %v11249 = vpop.f32.mrf.mxu0
    %v11250 = vadd.f32 %v11209, %v11249
    %v11251 = vpop.f32.mrf.mxu0
    %v11252 = vadd.f32 %v11211, %v11251
    %v11253 = vpop.f32.mrf.mxu0
    %v11254 = vpop.f32.mrf.mxu0
    %11255 = vdwg.mxu0
    %11256 = vmatprep.subr.bf16.mxu0 %v6580
    %11257 = vmatpush1.bf16.msra.mxu0 %v6579
    %11258 = vmatprep.subr.bf16.mxu0 %v6572
    %11259 = vmatpush1.bf16.msra.mxu0 %v6571
    %11260 = vmatprep.subr.bf16.mxu0 %v6564
    %11261 = vmatpush1.bf16.msra.mxu0 %v6563
    %11262 = vmatprep.subr.bf16.mxu0 %v6556
    %11263 = vmatpush1.bf16.msra.mxu0 %v6555
    %11264 = vmatprep.subr.bf16.mxu0 %v6548
    %11265 = vmatpush1.bf16.msra.mxu0 %v6547
    %11266 = vmatprep.subr.bf16.mxu0 %v6540
    %11267 = vmatpush1.bf16.msra.mxu0 %v6539
    %11268 = vmatprep.subr.bf16.mxu0 %v6532
    %11269 = vmatpush1.bf16.msra.mxu0 %v6531
    %11270 = vmatprep.subr.bf16.mxu0 %v6524
    %11271 = vmatpush1.bf16.msra.mxu0 %v6523
    %11272 = vmatprep.subr.bf16.mxu0 %v6644
    %11273 = vmatpush2.bf16.msra.mxu0 %v6643
    %11274 = vmatprep.subr.bf16.mxu0 %v6636
    %11275 = vmatpush2.bf16.msra.mxu0 %v6635
    %11276 = vmatprep.subr.bf16.mxu0 %v6628
    %11277 = vmatpush2.bf16.msra.mxu0 %v6627
    %11278 = vmatprep.subr.bf16.mxu0 %v6620
    %11279 = vmatpush2.bf16.msra.mxu0 %v6619
    %11280 = vmatprep.subr.bf16.mxu0 %v6612
    %11281 = vmatpush2.bf16.msra.mxu0 %v6611
    %11282 = vmatprep.subr.bf16.mxu0 %v6604
    %11283 = vmatpush2.bf16.msra.mxu0 %v6603
    %11284 = vmatprep.subr.bf16.mxu0 %v6596
    %11285 = vmatpush2.bf16.msra.mxu0 %v6595
    %11286 = vmatprep.subr.bf16.mxu0 %v6588
    %11287 = vmatpush2.bf16.msra.mxu0 %v6587
    %11288 = vmatprep.mubr.bf16.mxu0 %v179
    %11289 = vmatmul.mubr.bf16.gmra.mxu0 %v178
    %v11290 = vpop.f32.mrf.mxu0
    %v11291 = vadd.f32 %v1800, %v11290
    %v11292 = vpop.f32.mrf.mxu0
    %v11293 = vadd.f32 %v1804, %v11292
    %v11294 = vpop.f32.mrf.mxu0
    %v11295 = vpop.f32.mrf.mxu0
    %11296 = vdwg.mxu0
    %11297 = vmatprep.subr.bf16.mxu0 %v6708
    %11298 = vmatpush1.bf16.msra.mxu0 %v6707
    %11299 = vmatprep.subr.bf16.mxu0 %v6700
    %11300 = vmatpush1.bf16.msra.mxu0 %v6699
    %11301 = vmatprep.subr.bf16.mxu0 %v6692
    %11302 = vmatpush1.bf16.msra.mxu0 %v6691
    %11303 = vmatprep.subr.bf16.mxu0 %v6684
    %11304 = vmatpush1.bf16.msra.mxu0 %v6683
    %11305 = vmatprep.subr.bf16.mxu0 %v6676
    %11306 = vmatpush1.bf16.msra.mxu0 %v6675
    %11307 = vmatprep.subr.bf16.mxu0 %v6668
    %11308 = vmatpush1.bf16.msra.mxu0 %v6667
    %11309 = vmatprep.subr.bf16.mxu0 %v6660
    %11310 = vmatpush1.bf16.msra.mxu0 %v6659
    %11311 = vmatprep.subr.bf16.mxu0 %v6652
    %11312 = vmatpush1.bf16.msra.mxu0 %v6651
    %11313 = vmatprep.subr.bf16.mxu0 %v6772
    %11314 = vmatpush2.bf16.msra.mxu0 %v6771
    %11315 = vmatprep.subr.bf16.mxu0 %v6764
    %11316 = vmatpush2.bf16.msra.mxu0 %v6763
    %11317 = vmatprep.subr.bf16.mxu0 %v6756
    %11318 = vmatpush2.bf16.msra.mxu0 %v6755
    %11319 = vmatprep.subr.bf16.mxu0 %v6748
    %11320 = vmatpush2.bf16.msra.mxu0 %v6747
    %11321 = vmatprep.subr.bf16.mxu0 %v6740
    %11322 = vmatpush2.bf16.msra.mxu0 %v6739
    %11323 = vmatprep.subr.bf16.mxu0 %v6732
    %11324 = vmatpush2.bf16.msra.mxu0 %v6731
    %11325 = vmatprep.subr.bf16.mxu0 %v6724
    %11326 = vmatpush2.bf16.msra.mxu0 %v6723
    %11327 = vmatprep.subr.bf16.mxu0 %v6716
    %11328 = vmatpush2.bf16.msra.mxu0 %v6715
    %11329 = vmatprep.mubr.bf16.mxu0 %v181
    %11330 = vmatmul.mubr.bf16.gmra.mxu0 %v180
    %v11331 = vpop.f32.mrf.mxu0
    %v11332 = vadd.f32 %v11291, %v11331
    %v11333 = vpop.f32.mrf.mxu0
    %v11334 = vadd.f32 %v11293, %v11333
    %v11335 = vpop.f32.mrf.mxu0
    %v11336 = vpop.f32.mrf.mxu0
    %11337 = vdwg.mxu0
    %11338 = vmatprep.subr.bf16.mxu0 %v6836
    %11339 = vmatpush1.bf16.msra.mxu0 %v6835
    %11340 = vmatprep.subr.bf16.mxu0 %v6828
    %11341 = vmatpush1.bf16.msra.mxu0 %v6827
    %11342 = vmatprep.subr.bf16.mxu0 %v6820
    %11343 = vmatpush1.bf16.msra.mxu0 %v6819
    %11344 = vmatprep.subr.bf16.mxu0 %v6812
    %11345 = vmatpush1.bf16.msra.mxu0 %v6811
    %11346 = vmatprep.subr.bf16.mxu0 %v6804
    %11347 = vmatpush1.bf16.msra.mxu0 %v6803
    %11348 = vmatprep.subr.bf16.mxu0 %v6796
    %11349 = vmatpush1.bf16.msra.mxu0 %v6795
    %11350 = vmatprep.subr.bf16.mxu0 %v6788
    %11351 = vmatpush1.bf16.msra.mxu0 %v6787
    %11352 = vmatprep.subr.bf16.mxu0 %v6780
    %11353 = vmatpush1.bf16.msra.mxu0 %v6779
    %11354 = vmatprep.subr.bf16.mxu0 %v6900
    %11355 = vmatpush2.bf16.msra.mxu0 %v6899
    %11356 = vmatprep.subr.bf16.mxu0 %v6892
    %11357 = vmatpush2.bf16.msra.mxu0 %v6891
    %11358 = vmatprep.subr.bf16.mxu0 %v6884
    %11359 = vmatpush2.bf16.msra.mxu0 %v6883
    %11360 = vmatprep.subr.bf16.mxu0 %v6876
    %11361 = vmatpush2.bf16.msra.mxu0 %v6875
    %11362 = vmatprep.subr.bf16.mxu0 %v6868
    %11363 = vmatpush2.bf16.msra.mxu0 %v6867
    %11364 = vmatprep.subr.bf16.mxu0 %v6860
    %11365 = vmatpush2.bf16.msra.mxu0 %v6859
    %11366 = vmatprep.subr.bf16.mxu0 %v6852
    %11367 = vmatpush2.bf16.msra.mxu0 %v6851
    %11368 = vmatprep.subr.bf16.mxu0 %v6844
    %11369 = vmatpush2.bf16.msra.mxu0 %v6843
    %11370 = vmatprep.mubr.bf16.mxu0 %v183
    %11371 = vmatmul.mubr.bf16.gmra.mxu0 %v182
    %v11372 = vpop.f32.mrf.mxu0
    %v11373 = vadd.f32 %v11332, %v11372
    %v11374 = vpop.f32.mrf.mxu0
    %v11375 = vadd.f32 %v11334, %v11374
    %v11376 = vpop.f32.mrf.mxu0
    %v11377 = vpop.f32.mrf.mxu0
    %11378 = vdwg.mxu0
    %11379 = vmatprep.subr.bf16.mxu0 %v6964
    %11380 = vmatpush1.bf16.msra.mxu0 %v6963
    %11381 = vmatprep.subr.bf16.mxu0 %v6956
    %11382 = vmatpush1.bf16.msra.mxu0 %v6955
    %11383 = vmatprep.subr.bf16.mxu0 %v6948
    %11384 = vmatpush1.bf16.msra.mxu0 %v6947
    %11385 = vmatprep.subr.bf16.mxu0 %v6940
    %11386 = vmatpush1.bf16.msra.mxu0 %v6939
    %11387 = vmatprep.subr.bf16.mxu0 %v6932
    %11388 = vmatpush1.bf16.msra.mxu0 %v6931
    %11389 = vmatprep.subr.bf16.mxu0 %v6924
    %11390 = vmatpush1.bf16.msra.mxu0 %v6923
    %11391 = vmatprep.subr.bf16.mxu0 %v6916
    %11392 = vmatpush1.bf16.msra.mxu0 %v6915
    %11393 = vmatprep.subr.bf16.mxu0 %v6908
    %11394 = vmatpush1.bf16.msra.mxu0 %v6907
    %11395 = vmatprep.subr.bf16.mxu0 %v7028
    %11396 = vmatpush2.bf16.msra.mxu0 %v7027
    %11397 = vmatprep.subr.bf16.mxu0 %v7020
    %11398 = vmatpush2.bf16.msra.mxu0 %v7019
    %11399 = vmatprep.subr.bf16.mxu0 %v7012
    %11400 = vmatpush2.bf16.msra.mxu0 %v7011
    %11401 = vmatprep.subr.bf16.mxu0 %v7004
    %11402 = vmatpush2.bf16.msra.mxu0 %v7003
    %11403 = vmatprep.subr.bf16.mxu0 %v6996
    %11404 = vmatpush2.bf16.msra.mxu0 %v6995
    %11405 = vmatprep.subr.bf16.mxu0 %v6988
    %11406 = vmatpush2.bf16.msra.mxu0 %v6987
    %11407 = vmatprep.subr.bf16.mxu0 %v6980
    %11408 = vmatpush2.bf16.msra.mxu0 %v6979
    %11409 = vmatprep.subr.bf16.mxu0 %v6972
    %11410 = vmatpush2.bf16.msra.mxu0 %v6971
    %11411 = vmatprep.mubr.bf16.mxu0 %v185
    %11412 = vmatmul.mubr.bf16.gmra.mxu0 %v184
    %v11413 = vpop.f32.mrf.mxu0
    %v11414 = vadd.f32 %v11373, %v11413
    %v11415 = vpop.f32.mrf.mxu0
    %v11416 = vadd.f32 %v11375, %v11415
    %v11417 = vpop.f32.mrf.mxu0
    %v11418 = vpop.f32.mrf.mxu0
    %11419 = vdwg.mxu0
    %11420 = vmatprep.subr.bf16.mxu0 %v7092
    %11421 = vmatpush1.bf16.msra.mxu0 %v7091
    %11422 = vmatprep.subr.bf16.mxu0 %v7084
    %11423 = vmatpush1.bf16.msra.mxu0 %v7083
    %11424 = vmatprep.subr.bf16.mxu0 %v7076
    %11425 = vmatpush1.bf16.msra.mxu0 %v7075
    %11426 = vmatprep.subr.bf16.mxu0 %v7068
    %11427 = vmatpush1.bf16.msra.mxu0 %v7067
    %11428 = vmatprep.subr.bf16.mxu0 %v7060
    %11429 = vmatpush1.bf16.msra.mxu0 %v7059
    %11430 = vmatprep.subr.bf16.mxu0 %v7052
    %11431 = vmatpush1.bf16.msra.mxu0 %v7051
    %11432 = vmatprep.subr.bf16.mxu0 %v7044
    %11433 = vmatpush1.bf16.msra.mxu0 %v7043
    %11434 = vmatprep.subr.bf16.mxu0 %v7036
    %11435 = vmatpush1.bf16.msra.mxu0 %v7035
    %11436 = vmatprep.subr.bf16.mxu0 %v7156
    %11437 = vmatpush2.bf16.msra.mxu0 %v7155
    %11438 = vmatprep.subr.bf16.mxu0 %v7148
    %11439 = vmatpush2.bf16.msra.mxu0 %v7147
    %11440 = vmatprep.subr.bf16.mxu0 %v7140
    %11441 = vmatpush2.bf16.msra.mxu0 %v7139
    %11442 = vmatprep.subr.bf16.mxu0 %v7132
    %11443 = vmatpush2.bf16.msra.mxu0 %v7131
    %11444 = vmatprep.subr.bf16.mxu0 %v7124
    %11445 = vmatpush2.bf16.msra.mxu0 %v7123
    %11446 = vmatprep.subr.bf16.mxu0 %v7116
    %11447 = vmatpush2.bf16.msra.mxu0 %v7115
    %11448 = vmatprep.subr.bf16.mxu0 %v7108
    %11449 = vmatpush2.bf16.msra.mxu0 %v7107
    %11450 = vmatprep.subr.bf16.mxu0 %v7100
    %11451 = vmatpush2.bf16.msra.mxu0 %v7099
    %11452 = vmatprep.mubr.bf16.mxu0 %v187
    %11453 = vmatmul.mubr.bf16.gmra.mxu0 %v186
    %v11454 = vpop.f32.mrf.mxu0
    %v11455 = vadd.f32 %v11414, %v11454
    %v11456 = vpop.f32.mrf.mxu0
    %v11457 = vadd.f32 %v11416, %v11456
    %v11458 = vpop.f32.mrf.mxu0
    %v11459 = vpop.f32.mrf.mxu0
    %11460 = vdwg.mxu0
    %11461 = vmatprep.subr.bf16.mxu0 %v7220
    %11462 = vmatpush1.bf16.msra.mxu0 %v7219
    %11463 = vmatprep.subr.bf16.mxu0 %v7212
    %11464 = vmatpush1.bf16.msra.mxu0 %v7211
    %11465 = vmatprep.subr.bf16.mxu0 %v7204
    %11466 = vmatpush1.bf16.msra.mxu0 %v7203
    %11467 = vmatprep.subr.bf16.mxu0 %v7196
    %11468 = vmatpush1.bf16.msra.mxu0 %v7195
    %11469 = vmatprep.subr.bf16.mxu0 %v7188
    %11470 = vmatpush1.bf16.msra.mxu0 %v7187
    %11471 = vmatprep.subr.bf16.mxu0 %v7180
    %11472 = vmatpush1.bf16.msra.mxu0 %v7179
    %11473 = vmatprep.subr.bf16.mxu0 %v7172
    %11474 = vmatpush1.bf16.msra.mxu0 %v7171
    %11475 = vmatprep.subr.bf16.mxu0 %v7164
    %11476 = vmatpush1.bf16.msra.mxu0 %v7163
    %11477 = vmatprep.subr.bf16.mxu0 %v7284
    %11478 = vmatpush2.bf16.msra.mxu0 %v7283
    %11479 = vmatprep.subr.bf16.mxu0 %v7276
    %11480 = vmatpush2.bf16.msra.mxu0 %v7275
    %11481 = vmatprep.subr.bf16.mxu0 %v7268
    %11482 = vmatpush2.bf16.msra.mxu0 %v7267
    %11483 = vmatprep.subr.bf16.mxu0 %v7260
    %11484 = vmatpush2.bf16.msra.mxu0 %v7259
    %11485 = vmatprep.subr.bf16.mxu0 %v7252
    %11486 = vmatpush2.bf16.msra.mxu0 %v7251
    %11487 = vmatprep.subr.bf16.mxu0 %v7244
    %11488 = vmatpush2.bf16.msra.mxu0 %v7243
    %11489 = vmatprep.subr.bf16.mxu0 %v7236
    %11490 = vmatpush2.bf16.msra.mxu0 %v7235
    %11491 = vmatprep.subr.bf16.mxu0 %v7228
    %11492 = vmatpush2.bf16.msra.mxu0 %v7227
    %11493 = vmatprep.mubr.bf16.mxu0 %v189
    %11494 = vmatmul.mubr.bf16.gmra.mxu0 %v188
    %v11495 = vpop.f32.mrf.mxu0
    %v11496 = vadd.f32 %v11455, %v11495
    %v11497 = vpop.f32.mrf.mxu0
    %v11498 = vadd.f32 %v11457, %v11497
    %v11499 = vpop.f32.mrf.mxu0
    %v11500 = vpop.f32.mrf.mxu0
    %11501 = vdwg.mxu0
    %11502 = vmatprep.subr.bf16.mxu0 %v7348
    %11503 = vmatpush1.bf16.msra.mxu0 %v7347
    %11504 = vmatprep.subr.bf16.mxu0 %v7340
    %11505 = vmatpush1.bf16.msra.mxu0 %v7339
    %11506 = vmatprep.subr.bf16.mxu0 %v7332
    %11507 = vmatpush1.bf16.msra.mxu0 %v7331
    %11508 = vmatprep.subr.bf16.mxu0 %v7324
    %11509 = vmatpush1.bf16.msra.mxu0 %v7323
    %11510 = vmatprep.subr.bf16.mxu0 %v7316
    %11511 = vmatpush1.bf16.msra.mxu0 %v7315
    %11512 = vmatprep.subr.bf16.mxu0 %v7308
    %11513 = vmatpush1.bf16.msra.mxu0 %v7307
    %11514 = vmatprep.subr.bf16.mxu0 %v7300
    %11515 = vmatpush1.bf16.msra.mxu0 %v7299
    %11516 = vmatprep.subr.bf16.mxu0 %v7292
    %11517 = vmatpush1.bf16.msra.mxu0 %v7291
    %11518 = vmatprep.subr.bf16.mxu0 %v7412
    %11519 = vmatpush2.bf16.msra.mxu0 %v7411
    %11520 = vmatprep.subr.bf16.mxu0 %v7404
    %11521 = vmatpush2.bf16.msra.mxu0 %v7403
    %11522 = vmatprep.subr.bf16.mxu0 %v7396
    %11523 = vmatpush2.bf16.msra.mxu0 %v7395
    %11524 = vmatprep.subr.bf16.mxu0 %v7388
    %11525 = vmatpush2.bf16.msra.mxu0 %v7387
    %11526 = vmatprep.subr.bf16.mxu0 %v7380
    %11527 = vmatpush2.bf16.msra.mxu0 %v7379
    %11528 = vmatprep.subr.bf16.mxu0 %v7372
    %11529 = vmatpush2.bf16.msra.mxu0 %v7371
    %11530 = vmatprep.subr.bf16.mxu0 %v7364
    %11531 = vmatpush2.bf16.msra.mxu0 %v7363
    %11532 = vmatprep.subr.bf16.mxu0 %v7356
    %11533 = vmatpush2.bf16.msra.mxu0 %v7355
    %11534 = vmatprep.mubr.bf16.mxu0 %v191
    %11535 = vmatmul.mubr.bf16.gmra.mxu0 %v190
    %v11536 = vpop.f32.mrf.mxu0
    %v11537 = vadd.f32 %v11496, %v11536
    %v11538 = vpop.f32.mrf.mxu0
    %v11539 = vadd.f32 %v11498, %v11538
    %v11540 = vpop.f32.mrf.mxu0
    %v11541 = vpop.f32.mrf.mxu0
    %11542 = vdwg.mxu0
    %11543 = vmatprep.subr.bf16.mxu0 %v7476
    %11544 = vmatpush1.bf16.msra.mxu0 %v7475
    %11545 = vmatprep.subr.bf16.mxu0 %v7468
    %11546 = vmatpush1.bf16.msra.mxu0 %v7467
    %11547 = vmatprep.subr.bf16.mxu0 %v7460
    %11548 = vmatpush1.bf16.msra.mxu0 %v7459
    %11549 = vmatprep.subr.bf16.mxu0 %v7452
    %11550 = vmatpush1.bf16.msra.mxu0 %v7451
    %11551 = vmatprep.subr.bf16.mxu0 %v7444
    %11552 = vmatpush1.bf16.msra.mxu0 %v7443
    %11553 = vmatprep.subr.bf16.mxu0 %v7436
    %11554 = vmatpush1.bf16.msra.mxu0 %v7435
    %11555 = vmatprep.subr.bf16.mxu0 %v7428
    %11556 = vmatpush1.bf16.msra.mxu0 %v7427
    %11557 = vmatprep.subr.bf16.mxu0 %v7420
    %11558 = vmatpush1.bf16.msra.mxu0 %v7419
    %11559 = vmatprep.subr.bf16.mxu0 %v7540
    %11560 = vmatpush2.bf16.msra.mxu0 %v7539
    %11561 = vmatprep.subr.bf16.mxu0 %v7532
    %11562 = vmatpush2.bf16.msra.mxu0 %v7531
    %11563 = vmatprep.subr.bf16.mxu0 %v7524
    %11564 = vmatpush2.bf16.msra.mxu0 %v7523
    %11565 = vmatprep.subr.bf16.mxu0 %v7516
    %11566 = vmatpush2.bf16.msra.mxu0 %v7515
    %11567 = vmatprep.subr.bf16.mxu0 %v7508
    %11568 = vmatpush2.bf16.msra.mxu0 %v7507
    %11569 = vmatprep.subr.bf16.mxu0 %v7500
    %11570 = vmatpush2.bf16.msra.mxu0 %v7499
    %11571 = vmatprep.subr.bf16.mxu0 %v7492
    %11572 = vmatpush2.bf16.msra.mxu0 %v7491
    %11573 = vmatprep.subr.bf16.mxu0 %v7484
    %11574 = vmatpush2.bf16.msra.mxu0 %v7483
    %11575 = vmatprep.mubr.bf16.mxu0 %v193
    %11576 = vmatmul.mubr.bf16.gmra.mxu0 %v192
    %v11577 = vpop.f32.mrf.mxu0
    %v11578 = vadd.f32 %v11537, %v11577
    %v11579 = vpop.f32.mrf.mxu0
    %v11580 = vadd.f32 %v11539, %v11579
    %v11581 = vpop.f32.mrf.mxu0
    %v11582 = vpop.f32.mrf.mxu0
    %11583 = vdwg.mxu0
    %11584 = vmatprep.subr.bf16.mxu0 %v7604
    %11585 = vmatpush1.bf16.msra.mxu0 %v7603
    %11586 = vmatprep.subr.bf16.mxu0 %v7596
    %11587 = vmatpush1.bf16.msra.mxu0 %v7595
    %11588 = vmatprep.subr.bf16.mxu0 %v7588
    %11589 = vmatpush1.bf16.msra.mxu0 %v7587
    %11590 = vmatprep.subr.bf16.mxu0 %v7580
    %11591 = vmatpush1.bf16.msra.mxu0 %v7579
    %11592 = vmatprep.subr.bf16.mxu0 %v7572
    %11593 = vmatpush1.bf16.msra.mxu0 %v7571
    %11594 = vmatprep.subr.bf16.mxu0 %v7564
    %11595 = vmatpush1.bf16.msra.mxu0 %v7563
    %11596 = vmatprep.subr.bf16.mxu0 %v7556
    %11597 = vmatpush1.bf16.msra.mxu0 %v7555
    %11598 = vmatprep.subr.bf16.mxu0 %v7548
    %11599 = vmatpush1.bf16.msra.mxu0 %v7547
    %11600 = vmatprep.subr.bf16.mxu0 %v7668
    %11601 = vmatpush2.bf16.msra.mxu0 %v7667
    %11602 = vmatprep.subr.bf16.mxu0 %v7660
    %11603 = vmatpush2.bf16.msra.mxu0 %v7659
    %11604 = vmatprep.subr.bf16.mxu0 %v7652
    %11605 = vmatpush2.bf16.msra.mxu0 %v7651
    %11606 = vmatprep.subr.bf16.mxu0 %v7644
    %11607 = vmatpush2.bf16.msra.mxu0 %v7643
    %11608 = vmatprep.subr.bf16.mxu0 %v7636
    %11609 = vmatpush2.bf16.msra.mxu0 %v7635
    %11610 = vmatprep.subr.bf16.mxu0 %v7628
    %11611 = vmatpush2.bf16.msra.mxu0 %v7627
    %11612 = vmatprep.subr.bf16.mxu0 %v7620
    %11613 = vmatpush2.bf16.msra.mxu0 %v7619
    %11614 = vmatprep.subr.bf16.mxu0 %v7612
    %11615 = vmatpush2.bf16.msra.mxu0 %v7611
    %11616 = vmatprep.mubr.bf16.mxu0 %v195
    %11617 = vmatmul.mubr.bf16.gmra.mxu0 %v194
    %v11618 = vpop.f32.mrf.mxu0
    %v11619 = vadd.f32 %v11578, %v11618
    %v11620 = vpop.f32.mrf.mxu0
    %v11621 = vadd.f32 %v11580, %v11620
    %v11622 = vpop.f32.mrf.mxu0
    %v11623 = vpop.f32.mrf.mxu0
    %11624 = vdwg.mxu0
    %11625 = vmatprep.subr.bf16.mxu0 %v7732
    %11626 = vmatpush1.bf16.msra.mxu0 %v7731
    %11627 = vmatprep.subr.bf16.mxu0 %v7724
    %11628 = vmatpush1.bf16.msra.mxu0 %v7723
    %11629 = vmatprep.subr.bf16.mxu0 %v7716
    %11630 = vmatpush1.bf16.msra.mxu0 %v7715
    %11631 = vmatprep.subr.bf16.mxu0 %v7708
    %11632 = vmatpush1.bf16.msra.mxu0 %v7707
    %11633 = vmatprep.subr.bf16.mxu0 %v7700
    %11634 = vmatpush1.bf16.msra.mxu0 %v7699
    %11635 = vmatprep.subr.bf16.mxu0 %v7692
    %11636 = vmatpush1.bf16.msra.mxu0 %v7691
    %11637 = vmatprep.subr.bf16.mxu0 %v7684
    %11638 = vmatpush1.bf16.msra.mxu0 %v7683
    %11639 = vmatprep.subr.bf16.mxu0 %v7676
    %11640 = vmatpush1.bf16.msra.mxu0 %v7675
    %11641 = vmatprep.subr.bf16.mxu0 %v7796
    %11642 = vmatpush2.bf16.msra.mxu0 %v7795
    %11643 = vmatprep.subr.bf16.mxu0 %v7788
    %11644 = vmatpush2.bf16.msra.mxu0 %v7787
    %11645 = vmatprep.subr.bf16.mxu0 %v7780
    %11646 = vmatpush2.bf16.msra.mxu0 %v7779
    %11647 = vmatprep.subr.bf16.mxu0 %v7772
    %11648 = vmatpush2.bf16.msra.mxu0 %v7771
    %11649 = vmatprep.subr.bf16.mxu0 %v7764
    %11650 = vmatpush2.bf16.msra.mxu0 %v7763
    %11651 = vmatprep.subr.bf16.mxu0 %v7756
    %11652 = vmatpush2.bf16.msra.mxu0 %v7755
    %11653 = vmatprep.subr.bf16.mxu0 %v7748
    %11654 = vmatpush2.bf16.msra.mxu0 %v7747
    %11655 = vmatprep.subr.bf16.mxu0 %v7740
    %11656 = vmatpush2.bf16.msra.mxu0 %v7739
    %11657 = vmatprep.mubr.bf16.mxu0 %v197
    %11658 = vmatmul.mubr.bf16.gmra.mxu0 %v196
    %v11659 = vpop.f32.mrf.mxu0
    %v11660 = vadd.f32 %v11619, %v11659
    %v11661 = vpop.f32.mrf.mxu0
    %v11662 = vadd.f32 %v11621, %v11661
    %v11663 = vpop.f32.mrf.mxu0
    %v11664 = vpop.f32.mrf.mxu0
    %11665 = vdwg.mxu0
    %11666 = vmatprep.subr.bf16.mxu0 %v7860
    %11667 = vmatpush1.bf16.msra.mxu0 %v7859
    %11668 = vmatprep.subr.bf16.mxu0 %v7852
    %11669 = vmatpush1.bf16.msra.mxu0 %v7851
    %11670 = vmatprep.subr.bf16.mxu0 %v7844
    %11671 = vmatpush1.bf16.msra.mxu0 %v7843
    %11672 = vmatprep.subr.bf16.mxu0 %v7836
    %11673 = vmatpush1.bf16.msra.mxu0 %v7835
    %11674 = vmatprep.subr.bf16.mxu0 %v7828
    %11675 = vmatpush1.bf16.msra.mxu0 %v7827
    %11676 = vmatprep.subr.bf16.mxu0 %v7820
    %11677 = vmatpush1.bf16.msra.mxu0 %v7819
    %11678 = vmatprep.subr.bf16.mxu0 %v7812
    %11679 = vmatpush1.bf16.msra.mxu0 %v7811
    %11680 = vmatprep.subr.bf16.mxu0 %v7804
    %11681 = vmatpush1.bf16.msra.mxu0 %v7803
    %11682 = vmatprep.subr.bf16.mxu0 %v7924
    %11683 = vmatpush2.bf16.msra.mxu0 %v7923
    %11684 = vmatprep.subr.bf16.mxu0 %v7916
    %11685 = vmatpush2.bf16.msra.mxu0 %v7915
    %11686 = vmatprep.subr.bf16.mxu0 %v7908
    %11687 = vmatpush2.bf16.msra.mxu0 %v7907
    %11688 = vmatprep.subr.bf16.mxu0 %v7900
    %11689 = vmatpush2.bf16.msra.mxu0 %v7899
    %11690 = vmatprep.subr.bf16.mxu0 %v7892
    %11691 = vmatpush2.bf16.msra.mxu0 %v7891
    %11692 = vmatprep.subr.bf16.mxu0 %v7884
    %11693 = vmatpush2.bf16.msra.mxu0 %v7883
    %11694 = vmatprep.subr.bf16.mxu0 %v7876
    %11695 = vmatpush2.bf16.msra.mxu0 %v7875
    %11696 = vmatprep.subr.bf16.mxu0 %v7868
    %11697 = vmatpush2.bf16.msra.mxu0 %v7867
    %11698 = vmatprep.mubr.bf16.mxu0 %v199
    %11699 = vmatmul.mubr.bf16.gmra.mxu0 %v198
    %v11700 = vpop.f32.mrf.mxu0
    %v11701 = vadd.f32 %v11660, %v11700
    %v11702 = vpop.f32.mrf.mxu0
    %v11703 = vadd.f32 %v11662, %v11702
    %v11704 = vpop.f32.mrf.mxu0
    %v11705 = vpop.f32.mrf.mxu0
    %11706 = vdwg.mxu0
    %11707 = vmatprep.subr.bf16.mxu0 %v7988
    %11708 = vmatpush1.bf16.msra.mxu0 %v7987
    %11709 = vmatprep.subr.bf16.mxu0 %v7980
    %11710 = vmatpush1.bf16.msra.mxu0 %v7979
    %11711 = vmatprep.subr.bf16.mxu0 %v7972
    %11712 = vmatpush1.bf16.msra.mxu0 %v7971
    %11713 = vmatprep.subr.bf16.mxu0 %v7964
    %11714 = vmatpush1.bf16.msra.mxu0 %v7963
    %11715 = vmatprep.subr.bf16.mxu0 %v7956
    %11716 = vmatpush1.bf16.msra.mxu0 %v7955
    %11717 = vmatprep.subr.bf16.mxu0 %v7948
    %11718 = vmatpush1.bf16.msra.mxu0 %v7947
    %11719 = vmatprep.subr.bf16.mxu0 %v7940
    %11720 = vmatpush1.bf16.msra.mxu0 %v7939
    %11721 = vmatprep.subr.bf16.mxu0 %v7932
    %11722 = vmatpush1.bf16.msra.mxu0 %v7931
    %11723 = vmatprep.subr.bf16.mxu0 %v8052
    %11724 = vmatpush2.bf16.msra.mxu0 %v8051
    %11725 = vmatprep.subr.bf16.mxu0 %v8044
    %11726 = vmatpush2.bf16.msra.mxu0 %v8043
    %11727 = vmatprep.subr.bf16.mxu0 %v8036
    %11728 = vmatpush2.bf16.msra.mxu0 %v8035
    %11729 = vmatprep.subr.bf16.mxu0 %v8028
    %11730 = vmatpush2.bf16.msra.mxu0 %v8027
    %11731 = vmatprep.subr.bf16.mxu0 %v8020
    %11732 = vmatpush2.bf16.msra.mxu0 %v8019
    %11733 = vmatprep.subr.bf16.mxu0 %v8012
    %11734 = vmatpush2.bf16.msra.mxu0 %v8011
    %11735 = vmatprep.subr.bf16.mxu0 %v8004
    %11736 = vmatpush2.bf16.msra.mxu0 %v8003
    %11737 = vmatprep.subr.bf16.mxu0 %v7996
    %11738 = vmatpush2.bf16.msra.mxu0 %v7995
    %11739 = vmatprep.mubr.bf16.mxu0 %v201
    %11740 = vmatmul.mubr.bf16.gmra.mxu0 %v200
    %v11741 = vpop.f32.mrf.mxu0
    %v11742 = vadd.f32 %v11701, %v11741
    %v11743 = vpop.f32.mrf.mxu0
    %v11744 = vadd.f32 %v11703, %v11743
    %v11745 = vpop.f32.mrf.mxu0
    %v11746 = vpop.f32.mrf.mxu0
    %11747 = vdwg.mxu0
    %11748 = vmatprep.subr.bf16.mxu0 0
    %11749 = vmatpush1.bf16.msra.mxu0 0
    %11750 = vmatprep.subr.bf16.mxu0 0
    %11751 = vmatpush1.bf16.msra.mxu0 0
    %11752 = vmatprep.subr.bf16.mxu0 0
    %11753 = vmatpush1.bf16.msra.mxu0 0
    %11754 = vmatprep.subr.bf16.mxu0 0
    %11755 = vmatpush1.bf16.msra.mxu0 0
    %11756 = vmatprep.subr.bf16.mxu0 %v8084
    %11757 = vmatpush1.bf16.msra.mxu0 %v8083
    %11758 = vmatprep.subr.bf16.mxu0 %v8076
    %11759 = vmatpush1.bf16.msra.mxu0 %v8075
    %11760 = vmatprep.subr.bf16.mxu0 %v8068
    %11761 = vmatpush1.bf16.msra.mxu0 %v8067
    %11762 = vmatprep.subr.bf16.mxu0 %v8060
    %11763 = vmatpush1.bf16.msra.mxu0 %v8059
    %11764 = vmatprep.subr.bf16.mxu0 0
    %11765 = vmatpush2.bf16.msra.mxu0 0
    %11766 = vmatprep.subr.bf16.mxu0 0
    %11767 = vmatpush2.bf16.msra.mxu0 0
    %11768 = vmatprep.subr.bf16.mxu0 0
    %11769 = vmatpush2.bf16.msra.mxu0 0
    %11770 = vmatprep.subr.bf16.mxu0 0
    %11771 = vmatpush2.bf16.msra.mxu0 0
    %11772 = vmatprep.subr.bf16.mxu0 0
    %11773 = vmatpush2.bf16.msra.mxu0 0
    %11774 = vmatprep.subr.bf16.mxu0 0
    %11775 = vmatpush2.bf16.msra.mxu0 0
    %11776 = vmatprep.subr.bf16.mxu0 0
    %11777 = vmatpush2.bf16.msra.mxu0 0
    %11778 = vmatprep.subr.bf16.mxu0 0
    %11779 = vmatpush2.bf16.msra.mxu0 0
    %11780 = vmatprep.mubr.bf16.mxu0 0
    %11781 = vmatmul.mubr.bf16.gmra.mxu0 %v9655
    %v11782 = vpop.f32.mrf.mxu0
    %v11783 = vadd.f32 %v11742, %v11782
    %v11784 = vpop.f32.mrf.mxu0
    %v11785 = vadd.f32 %v11744, %v11784
    %v11786 = vpop.f32.mrf.mxu0
    %v11787 = vpop.f32.mrf.mxu0
    %11788 = vdwg.mxu0
    %v11789 = vmax.f32 %v10184, 0.0
    %v11790 = vmax.f32 %v10186, 0.0
    %v11791 = vmax.f32 %v10717, 0.0
    %v11792 = vmax.f32 %v10719, 0.0
    %v11793 = vmax.f32 %v11250, 0.0
    %v11794 = vmax.f32 %v11252, 0.0
    %v11795 = vmax.f32 %v11783, 0.0
    %v11796 = vmax.f32 %v11785, 0.0
    %v11797 = vld [vmem:[%s3] sm:$0xff]
    %v11798 = vld [vmem:[%s3 + $0x8] sm:$0xff]
    %v11799 = vld [vmem:[%s3 + $0x10] sm:$0xff]
    %v11800 = vld [vmem:[%s3 + $0x18] sm:$0xff]
    %v11801 = vld [vmem:[%s3 + $0x20] sm:$0xff]
    %v11802 = vld [vmem:[%s3 + $0x28] sm:$0xff]
    %v11803 = vld [vmem:[%s3 + $0x30] sm:$0xff]
    %v11804 = vld [vmem:[%s3 + $0x38] sm:$0xff]
    %v11805 = vld [vmem:[%s3 + $0x40] sm:$0xff]
    %v11806 = vld [vmem:[%s3 + $0x48] sm:$0xff]
    %v11807 = vld [vmem:[%s3 + $0x50] sm:$0xff]
    %v11808 = vld [vmem:[%s3 + $0x58] sm:$0xff]
    %v11809 = vld [vmem:[%s3 + $0x60] sm:$0xff]
    %v11810 = vld [vmem:[%s3 + $0x68] sm:$0xff]
    %v11811 = vld [vmem:[%s3 + $0x70] sm:$0xff]
    %v11812 = vld [vmem:[%s3 + $0x78] sm:$0xff]
    %v11813 = vld [vmem:[%s3 + $0x80] sm:$0xff]
    %v11814 = vld [vmem:[%s3 + $0x88] sm:$0xff]
    %v11815 = vld [vmem:[%s3 + $0x90] sm:$0xff]
    %v11816 = vld [vmem:[%s3 + $0x98] sm:$0xff]
    %v11817 = vld [vmem:[%s3 + $0xa0] sm:$0xff]
    %v11818 = vld [vmem:[%s3 + $0xa8] sm:$0xff]
    %v11819 = vld [vmem:[%s3 + $0xb0] sm:$0xff]
    %v11820 = vld [vmem:[%s3 + $0xb8] sm:$0xff]
    %v11821 = vld [vmem:[%s3 + $0xc0] sm:$0xff]
    %v11822 = vld [vmem:[%s3 + $0xc8] sm:$0xff]
    %v11823 = vld [vmem:[%s3 + $0xd0] sm:$0xff]
    %v11824 = vld [vmem:[%s3 + $0xd8] sm:$0xff]
    %v11825 = vld [vmem:[%s3 + $0xe0] sm:$0xff]
    %v11826 = vld [vmem:[%s3 + $0xe8] sm:$0xff]
    %v11827 = vld [vmem:[%s3 + $0xf0] sm:$0xff]
    %v11828 = vld [vmem:[%s3 + $0xf8] sm:$0xff]
    %v11829 = vld [vmem:[%s3 + $0x100] sm:$0xff]
    %v11830 = vld [vmem:[%s3 + $0x108] sm:$0xff]
    %v11831 = vld [vmem:[%s3 + $0x110] sm:$0xff]
    %v11832 = vld [vmem:[%s3 + $0x118] sm:$0xff]
    %v11833 = vld [vmem:[%s3 + $0x120] sm:$0xff]
    %v11834 = vld [vmem:[%s3 + $0x128] sm:$0xff]
    %v11835 = vld [vmem:[%s3 + $0x130] sm:$0xff]
    %v11836 = vld [vmem:[%s3 + $0x138] sm:$0xff]
    %v11837 = vld [vmem:[%s3 + $0x140] sm:$0xff]
    %v11838 = vld [vmem:[%s3 + $0x148] sm:$0xff]
    %v11839 = vld [vmem:[%s3 + $0x150] sm:$0xff]
    %v11840 = vld [vmem:[%s3 + $0x158] sm:$0xff]
    %v11841 = vld [vmem:[%s3 + $0x160] sm:$0xff]
    %v11842 = vld [vmem:[%s3 + $0x168] sm:$0xff]
    %v11843 = vld [vmem:[%s3 + $0x170] sm:$0xff]
    %v11844 = vld [vmem:[%s3 + $0x178] sm:$0xff]
    %v11845 = vld [vmem:[%s3 + $0x180] sm:$0xff]
    %v11846 = vld [vmem:[%s3 + $0x188] sm:$0xff]
    %v11847 = vld [vmem:[%s3 + $0x190] sm:$0xff]
    %v11848 = vld [vmem:[%s3 + $0x198] sm:$0xff]
    %v11849 = vld [vmem:[%s3 + $0x1a0] sm:$0xff]
    %v11850 = vld [vmem:[%s3 + $0x1a8] sm:$0xff]
    %v11851 = vld [vmem:[%s3 + $0x1b0] sm:$0xff]
    %v11852 = vld [vmem:[%s3 + $0x1b8] sm:$0xff]
    %v11853 = vld [vmem:[%s3 + $0x1c0] sm:$0xff]
    %v11854 = vld [vmem:[%s3 + $0x1c8] sm:$0xff]
    %v11855 = vld [vmem:[%s3 + $0x1d0] sm:$0xff]
    %v11856 = vld [vmem:[%s3 + $0x1d8] sm:$0xff]
    %v11857 = vld [vmem:[%s3 + $0x1e0] sm:$0xff]
    %v11858 = vld [vmem:[%s3 + $0x1e8] sm:$0xff]
    %v11859 = vld [vmem:[%s3 + $0x1f0] sm:$0xff]
    %v11860 = vld [vmem:[%s3 + $0x1f8] sm:$0xff]
    %v11861 = vld [vmem:[%s4] sm:$0x1]
    %v11863 = vlaneseq
    %v11864 = vshrl.u32 %v11863, 7
    %v11865 = vsub.s32 0, %v11864
    %v11866 = vrot.slane %v11861, %v11865
    %11868 = vmatprep.subr.mxu0 0.0
    %11869 = vmatpush1.msra.mxu0 %v11812
    %11870 = vmatprep.subr.mxu0 0.0
    %11871 = vmatpush1.msra.mxu0 %v11811
    %11872 = vmatprep.subr.mxu0 0.0
    %11873 = vmatpush1.msra.mxu0 %v11810
    %11874 = vmatprep.subr.mxu0 0.0
    %11875 = vmatpush1.msra.mxu0 %v11809
    %11876 = vmatprep.subr.mxu0 0.0
    %11877 = vmatpush1.msra.mxu0 %v11808
    %11878 = vmatprep.subr.mxu0 0.0
    %11879 = vmatpush1.msra.mxu0 %v11807
    %11880 = vmatprep.subr.mxu0 0.0
    %11881 = vmatpush1.msra.mxu0 %v11806
    %11882 = vmatprep.subr.mxu0 0.0
    %11883 = vmatpush1.msra.mxu0 %v11805
    %11884 = vmatprep.subr.mxu0 0.0
    %11885 = vmatpush1.msra.mxu0 %v11804
    %11886 = vmatprep.subr.mxu0 0.0
    %11887 = vmatpush1.msra.mxu0 %v11803
    %11888 = vmatprep.subr.mxu0 0.0
    %11889 = vmatpush1.msra.mxu0 %v11802
    %11890 = vmatprep.subr.mxu0 0.0
    %11891 = vmatpush1.msra.mxu0 %v11801
    %11892 = vmatprep.subr.mxu0 0.0
    %11893 = vmatpush1.msra.mxu0 %v11800
    %11894 = vmatprep.subr.mxu0 0.0
    %11895 = vmatpush1.msra.mxu0 %v11799
    %11896 = vmatprep.subr.mxu0 0.0
    %11897 = vmatpush1.msra.mxu0 %v11798
    %11898 = vmatprep.subr.mxu0 0.0
    %11899 = vmatpush1.msra.mxu0 %v11797
    %11900 = vmatprep.subr.mxu0 0.0
    %11901 = vmatpush2.msra.mxu0 %v11828
    %11902 = vmatprep.subr.mxu0 0.0
    %11903 = vmatpush2.msra.mxu0 %v11827
    %11904 = vmatprep.subr.mxu0 0.0
    %11905 = vmatpush2.msra.mxu0 %v11826
    %11906 = vmatprep.subr.mxu0 0.0
    %11907 = vmatpush2.msra.mxu0 %v11825
    %11908 = vmatprep.subr.mxu0 0.0
    %11909 = vmatpush2.msra.mxu0 %v11824
    %11910 = vmatprep.subr.mxu0 0.0
    %11911 = vmatpush2.msra.mxu0 %v11823
    %11912 = vmatprep.subr.mxu0 0.0
    %11913 = vmatpush2.msra.mxu0 %v11822
    %11914 = vmatprep.subr.mxu0 0.0
    %11915 = vmatpush2.msra.mxu0 %v11821
    %11916 = vmatprep.subr.mxu0 0.0
    %11917 = vmatpush2.msra.mxu0 %v11820
    %11918 = vmatprep.subr.mxu0 0.0
    %11919 = vmatpush2.msra.mxu0 %v11819
    %11920 = vmatprep.subr.mxu0 0.0
    %11921 = vmatpush2.msra.mxu0 %v11818
    %11922 = vmatprep.subr.mxu0 0.0
    %11923 = vmatpush2.msra.mxu0 %v11817
    %11924 = vmatprep.subr.mxu0 0.0
    %11925 = vmatpush2.msra.mxu0 %v11816
    %11926 = vmatprep.subr.mxu0 0.0
    %11927 = vmatpush2.msra.mxu0 %v11815
    %11928 = vmatprep.subr.mxu0 0.0
    %11929 = vmatpush2.msra.mxu0 %v11814
    %11930 = vmatprep.subr.mxu0 0.0
    %11931 = vmatpush2.msra.mxu0 %v11813
    %11932 = vmatprep.mubr.f32.mxu0 %v11790
    %11933 = vmatmul.mubr.f32.gmra.mxu0 %v11789
    %v11934 = vpop.f32.mrf.mxu0
    %v11935 = vadd.f32 %v11866, %v11934
    %v11936 = vpop.f32.mrf.mxu0
    %11937 = vdwg.mxu0
    %11938 = vmatprep.subr.mxu0 0.0
    %11939 = vmatpush1.msra.mxu0 %v11844
    %11940 = vmatprep.subr.mxu0 0.0
    %11941 = vmatpush1.msra.mxu0 %v11843
    %11942 = vmatprep.subr.mxu0 0.0
    %11943 = vmatpush1.msra.mxu0 %v11842
    %11944 = vmatprep.subr.mxu0 0.0
    %11945 = vmatpush1.msra.mxu0 %v11841
    %11946 = vmatprep.subr.mxu0 0.0
    %11947 = vmatpush1.msra.mxu0 %v11840
    %11948 = vmatprep.subr.mxu0 0.0
    %11949 = vmatpush1.msra.mxu0 %v11839
    %11950 = vmatprep.subr.mxu0 0.0
    %11951 = vmatpush1.msra.mxu0 %v11838
    %11952 = vmatprep.subr.mxu0 0.0
    %11953 = vmatpush1.msra.mxu0 %v11837
    %11954 = vmatprep.subr.mxu0 0.0
    %11955 = vmatpush1.msra.mxu0 %v11836
    %11956 = vmatprep.subr.mxu0 0.0
    %11957 = vmatpush1.msra.mxu0 %v11835
    %11958 = vmatprep.subr.mxu0 0.0
    %11959 = vmatpush1.msra.mxu0 %v11834
    %11960 = vmatprep.subr.mxu0 0.0
    %11961 = vmatpush1.msra.mxu0 %v11833
    %11962 = vmatprep.subr.mxu0 0.0
    %11963 = vmatpush1.msra.mxu0 %v11832
    %11964 = vmatprep.subr.mxu0 0.0
    %11965 = vmatpush1.msra.mxu0 %v11831
    %11966 = vmatprep.subr.mxu0 0.0
    %11967 = vmatpush1.msra.mxu0 %v11830
    %11968 = vmatprep.subr.mxu0 0.0
    %11969 = vmatpush1.msra.mxu0 %v11829
    %11970 = vmatprep.subr.mxu0 0.0
    %11971 = vmatpush2.msra.mxu0 %v11860
    %11972 = vmatprep.subr.mxu0 0.0
    %11973 = vmatpush2.msra.mxu0 %v11859
    %11974 = vmatprep.subr.mxu0 0.0
    %11975 = vmatpush2.msra.mxu0 %v11858
    %11976 = vmatprep.subr.mxu0 0.0
    %11977 = vmatpush2.msra.mxu0 %v11857
    %11978 = vmatprep.subr.mxu0 0.0
    %11979 = vmatpush2.msra.mxu0 %v11856
    %11980 = vmatprep.subr.mxu0 0.0
    %11981 = vmatpush2.msra.mxu0 %v11855
    %11982 = vmatprep.subr.mxu0 0.0
    %11983 = vmatpush2.msra.mxu0 %v11854
    %11984 = vmatprep.subr.mxu0 0.0
    %11985 = vmatpush2.msra.mxu0 %v11853
    %11986 = vmatprep.subr.mxu0 0.0
    %11987 = vmatpush2.msra.mxu0 %v11852
    %11988 = vmatprep.subr.mxu0 0.0
    %11989 = vmatpush2.msra.mxu0 %v11851
    %11990 = vmatprep.subr.mxu0 0.0
    %11991 = vmatpush2.msra.mxu0 %v11850
    %11992 = vmatprep.subr.mxu0 0.0
    %11993 = vmatpush2.msra.mxu0 %v11849
    %11994 = vmatprep.subr.mxu0 0.0
    %11995 = vmatpush2.msra.mxu0 %v11848
    %11996 = vmatprep.subr.mxu0 0.0
    %11997 = vmatpush2.msra.mxu0 %v11847
    %11998 = vmatprep.subr.mxu0 0.0
    %11999 = vmatpush2.msra.mxu0 %v11846
    %12000 = vmatprep.subr.mxu0 0.0
    %12001 = vmatpush2.msra.mxu0 %v11845
    %12002 = vmatprep.mubr.f32.mxu0 %v11792
    %12003 = vmatmul.mubr.f32.gmra.mxu0 %v11791
    %v12004 = vpop.f32.mrf.mxu0
    %v12005 = vadd.f32 %v11935, %v12004
    %v12006 = vpop.f32.mrf.mxu0
    %12007 = vdwg.mxu0
    %v12008 = vld [vmem:[%s5] sm:$0xff]
    %v12009 = vld [vmem:[%s5 + $0x8] sm:$0xff]
    %v12010 = vld [vmem:[%s5 + $0x10] sm:$0xff]
    %v12011 = vld [vmem:[%s5 + $0x18] sm:$0xff]
    %v12012 = vld [vmem:[%s5 + $0x20] sm:$0xff]
    %v12013 = vld [vmem:[%s5 + $0x28] sm:$0xff]
    %v12014 = vld [vmem:[%s5 + $0x30] sm:$0xff]
    %v12015 = vld [vmem:[%s5 + $0x38] sm:$0xff]
    %v12016 = vld [vmem:[%s5 + $0x40] sm:$0xff]
    %v12017 = vld [vmem:[%s5 + $0x48] sm:$0xff]
    %v12018 = vld [vmem:[%s5 + $0x50] sm:$0xff]
    %v12019 = vld [vmem:[%s5 + $0x58] sm:$0xff]
    %v12020 = vld [vmem:[%s5 + $0x60] sm:$0xff]
    %v12021 = vld [vmem:[%s5 + $0x68] sm:$0xff]
    %v12022 = vld [vmem:[%s5 + $0x70] sm:$0xff]
    %v12023 = vld [vmem:[%s5 + $0x78] sm:$0xff]
    %v12024 = vld [vmem:[%s5 + $0x80] sm:$0xff]
    %v12025 = vld [vmem:[%s5 + $0x88] sm:$0xff]
    %v12026 = vld [vmem:[%s5 + $0x90] sm:$0xff]
    %v12027 = vld [vmem:[%s5 + $0x98] sm:$0xff]
    %v12028 = vld [vmem:[%s5 + $0xa0] sm:$0xff]
    %v12029 = vld [vmem:[%s5 + $0xa8] sm:$0xff]
    %v12030 = vld [vmem:[%s5 + $0xb0] sm:$0xff]
    %v12031 = vld [vmem:[%s5 + $0xb8] sm:$0xff]
    %v12032 = vld [vmem:[%s5 + $0xc0] sm:$0xff]
    %v12033 = vld [vmem:[%s5 + $0xc8] sm:$0xff]
    %v12034 = vld [vmem:[%s5 + $0xd0] sm:$0xff]
    %v12035 = vld [vmem:[%s5 + $0xd8] sm:$0xff]
    %v12036 = vld [vmem:[%s5 + $0xe0] sm:$0xff]
    %v12037 = vld [vmem:[%s5 + $0xe8] sm:$0xff]
    %v12038 = vld [vmem:[%s5 + $0xf0] sm:$0xff]
    %v12039 = vld [vmem:[%s5 + $0xf8] sm:$0xff]
    %v12040 = vld [vmem:[%s5 + $0x100] sm:$0xff]
    %v12041 = vld [vmem:[%s5 + $0x108] sm:$0xff]
    %v12042 = vld [vmem:[%s5 + $0x110] sm:$0xff]
    %v12043 = vld [vmem:[%s5 + $0x118] sm:$0xff]
    %v12044 = vld [vmem:[%s5 + $0x120] sm:$0xff]
    %v12045 = vld [vmem:[%s5 + $0x128] sm:$0xff]
    %v12046 = vld [vmem:[%s5 + $0x130] sm:$0xff]
    %v12047 = vld [vmem:[%s5 + $0x138] sm:$0xff]
    %v12048 = vld [vmem:[%s5 + $0x140] sm:$0xff]
    %v12049 = vld [vmem:[%s5 + $0x148] sm:$0xff]
    %v12050 = vld [vmem:[%s5 + $0x150] sm:$0xff]
    %v12051 = vld [vmem:[%s5 + $0x158] sm:$0xff]
    %v12052 = vld [vmem:[%s5 + $0x160] sm:$0xff]
    %v12053 = vld [vmem:[%s5 + $0x168] sm:$0xff]
    %v12054 = vld [vmem:[%s5 + $0x170] sm:$0xff]
    %v12055 = vld [vmem:[%s5 + $0x178] sm:$0xff]
    %v12056 = vld [vmem:[%s5 + $0x180] sm:$0xff]
    %v12057 = vld [vmem:[%s5 + $0x188] sm:$0xff]
    %v12058 = vld [vmem:[%s5 + $0x190] sm:$0xff]
    %v12059 = vld [vmem:[%s5 + $0x198] sm:$0xff]
    %v12060 = vld [vmem:[%s5 + $0x1a0] sm:$0xff]
    %v12061 = vld [vmem:[%s5 + $0x1a8] sm:$0xff]
    %v12062 = vld [vmem:[%s5 + $0x1b0] sm:$0xff]
    %v12063 = vld [vmem:[%s5 + $0x1b8] sm:$0xff]
    %v12064 = vld [vmem:[%s5 + $0x1c0] sm:$0xff]
    %v12065 = vld [vmem:[%s5 + $0x1c8] sm:$0xff]
    %v12066 = vld [vmem:[%s5 + $0x1d0] sm:$0xff]
    %v12067 = vld [vmem:[%s5 + $0x1d8] sm:$0xff]
    %v12068 = vld [vmem:[%s5 + $0x1e0] sm:$0xff]
    %v12069 = vld [vmem:[%s5 + $0x1e8] sm:$0xff]
    %v12070 = vld [vmem:[%s5 + $0x1f0] sm:$0xff]
    %v12071 = vld [vmem:[%s5 + $0x1f8] sm:$0xff]
    %v12072 = vld [vmem:[#allocation2] sm:$0x1]
    %v12074 = vlaneseq
    %v12075 = vshrl.u32 %v12074, 7
    %v12076 = vsub.s32 0, %v12075
    %v12077 = vrot.slane %v12072, %v12076
    %12079 = vmatprep.subr.mxu0 0.0
    %12080 = vmatpush1.msra.mxu0 %v12023
    %12081 = vmatprep.subr.mxu0 0.0
    %12082 = vmatpush1.msra.mxu0 %v12022
    %12083 = vmatprep.subr.mxu0 0.0
    %12084 = vmatpush1.msra.mxu0 %v12021
    %12085 = vmatprep.subr.mxu0 0.0
    %12086 = vmatpush1.msra.mxu0 %v12020
    %12087 = vmatprep.subr.mxu0 0.0
    %12088 = vmatpush1.msra.mxu0 %v12019
    %12089 = vmatprep.subr.mxu0 0.0
    %12090 = vmatpush1.msra.mxu0 %v12018
    %12091 = vmatprep.subr.mxu0 0.0
    %12092 = vmatpush1.msra.mxu0 %v12017
    %12093 = vmatprep.subr.mxu0 0.0
    %12094 = vmatpush1.msra.mxu0 %v12016
    %12095 = vmatprep.subr.mxu0 0.0
    %12096 = vmatpush1.msra.mxu0 %v12015
    %12097 = vmatprep.subr.mxu0 0.0
    %12098 = vmatpush1.msra.mxu0 %v12014
    %12099 = vmatprep.subr.mxu0 0.0
    %12100 = vmatpush1.msra.mxu0 %v12013
    %12101 = vmatprep.subr.mxu0 0.0
    %12102 = vmatpush1.msra.mxu0 %v12012
    %12103 = vmatprep.subr.mxu0 0.0
    %12104 = vmatpush1.msra.mxu0 %v12011
    %12105 = vmatprep.subr.mxu0 0.0
    %12106 = vmatpush1.msra.mxu0 %v12010
    %12107 = vmatprep.subr.mxu0 0.0
    %12108 = vmatpush1.msra.mxu0 %v12009
    %12109 = vmatprep.subr.mxu0 0.0
    %12110 = vmatpush1.msra.mxu0 %v12008
    %12111 = vmatprep.subr.mxu0 0.0
    %12112 = vmatpush2.msra.mxu0 %v12039
    %12113 = vmatprep.subr.mxu0 0.0
    %12114 = vmatpush2.msra.mxu0 %v12038
    %12115 = vmatprep.subr.mxu0 0.0
    %12116 = vmatpush2.msra.mxu0 %v12037
    %12117 = vmatprep.subr.mxu0 0.0
    %12118 = vmatpush2.msra.mxu0 %v12036
    %12119 = vmatprep.subr.mxu0 0.0
    %12120 = vmatpush2.msra.mxu0 %v12035
    %12121 = vmatprep.subr.mxu0 0.0
    %12122 = vmatpush2.msra.mxu0 %v12034
    %12123 = vmatprep.subr.mxu0 0.0
    %12124 = vmatpush2.msra.mxu0 %v12033
    %12125 = vmatprep.subr.mxu0 0.0
    %12126 = vmatpush2.msra.mxu0 %v12032
    %12127 = vmatprep.subr.mxu0 0.0
    %12128 = vmatpush2.msra.mxu0 %v12031
    %12129 = vmatprep.subr.mxu0 0.0
    %12130 = vmatpush2.msra.mxu0 %v12030
    %12131 = vmatprep.subr.mxu0 0.0
    %12132 = vmatpush2.msra.mxu0 %v12029
    %12133 = vmatprep.subr.mxu0 0.0
    %12134 = vmatpush2.msra.mxu0 %v12028
    %12135 = vmatprep.subr.mxu0 0.0
    %12136 = vmatpush2.msra.mxu0 %v12027
    %12137 = vmatprep.subr.mxu0 0.0
    %12138 = vmatpush2.msra.mxu0 %v12026
    %12139 = vmatprep.subr.mxu0 0.0
    %12140 = vmatpush2.msra.mxu0 %v12025
    %12141 = vmatprep.subr.mxu0 0.0
    %12142 = vmatpush2.msra.mxu0 %v12024
    %12143 = vmatprep.mubr.f32.mxu0 %v11794
    %12144 = vmatmul.mubr.f32.gmra.mxu0 %v11793
    %v12145 = vpop.f32.mrf.mxu0
    %v12146 = vadd.f32 %v12077, %v12145
    %v12147 = vpop.f32.mrf.mxu0
    %12148 = vdwg.mxu0
    %12149 = vmatprep.subr.mxu0 0.0
    %12150 = vmatpush1.msra.mxu0 %v12055
    %12151 = vmatprep.subr.mxu0 0.0
    %12152 = vmatpush1.msra.mxu0 %v12054
    %12153 = vmatprep.subr.mxu0 0.0
    %12154 = vmatpush1.msra.mxu0 %v12053
    %12155 = vmatprep.subr.mxu0 0.0
    %12156 = vmatpush1.msra.mxu0 %v12052
    %12157 = vmatprep.subr.mxu0 0.0
    %12158 = vmatpush1.msra.mxu0 %v12051
    %12159 = vmatprep.subr.mxu0 0.0
    %12160 = vmatpush1.msra.mxu0 %v12050
    %12161 = vmatprep.subr.mxu0 0.0
    %12162 = vmatpush1.msra.mxu0 %v12049
    %12163 = vmatprep.subr.mxu0 0.0
    %12164 = vmatpush1.msra.mxu0 %v12048
    %12165 = vmatprep.subr.mxu0 0.0
    %12166 = vmatpush1.msra.mxu0 %v12047
    %12167 = vmatprep.subr.mxu0 0.0
    %12168 = vmatpush1.msra.mxu0 %v12046
    %12169 = vmatprep.subr.mxu0 0.0
    %12170 = vmatpush1.msra.mxu0 %v12045
    %12171 = vmatprep.subr.mxu0 0.0
    %12172 = vmatpush1.msra.mxu0 %v12044
    %12173 = vmatprep.subr.mxu0 0.0
    %12174 = vmatpush1.msra.mxu0 %v12043
    %12175 = vmatprep.subr.mxu0 0.0
    %12176 = vmatpush1.msra.mxu0 %v12042
    %12177 = vmatprep.subr.mxu0 0.0
    %12178 = vmatpush1.msra.mxu0 %v12041
    %12179 = vmatprep.subr.mxu0 0.0
    %12180 = vmatpush1.msra.mxu0 %v12040
    %12181 = vmatprep.subr.mxu0 0.0
    %12182 = vmatpush2.msra.mxu0 %v12071
    %12183 = vmatprep.subr.mxu0 0.0
    %12184 = vmatpush2.msra.mxu0 %v12070
    %12185 = vmatprep.subr.mxu0 0.0
    %12186 = vmatpush2.msra.mxu0 %v12069
    %12187 = vmatprep.subr.mxu0 0.0
    %12188 = vmatpush2.msra.mxu0 %v12068
    %12189 = vmatprep.subr.mxu0 0.0
    %12190 = vmatpush2.msra.mxu0 %v12067
    %12191 = vmatprep.subr.mxu0 0.0
    %12192 = vmatpush2.msra.mxu0 %v12066
    %12193 = vmatprep.subr.mxu0 0.0
    %12194 = vmatpush2.msra.mxu0 %v12065
    %12195 = vmatprep.subr.mxu0 0.0
    %12196 = vmatpush2.msra.mxu0 %v12064
    %12197 = vmatprep.subr.mxu0 0.0
    %12198 = vmatpush2.msra.mxu0 %v12063
    %12199 = vmatprep.subr.mxu0 0.0
    %12200 = vmatpush2.msra.mxu0 %v12062
    %12201 = vmatprep.subr.mxu0 0.0
    %12202 = vmatpush2.msra.mxu0 %v12061
    %12203 = vmatprep.subr.mxu0 0.0
    %12204 = vmatpush2.msra.mxu0 %v12060
    %12205 = vmatprep.subr.mxu0 0.0
    %12206 = vmatpush2.msra.mxu0 %v12059
    %12207 = vmatprep.subr.mxu0 0.0
    %12208 = vmatpush2.msra.mxu0 %v12058
    %12209 = vmatprep.subr.mxu0 0.0
    %12210 = vmatpush2.msra.mxu0 %v12057
    %12211 = vmatprep.subr.mxu0 0.0
    %12212 = vmatpush2.msra.mxu0 %v12056
    %12213 = vmatprep.mubr.f32.mxu0 %v11796
    %12214 = vmatmul.mubr.f32.gmra.mxu0 %v11795
    %v12215 = vpop.f32.mrf.mxu0
    %v12216 = vadd.f32 %v12146, %v12215
    %v12217 = vpop.f32.mrf.mxu0
    %12218 = vdwg.mxu0
    %vm12219 = vcmask 17408
    %v12220 = vsel %vm12219, %v12005, 0.0
    %12221 = vadd.xlane.f32.xlu0 %v12220
    %v12222 = vpop.xlane.xlu0 %12221
    %v12223 = vrcp.pop 3.0
    %v12224 = vmul.f32 %v12222, %v12223
    %12226 = vset.pattern.permute.xlu0 0
    %12227 = vperm.xlu0 %12226, %v12216
    %v12228 = vpop.permute.xlu0 %12227
    %v12230 = vadd.f32 %v12228, %v12005
    %v12231 = vsub.f32 %v12230, %v12224
    %12232 = vst.msk [vmem:[#allocation3] sm:$0x3] %vm12219, %v12231
    // Predicated region
    $region30: #{duelnet_forward.7} parent=1 // pred_check
      _
    $region31: #{duelnet_forward.7} parent=1 // pred_check_branch
      %12234 = sbr.rel (0) target = $region33
    $region32: #{duelnet_forward.7} parent=1 // pred_region
      %s12236 = ssub.s32 32, 32
      %12237 = vsyncadd [#allocation4], %s12236
      %s12239 = sshll.u32 [#allocation3], 4
      %s12240 = int_to_ptr.vmem [resolvable:$true] %s12239
      %12242 = dma.vmem_to_hbm [thread:$0]  %s12240, 32, %s7, [#allocation4]
    $region33: #{duelnet_forward.7} parent=1 // pred_fallthru
      _
    // Predicated region
    $region34: #{duelnet_forward.7} parent=1 // pred_check
      _
    $region35: #{duelnet_forward.7} parent=1 // pred_check_branch
      %12244 = sbr.rel (0) target = $region37
    $region36: #{duelnet_forward.7} parent=1 // pred_region
      %12245 = dma.done [#allocation4], 32
    $region37: #{duelnet_forward.7} parent=1 // pred_fallthru
      _
    %12246 = vsyncpa [#allocation4], 1

</llo_original>
